<compile_context>
chip_gen: v7x
topology: tpu7x:2x2x1
jax: 0.10.0
libtpu: 0.0.40
codegen_flags: <defaults>
</compile_context>

<pallas_src>
import jax
import jax.numpy as jnp
from jax.experimental import pallas as pl
from jax.experimental.pallas import tpu as pltpu

# Logical (torch) dims and lane-padded dims.
IN_DIM, HID_DIM, OUT_DIM = 100, 1200, 784
IN_PAD, HID_PAD, OUT_PAD = 128, 1280, 896


def mlp_kernel(x_ref, w1_ref, b1_ref, w2_ref, b2_ref, w3_ref, b3_ref, out_ref):
    # Layer 1: Linear(100 -> 1200) + ReLU  (bf16 operands, f32 MXU accumulate)
    h1 = jnp.dot(x_ref[...], w1_ref[...], preferred_element_type=jnp.float32)
    h1 = jnp.maximum(h1 + b1_ref[...], 0.0)

    # Layer 2: Linear(1200 -> 1200) + ReLU
    h2 = jnp.dot(h1.astype(jnp.bfloat16), w2_ref[...],
                 preferred_element_type=jnp.float32)
    h2 = jnp.maximum(h2 + b2_ref[...], 0.0)

    # Layer 3: Linear(1200 -> 784) + Sigmoid.
    # exp goes to the EUP; the reciprocal is pushed to the EUP too (approx vrcp),
    # keeping the sigmoid epilogue out of the VPU slots.
    logits = jnp.dot(h2.astype(jnp.bfloat16), w3_ref[...],
                     preferred_element_type=jnp.float32)
    logits = logits + b3_ref[...]
    out_ref[...] = pl.reciprocal(1.0 + jnp.exp(-logits), approx=True)


def _pad2(a, rows, cols):
    return jnp.pad(a, ((0, rows - a.shape[0]), (0, cols - a.shape[1])))


def pack_params(params):
    """Zero-pad params to lane multiples; quantize weights to bf16 (biases stay f32)."""
    w1, b1, w2, b2, w3, b3 = params
    return (
        _pad2(w1, IN_PAD, HID_PAD).astype(jnp.bfloat16),
        _pad2(b1, 1, HID_PAD),
        _pad2(w2, HID_PAD, HID_PAD).astype(jnp.bfloat16),
        _pad2(b2, 1, HID_PAD),
        _pad2(w3, HID_PAD, OUT_PAD).astype(jnp.bfloat16),
        _pad2(b3, 1, OUT_PAD),
    )


def _device_tuning():
    """Per-generation (max batch tile, vmem_limit_bytes)."""
    try:
        kind = jax.devices()[0].device_kind.lower()
    except Exception:
        kind = ""
    if "7x" in kind or "v7" in kind:
        # v7x: only 64 MiB physical VMEM / TC -> keep the 32 MiB scoped limit.
        # With single-buffered weights a 512-row tile is ~18-28 MiB, which fits.
        return 512, 32 << 20
    if "v6" in kind:
        return 512, 64 << 20
    if "v5" in kind:
        return 512, 64 << 20
    # Unknown chip: conservative defaults.
    return 256, 32 << 20


def mnist_generator_forward(x, packed_params):
    """x: (B, 100) float32 -> (B, 1, 28, 28) float32."""
    w1, b1, w2, b2, w3, b3 = packed_params
    B = x.shape[0]

    # Batch tiling: pad batch to a sublane multiple; tile size per generation.
    tm_max, vmem_limit = _device_tuning()
    b_pad = -(-B // 8) * 8
    tm = min(tm_max, b_pad)
    b_pad = -(-b_pad // tm) * tm
    grid = (b_pad // tm,)

    # Lane-pad + bf16-cast the input (zeros in padded columns contribute nothing).
    xp = jnp.zeros((b_pad, IN_PAD), jnp.bfloat16)
    xp = xp.at[:B, :IN_DIM].set(x.astype(jnp.bfloat16))

    row = lambda i: (i, 0)     # batch-tiled operands
    const = lambda i: (0, 0)   # VMEM-resident weights/biases (fetched once)
    # Constant block index across the whole grid -> double-buffering is pure
    # VMEM waste; keep a single resident copy.
    resident = pl.Buffered(buffer_count=1)

    # Only shard the batch axis across TensorCores (megacore) when there is
    # enough work to amortize duplicating the ~5.6 MiB resident weight fetch.
    semantics = ("parallel",) if grid[0] >= 4 else ("arbitrary",)

    flops = 2 * b_pad * (IN_PAD * HID_PAD + HID_PAD * HID_PAD + HID_PAD * OUT_PAD)
    bytes_accessed = (
        xp.size * 2
        + (w1.size + w2.size + w3.size) * 2
        + (b1.size + b2.size + b3.size) * 4
        + b_pad * OUT_PAD * 4
    )

    y = pl.pallas_call(
        mlp_kernel,
        out_shape=jax.ShapeDtypeStruct((b_pad, OUT_PAD), jnp.float32),
        grid=grid,
        in_specs=[
            pl.BlockSpec((tm, IN_PAD), row),
            pl.BlockSpec((IN_PAD, HID_PAD), const, pipeline_mode=resident),
            pl.BlockSpec((1, HID_PAD), const, pipeline_mode=resident),
            pl.BlockSpec((HID_PAD, HID_PAD), const, pipeline_mode=resident),
            pl.BlockSpec((1, HID_PAD), const, pipeline_mode=resident),
            pl.BlockSpec((HID_PAD, OUT_PAD), const, pipeline_mode=resident),
            pl.BlockSpec((1, OUT_PAD), const, pipeline_mode=resident),
        ],
        out_specs=pl.BlockSpec((tm, OUT_PAD), row),
        compiler_params=pltpu.CompilerParams(
            dimension_semantics=semantics,
            vmem_limit_bytes=vmem_limit,
        ),
        cost_estimate=pl.CostEstimate(
            flops=flops,
            transcendentals=b_pad * OUT_PAD,
            bytes_accessed=bytes_accessed,
        ),
    )(xp, w1, b1, w2, b2, w3, b3)

    # Slice off the lane/batch padding; matches torch's .view(-1, 1, 28, 28).
    return y[:B, :OUT_DIM].reshape(-1, 1, 28, 28)


def init_params(key, input_dim=100, hidden=1200, output_dim=784):
    """Mimics torch.nn.Linear default init: U(-1/sqrt(fan_in), 1/sqrt(fan_in)).

    Weights are stored (in, out) so the kernel computes x @ W + b directly.
    """
    ks = jax.random.split(key, 6)

    def lin(kw, kb, fan_in, fan_out):
        bound = 1.0 / jnp.sqrt(jnp.float32(fan_in))
        w = jax.random.uniform(kw, (fan_in, fan_out), jnp.float32, -bound, bound)
        b = jax.random.uniform(kb, (1, fan_out), jnp.float32, -bound, bound)
        return w, b

    w1, b1 = lin(ks[0], ks[1], input_dim, hidden)
    w2, b2 = lin(ks[2], ks[3], hidden, hidden)
    w3, b3 = lin(ks[4], ks[5], hidden, output_dim)
    return (w1, b1, w2, b2, w3, b3)


def reference_forward(x, params):
    """Pure-JAX reference mirroring the kernel's bf16-weight / f32-accumulate math."""
    w1, b1, w2, b2, w3, b3 = params
    bf = jnp.bfloat16
    h1 = jnp.maximum(
        jnp.dot(x.astype(bf), w1.astype(bf), preferred_element_type=jnp.float32) + b1, 0.0)
    h2 = jnp.maximum(
        jnp.dot(h1.astype(bf), w2.astype(bf), preferred_element_type=jnp.float32) + b2, 0.0)
    logits = jnp.dot(h2.astype(bf), w3.astype(bf), preferred_element_type=jnp.float32) + b3
    return jax.nn.sigmoid(logits).reshape(-1, 1, 28, 28)


if __name__ == "__main__":
    key = jax.random.PRNGKey(0)
    k_params, k_x = jax.random.split(key)

    B, INPUT_DIM = 8, 100
    params = init_params(k_params, input_dim=INPUT_DIM)
    packed = pack_params(params)
    x = jax.random.normal(k_x, (B, INPUT_DIM), jnp.float32)

    out = mnist_generator_forward(x, packed)
    out = jax.block_until_ready(out)

    assert out.shape == (B, 1, 28, 28), out.shape

    ref = jax.block_until_ready(reference_forward(x, params))
    # Tolerance covers intentional bf16 weight storage + approx (EUP) reciprocal.
    err = float(jnp.max(jnp.abs(out - ref)))
    assert jnp.allclose(out, ref, atol=3e-3, rtol=3e-3), err

    print("KERNEL_OK")
</pallas_src>

<mosaic_0001>
module attributes {stable_mosaic.version = 11 : i64} {
  func.func @mlp_kernel(%arg0: i32, %arg1: memref<8x128xbf16, #tpu.memory_space<vmem>>, %arg2: memref<128x1280xbf16, #tpu.memory_space<vmem>>, %arg3: memref<1x1280xf32, #tpu.memory_space<vmem>>, %arg4: memref<1280x1280xbf16, #tpu.memory_space<vmem>>, %arg5: memref<1x1280xf32, #tpu.memory_space<vmem>>, %arg6: memref<1280x896xbf16, #tpu.memory_space<vmem>>, %arg7: memref<1x896xf32, #tpu.memory_space<vmem>>, %arg8: memref<8x896xf32, #tpu.memory_space<vmem>>) attributes {dimension_semantics = [#tpu.dimension_semantics<arbitrary>], iteration_bounds = array<i64: 1>, scalar_prefetch = 0 : i64, scratch_operands = 0 : i64, tpu.core_type = #tpu.core_type<tc>, window_params = [{transform_indices = @transform_0, window_bounds = array<i64: 8, 128>}, {pipeline_mode = #tpu.pipeline_mode<synchronous>, transform_indices = @transform_1, window_bounds = array<i64: 128, 1280>}, {pipeline_mode = #tpu.pipeline_mode<synchronous>, transform_indices = @transform_2, window_bounds = array<i64: 1, 1280>}, {pipeline_mode = #tpu.pipeline_mode<synchronous>, transform_indices = @transform_3, window_bounds = array<i64: 1280, 1280>}, {pipeline_mode = #tpu.pipeline_mode<synchronous>, transform_indices = @transform_4, window_bounds = array<i64: 1, 1280>}, {pipeline_mode = #tpu.pipeline_mode<synchronous>, transform_indices = @transform_5, window_bounds = array<i64: 1280, 896>}, {pipeline_mode = #tpu.pipeline_mode<synchronous>, transform_indices = @transform_6, window_bounds = array<i64: 1, 896>}, {transform_indices = @transform_7, window_bounds = array<i64: 8, 896>}]} {
    %c0 = arith.constant 0 : index
    %c0_0 = arith.constant 0 : index
    %0 = vector.load %arg1[%c0, %c0_0] : memref<8x128xbf16, #tpu.memory_space<vmem>>, vector<8x128xbf16>
    %c0_1 = arith.constant 0 : index
    %c0_2 = arith.constant 0 : index
    %1 = vector.load %arg2[%c0_1, %c0_2] : memref<128x1280xbf16, #tpu.memory_space<vmem>>, vector<128x1280xbf16>
    %cst = arith.constant dense<0.000000e+00> : vector<8x1280xf32>
    %2 = tpu.matmul %0, %1, %cst {dimension_numbers = #tpu.dot_dimension_numbers<[1], [0], [0], [1], [0, 0, 1, 1], [], []>} : vector<8x128xbf16>, vector<128x1280xbf16>, vector<8x1280xf32> -> vector<8x1280xf32>
    %c0_3 = arith.constant 0 : index
    %c0_4 = arith.constant 0 : index
    %3 = vector.load %arg3[%c0_3, %c0_4] : memref<1x1280xf32, #tpu.memory_space<vmem>>, vector<1x1280xf32>
    %4 = vector.broadcast %3 : vector<1x1280xf32> to vector<8x1280xf32>
    %5 = arith.addf %2, %4 : vector<8x1280xf32>
    %cst_5 = arith.constant 0.000000e+00 : f32
    %6 = vector.broadcast %cst_5 : f32 to vector<8x1280xf32>
    %7 = arith.maximumf %5, %6 : vector<8x1280xf32>
    %8 = arith.truncf %7 : vector<8x1280xf32> to vector<8x1280xbf16>
    %c0_6 = arith.constant 0 : index
    %c0_7 = arith.constant 0 : index
    %9 = vector.load %arg4[%c0_6, %c0_7] : memref<1280x1280xbf16, #tpu.memory_space<vmem>>, vector<1280x1280xbf16>
    %cst_8 = arith.constant dense<0.000000e+00> : vector<8x1280xf32>
    %10 = tpu.matmul %8, %9, %cst_8 {dimension_numbers = #tpu.dot_dimension_numbers<[1], [0], [0], [1], [0, 0, 1, 1], [], []>} : vector<8x1280xbf16>, vector<1280x1280xbf16>, vector<8x1280xf32> -> vector<8x1280xf32>
    %c0_9 = arith.constant 0 : index
    %c0_10 = arith.constant 0 : index
    %11 = vector.load %arg5[%c0_9, %c0_10] : memref<1x1280xf32, #tpu.memory_space<vmem>>, vector<1x1280xf32>
    %12 = vector.broadcast %11 : vector<1x1280xf32> to vector<8x1280xf32>
    %13 = arith.addf %10, %12 : vector<8x1280xf32>
    %cst_11 = arith.constant 0.000000e+00 : f32
    %14 = vector.broadcast %cst_11 : f32 to vector<8x1280xf32>
    %15 = arith.maximumf %13, %14 : vector<8x1280xf32>
    %16 = arith.truncf %15 : vector<8x1280xf32> to vector<8x1280xbf16>
    %c0_12 = arith.constant 0 : index
    %c0_13 = arith.constant 0 : index
    %17 = vector.load %arg6[%c0_12, %c0_13] : memref<1280x896xbf16, #tpu.memory_space<vmem>>, vector<1280x896xbf16>
    %cst_14 = arith.constant dense<0.000000e+00> : vector<8x896xf32>
    %18 = tpu.matmul %16, %17, %cst_14 {dimension_numbers = #tpu.dot_dimension_numbers<[1], [0], [0], [1], [0, 0, 1, 1], [], []>} : vector<8x1280xbf16>, vector<1280x896xbf16>, vector<8x896xf32> -> vector<8x896xf32>
    %c0_15 = arith.constant 0 : index
    %c0_16 = arith.constant 0 : index
    %19 = vector.load %arg7[%c0_15, %c0_16] : memref<1x896xf32, #tpu.memory_space<vmem>>, vector<1x896xf32>
    %20 = vector.broadcast %19 : vector<1x896xf32> to vector<8x896xf32>
    %21 = arith.addf %18, %20 : vector<8x896xf32>
    %cst_17 = arith.constant 0.000000e+00 : f32
    %22 = vector.broadcast %cst_17 : f32 to vector<8x896xf32>
    %23 = arith.subf %22, %21 : vector<8x896xf32>
    %24 = math.exp %23 : vector<8x896xf32>
    %cst_18 = arith.constant 1.000000e+00 : f32
    %25 = vector.broadcast %cst_18 : f32 to vector<8x896xf32>
    %26 = arith.addf %25, %24 : vector<8x896xf32>
    %27 = tpu.reciprocal %26 {approx = true} : vector<8x896xf32> -> vector<8x896xf32>
    %c0_19 = arith.constant 0 : index
    %c0_20 = arith.constant 0 : index
    %28 = vector.load %arg8[%c0_19, %c0_20] : memref<8x896xf32, #tpu.memory_space<vmem>>, vector<8x896xf32>
    tpu.vector_store %arg8[%c0_19, %c0_20], %27 {strides = array<i32>} : memref<8x896xf32, #tpu.memory_space<vmem>>, vector<8x896xf32>,
    return
  }
  func.func @transform_0(%arg0: i32) -> (i32, i32) {
    %c0_i32 = arith.constant 0 : i32
    %c0_i32_0 = arith.constant 0 : i32
    return %arg0, %c0_i32 : i32, i32
  }
  func.func @transform_1(%arg0: i32) -> (i32, i32) {
    %c0_i32 = arith.constant 0 : i32
    %c0_i32_0 = arith.constant 0 : i32
    %c0_i32_1 = arith.constant 0 : i32
    return %c0_i32, %c0_i32_0 : i32, i32
  }
  func.func @transform_2(%arg0: i32) -> (i32, i32) {
    %c0_i32 = arith.constant 0 : i32
    %c0_i32_0 = arith.constant 0 : i32
    %c0_i32_1 = arith.constant 0 : i32
    return %c0_i32, %c0_i32_0 : i32, i32
  }
  func.func @transform_3(%arg0: i32) -> (i32, i32) {
    %c0_i32 = arith.constant 0 : i32
    %c0_i32_0 = arith.constant 0 : i32
    %c0_i32_1 = arith.constant 0 : i32
    return %c0_i32, %c0_i32_0 : i32, i32
  }
  func.func @transform_4(%arg0: i32) -> (i32, i32) {
    %c0_i32 = arith.constant 0 : i32
    %c0_i32_0 = arith.constant 0 : i32
    %c0_i32_1 = arith.constant 0 : i32
    return %c0_i32, %c0_i32_0 : i32, i32
  }
  func.func @transform_5(%arg0: i32) -> (i32, i32) {
    %c0_i32 = arith.constant 0 : i32
    %c0_i32_0 = arith.constant 0 : i32
    %c0_i32_1 = arith.constant 0 : i32
    return %c0_i32, %c0_i32_0 : i32, i32
  }
  func.func @transform_6(%arg0: i32) -> (i32, i32) {
    %c0_i32 = arith.constant 0 : i32
    %c0_i32_0 = arith.constant 0 : i32
    %c0_i32_1 = arith.constant 0 : i32
    return %c0_i32, %c0_i32_0 : i32, i32
  }
  func.func @transform_7(%arg0: i32) -> (i32, i32) {
    %c0_i32 = arith.constant 0 : i32
    %c0_i32_0 = arith.constant 0 : i32
    return %arg0, %c0_i32 : i32, i32
  }
}

</mosaic_0001>

<llo_original>
// kernel: tpu_custom_call.1
$region0: #{tpu_custom_call.1}
  #allocation0 [shape = 'u32[]', space=smem, size = 0x4, offset = 0x4, fixed_abs, tag = 'smem constant byte address 0x4 - core index']
  #allocation1 [shape = 'u32[144,128]{1,0:T(1,128)}', space=vmem, size = 0x12000, scoped, tag = 'internal scratch']
  %s0 = inlined_call_operand.hbm [shape: bf16[8,128], index: 0, kind: input, shape index: {}]
  %s1 = inlined_call_operand.hbm [shape: bf16[128,1280], index: 1, kind: input, shape index: {}]
  %s2 = inlined_call_operand.hbm [shape: f32[1,1280], index: 2, kind: input, shape index: {}]
  %s3 = inlined_call_operand.hbm [shape: bf16[1280,1280], index: 3, kind: input, shape index: {}]
  %s4 = inlined_call_operand.hbm [shape: f32[1,1280], index: 4, kind: input, shape index: {}]
  %s5 = inlined_call_operand.hbm [shape: bf16[1280,896], index: 5, kind: input, shape index: {}]
  %s6 = inlined_call_operand.hbm [shape: f32[1,896], index: 6, kind: input, shape index: {}]
  %s7 = inlined_call_operand.hbm [shape: f32[8,896], index: 7, kind: output, shape index: {}]
  %s8 = sld [smem:[#allocation0]]
  $region66: #{tpu_custom_call.1} parent=0
    _
  %s10 = ssub.s32 1, %s8
  %s11 = scalar_select 0, %s10, %s8
  $region1: #{tpu_custom_call.1} parent=0
    #allocation2 [shape = 'u8[2048]{0}', space=vmem, size = 0x800, scoped, tag = 'input window, operand 0, single buffered']
    #allocation3 [shape = 's32[1]{0}', space=sflag, size = 0x4, scoped, tag = 'scoped memory for tpu_custom_call.1']
    #allocation4 [shape = 's32[1]{0}', space=sflag, size = 0x4, scoped, tag = 'scoped memory for tpu_custom_call.1']
    #allocation5 [shape = 'u8[327680]{0}', space=vmem, size = 0x50000, scoped, tag = 'input window, operand 1, single buffered']
    #allocation6 [shape = 's32[1]{0}', space=sflag, size = 0x4, scoped, tag = 'scoped memory for tpu_custom_call.1']
    #allocation7 [shape = 'u8[5120]{0}', space=vmem, size = 0x1400, scoped, tag = 'input window, operand 2, single buffered']
    #allocation8 [shape = 'u8[3276800]{0}', space=vmem, size = 0x320000, scoped, tag = 'input window, operand 3, single buffered']
    #allocation9 [shape = 's32[1]{0}', space=sflag, size = 0x4, scoped, tag = 'scoped memory for tpu_custom_call.1']
    #allocation10 [shape = 'u8[5120]{0}', space=vmem, size = 0x1400, scoped, tag = 'input window, operand 4, single buffered']
    #allocation11 [shape = 'u8[2293760]{0}', space=vmem, size = 0x230000, scoped, tag = 'input window, operand 5, single buffered']
    #allocation12 [shape = 's32[1]{0}', space=sflag, size = 0x4, scoped, tag = 'scoped memory for tpu_custom_call.1']
    #allocation13 [shape = 'u8[3584]{0}', space=vmem, size = 0x1000, scoped, tag = 'input window, operand 6, single buffered']
    #allocation14 [shape = 'u8[28672]{0}', space=vmem, size = 0x7000, scoped, tag = 'output window, operand 0, single buffered']
    %12 = vsyncpa [#allocation3], 0
    %13 = vsyncpa [#allocation6], 0
    %14 = vsyncpa [#allocation9], 0
    %15 = vsyncpa [#allocation12], 0
    %16 = vsyncpa [#allocation4], 0
    // Predicated region
    $region2: #{tpu_custom_call.1} parent=1 // pred_check
      _
    $region3: #{tpu_custom_call.1} parent=1 // pred_check_branch
      %18 = sbr.rel (0) target = $region5
    $region4: #{tpu_custom_call.1} parent=1 // pred_region
      %s20 = ssub.s32 64, 64
      %21 = vsyncadd [#allocation3], %s20
      %s23 = sshll.u32 [#allocation2], 4
      %s24 = int_to_ptr.vmem [resolvable:$true] %s23
      %26 = dma.hbm_to_vmem [thread:$0]  %s0, 64, %s24, [#allocation3]
    $region5: #{tpu_custom_call.1} parent=1 // pred_fallthru
      _
    // Predicated region
    $region6: #{tpu_custom_call.1} parent=1 // pred_check
      _
    $region7: #{tpu_custom_call.1} parent=1 // pred_check_branch
      %28 = sbr.rel (0) target = $region9
    $region8: #{tpu_custom_call.1} parent=1 // pred_region
      %s30 = ssub.s32 10240, 10240
      %31 = vsyncadd [#allocation6], %s30
      %s32 = sshll.u32 [#allocation5], 4
      %s33 = int_to_ptr.vmem [resolvable:$true] %s32
      %38 = dma.hbm_to_vmem [thread:$0]  %s1, 10240, %s33, [#allocation6], 640, 640, 40
    $region9: #{tpu_custom_call.1} parent=1 // pred_fallthru
      _
    // Predicated region
    $region10: #{tpu_custom_call.1} parent=1 // pred_check
      _
    $region11: #{tpu_custom_call.1} parent=1 // pred_check_branch
      %40 = sbr.rel (0) target = $region13
    $region12: #{tpu_custom_call.1} parent=1 // pred_region
      %s42 = ssub.s32 160, 160
      %43 = vsyncadd [#allocation6], %s42
      %s45 = sshll.u32 [#allocation7], 4
      %s46 = int_to_ptr.vmem [resolvable:$true] %s45
      %48 = dma.hbm_to_vmem [thread:$0]  %s2, 160, %s46, [#allocation6]
    $region13: #{tpu_custom_call.1} parent=1 // pred_fallthru
      _
    // Predicated region
    $region14: #{tpu_custom_call.1} parent=1 // pred_check
      _
    $region15: #{tpu_custom_call.1} parent=1 // pred_check_branch
      %50 = sbr.rel (0) target = $region17
    $region16: #{tpu_custom_call.1} parent=1 // pred_region
      %s52 = ssub.s32 102400, 102400
      %53 = vsyncadd [#allocation9], %s52
      %s54 = sshll.u32 [#allocation8], 4
      %s55 = int_to_ptr.vmem [resolvable:$true] %s54
      %60 = dma.hbm_to_vmem [thread:$0]  %s3, 102400, %s55, [#allocation9], 640, 640, 40
    $region17: #{tpu_custom_call.1} parent=1 // pred_fallthru
      _
    // Predicated region
    $region18: #{tpu_custom_call.1} parent=1 // pred_check
      _
    $region19: #{tpu_custom_call.1} parent=1 // pred_check_branch
      %62 = sbr.rel (0) target = $region21
    $region20: #{tpu_custom_call.1} parent=1 // pred_region
      %s64 = ssub.s32 160, 160
      %65 = vsyncadd [#allocation9], %s64
      %s67 = sshll.u32 [#allocation10], 4
      %s68 = int_to_ptr.vmem [resolvable:$true] %s67
      %70 = dma.hbm_to_vmem [thread:$0]  %s4, 160, %s68, [#allocation9]
    $region21: #{tpu_custom_call.1} parent=1 // pred_fallthru
      _
    // Predicated region
    $region22: #{tpu_custom_call.1} parent=1 // pred_check
      _
    $region23: #{tpu_custom_call.1} parent=1 // pred_check_branch
      %72 = sbr.rel (0) target = $region25
    $region24: #{tpu_custom_call.1} parent=1 // pred_region
      %s74 = ssub.s32 71680, 71680
      %75 = vsyncadd [#allocation12], %s74
      %s76 = sshll.u32 [#allocation11], 4
      %s77 = int_to_ptr.vmem [resolvable:$true] %s76
      %82 = dma.hbm_to_vmem [thread:$0]  %s5, 71680, %s77, [#allocation12], 448, 448, 28
    $region25: #{tpu_custom_call.1} parent=1 // pred_fallthru
      _
    // Predicated region
    $region26: #{tpu_custom_call.1} parent=1 // pred_check
      _
    $region27: #{tpu_custom_call.1} parent=1 // pred_check_branch
      %84 = sbr.rel (0) target = $region29
    $region28: #{tpu_custom_call.1} parent=1 // pred_region
      %s86 = ssub.s32 112, 112
      %87 = vsyncadd [#allocation12], %s86
      %s89 = sshll.u32 [#allocation13], 4
      %s90 = int_to_ptr.vmem [resolvable:$true] %s89
      %92 = dma.hbm_to_vmem [thread:$0]  %s6, 112, %s90, [#allocation12]
    $region29: #{tpu_custom_call.1} parent=1 // pred_fallthru
      _
    // Predicated region
    $region30: #{tpu_custom_call.1} parent=1 // pred_check
      _
    $region31: #{tpu_custom_call.1} parent=1 // pred_check_branch
      %94 = sbr.rel (0) target = $region33
    $region32: #{tpu_custom_call.1} parent=1 // pred_region
      %95 = dma.done [#allocation3], 64
    $region33: #{tpu_custom_call.1} parent=1 // pred_fallthru
      _
    // Predicated region
    $region34: #{tpu_custom_call.1} parent=1 // pred_check
      _
    $region35: #{tpu_custom_call.1} parent=1 // pred_check_branch
      %97 = sbr.rel (0) target = $region37
    $region36: #{tpu_custom_call.1} parent=1 // pred_region
      %98 = dma.done [#allocation6], 10240
    $region37: #{tpu_custom_call.1} parent=1 // pred_fallthru
      _
    // Predicated region
    $region38: #{tpu_custom_call.1} parent=1 // pred_check
      _
    $region39: #{tpu_custom_call.1} parent=1 // pred_check_branch
      %100 = sbr.rel (0) target = $region41
    $region40: #{tpu_custom_call.1} parent=1 // pred_region
      %101 = dma.done [#allocation6], 160
    $region41: #{tpu_custom_call.1} parent=1 // pred_fallthru
      _
    // Predicated region
    $region42: #{tpu_custom_call.1} parent=1 // pred_check
      _
    $region43: #{tpu_custom_call.1} parent=1 // pred_check_branch
      %103 = sbr.rel (0) target = $region45
    $region44: #{tpu_custom_call.1} parent=1 // pred_region
      %104 = dma.done [#allocation9], 102400
    $region45: #{tpu_custom_call.1} parent=1 // pred_fallthru
      _
    // Predicated region
    $region46: #{tpu_custom_call.1} parent=1 // pred_check
      _
    $region47: #{tpu_custom_call.1} parent=1 // pred_check_branch
      %106 = sbr.rel (0) target = $region49
    $region48: #{tpu_custom_call.1} parent=1 // pred_region
      %107 = dma.done [#allocation9], 160
    $region49: #{tpu_custom_call.1} parent=1 // pred_fallthru
      _
    // Predicated region
    $region50: #{tpu_custom_call.1} parent=1 // pred_check
      _
    $region51: #{tpu_custom_call.1} parent=1 // pred_check_branch
      %109 = sbr.rel (0) target = $region53
    $region52: #{tpu_custom_call.1} parent=1 // pred_region
      %110 = dma.done [#allocation12], 71680
    $region53: #{tpu_custom_call.1} parent=1 // pred_fallthru
      _
    // Predicated region
    $region54: #{tpu_custom_call.1} parent=1 // pred_check
      _
    $region55: #{tpu_custom_call.1} parent=1 // pred_check_branch
      %112 = sbr.rel (0) target = $region57
    $region56: #{tpu_custom_call.1} parent=1 // pred_region
      %113 = dma.done [#allocation12], 112
    $region57: #{tpu_custom_call.1} parent=1 // pred_fallthru
      _
    %v115 = vld [vmem:[#allocation2] sm:$0xf]
    %v116 = vld [vmem:[#allocation5] sm:$0xff]
    %v117 = vld [vmem:[#allocation5 + $0x8] sm:$0xff]
    %v118 = vld [vmem:[#allocation5 + $0x10] sm:$0xff]
    %v119 = vld [vmem:[#allocation5 + $0x18] sm:$0xff]
    %v120 = vld [vmem:[#allocation5 + $0x20] sm:$0xff]
    %v121 = vld [vmem:[#allocation5 + $0x28] sm:$0xff]
    %v122 = vld [vmem:[#allocation5 + $0x30] sm:$0xff]
    %v123 = vld [vmem:[#allocation5 + $0x38] sm:$0xff]
    %v124 = vld [vmem:[#allocation5 + $0x40] sm:$0xff]
    %v125 = vld [vmem:[#allocation5 + $0x48] sm:$0xff]
    %v126 = vld [vmem:[#allocation5 + $0x50] sm:$0xff]
    %v127 = vld [vmem:[#allocation5 + $0x58] sm:$0xff]
    %v128 = vld [vmem:[#allocation5 + $0x60] sm:$0xff]
    %v129 = vld [vmem:[#allocation5 + $0x68] sm:$0xff]
    %v130 = vld [vmem:[#allocation5 + $0x70] sm:$0xff]
    %v131 = vld [vmem:[#allocation5 + $0x78] sm:$0xff]
    %v132 = vld [vmem:[#allocation5 + $0x80] sm:$0xff]
    %v133 = vld [vmem:[#allocation5 + $0x88] sm:$0xff]
    %v134 = vld [vmem:[#allocation5 + $0x90] sm:$0xff]
    %v135 = vld [vmem:[#allocation5 + $0x98] sm:$0xff]
    %v136 = vld [vmem:[#allocation5 + $0xa0] sm:$0xff]
    %v137 = vld [vmem:[#allocation5 + $0xa8] sm:$0xff]
    %v138 = vld [vmem:[#allocation5 + $0xb0] sm:$0xff]
    %v139 = vld [vmem:[#allocation5 + $0xb8] sm:$0xff]
    %v140 = vld [vmem:[#allocation5 + $0xc0] sm:$0xff]
    %v141 = vld [vmem:[#allocation5 + $0xc8] sm:$0xff]
    %v142 = vld [vmem:[#allocation5 + $0xd0] sm:$0xff]
    %v143 = vld [vmem:[#allocation5 + $0xd8] sm:$0xff]
    %v144 = vld [vmem:[#allocation5 + $0xe0] sm:$0xff]
    %v145 = vld [vmem:[#allocation5 + $0xe8] sm:$0xff]
    %v146 = vld [vmem:[#allocation5 + $0xf0] sm:$0xff]
    %v147 = vld [vmem:[#allocation5 + $0xf8] sm:$0xff]
    %v148 = vld [vmem:[#allocation5 + $0x100] sm:$0xff]
    %v149 = vld [vmem:[#allocation5 + $0x108] sm:$0xff]
    %v150 = vld [vmem:[#allocation5 + $0x110] sm:$0xff]
    %v151 = vld [vmem:[#allocation5 + $0x118] sm:$0xff]
    %v152 = vld [vmem:[#allocation5 + $0x120] sm:$0xff]
    %v153 = vld [vmem:[#allocation5 + $0x128] sm:$0xff]
    %v154 = vld [vmem:[#allocation5 + $0x130] sm:$0xff]
    %v155 = vld [vmem:[#allocation5 + $0x138] sm:$0xff]
    %v156 = vld [vmem:[#allocation5 + $0x140] sm:$0xff]
    %v157 = vld [vmem:[#allocation5 + $0x148] sm:$0xff]
    %v158 = vld [vmem:[#allocation5 + $0x150] sm:$0xff]
    %v159 = vld [vmem:[#allocation5 + $0x158] sm:$0xff]
    %v160 = vld [vmem:[#allocation5 + $0x160] sm:$0xff]
    %v161 = vld [vmem:[#allocation5 + $0x168] sm:$0xff]
    %v162 = vld [vmem:[#allocation5 + $0x170] sm:$0xff]
    %v163 = vld [vmem:[#allocation5 + $0x178] sm:$0xff]
    %v164 = vld [vmem:[#allocation5 + $0x180] sm:$0xff]
    %v165 = vld [vmem:[#allocation5 + $0x188] sm:$0xff]
    %v166 = vld [vmem:[#allocation5 + $0x190] sm:$0xff]
    %v167 = vld [vmem:[#allocation5 + $0x198] sm:$0xff]
    %v168 = vld [vmem:[#allocation5 + $0x1a0] sm:$0xff]
    %v169 = vld [vmem:[#allocation5 + $0x1a8] sm:$0xff]
    %v170 = vld [vmem:[#allocation5 + $0x1b0] sm:$0xff]
    %v171 = vld [vmem:[#allocation5 + $0x1b8] sm:$0xff]
    %v172 = vld [vmem:[#allocation5 + $0x1c0] sm:$0xff]
    %v173 = vld [vmem:[#allocation5 + $0x1c8] sm:$0xff]
    %v174 = vld [vmem:[#allocation5 + $0x1d0] sm:$0xff]
    %v175 = vld [vmem:[#allocation5 + $0x1d8] sm:$0xff]
    %v176 = vld [vmem:[#allocation5 + $0x1e0] sm:$0xff]
    %v177 = vld [vmem:[#allocation5 + $0x1e8] sm:$0xff]
    %v178 = vld [vmem:[#allocation5 + $0x1f0] sm:$0xff]
    %v179 = vld [vmem:[#allocation5 + $0x1f8] sm:$0xff]
    %v180 = vld [vmem:[#allocation5 + $0x200] sm:$0xff]
    %v181 = vld [vmem:[#allocation5 + $0x208] sm:$0xff]
    %v182 = vld [vmem:[#allocation5 + $0x210] sm:$0xff]
    %v183 = vld [vmem:[#allocation5 + $0x218] sm:$0xff]
    %v184 = vld [vmem:[#allocation5 + $0x220] sm:$0xff]
    %v185 = vld [vmem:[#allocation5 + $0x228] sm:$0xff]
    %v186 = vld [vmem:[#allocation5 + $0x230] sm:$0xff]
    %v187 = vld [vmem:[#allocation5 + $0x238] sm:$0xff]
    %v188 = vld [vmem:[#allocation5 + $0x240] sm:$0xff]
    %v189 = vld [vmem:[#allocation5 + $0x248] sm:$0xff]
    %v190 = vld [vmem:[#allocation5 + $0x250] sm:$0xff]
    %v191 = vld [vmem:[#allocation5 + $0x258] sm:$0xff]
    %v192 = vld [vmem:[#allocation5 + $0x260] sm:$0xff]
    %v193 = vld [vmem:[#allocation5 + $0x268] sm:$0xff]
    %v194 = vld [vmem:[#allocation5 + $0x270] sm:$0xff]
    %v195 = vld [vmem:[#allocation5 + $0x278] sm:$0xff]
    %v196 = vld [vmem:[#allocation7] sm:$0xff]
    %v197 = vld [vmem:[#allocation7 + $0x8] sm:$0x3]
    %v200 = vlaneseq
    %v201 = vshrl.u32 %v200, 7
    %v202 = vsub.s32 0, %v201
    %v203 = vrot.slane %v196, %v202
    %v204 = vlaneseq
    %v205 = vshrl.u32 %v204, 7
    %v206 = vsub.s32 1, %v205
    %v207 = vrot.slane %v196, %v206
    %v208 = vlaneseq
    %v209 = vshrl.u32 %v208, 7
    %v210 = vsub.s32 2, %v209
    %v211 = vrot.slane %v196, %v210
    %v212 = vlaneseq
    %v213 = vshrl.u32 %v212, 7
    %v214 = vsub.s32 3, %v213
    %v215 = vrot.slane %v196, %v214
    %v216 = vlaneseq
    %v217 = vshrl.u32 %v216, 7
    %v218 = vsub.s32 4, %v217
    %v219 = vrot.slane %v196, %v218
    %v220 = vlaneseq
    %v221 = vshrl.u32 %v220, 7
    %v222 = vsub.s32 5, %v221
    %v223 = vrot.slane %v196, %v222
    %v224 = vlaneseq
    %v225 = vshrl.u32 %v224, 7
    %v226 = vsub.s32 6, %v225
    %v227 = vrot.slane %v196, %v226
    %v228 = vlaneseq
    %v229 = vshrl.u32 %v228, 7
    %v230 = vsub.s32 7, %v229
    %v231 = vrot.slane %v196, %v230
    %v232 = vlaneseq
    %v233 = vshrl.u32 %v232, 7
    %v234 = vsub.s32 0, %v233
    %v235 = vrot.slane %v197, %v234
    %v236 = vlaneseq
    %v237 = vshrl.u32 %v236, 7
    %v238 = vsub.s32 1, %v237
    %v239 = vrot.slane %v197, %v238
    %v330 = vunpack.c.l.b16 %v116
    %v331 = vunpack.c.h.b16 %v116
    %v332 = vunpack.c.l.b16 %v117
    %v333 = vunpack.c.h.b16 %v117
    %v334 = vunpack.c.l.b16 %v118
    %v335 = vunpack.c.h.b16 %v118
    %v336 = vunpack.c.l.b16 %v119
    %v337 = vunpack.c.h.b16 %v119
    %v338 = vunpack.c.l.b16 %v120
    %v339 = vunpack.c.h.b16 %v120
    %v340 = vunpack.c.l.b16 %v121
    %v341 = vunpack.c.h.b16 %v121
    %v342 = vunpack.c.l.b16 %v122
    %v343 = vunpack.c.h.b16 %v122
    %v344 = vunpack.c.l.b16 %v123
    %v345 = vunpack.c.h.b16 %v123
    %v346 = vunpack.c.l.b16 %v124
    %v347 = vunpack.c.h.b16 %v124
    %v348 = vunpack.c.l.b16 %v125
    %v349 = vunpack.c.h.b16 %v125
    %v350 = vunpack.c.l.b16 %v126
    %v351 = vunpack.c.h.b16 %v126
    %v352 = vunpack.c.l.b16 %v127
    %v353 = vunpack.c.h.b16 %v127
    %v354 = vunpack.c.l.b16 %v128
    %v355 = vunpack.c.h.b16 %v128
    %v356 = vunpack.c.l.b16 %v129
    %v357 = vunpack.c.h.b16 %v129
    %v358 = vunpack.c.l.b16 %v130
    %v359 = vunpack.c.h.b16 %v130
    %v360 = vunpack.c.l.b16 %v131
    %v361 = vunpack.c.h.b16 %v131
    %v362 = vunpack.c.l.b16 %v132
    %v363 = vunpack.c.h.b16 %v132
    %v364 = vunpack.c.l.b16 %v133
    %v365 = vunpack.c.h.b16 %v133
    %v366 = vunpack.c.l.b16 %v134
    %v367 = vunpack.c.h.b16 %v134
    %v368 = vunpack.c.l.b16 %v135
    %v369 = vunpack.c.h.b16 %v135
    %v370 = vunpack.c.l.b16 %v136
    %v371 = vunpack.c.h.b16 %v136
    %v372 = vunpack.c.l.b16 %v137
    %v373 = vunpack.c.h.b16 %v137
    %v374 = vunpack.c.l.b16 %v138
    %v375 = vunpack.c.h.b16 %v138
    %v376 = vunpack.c.l.b16 %v139
    %v377 = vunpack.c.h.b16 %v139
    %v378 = vunpack.c.l.b16 %v140
    %v379 = vunpack.c.h.b16 %v140
    %v380 = vunpack.c.l.b16 %v141
    %v381 = vunpack.c.h.b16 %v141
    %v382 = vunpack.c.l.b16 %v142
    %v383 = vunpack.c.h.b16 %v142
    %v384 = vunpack.c.l.b16 %v143
    %v385 = vunpack.c.h.b16 %v143
    %v386 = vunpack.c.l.b16 %v144
    %v387 = vunpack.c.h.b16 %v144
    %v388 = vunpack.c.l.b16 %v145
    %v389 = vunpack.c.h.b16 %v145
    %v390 = vunpack.c.l.b16 %v146
    %v391 = vunpack.c.h.b16 %v146
    %v392 = vunpack.c.l.b16 %v147
    %v393 = vunpack.c.h.b16 %v147
    %v394 = vunpack.c.l.b16 %v148
    %v395 = vunpack.c.h.b16 %v148
    %v396 = vunpack.c.l.b16 %v149
    %v397 = vunpack.c.h.b16 %v149
    %v398 = vunpack.c.l.b16 %v150
    %v399 = vunpack.c.h.b16 %v150
    %v400 = vunpack.c.l.b16 %v151
    %v401 = vunpack.c.h.b16 %v151
    %v402 = vunpack.c.l.b16 %v152
    %v403 = vunpack.c.h.b16 %v152
    %v404 = vunpack.c.l.b16 %v153
    %v405 = vunpack.c.h.b16 %v153
    %v406 = vunpack.c.l.b16 %v154
    %v407 = vunpack.c.h.b16 %v154
    %v408 = vunpack.c.l.b16 %v155
    %v409 = vunpack.c.h.b16 %v155
    %v410 = vunpack.c.l.b16 %v156
    %v411 = vunpack.c.h.b16 %v156
    %v412 = vunpack.c.l.b16 %v157
    %v413 = vunpack.c.h.b16 %v157
    %v414 = vunpack.c.l.b16 %v158
    %v415 = vunpack.c.h.b16 %v158
    %v416 = vunpack.c.l.b16 %v159
    %v417 = vunpack.c.h.b16 %v159
    %v418 = vunpack.c.l.b16 %v160
    %v419 = vunpack.c.h.b16 %v160
    %v420 = vunpack.c.l.b16 %v161
    %v421 = vunpack.c.h.b16 %v161
    %v422 = vunpack.c.l.b16 %v162
    %v423 = vunpack.c.h.b16 %v162
    %v424 = vunpack.c.l.b16 %v163
    %v425 = vunpack.c.h.b16 %v163
    %v426 = vunpack.c.l.b16 %v164
    %v427 = vunpack.c.h.b16 %v164
    %v428 = vunpack.c.l.b16 %v165
    %v429 = vunpack.c.h.b16 %v165
    %v430 = vunpack.c.l.b16 %v166
    %v431 = vunpack.c.h.b16 %v166
    %v432 = vunpack.c.l.b16 %v167
    %v433 = vunpack.c.h.b16 %v167
    %v434 = vunpack.c.l.b16 %v168
    %v435 = vunpack.c.h.b16 %v168
    %v436 = vunpack.c.l.b16 %v169
    %v437 = vunpack.c.h.b16 %v169
    %v438 = vunpack.c.l.b16 %v170
    %v439 = vunpack.c.h.b16 %v170
    %v440 = vunpack.c.l.b16 %v171
    %v441 = vunpack.c.h.b16 %v171
    %v442 = vunpack.c.l.b16 %v172
    %v443 = vunpack.c.h.b16 %v172
    %v444 = vunpack.c.l.b16 %v173
    %v445 = vunpack.c.h.b16 %v173
    %v446 = vunpack.c.l.b16 %v174
    %v447 = vunpack.c.h.b16 %v174
    %v448 = vunpack.c.l.b16 %v175
    %v449 = vunpack.c.h.b16 %v175
    %v450 = vunpack.c.l.b16 %v176
    %v451 = vunpack.c.h.b16 %v176
    %v452 = vunpack.c.l.b16 %v177
    %v453 = vunpack.c.h.b16 %v177
    %v454 = vunpack.c.l.b16 %v178
    %v455 = vunpack.c.h.b16 %v178
    %v456 = vunpack.c.l.b16 %v179
    %v457 = vunpack.c.h.b16 %v179
    %v458 = vunpack.c.l.b16 %v180
    %v459 = vunpack.c.h.b16 %v180
    %v460 = vunpack.c.l.b16 %v181
    %v461 = vunpack.c.h.b16 %v181
    %v462 = vunpack.c.l.b16 %v182
    %v463 = vunpack.c.h.b16 %v182
    %v464 = vunpack.c.l.b16 %v183
    %v465 = vunpack.c.h.b16 %v183
    %v466 = vunpack.c.l.b16 %v184
    %v467 = vunpack.c.h.b16 %v184
    %v468 = vunpack.c.l.b16 %v185
    %v469 = vunpack.c.h.b16 %v185
    %v470 = vunpack.c.l.b16 %v186
    %v471 = vunpack.c.h.b16 %v186
    %v472 = vunpack.c.l.b16 %v187
    %v473 = vunpack.c.h.b16 %v187
    %v474 = vunpack.c.l.b16 %v188
    %v475 = vunpack.c.h.b16 %v188
    %v476 = vunpack.c.l.b16 %v189
    %v477 = vunpack.c.h.b16 %v189
    %v478 = vunpack.c.l.b16 %v190
    %v479 = vunpack.c.h.b16 %v190
    %v480 = vunpack.c.l.b16 %v191
    %v481 = vunpack.c.h.b16 %v191
    %v482 = vunpack.c.l.b16 %v192
    %v483 = vunpack.c.h.b16 %v192
    %v484 = vunpack.c.l.b16 %v193
    %v485 = vunpack.c.h.b16 %v193
    %v486 = vunpack.c.l.b16 %v194
    %v487 = vunpack.c.h.b16 %v194
    %v488 = vunpack.c.l.b16 %v195
    %v489 = vunpack.c.h.b16 %v195
    %v490 = vpack.c.b16 %v340, %v330
    %v491 = vpack.c.b16 %v341, %v331
    %v492 = vpack.c.b16 %v342, %v332
    %v493 = vpack.c.b16 %v343, %v333
    %v494 = vpack.c.b16 %v344, %v334
    %v495 = vpack.c.b16 %v345, %v335
    %v496 = vpack.c.b16 %v346, %v336
    %v497 = vpack.c.b16 %v347, %v337
    %v498 = vpack.c.b16 %v348, %v338
    %v499 = vpack.c.b16 %v349, %v339
    %v500 = vpack.c.b16 %v360, %v350
    %v501 = vpack.c.b16 %v361, %v351
    %v502 = vpack.c.b16 %v362, %v352
    %v503 = vpack.c.b16 %v363, %v353
    %v504 = vpack.c.b16 %v364, %v354
    %v505 = vpack.c.b16 %v365, %v355
    %v506 = vpack.c.b16 %v366, %v356
    %v507 = vpack.c.b16 %v367, %v357
    %v508 = vpack.c.b16 %v368, %v358
    %v509 = vpack.c.b16 %v369, %v359
    %v510 = vpack.c.b16 %v380, %v370
    %v511 = vpack.c.b16 %v381, %v371
    %v512 = vpack.c.b16 %v382, %v372
    %v513 = vpack.c.b16 %v383, %v373
    %v514 = vpack.c.b16 %v384, %v374
    %v515 = vpack.c.b16 %v385, %v375
    %v516 = vpack.c.b16 %v386, %v376
    %v517 = vpack.c.b16 %v387, %v377
    %v518 = vpack.c.b16 %v388, %v378
    %v519 = vpack.c.b16 %v389, %v379
    %v520 = vpack.c.b16 %v400, %v390
    %v521 = vpack.c.b16 %v401, %v391
    %v522 = vpack.c.b16 %v402, %v392
    %v523 = vpack.c.b16 %v403, %v393
    %v524 = vpack.c.b16 %v404, %v394
    %v525 = vpack.c.b16 %v405, %v395
    %v526 = vpack.c.b16 %v406, %v396
    %v527 = vpack.c.b16 %v407, %v397
    %v528 = vpack.c.b16 %v408, %v398
    %v529 = vpack.c.b16 %v409, %v399
    %v530 = vpack.c.b16 %v420, %v410
    %v531 = vpack.c.b16 %v421, %v411
    %v532 = vpack.c.b16 %v422, %v412
    %v533 = vpack.c.b16 %v423, %v413
    %v534 = vpack.c.b16 %v424, %v414
    %v535 = vpack.c.b16 %v425, %v415
    %v536 = vpack.c.b16 %v426, %v416
    %v537 = vpack.c.b16 %v427, %v417
    %v538 = vpack.c.b16 %v428, %v418
    %v539 = vpack.c.b16 %v429, %v419
    %v540 = vpack.c.b16 %v440, %v430
    %v541 = vpack.c.b16 %v441, %v431
    %v542 = vpack.c.b16 %v442, %v432
    %v543 = vpack.c.b16 %v443, %v433
    %v544 = vpack.c.b16 %v444, %v434
    %v545 = vpack.c.b16 %v445, %v435
    %v546 = vpack.c.b16 %v446, %v436
    %v547 = vpack.c.b16 %v447, %v437
    %v548 = vpack.c.b16 %v448, %v438
    %v549 = vpack.c.b16 %v449, %v439
    %v550 = vpack.c.b16 %v460, %v450
    %v551 = vpack.c.b16 %v461, %v451
    %v552 = vpack.c.b16 %v462, %v452
    %v553 = vpack.c.b16 %v463, %v453
    %v554 = vpack.c.b16 %v464, %v454
    %v555 = vpack.c.b16 %v465, %v455
    %v556 = vpack.c.b16 %v466, %v456
    %v557 = vpack.c.b16 %v467, %v457
    %v558 = vpack.c.b16 %v468, %v458
    %v559 = vpack.c.b16 %v469, %v459
    %v560 = vpack.c.b16 %v480, %v470
    %v561 = vpack.c.b16 %v481, %v471
    %v562 = vpack.c.b16 %v482, %v472
    %v563 = vpack.c.b16 %v483, %v473
    %v564 = vpack.c.b16 %v484, %v474
    %v565 = vpack.c.b16 %v485, %v475
    %v566 = vpack.c.b16 %v486, %v476
    %v567 = vpack.c.b16 %v487, %v477
    %v568 = vpack.c.b16 %v488, %v478
    %v569 = vpack.c.b16 %v489, %v479
    %650 = vmatprep.subr.bf16.mxu0 %v491
    %651 = vmatpush1.bf16.msra.mxu0 %v490
    %652 = vmatprep.subr.bf16.mxu0 %v501
    %653 = vmatpush1.bf16.msra.mxu0 %v500
    %654 = vmatprep.subr.bf16.mxu0 %v511
    %655 = vmatpush1.bf16.msra.mxu0 %v510
    %656 = vmatprep.subr.bf16.mxu0 %v521
    %657 = vmatpush1.bf16.msra.mxu0 %v520
    %658 = vmatprep.subr.bf16.mxu0 %v531
    %659 = vmatpush1.bf16.msra.mxu0 %v530
    %660 = vmatprep.subr.bf16.mxu0 %v541
    %661 = vmatpush1.bf16.msra.mxu0 %v540
    %662 = vmatprep.subr.bf16.mxu0 %v551
    %663 = vmatpush1.bf16.msra.mxu0 %v550
    %664 = vmatprep.subr.bf16.mxu0 %v561
    %665 = vmatpush1.bf16.msra.mxu0 %v560
    %666 = vmatprep.subr.bf16.mxu0 0
    %667 = vmatpush1.bf16.msra.mxu0 0
    %668 = vmatprep.subr.bf16.mxu0 0
    %669 = vmatpush1.bf16.msra.mxu0 0
    %670 = vmatprep.subr.bf16.mxu0 0
    %671 = vmatpush1.bf16.msra.mxu0 0
    %672 = vmatprep.subr.bf16.mxu0 0
    %673 = vmatpush1.bf16.msra.mxu0 0
    %674 = vmatprep.subr.bf16.mxu0 0
    %675 = vmatpush1.bf16.msra.mxu0 0
    %676 = vmatprep.subr.bf16.mxu0 0
    %677 = vmatpush1.bf16.msra.mxu0 0
    %678 = vmatprep.subr.bf16.mxu0 0
    %679 = vmatpush1.bf16.msra.mxu0 0
    %680 = vmatprep.subr.bf16.mxu0 0
    %681 = vmatpush1.bf16.msra.mxu0 0
    %682 = vmatprep.mubr.bf16.mxu0 0
    %683 = vmatmul.mubr.bf16.gmra.mrb[0].mxu0 %v115
    %v684 = vpop.f32.mrb[0].mxu0
    %v685 = vadd.f32 %v203, %v684
    %v686 = vpop.f32.mrb[0].mxu0
    %v687 = vadd.f32 %v207, %v686
    %v688 = vpop.f32.mrb[0].mxu0
    %v689 = vpop.f32.mrb[0].mxu0
    %690 = vdwg.mxu0
    %691 = vmatprep.subr.bf16.mxu0 %v493
    %692 = vmatpush1.bf16.msra.mxu0 %v492
    %693 = vmatprep.subr.bf16.mxu0 %v503
    %694 = vmatpush1.bf16.msra.mxu0 %v502
    %695 = vmatprep.subr.bf16.mxu0 %v513
    %696 = vmatpush1.bf16.msra.mxu0 %v512
    %697 = vmatprep.subr.bf16.mxu0 %v523
    %698 = vmatpush1.bf16.msra.mxu0 %v522
    %699 = vmatprep.subr.bf16.mxu0 %v533
    %700 = vmatpush1.bf16.msra.mxu0 %v532
    %701 = vmatprep.subr.bf16.mxu0 %v543
    %702 = vmatpush1.bf16.msra.mxu0 %v542
    %703 = vmatprep.subr.bf16.mxu0 %v553
    %704 = vmatpush1.bf16.msra.mxu0 %v552
    %705 = vmatprep.subr.bf16.mxu0 %v563
    %706 = vmatpush1.bf16.msra.mxu0 %v562
    %707 = vmatprep.subr.bf16.mxu0 0
    %708 = vmatpush1.bf16.msra.mxu0 0
    %709 = vmatprep.subr.bf16.mxu0 0
    %710 = vmatpush1.bf16.msra.mxu0 0
    %711 = vmatprep.subr.bf16.mxu0 0
    %712 = vmatpush1.bf16.msra.mxu0 0
    %713 = vmatprep.subr.bf16.mxu0 0
    %714 = vmatpush1.bf16.msra.mxu0 0
    %715 = vmatprep.subr.bf16.mxu0 0
    %716 = vmatpush1.bf16.msra.mxu0 0
    %717 = vmatprep.subr.bf16.mxu0 0
    %718 = vmatpush1.bf16.msra.mxu0 0
    %719 = vmatprep.subr.bf16.mxu0 0
    %720 = vmatpush1.bf16.msra.mxu0 0
    %721 = vmatprep.subr.bf16.mxu0 0
    %722 = vmatpush1.bf16.msra.mxu0 0
    %723 = vmatprep.mubr.bf16.mxu0 0
    %724 = vmatmul.mubr.bf16.gmra.mrb[0].mxu0 %v115
    %v725 = vpop.f32.mrb[0].mxu0
    %v726 = vadd.f32 %v211, %v725
    %v727 = vpop.f32.mrb[0].mxu0
    %v728 = vadd.f32 %v215, %v727
    %v729 = vpop.f32.mrb[0].mxu0
    %v730 = vpop.f32.mrb[0].mxu0
    %731 = vdwg.mxu0
    %732 = vmatprep.subr.bf16.mxu0 %v495
    %733 = vmatpush1.bf16.msra.mxu0 %v494
    %734 = vmatprep.subr.bf16.mxu0 %v505
    %735 = vmatpush1.bf16.msra.mxu0 %v504
    %736 = vmatprep.subr.bf16.mxu0 %v515
    %737 = vmatpush1.bf16.msra.mxu0 %v514
    %738 = vmatprep.subr.bf16.mxu0 %v525
    %739 = vmatpush1.bf16.msra.mxu0 %v524
    %740 = vmatprep.subr.bf16.mxu0 %v535
    %741 = vmatpush1.bf16.msra.mxu0 %v534
    %742 = vmatprep.subr.bf16.mxu0 %v545
    %743 = vmatpush1.bf16.msra.mxu0 %v544
    %744 = vmatprep.subr.bf16.mxu0 %v555
    %745 = vmatpush1.bf16.msra.mxu0 %v554
    %746 = vmatprep.subr.bf16.mxu0 %v565
    %747 = vmatpush1.bf16.msra.mxu0 %v564
    %748 = vmatprep.subr.bf16.mxu0 0
    %749 = vmatpush1.bf16.msra.mxu0 0
    %750 = vmatprep.subr.bf16.mxu0 0
    %751 = vmatpush1.bf16.msra.mxu0 0
    %752 = vmatprep.subr.bf16.mxu0 0
    %753 = vmatpush1.bf16.msra.mxu0 0
    %754 = vmatprep.subr.bf16.mxu0 0
    %755 = vmatpush1.bf16.msra.mxu0 0
    %756 = vmatprep.subr.bf16.mxu0 0
    %757 = vmatpush1.bf16.msra.mxu0 0
    %758 = vmatprep.subr.bf16.mxu0 0
    %759 = vmatpush1.bf16.msra.mxu0 0
    %760 = vmatprep.subr.bf16.mxu0 0
    %761 = vmatpush1.bf16.msra.mxu0 0
    %762 = vmatprep.subr.bf16.mxu0 0
    %763 = vmatpush1.bf16.msra.mxu0 0
    %764 = vmatprep.mubr.bf16.mxu0 0
    %765 = vmatmul.mubr.bf16.gmra.mrb[0].mxu0 %v115
    %v766 = vpop.f32.mrb[0].mxu0
    %v767 = vadd.f32 %v219, %v766
    %v768 = vpop.f32.mrb[0].mxu0
    %v769 = vadd.f32 %v223, %v768
    %v770 = vpop.f32.mrb[0].mxu0
    %v771 = vpop.f32.mrb[0].mxu0
    %772 = vdwg.mxu0
    %773 = vmatprep.subr.bf16.mxu0 %v497
    %774 = vmatpush1.bf16.msra.mxu0 %v496
    %775 = vmatprep.subr.bf16.mxu0 %v507
    %776 = vmatpush1.bf16.msra.mxu0 %v506
    %777 = vmatprep.subr.bf16.mxu0 %v517
    %778 = vmatpush1.bf16.msra.mxu0 %v516
    %779 = vmatprep.subr.bf16.mxu0 %v527
    %780 = vmatpush1.bf16.msra.mxu0 %v526
    %781 = vmatprep.subr.bf16.mxu0 %v537
    %782 = vmatpush1.bf16.msra.mxu0 %v536
    %783 = vmatprep.subr.bf16.mxu0 %v547
    %784 = vmatpush1.bf16.msra.mxu0 %v546
    %785 = vmatprep.subr.bf16.mxu0 %v557
    %786 = vmatpush1.bf16.msra.mxu0 %v556
    %787 = vmatprep.subr.bf16.mxu0 %v567
    %788 = vmatpush1.bf16.msra.mxu0 %v566
    %789 = vmatprep.subr.bf16.mxu0 0
    %790 = vmatpush1.bf16.msra.mxu0 0
    %791 = vmatprep.subr.bf16.mxu0 0
    %792 = vmatpush1.bf16.msra.mxu0 0
    %793 = vmatprep.subr.bf16.mxu0 0
    %794 = vmatpush1.bf16.msra.mxu0 0
    %795 = vmatprep.subr.bf16.mxu0 0
    %796 = vmatpush1.bf16.msra.mxu0 0
    %797 = vmatprep.subr.bf16.mxu0 0
    %798 = vmatpush1.bf16.msra.mxu0 0
    %799 = vmatprep.subr.bf16.mxu0 0
    %800 = vmatpush1.bf16.msra.mxu0 0
    %801 = vmatprep.subr.bf16.mxu0 0
    %802 = vmatpush1.bf16.msra.mxu0 0
    %803 = vmatprep.subr.bf16.mxu0 0
    %804 = vmatpush1.bf16.msra.mxu0 0
    %805 = vmatprep.mubr.bf16.mxu0 0
    %806 = vmatmul.mubr.bf16.gmra.mrb[0].mxu0 %v115
    %v807 = vpop.f32.mrb[0].mxu0
    %v808 = vadd.f32 %v227, %v807
    %v809 = vpop.f32.mrb[0].mxu0
    %v810 = vadd.f32 %v231, %v809
    %v811 = vpop.f32.mrb[0].mxu0
    %v812 = vpop.f32.mrb[0].mxu0
    %813 = vdwg.mxu0
    %814 = vmatprep.subr.bf16.mxu0 %v499
    %815 = vmatpush1.bf16.msra.mxu0 %v498
    %816 = vmatprep.subr.bf16.mxu0 %v509
    %817 = vmatpush1.bf16.msra.mxu0 %v508
    %818 = vmatprep.subr.bf16.mxu0 %v519
    %819 = vmatpush1.bf16.msra.mxu0 %v518
    %820 = vmatprep.subr.bf16.mxu0 %v529
    %821 = vmatpush1.bf16.msra.mxu0 %v528
    %822 = vmatprep.subr.bf16.mxu0 %v539
    %823 = vmatpush1.bf16.msra.mxu0 %v538
    %824 = vmatprep.subr.bf16.mxu0 %v549
    %825 = vmatpush1.bf16.msra.mxu0 %v548
    %826 = vmatprep.subr.bf16.mxu0 %v559
    %827 = vmatpush1.bf16.msra.mxu0 %v558
    %828 = vmatprep.subr.bf16.mxu0 %v569
    %829 = vmatpush1.bf16.msra.mxu0 %v568
    %830 = vmatprep.subr.bf16.mxu0 0
    %831 = vmatpush1.bf16.msra.mxu0 0
    %832 = vmatprep.subr.bf16.mxu0 0
    %833 = vmatpush1.bf16.msra.mxu0 0
    %834 = vmatprep.subr.bf16.mxu0 0
    %835 = vmatpush1.bf16.msra.mxu0 0
    %836 = vmatprep.subr.bf16.mxu0 0
    %837 = vmatpush1.bf16.msra.mxu0 0
    %838 = vmatprep.subr.bf16.mxu0 0
    %839 = vmatpush1.bf16.msra.mxu0 0
    %840 = vmatprep.subr.bf16.mxu0 0
    %841 = vmatpush1.bf16.msra.mxu0 0
    %842 = vmatprep.subr.bf16.mxu0 0
    %843 = vmatpush1.bf16.msra.mxu0 0
    %844 = vmatprep.subr.bf16.mxu0 0
    %845 = vmatpush1.bf16.msra.mxu0 0
    %846 = vmatprep.mubr.bf16.mxu0 0
    %847 = vmatmul.mubr.bf16.gmra.mrb[0].mxu0 %v115
    %v848 = vpop.f32.mrb[0].mxu0
    %v849 = vadd.f32 %v235, %v848
    %v850 = vpop.f32.mrb[0].mxu0
    %v851 = vadd.f32 %v239, %v850
    %v852 = vpop.f32.mrb[0].mxu0
    %v853 = vpop.f32.mrb[0].mxu0
    %854 = vdwg.mxu0
    %v855 = vmax.f32 %v685, 0.0
    %v856 = vmax.f32 %v687, 0.0
    %v857 = vmax.f32 %v726, 0.0
    %v858 = vmax.f32 %v728, 0.0
    %v859 = vmax.f32 %v767, 0.0
    %v860 = vmax.f32 %v769, 0.0
    %v861 = vmax.f32 %v808, 0.0
    %v862 = vmax.f32 %v810, 0.0
    %v863 = vmax.f32 %v849, 0.0
    %v864 = vmax.f32 %v851, 0.0
    %v865 = vpack.c.bf16 %v855, %v855
    %v866 = vpack.c.bf16 %v856, %v856
    %v867 = vpack.c.bf16 %v857, %v857
    %v868 = vpack.c.bf16 %v858, %v858
    %v869 = vpack.c.bf16 %v859, %v859
    %v870 = vpack.c.bf16 %v860, %v860
    %v871 = vpack.c.bf16 %v861, %v861
    %v872 = vpack.c.bf16 %v862, %v862
    %v873 = vpack.c.bf16 %v863, %v863
    %v874 = vpack.c.bf16 %v864, %v864
    %v875 = vld [vmem:[#allocation8] sm:$0xff]
    %v876 = vld [vmem:[#allocation8 + $0x8] sm:$0xff]
    %v877 = vld [vmem:[#allocation8 + $0x10] sm:$0xff]
    %v878 = vld [vmem:[#allocation8 + $0x18] sm:$0xff]
    %v879 = vld [vmem:[#allocation8 + $0x20] sm:$0xff]
    %v880 = vld [vmem:[#allocation8 + $0x28] sm:$0xff]
    %v881 = vld [vmem:[#allocation8 + $0x30] sm:$0xff]
    %v882 = vld [vmem:[#allocation8 + $0x38] sm:$0xff]
    %v883 = vld [vmem:[#allocation8 + $0x40] sm:$0xff]
    %v884 = vld [vmem:[#allocation8 + $0x48] sm:$0xff]
    %v885 = vld [vmem:[#allocation8 + $0x50] sm:$0xff]
    %v886 = vld [vmem:[#allocation8 + $0x58] sm:$0xff]
    %v887 = vld [vmem:[#allocation8 + $0x60] sm:$0xff]
    %v888 = vld [vmem:[#allocation8 + $0x68] sm:$0xff]
    %v889 = vld [vmem:[#allocation8 + $0x70] sm:$0xff]
    %v890 = vld [vmem:[#allocation8 + $0x78] sm:$0xff]
    %v891 = vld [vmem:[#allocation8 + $0x80] sm:$0xff]
    %v892 = vld [vmem:[#allocation8 + $0x88] sm:$0xff]
    %v893 = vld [vmem:[#allocation8 + $0x90] sm:$0xff]
    %v894 = vld [vmem:[#allocation8 + $0x98] sm:$0xff]
    %v895 = vld [vmem:[#allocation8 + $0xa0] sm:$0xff]
    %v896 = vld [vmem:[#allocation8 + $0xa8] sm:$0xff]
    %v897 = vld [vmem:[#allocation8 + $0xb0] sm:$0xff]
    %v898 = vld [vmem:[#allocation8 + $0xb8] sm:$0xff]
    %v899 = vld [vmem:[#allocation8 + $0xc0] sm:$0xff]
    %v900 = vld [vmem:[#allocation8 + $0xc8] sm:$0xff]
    %v901 = vld [vmem:[#allocation8 + $0xd0] sm:$0xff]
    %v902 = vld [vmem:[#allocation8 + $0xd8] sm:$0xff]
    %v903 = vld [vmem:[#allocation8 + $0xe0] sm:$0xff]
    %v904 = vld [vmem:[#allocation8 + $0xe8] sm:$0xff]
    %v905 = vld [vmem:[#allocation8 + $0xf0] sm:$0xff]
    %v906 = vld [vmem:[#allocation8 + $0xf8] sm:$0xff]
    %v907 = vld [vmem:[#allocation8 + $0x100] sm:$0xff]
    %v908 = vld [vmem:[#allocation8 + $0x108] sm:$0xff]
    %v909 = vld [vmem:[#allocation8 + $0x110] sm:$0xff]
    %v910 = vld [vmem:[#allocation8 + $0x118] sm:$0xff]
    %v911 = vld [vmem:[#allocation8 + $0x120] sm:$0xff]
    %v912 = vld [vmem:[#allocation8 + $0x128] sm:$0xff]
    %v913 = vld [vmem:[#allocation8 + $0x130] sm:$0xff]
    %v914 = vld [vmem:[#allocation8 + $0x138] sm:$0xff]
    %v915 = vld [vmem:[#allocation8 + $0x140] sm:$0xff]
    %v916 = vld [vmem:[#allocation8 + $0x148] sm:$0xff]
    %v917 = vld [vmem:[#allocation8 + $0x150] sm:$0xff]
    %v918 = vld [vmem:[#allocation8 + $0x158] sm:$0xff]
    %v919 = vld [vmem:[#allocation8 + $0x160] sm:$0xff]
    %v920 = vld [vmem:[#allocation8 + $0x168] sm:$0xff]
    %v921 = vld [vmem:[#allocation8 + $0x170] sm:$0xff]
    %v922 = vld [vmem:[#allocation8 + $0x178] sm:$0xff]
    %v923 = vld [vmem:[#allocation8 + $0x180] sm:$0xff]
    %v924 = vld [vmem:[#allocation8 + $0x188] sm:$0xff]
    %v925 = vld [vmem:[#allocation8 + $0x190] sm:$0xff]
    %v926 = vld [vmem:[#allocation8 + $0x198] sm:$0xff]
    %v927 = vld [vmem:[#allocation8 + $0x1a0] sm:$0xff]
    %v928 = vld [vmem:[#allocation8 + $0x1a8] sm:$0xff]
    %v929 = vld [vmem:[#allocation8 + $0x1b0] sm:$0xff]
    %v930 = vld [vmem:[#allocation8 + $0x1b8] sm:$0xff]
    %v931 = vld [vmem:[#allocation8 + $0x1c0] sm:$0xff]
    %v932 = vld [vmem:[#allocation8 + $0x1c8] sm:$0xff]
    %v933 = vld [vmem:[#allocation8 + $0x1d0] sm:$0xff]
    %v934 = vld [vmem:[#allocation8 + $0x1d8] sm:$0xff]
    %v935 = vld [vmem:[#allocation8 + $0x1e0] sm:$0xff]
    %v936 = vld [vmem:[#allocation8 + $0x1e8] sm:$0xff]
    %v937 = vld [vmem:[#allocation8 + $0x1f0] sm:$0xff]
    %v938 = vld [vmem:[#allocation8 + $0x1f8] sm:$0xff]
    %v939 = vld [vmem:[#allocation8 + $0x200] sm:$0xff]
    %v940 = vld [vmem:[#allocation8 + $0x208] sm:$0xff]
    %v941 = vld [vmem:[#allocation8 + $0x210] sm:$0xff]
    %v942 = vld [vmem:[#allocation8 + $0x218] sm:$0xff]
    %v943 = vld [vmem:[#allocation8 + $0x220] sm:$0xff]
    %v944 = vld [vmem:[#allocation8 + $0x228] sm:$0xff]
    %v945 = vld [vmem:[#allocation8 + $0x230] sm:$0xff]
    %v946 = vld [vmem:[#allocation8 + $0x238] sm:$0xff]
    %v947 = vld [vmem:[#allocation8 + $0x240] sm:$0xff]
    %v948 = vld [vmem:[#allocation8 + $0x248] sm:$0xff]
    %v949 = vld [vmem:[#allocation8 + $0x250] sm:$0xff]
    %v950 = vld [vmem:[#allocation8 + $0x258] sm:$0xff]
    %v951 = vld [vmem:[#allocation8 + $0x260] sm:$0xff]
    %v952 = vld [vmem:[#allocation8 + $0x268] sm:$0xff]
    %v953 = vld [vmem:[#allocation8 + $0x270] sm:$0xff]
    %v954 = vld [vmem:[#allocation8 + $0x278] sm:$0xff]
    %v955 = vld [vmem:[#allocation8 + $0x280] sm:$0xff]
    %v956 = vld [vmem:[#allocation8 + $0x288] sm:$0xff]
    %v957 = vld [vmem:[#allocation8 + $0x290] sm:$0xff]
    %v958 = vld [vmem:[#allocation8 + $0x298] sm:$0xff]
    %v959 = vld [vmem:[#allocation8 + $0x2a0] sm:$0xff]
    %v960 = vld [vmem:[#allocation8 + $0x2a8] sm:$0xff]
    %v961 = vld [vmem:[#allocation8 + $0x2b0] sm:$0xff]
    %v962 = vld [vmem:[#allocation8 + $0x2b8] sm:$0xff]
    %v963 = vld [vmem:[#allocation8 + $0x2c0] sm:$0xff]
    %v964 = vld [vmem:[#allocation8 + $0x2c8] sm:$0xff]
    %v965 = vld [vmem:[#allocation8 + $0x2d0] sm:$0xff]
    %v966 = vld [vmem:[#allocation8 + $0x2d8] sm:$0xff]
    %v967 = vld [vmem:[#allocation8 + $0x2e0] sm:$0xff]
    %v968 = vld [vmem:[#allocation8 + $0x2e8] sm:$0xff]
    %v969 = vld [vmem:[#allocation8 + $0x2f0] sm:$0xff]
    %v970 = vld [vmem:[#allocation8 + $0x2f8] sm:$0xff]
    %v971 = vld [vmem:[#allocation8 + $0x300] sm:$0xff]
    %v972 = vld [vmem:[#allocation8 + $0x308] sm:$0xff]
    %v973 = vld [vmem:[#allocation8 + $0x310] sm:$0xff]
    %v974 = vld [vmem:[#allocation8 + $0x318] sm:$0xff]
    %v975 = vld [vmem:[#allocation8 + $0x320] sm:$0xff]
    %v976 = vld [vmem:[#allocation8 + $0x328] sm:$0xff]
    %v977 = vld [vmem:[#allocation8 + $0x330] sm:$0xff]
    %v978 = vld [vmem:[#allocation8 + $0x338] sm:$0xff]
    %v979 = vld [vmem:[#allocation8 + $0x340] sm:$0xff]
    %v980 = vld [vmem:[#allocation8 + $0x348] sm:$0xff]
    %v981 = vld [vmem:[#allocation8 + $0x350] sm:$0xff]
    %v982 = vld [vmem:[#allocation8 + $0x358] sm:$0xff]
    %v983 = vld [vmem:[#allocation8 + $0x360] sm:$0xff]
    %v984 = vld [vmem:[#allocation8 + $0x368] sm:$0xff]
    %v985 = vld [vmem:[#allocation8 + $0x370] sm:$0xff]
    %v986 = vld [vmem:[#allocation8 + $0x378] sm:$0xff]
    %v987 = vld [vmem:[#allocation8 + $0x380] sm:$0xff]
    %v988 = vld [vmem:[#allocation8 + $0x388] sm:$0xff]
    %v989 = vld [vmem:[#allocation8 + $0x390] sm:$0xff]
    %v990 = vld [vmem:[#allocation8 + $0x398] sm:$0xff]
    %v991 = vld [vmem:[#allocation8 + $0x3a0] sm:$0xff]
    %v992 = vld [vmem:[#allocation8 + $0x3a8] sm:$0xff]
    %v993 = vld [vmem:[#allocation8 + $0x3b0] sm:$0xff]
    %v994 = vld [vmem:[#allocation8 + $0x3b8] sm:$0xff]
    %v995 = vld [vmem:[#allocation8 + $0x3c0] sm:$0xff]
    %v996 = vld [vmem:[#allocation8 + $0x3c8] sm:$0xff]
    %v997 = vld [vmem:[#allocation8 + $0x3d0] sm:$0xff]
    %v998 = vld [vmem:[#allocation8 + $0x3d8] sm:$0xff]
    %v999 = vld [vmem:[#allocation8 + $0x3e0] sm:$0xff]
    %v1000 = vld [vmem:[#allocation8 + $0x3e8] sm:$0xff]
    %v1001 = vld [vmem:[#allocation8 + $0x3f0] sm:$0xff]
    %v1002 = vld [vmem:[#allocation8 + $0x3f8] sm:$0xff]
    %v1003 = vld [vmem:[#allocation8 + $0x400] sm:$0xff]
    %v1004 = vld [vmem:[#allocation8 + $0x408] sm:$0xff]
    %v1005 = vld [vmem:[#allocation8 + $0x410] sm:$0xff]
    %v1006 = vld [vmem:[#allocation8 + $0x418] sm:$0xff]
    %v1007 = vld [vmem:[#allocation8 + $0x420] sm:$0xff]
    %v1008 = vld [vmem:[#allocation8 + $0x428] sm:$0xff]
    %v1009 = vld [vmem:[#allocation8 + $0x430] sm:$0xff]
    %v1010 = vld [vmem:[#allocation8 + $0x438] sm:$0xff]
    %v1011 = vld [vmem:[#allocation8 + $0x440] sm:$0xff]
    %v1012 = vld [vmem:[#allocation8 + $0x448] sm:$0xff]
    %v1013 = vld [vmem:[#allocation8 + $0x450] sm:$0xff]
    %v1014 = vld [vmem:[#allocation8 + $0x458] sm:$0xff]
    %v1015 = vld [vmem:[#allocation8 + $0x460] sm:$0xff]
    %v1016 = vld [vmem:[#allocation8 + $0x468] sm:$0xff]
    %v1017 = vld [vmem:[#allocation8 + $0x470] sm:$0xff]
    %v1018 = vld [vmem:[#allocation8 + $0x478] sm:$0xff]
    %v1019 = vld [vmem:[#allocation8 + $0x480] sm:$0xff]
    %v1020 = vld [vmem:[#allocation8 + $0x488] sm:$0xff]
    %v1021 = vld [vmem:[#allocation8 + $0x490] sm:$0xff]
    %v1022 = vld [vmem:[#allocation8 + $0x498] sm:$0xff]
    %v1023 = vld [vmem:[#allocation8 + $0x4a0] sm:$0xff]
    %v1024 = vld [vmem:[#allocation8 + $0x4a8] sm:$0xff]
    %v1025 = vld [vmem:[#allocation8 + $0x4b0] sm:$0xff]
    %v1026 = vld [vmem:[#allocation8 + $0x4b8] sm:$0xff]
    %v1027 = vld [vmem:[#allocation8 + $0x4c0] sm:$0xff]
    %v1028 = vld [vmem:[#allocation8 + $0x4c8] sm:$0xff]
    %v1029 = vld [vmem:[#allocation8 + $0x4d0] sm:$0xff]
    %v1030 = vld [vmem:[#allocation8 + $0x4d8] sm:$0xff]
    %v1031 = vld [vmem:[#allocation8 + $0x4e0] sm:$0xff]
    %v1032 = vld [vmem:[#allocation8 + $0x4e8] sm:$0xff]
    %v1033 = vld [vmem:[#allocation8 + $0x4f0] sm:$0xff]
    %v1034 = vld [vmem:[#allocation8 + $0x4f8] sm:$0xff]
    %v1035 = vld [vmem:[#allocation8 + $0x500] sm:$0xff]
    %v1036 = vld [vmem:[#allocation8 + $0x508] sm:$0xff]
    %v1037 = vld [vmem:[#allocation8 + $0x510] sm:$0xff]
    %v1038 = vld [vmem:[#allocation8 + $0x518] sm:$0xff]
    %v1039 = vld [vmem:[#allocation8 + $0x520] sm:$0xff]
    %v1040 = vld [vmem:[#allocation8 + $0x528] sm:$0xff]
    %v1041 = vld [vmem:[#allocation8 + $0x530] sm:$0xff]
    %v1042 = vld [vmem:[#allocation8 + $0x538] sm:$0xff]
    %v1043 = vld [vmem:[#allocation8 + $0x540] sm:$0xff]
    %v1044 = vld [vmem:[#allocation8 + $0x548] sm:$0xff]
    %v1045 = vld [vmem:[#allocation8 + $0x550] sm:$0xff]
    %v1046 = vld [vmem:[#allocation8 + $0x558] sm:$0xff]
    %v1047 = vld [vmem:[#allocation8 + $0x560] sm:$0xff]
    %v1048 = vld [vmem:[#allocation8 + $0x568] sm:$0xff]
    %v1049 = vld [vmem:[#allocation8 + $0x570] sm:$0xff]
    %v1050 = vld [vmem:[#allocation8 + $0x578] sm:$0xff]
    %v1051 = vld [vmem:[#allocation8 + $0x580] sm:$0xff]
    %v1052 = vld [vmem:[#allocation8 + $0x588] sm:$0xff]
    %v1053 = vld [vmem:[#allocation8 + $0x590] sm:$0xff]
    %v1054 = vld [vmem:[#allocation8 + $0x598] sm:$0xff]
    %v1055 = vld [vmem:[#allocation8 + $0x5a0] sm:$0xff]
    %v1056 = vld [vmem:[#allocation8 + $0x5a8] sm:$0xff]
    %v1057 = vld [vmem:[#allocation8 + $0x5b0] sm:$0xff]
    %v1058 = vld [vmem:[#allocation8 + $0x5b8] sm:$0xff]
    %v1059 = vld [vmem:[#allocation8 + $0x5c0] sm:$0xff]
    %v1060 = vld [vmem:[#allocation8 + $0x5c8] sm:$0xff]
    %v1061 = vld [vmem:[#allocation8 + $0x5d0] sm:$0xff]
    %v1062 = vld [vmem:[#allocation8 + $0x5d8] sm:$0xff]
    %v1063 = vld [vmem:[#allocation8 + $0x5e0] sm:$0xff]
    %v1064 = vld [vmem:[#allocation8 + $0x5e8] sm:$0xff]
    %v1065 = vld [vmem:[#allocation8 + $0x5f0] sm:$0xff]
    %v1066 = vld [vmem:[#allocation8 + $0x5f8] sm:$0xff]
    %v1067 = vld [vmem:[#allocation8 + $0x600] sm:$0xff]
    %v1068 = vld [vmem:[#allocation8 + $0x608] sm:$0xff]
    %v1069 = vld [vmem:[#allocation8 + $0x610] sm:$0xff]
    %v1070 = vld [vmem:[#allocation8 + $0x618] sm:$0xff]
    %v1071 = vld [vmem:[#allocation8 + $0x620] sm:$0xff]
    %v1072 = vld [vmem:[#allocation8 + $0x628] sm:$0xff]
    %v1073 = vld [vmem:[#allocation8 + $0x630] sm:$0xff]
    %v1074 = vld [vmem:[#allocation8 + $0x638] sm:$0xff]
    %v1075 = vld [vmem:[#allocation8 + $0x640] sm:$0xff]
    %v1076 = vld [vmem:[#allocation8 + $0x648] sm:$0xff]
    %v1077 = vld [vmem:[#allocation8 + $0x650] sm:$0xff]
    %v1078 = vld [vmem:[#allocation8 + $0x658] sm:$0xff]
    %v1079 = vld [vmem:[#allocation8 + $0x660] sm:$0xff]
    %v1080 = vld [vmem:[#allocation8 + $0x668] sm:$0xff]
    %v1081 = vld [vmem:[#allocation8 + $0x670] sm:$0xff]
    %v1082 = vld [vmem:[#allocation8 + $0x678] sm:$0xff]
    %v1083 = vld [vmem:[#allocation8 + $0x680] sm:$0xff]
    %v1084 = vld [vmem:[#allocation8 + $0x688] sm:$0xff]
    %v1085 = vld [vmem:[#allocation8 + $0x690] sm:$0xff]
    %v1086 = vld [vmem:[#allocation8 + $0x698] sm:$0xff]
    %v1087 = vld [vmem:[#allocation8 + $0x6a0] sm:$0xff]
    %v1088 = vld [vmem:[#allocation8 + $0x6a8] sm:$0xff]
    %v1089 = vld [vmem:[#allocation8 + $0x6b0] sm:$0xff]
    %v1090 = vld [vmem:[#allocation8 + $0x6b8] sm:$0xff]
    %v1091 = vld [vmem:[#allocation8 + $0x6c0] sm:$0xff]
    %v1092 = vld [vmem:[#allocation8 + $0x6c8] sm:$0xff]
    %v1093 = vld [vmem:[#allocation8 + $0x6d0] sm:$0xff]
    %v1094 = vld [vmem:[#allocation8 + $0x6d8] sm:$0xff]
    %v1095 = vld [vmem:[#allocation8 + $0x6e0] sm:$0xff]
    %v1096 = vld [vmem:[#allocation8 + $0x6e8] sm:$0xff]
    %v1097 = vld [vmem:[#allocation8 + $0x6f0] sm:$0xff]
    %v1098 = vld [vmem:[#allocation8 + $0x6f8] sm:$0xff]
    %v1099 = vld [vmem:[#allocation8 + $0x700] sm:$0xff]
    %v1100 = vld [vmem:[#allocation8 + $0x708] sm:$0xff]
    %v1101 = vld [vmem:[#allocation8 + $0x710] sm:$0xff]
    %v1102 = vld [vmem:[#allocation8 + $0x718] sm:$0xff]
    %v1103 = vld [vmem:[#allocation8 + $0x720] sm:$0xff]
    %v1104 = vld [vmem:[#allocation8 + $0x728] sm:$0xff]
    %v1105 = vld [vmem:[#allocation8 + $0x730] sm:$0xff]
    %v1106 = vld [vmem:[#allocation8 + $0x738] sm:$0xff]
    %v1107 = vld [vmem:[#allocation8 + $0x740] sm:$0xff]
    %v1108 = vld [vmem:[#allocation8 + $0x748] sm:$0xff]
    %v1109 = vld [vmem:[#allocation8 + $0x750] sm:$0xff]
    %v1110 = vld [vmem:[#allocation8 + $0x758] sm:$0xff]
    %v1111 = vld [vmem:[#allocation8 + $0x760] sm:$0xff]
    %v1112 = vld [vmem:[#allocation8 + $0x768] sm:$0xff]
    %v1113 = vld [vmem:[#allocation8 + $0x770] sm:$0xff]
    %v1114 = vld [vmem:[#allocation8 + $0x778] sm:$0xff]
    %v1115 = vld [vmem:[#allocation8 + $0x780] sm:$0xff]
    %v1116 = vld [vmem:[#allocation8 + $0x788] sm:$0xff]
    %v1117 = vld [vmem:[#allocation8 + $0x790] sm:$0xff]
    %v1118 = vld [vmem:[#allocation8 + $0x798] sm:$0xff]
    %v1119 = vld [vmem:[#allocation8 + $0x7a0] sm:$0xff]
    %v1120 = vld [vmem:[#allocation8 + $0x7a8] sm:$0xff]
    %v1121 = vld [vmem:[#allocation8 + $0x7b0] sm:$0xff]
    %v1122 = vld [vmem:[#allocation8 + $0x7b8] sm:$0xff]
    %v1123 = vld [vmem:[#allocation8 + $0x7c0] sm:$0xff]
    %v1124 = vld [vmem:[#allocation8 + $0x7c8] sm:$0xff]
    %v1125 = vld [vmem:[#allocation8 + $0x7d0] sm:$0xff]
    %v1126 = vld [vmem:[#allocation8 + $0x7d8] sm:$0xff]
    %v1127 = vld [vmem:[#allocation8 + $0x7e0] sm:$0xff]
    %v1128 = vld [vmem:[#allocation8 + $0x7e8] sm:$0xff]
    %v1129 = vld [vmem:[#allocation8 + $0x7f0] sm:$0xff]
    %v1130 = vld [vmem:[#allocation8 + $0x7f8] sm:$0xff]
    %v1131 = vld [vmem:[#allocation8 + $0x800] sm:$0xff]
    %v1132 = vld [vmem:[#allocation8 + $0x808] sm:$0xff]
    %v1133 = vld [vmem:[#allocation8 + $0x810] sm:$0xff]
    %v1134 = vld [vmem:[#allocation8 + $0x818] sm:$0xff]
    %v1135 = vld [vmem:[#allocation8 + $0x820] sm:$0xff]
    %v1136 = vld [vmem:[#allocation8 + $0x828] sm:$0xff]
    %v1137 = vld [vmem:[#allocation8 + $0x830] sm:$0xff]
    %v1138 = vld [vmem:[#allocation8 + $0x838] sm:$0xff]
    %v1139 = vld [vmem:[#allocation8 + $0x840] sm:$0xff]
    %v1140 = vld [vmem:[#allocation8 + $0x848] sm:$0xff]
    %v1141 = vld [vmem:[#allocation8 + $0x850] sm:$0xff]
    %v1142 = vld [vmem:[#allocation8 + $0x858] sm:$0xff]
    %v1143 = vld [vmem:[#allocation8 + $0x860] sm:$0xff]
    %v1144 = vld [vmem:[#allocation8 + $0x868] sm:$0xff]
    %v1145 = vld [vmem:[#allocation8 + $0x870] sm:$0xff]
    %v1146 = vld [vmem:[#allocation8 + $0x878] sm:$0xff]
    %v1147 = vld [vmem:[#allocation8 + $0x880] sm:$0xff]
    %v1148 = vld [vmem:[#allocation8 + $0x888] sm:$0xff]
    %v1149 = vld [vmem:[#allocation8 + $0x890] sm:$0xff]
    %v1150 = vld [vmem:[#allocation8 + $0x898] sm:$0xff]
    %v1151 = vld [vmem:[#allocation8 + $0x8a0] sm:$0xff]
    %v1152 = vld [vmem:[#allocation8 + $0x8a8] sm:$0xff]
    %v1153 = vld [vmem:[#allocation8 + $0x8b0] sm:$0xff]
    %v1154 = vld [vmem:[#allocation8 + $0x8b8] sm:$0xff]
    %v1155 = vld [vmem:[#allocation8 + $0x8c0] sm:$0xff]
    %v1156 = vld [vmem:[#allocation8 + $0x8c8] sm:$0xff]
    %v1157 = vld [vmem:[#allocation8 + $0x8d0] sm:$0xff]
    %v1158 = vld [vmem:[#allocation8 + $0x8d8] sm:$0xff]
    %v1159 = vld [vmem:[#allocation8 + $0x8e0] sm:$0xff]
    %v1160 = vld [vmem:[#allocation8 + $0x8e8] sm:$0xff]
    %v1161 = vld [vmem:[#allocation8 + $0x8f0] sm:$0xff]
    %v1162 = vld [vmem:[#allocation8 + $0x8f8] sm:$0xff]
    %v1163 = vld [vmem:[#allocation8 + $0x900] sm:$0xff]
    %v1164 = vld [vmem:[#allocation8 + $0x908] sm:$0xff]
    %v1165 = vld [vmem:[#allocation8 + $0x910] sm:$0xff]
    %v1166 = vld [vmem:[#allocation8 + $0x918] sm:$0xff]
    %v1167 = vld [vmem:[#allocation8 + $0x920] sm:$0xff]
    %v1168 = vld [vmem:[#allocation8 + $0x928] sm:$0xff]
    %v1169 = vld [vmem:[#allocation8 + $0x930] sm:$0xff]
    %v1170 = vld [vmem:[#allocation8 + $0x938] sm:$0xff]
    %v1171 = vld [vmem:[#allocation8 + $0x940] sm:$0xff]
    %v1172 = vld [vmem:[#allocation8 + $0x948] sm:$0xff]
    %v1173 = vld [vmem:[#allocation8 + $0x950] sm:$0xff]
    %v1174 = vld [vmem:[#allocation8 + $0x958] sm:$0xff]
    %v1175 = vld [vmem:[#allocation8 + $0x960] sm:$0xff]
    %v1176 = vld [vmem:[#allocation8 + $0x968] sm:$0xff]
    %v1177 = vld [vmem:[#allocation8 + $0x970] sm:$0xff]
    %v1178 = vld [vmem:[#allocation8 + $0x978] sm:$0xff]
    %v1179 = vld [vmem:[#allocation8 + $0x980] sm:$0xff]
    %v1180 = vld [vmem:[#allocation8 + $0x988] sm:$0xff]
    %v1181 = vld [vmem:[#allocation8 + $0x990] sm:$0xff]
    %v1182 = vld [vmem:[#allocation8 + $0x998] sm:$0xff]
    %v1183 = vld [vmem:[#allocation8 + $0x9a0] sm:$0xff]
    %v1184 = vld [vmem:[#allocation8 + $0x9a8] sm:$0xff]
    %v1185 = vld [vmem:[#allocation8 + $0x9b0] sm:$0xff]
    %v1186 = vld [vmem:[#allocation8 + $0x9b8] sm:$0xff]
    %v1187 = vld [vmem:[#allocation8 + $0x9c0] sm:$0xff]
    %v1188 = vld [vmem:[#allocation8 + $0x9c8] sm:$0xff]
    %v1189 = vld [vmem:[#allocation8 + $0x9d0] sm:$0xff]
    %v1190 = vld [vmem:[#allocation8 + $0x9d8] sm:$0xff]
    %v1191 = vld [vmem:[#allocation8 + $0x9e0] sm:$0xff]
    %v1192 = vld [vmem:[#allocation8 + $0x9e8] sm:$0xff]
    %v1193 = vld [vmem:[#allocation8 + $0x9f0] sm:$0xff]
    %v1194 = vld [vmem:[#allocation8 + $0x9f8] sm:$0xff]
    %v1195 = vld [vmem:[#allocation8 + $0xa00] sm:$0xff]
    %v1196 = vld [vmem:[#allocation8 + $0xa08] sm:$0xff]
    %v1197 = vld [vmem:[#allocation8 + $0xa10] sm:$0xff]
    %v1198 = vld [vmem:[#allocation8 + $0xa18] sm:$0xff]
    %v1199 = vld [vmem:[#allocation8 + $0xa20] sm:$0xff]
    %v1200 = vld [vmem:[#allocation8 + $0xa28] sm:$0xff]
    %v1201 = vld [vmem:[#allocation8 + $0xa30] sm:$0xff]
    %v1202 = vld [vmem:[#allocation8 + $0xa38] sm:$0xff]
    %v1203 = vld [vmem:[#allocation8 + $0xa40] sm:$0xff]
    %v1204 = vld [vmem:[#allocation8 + $0xa48] sm:$0xff]
    %v1205 = vld [vmem:[#allocation8 + $0xa50] sm:$0xff]
    %v1206 = vld [vmem:[#allocation8 + $0xa58] sm:$0xff]
    %v1207 = vld [vmem:[#allocation8 + $0xa60] sm:$0xff]
    %v1208 = vld [vmem:[#allocation8 + $0xa68] sm:$0xff]
    %v1209 = vld [vmem:[#allocation8 + $0xa70] sm:$0xff]
    %v1210 = vld [vmem:[#allocation8 + $0xa78] sm:$0xff]
    %v1211 = vld [vmem:[#allocation8 + $0xa80] sm:$0xff]
    %v1212 = vld [vmem:[#allocation8 + $0xa88] sm:$0xff]
    %v1213 = vld [vmem:[#allocation8 + $0xa90] sm:$0xff]
    %v1214 = vld [vmem:[#allocation8 + $0xa98] sm:$0xff]
    %v1215 = vld [vmem:[#allocation8 + $0xaa0] sm:$0xff]
    %v1216 = vld [vmem:[#allocation8 + $0xaa8] sm:$0xff]
    %v1217 = vld [vmem:[#allocation8 + $0xab0] sm:$0xff]
    %v1218 = vld [vmem:[#allocation8 + $0xab8] sm:$0xff]
    %v1219 = vld [vmem:[#allocation8 + $0xac0] sm:$0xff]
    %v1220 = vld [vmem:[#allocation8 + $0xac8] sm:$0xff]
    %v1221 = vld [vmem:[#allocation8 + $0xad0] sm:$0xff]
    %v1222 = vld [vmem:[#allocation8 + $0xad8] sm:$0xff]
    %v1223 = vld [vmem:[#allocation8 + $0xae0] sm:$0xff]
    %v1224 = vld [vmem:[#allocation8 + $0xae8] sm:$0xff]
    %v1225 = vld [vmem:[#allocation8 + $0xaf0] sm:$0xff]
    %v1226 = vld [vmem:[#allocation8 + $0xaf8] sm:$0xff]
    %v1227 = vld [vmem:[#allocation8 + $0xb00] sm:$0xff]
    %v1228 = vld [vmem:[#allocation8 + $0xb08] sm:$0xff]
    %v1229 = vld [vmem:[#allocation8 + $0xb10] sm:$0xff]
    %v1230 = vld [vmem:[#allocation8 + $0xb18] sm:$0xff]
    %v1231 = vld [vmem:[#allocation8 + $0xb20] sm:$0xff]
    %v1232 = vld [vmem:[#allocation8 + $0xb28] sm:$0xff]
    %v1233 = vld [vmem:[#allocation8 + $0xb30] sm:$0xff]
    %v1234 = vld [vmem:[#allocation8 + $0xb38] sm:$0xff]
    %v1235 = vld [vmem:[#allocation8 + $0xb40] sm:$0xff]
    %v1236 = vld [vmem:[#allocation8 + $0xb48] sm:$0xff]
    %v1237 = vld [vmem:[#allocation8 + $0xb50] sm:$0xff]
    %v1238 = vld [vmem:[#allocation8 + $0xb58] sm:$0xff]
    %v1239 = vld [vmem:[#allocation8 + $0xb60] sm:$0xff]
    %v1240 = vld [vmem:[#allocation8 + $0xb68] sm:$0xff]
    %v1241 = vld [vmem:[#allocation8 + $0xb70] sm:$0xff]
    %v1242 = vld [vmem:[#allocation8 + $0xb78] sm:$0xff]
    %v1243 = vld [vmem:[#allocation8 + $0xb80] sm:$0xff]
    %v1244 = vld [vmem:[#allocation8 + $0xb88] sm:$0xff]
    %v1245 = vld [vmem:[#allocation8 + $0xb90] sm:$0xff]
    %v1246 = vld [vmem:[#allocation8 + $0xb98] sm:$0xff]
    %v1247 = vld [vmem:[#allocation8 + $0xba0] sm:$0xff]
    %v1248 = vld [vmem:[#allocation8 + $0xba8] sm:$0xff]
    %v1249 = vld [vmem:[#allocation8 + $0xbb0] sm:$0xff]
    %v1250 = vld [vmem:[#allocation8 + $0xbb8] sm:$0xff]
    %v1251 = vld [vmem:[#allocation8 + $0xbc0] sm:$0xff]
    %v1252 = vld [vmem:[#allocation8 + $0xbc8] sm:$0xff]
    %v1253 = vld [vmem:[#allocation8 + $0xbd0] sm:$0xff]
    %v1254 = vld [vmem:[#allocation8 + $0xbd8] sm:$0xff]
    %v1255 = vld [vmem:[#allocation8 + $0xbe0] sm:$0xff]
    %v1256 = vld [vmem:[#allocation8 + $0xbe8] sm:$0xff]
    %v1257 = vld [vmem:[#allocation8 + $0xbf0] sm:$0xff]
    %v1258 = vld [vmem:[#allocation8 + $0xbf8] sm:$0xff]
    %v1259 = vld [vmem:[#allocation8 + $0xc00] sm:$0xff]
    %v1260 = vld [vmem:[#allocation8 + $0xc08] sm:$0xff]
    %v1261 = vld [vmem:[#allocation8 + $0xc10] sm:$0xff]
    %v1262 = vld [vmem:[#allocation8 + $0xc18] sm:$0xff]
    %v1263 = vld [vmem:[#allocation8 + $0xc20] sm:$0xff]
    %v1264 = vld [vmem:[#allocation8 + $0xc28] sm:$0xff]
    %v1265 = vld [vmem:[#allocation8 + $0xc30] sm:$0xff]
    %v1266 = vld [vmem:[#allocation8 + $0xc38] sm:$0xff]
    %v1267 = vld [vmem:[#allocation8 + $0xc40] sm:$0xff]
    %v1268 = vld [vmem:[#allocation8 + $0xc48] sm:$0xff]
    %v1269 = vld [vmem:[#allocation8 + $0xc50] sm:$0xff]
    %v1270 = vld [vmem:[#allocation8 + $0xc58] sm:$0xff]
    %v1271 = vld [vmem:[#allocation8 + $0xc60] sm:$0xff]
    %v1272 = vld [vmem:[#allocation8 + $0xc68] sm:$0xff]
    %v1273 = vld [vmem:[#allocation8 + $0xc70] sm:$0xff]
    %v1274 = vld [vmem:[#allocation8 + $0xc78] sm:$0xff]
    %v1275 = vld [vmem:[#allocation8 + $0xc80] sm:$0xff]
    %v1276 = vld [vmem:[#allocation8 + $0xc88] sm:$0xff]
    %v1277 = vld [vmem:[#allocation8 + $0xc90] sm:$0xff]
    %v1278 = vld [vmem:[#allocation8 + $0xc98] sm:$0xff]
    %v1279 = vld [vmem:[#allocation8 + $0xca0] sm:$0xff]
    %v1280 = vld [vmem:[#allocation8 + $0xca8] sm:$0xff]
    %v1281 = vld [vmem:[#allocation8 + $0xcb0] sm:$0xff]
    %v1282 = vld [vmem:[#allocation8 + $0xcb8] sm:$0xff]
    %v1283 = vld [vmem:[#allocation8 + $0xcc0] sm:$0xff]
    %v1284 = vld [vmem:[#allocation8 + $0xcc8] sm:$0xff]
    %v1285 = vld [vmem:[#allocation8 + $0xcd0] sm:$0xff]
    %v1286 = vld [vmem:[#allocation8 + $0xcd8] sm:$0xff]
    %v1287 = vld [vmem:[#allocation8 + $0xce0] sm:$0xff]
    %v1288 = vld [vmem:[#allocation8 + $0xce8] sm:$0xff]
    %v1289 = vld [vmem:[#allocation8 + $0xcf0] sm:$0xff]
    %v1290 = vld [vmem:[#allocation8 + $0xcf8] sm:$0xff]
    %v1291 = vld [vmem:[#allocation8 + $0xd00] sm:$0xff]
    %v1292 = vld [vmem:[#allocation8 + $0xd08] sm:$0xff]
    %v1293 = vld [vmem:[#allocation8 + $0xd10] sm:$0xff]
    %v1294 = vld [vmem:[#allocation8 + $0xd18] sm:$0xff]
    %v1295 = vld [vmem:[#allocation8 + $0xd20] sm:$0xff]
    %v1296 = vld [vmem:[#allocation8 + $0xd28] sm:$0xff]
    %v1297 = vld [vmem:[#allocation8 + $0xd30] sm:$0xff]
    %v1298 = vld [vmem:[#allocation8 + $0xd38] sm:$0xff]
    %v1299 = vld [vmem:[#allocation8 + $0xd40] sm:$0xff]
    %v1300 = vld [vmem:[#allocation8 + $0xd48] sm:$0xff]
    %v1301 = vld [vmem:[#allocation8 + $0xd50] sm:$0xff]
    %v1302 = vld [vmem:[#allocation8 + $0xd58] sm:$0xff]
    %v1303 = vld [vmem:[#allocation8 + $0xd60] sm:$0xff]
    %v1304 = vld [vmem:[#allocation8 + $0xd68] sm:$0xff]
    %v1305 = vld [vmem:[#allocation8 + $0xd70] sm:$0xff]
    %v1306 = vld [vmem:[#allocation8 + $0xd78] sm:$0xff]
    %v1307 = vld [vmem:[#allocation8 + $0xd80] sm:$0xff]
    %v1308 = vld [vmem:[#allocation8 + $0xd88] sm:$0xff]
    %v1309 = vld [vmem:[#allocation8 + $0xd90] sm:$0xff]
    %v1310 = vld [vmem:[#allocation8 + $0xd98] sm:$0xff]
    %v1311 = vld [vmem:[#allocation8 + $0xda0] sm:$0xff]
    %v1312 = vld [vmem:[#allocation8 + $0xda8] sm:$0xff]
    %v1313 = vld [vmem:[#allocation8 + $0xdb0] sm:$0xff]
    %v1314 = vld [vmem:[#allocation8 + $0xdb8] sm:$0xff]
    %v1315 = vld [vmem:[#allocation8 + $0xdc0] sm:$0xff]
    %v1316 = vld [vmem:[#allocation8 + $0xdc8] sm:$0xff]
    %v1317 = vld [vmem:[#allocation8 + $0xdd0] sm:$0xff]
    %v1318 = vld [vmem:[#allocation8 + $0xdd8] sm:$0xff]
    %v1319 = vld [vmem:[#allocation8 + $0xde0] sm:$0xff]
    %v1320 = vld [vmem:[#allocation8 + $0xde8] sm:$0xff]
    %v1321 = vld [vmem:[#allocation8 + $0xdf0] sm:$0xff]
    %v1322 = vld [vmem:[#allocation8 + $0xdf8] sm:$0xff]
    %v1323 = vld [vmem:[#allocation8 + $0xe00] sm:$0xff]
    %v1324 = vld [vmem:[#allocation8 + $0xe08] sm:$0xff]
    %v1325 = vld [vmem:[#allocation8 + $0xe10] sm:$0xff]
    %v1326 = vld [vmem:[#allocation8 + $0xe18] sm:$0xff]
    %v1327 = vld [vmem:[#allocation8 + $0xe20] sm:$0xff]
    %v1328 = vld [vmem:[#allocation8 + $0xe28] sm:$0xff]
    %v1329 = vld [vmem:[#allocation8 + $0xe30] sm:$0xff]
    %v1330 = vld [vmem:[#allocation8 + $0xe38] sm:$0xff]
    %v1331 = vld [vmem:[#allocation8 + $0xe40] sm:$0xff]
    %v1332 = vld [vmem:[#allocation8 + $0xe48] sm:$0xff]
    %v1333 = vld [vmem:[#allocation8 + $0xe50] sm:$0xff]
    %v1334 = vld [vmem:[#allocation8 + $0xe58] sm:$0xff]
    %v1335 = vld [vmem:[#allocation8 + $0xe60] sm:$0xff]
    %v1336 = vld [vmem:[#allocation8 + $0xe68] sm:$0xff]
    %v1337 = vld [vmem:[#allocation8 + $0xe70] sm:$0xff]
    %v1338 = vld [vmem:[#allocation8 + $0xe78] sm:$0xff]
    %v1339 = vld [vmem:[#allocation8 + $0xe80] sm:$0xff]
    %v1340 = vld [vmem:[#allocation8 + $0xe88] sm:$0xff]
    %v1341 = vld [vmem:[#allocation8 + $0xe90] sm:$0xff]
    %v1342 = vld [vmem:[#allocation8 + $0xe98] sm:$0xff]
    %v1343 = vld [vmem:[#allocation8 + $0xea0] sm:$0xff]
    %v1344 = vld [vmem:[#allocation8 + $0xea8] sm:$0xff]
    %v1345 = vld [vmem:[#allocation8 + $0xeb0] sm:$0xff]
    %v1346 = vld [vmem:[#allocation8 + $0xeb8] sm:$0xff]
    %v1347 = vld [vmem:[#allocation8 + $0xec0] sm:$0xff]
    %v1348 = vld [vmem:[#allocation8 + $0xec8] sm:$0xff]
    %v1349 = vld [vmem:[#allocation8 + $0xed0] sm:$0xff]
    %v1350 = vld [vmem:[#allocation8 + $0xed8] sm:$0xff]
    %v1351 = vld [vmem:[#allocation8 + $0xee0] sm:$0xff]
    %v1352 = vld [vmem:[#allocation8 + $0xee8] sm:$0xff]
    %v1353 = vld [vmem:[#allocation8 + $0xef0] sm:$0xff]
    %v1354 = vld [vmem:[#allocation8 + $0xef8] sm:$0xff]
    %v1355 = vld [vmem:[#allocation8 + $0xf00] sm:$0xff]
    %v1356 = vld [vmem:[#allocation8 + $0xf08] sm:$0xff]
    %v1357 = vld [vmem:[#allocation8 + $0xf10] sm:$0xff]
    %v1358 = vld [vmem:[#allocation8 + $0xf18] sm:$0xff]
    %v1359 = vld [vmem:[#allocation8 + $0xf20] sm:$0xff]
    %v1360 = vld [vmem:[#allocation8 + $0xf28] sm:$0xff]
    %v1361 = vld [vmem:[#allocation8 + $0xf30] sm:$0xff]
    %v1362 = vld [vmem:[#allocation8 + $0xf38] sm:$0xff]
    %v1363 = vld [vmem:[#allocation8 + $0xf40] sm:$0xff]
    %v1364 = vld [vmem:[#allocation8 + $0xf48] sm:$0xff]
    %v1365 = vld [vmem:[#allocation8 + $0xf50] sm:$0xff]
    %v1366 = vld [vmem:[#allocation8 + $0xf58] sm:$0xff]
    %v1367 = vld [vmem:[#allocation8 + $0xf60] sm:$0xff]
    %v1368 = vld [vmem:[#allocation8 + $0xf68] sm:$0xff]
    %v1369 = vld [vmem:[#allocation8 + $0xf70] sm:$0xff]
    %v1370 = vld [vmem:[#allocation8 + $0xf78] sm:$0xff]
    %v1371 = vld [vmem:[#allocation8 + $0xf80] sm:$0xff]
    %v1372 = vld [vmem:[#allocation8 + $0xf88] sm:$0xff]
    %v1373 = vld [vmem:[#allocation8 + $0xf90] sm:$0xff]
    %v1374 = vld [vmem:[#allocation8 + $0xf98] sm:$0xff]
    %v1375 = vld [vmem:[#allocation8 + $0xfa0] sm:$0xff]
    %v1376 = vld [vmem:[#allocation8 + $0xfa8] sm:$0xff]
    %v1377 = vld [vmem:[#allocation8 + $0xfb0] sm:$0xff]
    %v1378 = vld [vmem:[#allocation8 + $0xfb8] sm:$0xff]
    %v1379 = vld [vmem:[#allocation8 + $0xfc0] sm:$0xff]
    %v1380 = vld [vmem:[#allocation8 + $0xfc8] sm:$0xff]
    %v1381 = vld [vmem:[#allocation8 + $0xfd0] sm:$0xff]
    %v1382 = vld [vmem:[#allocation8 + $0xfd8] sm:$0xff]
    %v1383 = vld [vmem:[#allocation8 + $0xfe0] sm:$0xff]
    %v1384 = vld [vmem:[#allocation8 + $0xfe8] sm:$0xff]
    %v1385 = vld [vmem:[#allocation8 + $0xff0] sm:$0xff]
    %v1386 = vld [vmem:[#allocation8 + $0xff8] sm:$0xff]
    %v1387 = vld [vmem:[#allocation8 + $0x1000] sm:$0xff]
    %v1388 = vld [vmem:[#allocation8 + $0x1008] sm:$0xff]
    %v1389 = vld [vmem:[#allocation8 + $0x1010] sm:$0xff]
    %v1390 = vld [vmem:[#allocation8 + $0x1018] sm:$0xff]
    %v1391 = vld [vmem:[#allocation8 + $0x1020] sm:$0xff]
    %v1392 = vld [vmem:[#allocation8 + $0x1028] sm:$0xff]
    %v1393 = vld [vmem:[#allocation8 + $0x1030] sm:$0xff]
    %v1394 = vld [vmem:[#allocation8 + $0x1038] sm:$0xff]
    %v1395 = vld [vmem:[#allocation8 + $0x1040] sm:$0xff]
    %v1396 = vld [vmem:[#allocation8 + $0x1048] sm:$0xff]
    %v1397 = vld [vmem:[#allocation8 + $0x1050] sm:$0xff]
    %v1398 = vld [vmem:[#allocation8 + $0x1058] sm:$0xff]
    %v1399 = vld [vmem:[#allocation8 + $0x1060] sm:$0xff]
    %v1400 = vld [vmem:[#allocation8 + $0x1068] sm:$0xff]
    %v1401 = vld [vmem:[#allocation8 + $0x1070] sm:$0xff]
    %v1402 = vld [vmem:[#allocation8 + $0x1078] sm:$0xff]
    %v1403 = vld [vmem:[#allocation8 + $0x1080] sm:$0xff]
    %v1404 = vld [vmem:[#allocation8 + $0x1088] sm:$0xff]
    %v1405 = vld [vmem:[#allocation8 + $0x1090] sm:$0xff]
    %v1406 = vld [vmem:[#allocation8 + $0x1098] sm:$0xff]
    %v1407 = vld [vmem:[#allocation8 + $0x10a0] sm:$0xff]
    %v1408 = vld [vmem:[#allocation8 + $0x10a8] sm:$0xff]
    %v1409 = vld [vmem:[#allocation8 + $0x10b0] sm:$0xff]
    %v1410 = vld [vmem:[#allocation8 + $0x10b8] sm:$0xff]
    %v1411 = vld [vmem:[#allocation8 + $0x10c0] sm:$0xff]
    %v1412 = vld [vmem:[#allocation8 + $0x10c8] sm:$0xff]
    %v1413 = vld [vmem:[#allocation8 + $0x10d0] sm:$0xff]
    %v1414 = vld [vmem:[#allocation8 + $0x10d8] sm:$0xff]
    %v1415 = vld [vmem:[#allocation8 + $0x10e0] sm:$0xff]
    %v1416 = vld [vmem:[#allocation8 + $0x10e8] sm:$0xff]
    %v1417 = vld [vmem:[#allocation8 + $0x10f0] sm:$0xff]
    %v1418 = vld [vmem:[#allocation8 + $0x10f8] sm:$0xff]
    %v1419 = vld [vmem:[#allocation8 + $0x1100] sm:$0xff]
    %v1420 = vld [vmem:[#allocation8 + $0x1108] sm:$0xff]
    %v1421 = vld [vmem:[#allocation8 + $0x1110] sm:$0xff]
    %v1422 = vld [vmem:[#allocation8 + $0x1118] sm:$0xff]
    %v1423 = vld [vmem:[#allocation8 + $0x1120] sm:$0xff]
    %v1424 = vld [vmem:[#allocation8 + $0x1128] sm:$0xff]
    %v1425 = vld [vmem:[#allocation8 + $0x1130] sm:$0xff]
    %v1426 = vld [vmem:[#allocation8 + $0x1138] sm:$0xff]
    %v1427 = vld [vmem:[#allocation8 + $0x1140] sm:$0xff]
    %v1428 = vld [vmem:[#allocation8 + $0x1148] sm:$0xff]
    %v1429 = vld [vmem:[#allocation8 + $0x1150] sm:$0xff]
    %v1430 = vld [vmem:[#allocation8 + $0x1158] sm:$0xff]
    %v1431 = vld [vmem:[#allocation8 + $0x1160] sm:$0xff]
    %v1432 = vld [vmem:[#allocation8 + $0x1168] sm:$0xff]
    %v1433 = vld [vmem:[#allocation8 + $0x1170] sm:$0xff]
    %v1434 = vld [vmem:[#allocation8 + $0x1178] sm:$0xff]
    %v1435 = vld [vmem:[#allocation8 + $0x1180] sm:$0xff]
    %v1436 = vld [vmem:[#allocation8 + $0x1188] sm:$0xff]
    %v1437 = vld [vmem:[#allocation8 + $0x1190] sm:$0xff]
    %v1438 = vld [vmem:[#allocation8 + $0x1198] sm:$0xff]
    %v1439 = vld [vmem:[#allocation8 + $0x11a0] sm:$0xff]
    %v1440 = vld [vmem:[#allocation8 + $0x11a8] sm:$0xff]
    %v1441 = vld [vmem:[#allocation8 + $0x11b0] sm:$0xff]
    %v1442 = vld [vmem:[#allocation8 + $0x11b8] sm:$0xff]
    %v1443 = vld [vmem:[#allocation8 + $0x11c0] sm:$0xff]
    %v1444 = vld [vmem:[#allocation8 + $0x11c8] sm:$0xff]
    %v1445 = vld [vmem:[#allocation8 + $0x11d0] sm:$0xff]
    %v1446 = vld [vmem:[#allocation8 + $0x11d8] sm:$0xff]
    %v1447 = vld [vmem:[#allocation8 + $0x11e0] sm:$0xff]
    %v1448 = vld [vmem:[#allocation8 + $0x11e8] sm:$0xff]
    %v1449 = vld [vmem:[#allocation8 + $0x11f0] sm:$0xff]
    %v1450 = vld [vmem:[#allocation8 + $0x11f8] sm:$0xff]
    %v1451 = vld [vmem:[#allocation8 + $0x1200] sm:$0xff]
    %v1452 = vld [vmem:[#allocation8 + $0x1208] sm:$0xff]
    %v1453 = vld [vmem:[#allocation8 + $0x1210] sm:$0xff]
    %v1454 = vld [vmem:[#allocation8 + $0x1218] sm:$0xff]
    %v1455 = vld [vmem:[#allocation8 + $0x1220] sm:$0xff]
    %v1456 = vld [vmem:[#allocation8 + $0x1228] sm:$0xff]
    %v1457 = vld [vmem:[#allocation8 + $0x1230] sm:$0xff]
    %v1458 = vld [vmem:[#allocation8 + $0x1238] sm:$0xff]
    %v1459 = vld [vmem:[#allocation8 + $0x1240] sm:$0xff]
    %v1460 = vld [vmem:[#allocation8 + $0x1248] sm:$0xff]
    %v1461 = vld [vmem:[#allocation8 + $0x1250] sm:$0xff]
    %v1462 = vld [vmem:[#allocation8 + $0x1258] sm:$0xff]
    %v1463 = vld [vmem:[#allocation8 + $0x1260] sm:$0xff]
    %v1464 = vld [vmem:[#allocation8 + $0x1268] sm:$0xff]
    %v1465 = vld [vmem:[#allocation8 + $0x1270] sm:$0xff]
    %v1466 = vld [vmem:[#allocation8 + $0x1278] sm:$0xff]
    %v1467 = vld [vmem:[#allocation8 + $0x1280] sm:$0xff]
    %v1468 = vld [vmem:[#allocation8 + $0x1288] sm:$0xff]
    %v1469 = vld [vmem:[#allocation8 + $0x1290] sm:$0xff]
    %v1470 = vld [vmem:[#allocation8 + $0x1298] sm:$0xff]
    %v1471 = vld [vmem:[#allocation8 + $0x12a0] sm:$0xff]
    %v1472 = vld [vmem:[#allocation8 + $0x12a8] sm:$0xff]
    %v1473 = vld [vmem:[#allocation8 + $0x12b0] sm:$0xff]
    %v1474 = vld [vmem:[#allocation8 + $0x12b8] sm:$0xff]
    %v1475 = vld [vmem:[#allocation8 + $0x12c0] sm:$0xff]
    %v1476 = vld [vmem:[#allocation8 + $0x12c8] sm:$0xff]
    %v1477 = vld [vmem:[#allocation8 + $0x12d0] sm:$0xff]
    %v1478 = vld [vmem:[#allocation8 + $0x12d8] sm:$0xff]
    %v1479 = vld [vmem:[#allocation8 + $0x12e0] sm:$0xff]
    %v1480 = vld [vmem:[#allocation8 + $0x12e8] sm:$0xff]
    %v1481 = vld [vmem:[#allocation8 + $0x12f0] sm:$0xff]
    %v1482 = vld [vmem:[#allocation8 + $0x12f8] sm:$0xff]
    %v1483 = vld [vmem:[#allocation8 + $0x1300] sm:$0xff]
    %v1484 = vld [vmem:[#allocation8 + $0x1308] sm:$0xff]
    %v1485 = vld [vmem:[#allocation8 + $0x1310] sm:$0xff]
    %v1486 = vld [vmem:[#allocation8 + $0x1318] sm:$0xff]
    %v1487 = vld [vmem:[#allocation8 + $0x1320] sm:$0xff]
    %v1488 = vld [vmem:[#allocation8 + $0x1328] sm:$0xff]
    %v1489 = vld [vmem:[#allocation8 + $0x1330] sm:$0xff]
    %v1490 = vld [vmem:[#allocation8 + $0x1338] sm:$0xff]
    %v1491 = vld [vmem:[#allocation8 + $0x1340] sm:$0xff]
    %v1492 = vld [vmem:[#allocation8 + $0x1348] sm:$0xff]
    %v1493 = vld [vmem:[#allocation8 + $0x1350] sm:$0xff]
    %v1494 = vld [vmem:[#allocation8 + $0x1358] sm:$0xff]
    %v1495 = vld [vmem:[#allocation8 + $0x1360] sm:$0xff]
    %v1496 = vld [vmem:[#allocation8 + $0x1368] sm:$0xff]
    %v1497 = vld [vmem:[#allocation8 + $0x1370] sm:$0xff]
    %v1498 = vld [vmem:[#allocation8 + $0x1378] sm:$0xff]
    %v1499 = vld [vmem:[#allocation8 + $0x1380] sm:$0xff]
    %v1500 = vld [vmem:[#allocation8 + $0x1388] sm:$0xff]
    %v1501 = vld [vmem:[#allocation8 + $0x1390] sm:$0xff]
    %v1502 = vld [vmem:[#allocation8 + $0x1398] sm:$0xff]
    %v1503 = vld [vmem:[#allocation8 + $0x13a0] sm:$0xff]
    %v1504 = vld [vmem:[#allocation8 + $0x13a8] sm:$0xff]
    %v1505 = vld [vmem:[#allocation8 + $0x13b0] sm:$0xff]
    %v1506 = vld [vmem:[#allocation8 + $0x13b8] sm:$0xff]
    %v1507 = vld [vmem:[#allocation8 + $0x13c0] sm:$0xff]
    %v1508 = vld [vmem:[#allocation8 + $0x13c8] sm:$0xff]
    %v1509 = vld [vmem:[#allocation8 + $0x13d0] sm:$0xff]
    %v1510 = vld [vmem:[#allocation8 + $0x13d8] sm:$0xff]
    %v1511 = vld [vmem:[#allocation8 + $0x13e0] sm:$0xff]
    %v1512 = vld [vmem:[#allocation8 + $0x13e8] sm:$0xff]
    %v1513 = vld [vmem:[#allocation8 + $0x13f0] sm:$0xff]
    %v1514 = vld [vmem:[#allocation8 + $0x13f8] sm:$0xff]
    %v1515 = vld [vmem:[#allocation8 + $0x1400] sm:$0xff]
    %v1516 = vld [vmem:[#allocation8 + $0x1408] sm:$0xff]
    %v1517 = vld [vmem:[#allocation8 + $0x1410] sm:$0xff]
    %v1518 = vld [vmem:[#allocation8 + $0x1418] sm:$0xff]
    %v1519 = vld [vmem:[#allocation8 + $0x1420] sm:$0xff]
    %v1520 = vld [vmem:[#allocation8 + $0x1428] sm:$0xff]
    %v1521 = vld [vmem:[#allocation8 + $0x1430] sm:$0xff]
    %v1522 = vld [vmem:[#allocation8 + $0x1438] sm:$0xff]
    %v1523 = vld [vmem:[#allocation8 + $0x1440] sm:$0xff]
    %v1524 = vld [vmem:[#allocation8 + $0x1448] sm:$0xff]
    %v1525 = vld [vmem:[#allocation8 + $0x1450] sm:$0xff]
    %v1526 = vld [vmem:[#allocation8 + $0x1458] sm:$0xff]
    %v1527 = vld [vmem:[#allocation8 + $0x1460] sm:$0xff]
    %v1528 = vld [vmem:[#allocation8 + $0x1468] sm:$0xff]
    %v1529 = vld [vmem:[#allocation8 + $0x1470] sm:$0xff]
    %v1530 = vld [vmem:[#allocation8 + $0x1478] sm:$0xff]
    %v1531 = vld [vmem:[#allocation8 + $0x1480] sm:$0xff]
    %v1532 = vld [vmem:[#allocation8 + $0x1488] sm:$0xff]
    %v1533 = vld [vmem:[#allocation8 + $0x1490] sm:$0xff]
    %v1534 = vld [vmem:[#allocation8 + $0x1498] sm:$0xff]
    %v1535 = vld [vmem:[#allocation8 + $0x14a0] sm:$0xff]
    %v1536 = vld [vmem:[#allocation8 + $0x14a8] sm:$0xff]
    %v1537 = vld [vmem:[#allocation8 + $0x14b0] sm:$0xff]
    %v1538 = vld [vmem:[#allocation8 + $0x14b8] sm:$0xff]
    %v1539 = vld [vmem:[#allocation8 + $0x14c0] sm:$0xff]
    %v1540 = vld [vmem:[#allocation8 + $0x14c8] sm:$0xff]
    %v1541 = vld [vmem:[#allocation8 + $0x14d0] sm:$0xff]
    %v1542 = vld [vmem:[#allocation8 + $0x14d8] sm:$0xff]
    %v1543 = vld [vmem:[#allocation8 + $0x14e0] sm:$0xff]
    %v1544 = vld [vmem:[#allocation8 + $0x14e8] sm:$0xff]
    %v1545 = vld [vmem:[#allocation8 + $0x14f0] sm:$0xff]
    %v1546 = vld [vmem:[#allocation8 + $0x14f8] sm:$0xff]
    %v1547 = vld [vmem:[#allocation8 + $0x1500] sm:$0xff]
    %v1548 = vld [vmem:[#allocation8 + $0x1508] sm:$0xff]
    %v1549 = vld [vmem:[#allocation8 + $0x1510] sm:$0xff]
    %v1550 = vld [vmem:[#allocation8 + $0x1518] sm:$0xff]
    %v1551 = vld [vmem:[#allocation8 + $0x1520] sm:$0xff]
    %v1552 = vld [vmem:[#allocation8 + $0x1528] sm:$0xff]
    %v1553 = vld [vmem:[#allocation8 + $0x1530] sm:$0xff]
    %v1554 = vld [vmem:[#allocation8 + $0x1538] sm:$0xff]
    %v1555 = vld [vmem:[#allocation8 + $0x1540] sm:$0xff]
    %v1556 = vld [vmem:[#allocation8 + $0x1548] sm:$0xff]
    %v1557 = vld [vmem:[#allocation8 + $0x1550] sm:$0xff]
    %v1558 = vld [vmem:[#allocation8 + $0x1558] sm:$0xff]
    %v1559 = vld [vmem:[#allocation8 + $0x1560] sm:$0xff]
    %v1560 = vld [vmem:[#allocation8 + $0x1568] sm:$0xff]
    %v1561 = vld [vmem:[#allocation8 + $0x1570] sm:$0xff]
    %v1562 = vld [vmem:[#allocation8 + $0x1578] sm:$0xff]
    %v1563 = vld [vmem:[#allocation8 + $0x1580] sm:$0xff]
    %v1564 = vld [vmem:[#allocation8 + $0x1588] sm:$0xff]
    %v1565 = vld [vmem:[#allocation8 + $0x1590] sm:$0xff]
    %v1566 = vld [vmem:[#allocation8 + $0x1598] sm:$0xff]
    %v1567 = vld [vmem:[#allocation8 + $0x15a0] sm:$0xff]
    %v1568 = vld [vmem:[#allocation8 + $0x15a8] sm:$0xff]
    %v1569 = vld [vmem:[#allocation8 + $0x15b0] sm:$0xff]
    %v1570 = vld [vmem:[#allocation8 + $0x15b8] sm:$0xff]
    %v1571 = vld [vmem:[#allocation8 + $0x15c0] sm:$0xff]
    %v1572 = vld [vmem:[#allocation8 + $0x15c8] sm:$0xff]
    %v1573 = vld [vmem:[#allocation8 + $0x15d0] sm:$0xff]
    %v1574 = vld [vmem:[#allocation8 + $0x15d8] sm:$0xff]
    %v1575 = vld [vmem:[#allocation8 + $0x15e0] sm:$0xff]
    %v1576 = vld [vmem:[#allocation8 + $0x15e8] sm:$0xff]
    %v1577 = vld [vmem:[#allocation8 + $0x15f0] sm:$0xff]
    %v1578 = vld [vmem:[#allocation8 + $0x15f8] sm:$0xff]
    %v1579 = vld [vmem:[#allocation8 + $0x1600] sm:$0xff]
    %v1580 = vld [vmem:[#allocation8 + $0x1608] sm:$0xff]
    %v1581 = vld [vmem:[#allocation8 + $0x1610] sm:$0xff]
    %v1582 = vld [vmem:[#allocation8 + $0x1618] sm:$0xff]
    %v1583 = vld [vmem:[#allocation8 + $0x1620] sm:$0xff]
    %v1584 = vld [vmem:[#allocation8 + $0x1628] sm:$0xff]
    %v1585 = vld [vmem:[#allocation8 + $0x1630] sm:$0xff]
    %v1586 = vld [vmem:[#allocation8 + $0x1638] sm:$0xff]
    %v1587 = vld [vmem:[#allocation8 + $0x1640] sm:$0xff]
    %v1588 = vld [vmem:[#allocation8 + $0x1648] sm:$0xff]
    %v1589 = vld [vmem:[#allocation8 + $0x1650] sm:$0xff]
    %v1590 = vld [vmem:[#allocation8 + $0x1658] sm:$0xff]
    %v1591 = vld [vmem:[#allocation8 + $0x1660] sm:$0xff]
    %v1592 = vld [vmem:[#allocation8 + $0x1668] sm:$0xff]
    %v1593 = vld [vmem:[#allocation8 + $0x1670] sm:$0xff]
    %v1594 = vld [vmem:[#allocation8 + $0x1678] sm:$0xff]
    %v1595 = vld [vmem:[#allocation8 + $0x1680] sm:$0xff]
    %v1596 = vld [vmem:[#allocation8 + $0x1688] sm:$0xff]
    %v1597 = vld [vmem:[#allocation8 + $0x1690] sm:$0xff]
    %v1598 = vld [vmem:[#allocation8 + $0x1698] sm:$0xff]
    %v1599 = vld [vmem:[#allocation8 + $0x16a0] sm:$0xff]
    %v1600 = vld [vmem:[#allocation8 + $0x16a8] sm:$0xff]
    %v1601 = vld [vmem:[#allocation8 + $0x16b0] sm:$0xff]
    %v1602 = vld [vmem:[#allocation8 + $0x16b8] sm:$0xff]
    %v1603 = vld [vmem:[#allocation8 + $0x16c0] sm:$0xff]
    %v1604 = vld [vmem:[#allocation8 + $0x16c8] sm:$0xff]
    %v1605 = vld [vmem:[#allocation8 + $0x16d0] sm:$0xff]
    %v1606 = vld [vmem:[#allocation8 + $0x16d8] sm:$0xff]
    %v1607 = vld [vmem:[#allocation8 + $0x16e0] sm:$0xff]
    %v1608 = vld [vmem:[#allocation8 + $0x16e8] sm:$0xff]
    %v1609 = vld [vmem:[#allocation8 + $0x16f0] sm:$0xff]
    %v1610 = vld [vmem:[#allocation8 + $0x16f8] sm:$0xff]
    %v1611 = vld [vmem:[#allocation8 + $0x1700] sm:$0xff]
    %v1612 = vld [vmem:[#allocation8 + $0x1708] sm:$0xff]
    %v1613 = vld [vmem:[#allocation8 + $0x1710] sm:$0xff]
    %v1614 = vld [vmem:[#allocation8 + $0x1718] sm:$0xff]
    %v1615 = vld [vmem:[#allocation8 + $0x1720] sm:$0xff]
    %v1616 = vld [vmem:[#allocation8 + $0x1728] sm:$0xff]
    %v1617 = vld [vmem:[#allocation8 + $0x1730] sm:$0xff]
    %v1618 = vld [vmem:[#allocation8 + $0x1738] sm:$0xff]
    %v1619 = vld [vmem:[#allocation8 + $0x1740] sm:$0xff]
    %v1620 = vld [vmem:[#allocation8 + $0x1748] sm:$0xff]
    %v1621 = vld [vmem:[#allocation8 + $0x1750] sm:$0xff]
    %v1622 = vld [vmem:[#allocation8 + $0x1758] sm:$0xff]
    %v1623 = vld [vmem:[#allocation8 + $0x1760] sm:$0xff]
    %v1624 = vld [vmem:[#allocation8 + $0x1768] sm:$0xff]
    %v1625 = vld [vmem:[#allocation8 + $0x1770] sm:$0xff]
    %v1626 = vld [vmem:[#allocation8 + $0x1778] sm:$0xff]
    %v1627 = vld [vmem:[#allocation8 + $0x1780] sm:$0xff]
    %v1628 = vld [vmem:[#allocation8 + $0x1788] sm:$0xff]
    %v1629 = vld [vmem:[#allocation8 + $0x1790] sm:$0xff]
    %v1630 = vld [vmem:[#allocation8 + $0x1798] sm:$0xff]
    %v1631 = vld [vmem:[#allocation8 + $0x17a0] sm:$0xff]
    %v1632 = vld [vmem:[#allocation8 + $0x17a8] sm:$0xff]
    %v1633 = vld [vmem:[#allocation8 + $0x17b0] sm:$0xff]
    %v1634 = vld [vmem:[#allocation8 + $0x17b8] sm:$0xff]
    %v1635 = vld [vmem:[#allocation8 + $0x17c0] sm:$0xff]
    %v1636 = vld [vmem:[#allocation8 + $0x17c8] sm:$0xff]
    %v1637 = vld [vmem:[#allocation8 + $0x17d0] sm:$0xff]
    %v1638 = vld [vmem:[#allocation8 + $0x17d8] sm:$0xff]
    %v1639 = vld [vmem:[#allocation8 + $0x17e0] sm:$0xff]
    %v1640 = vld [vmem:[#allocation8 + $0x17e8] sm:$0xff]
    %v1641 = vld [vmem:[#allocation8 + $0x17f0] sm:$0xff]
    %v1642 = vld [vmem:[#allocation8 + $0x17f8] sm:$0xff]
    %v1643 = vld [vmem:[#allocation8 + $0x1800] sm:$0xff]
    %v1644 = vld [vmem:[#allocation8 + $0x1808] sm:$0xff]
    %v1645 = vld [vmem:[#allocation8 + $0x1810] sm:$0xff]
    %v1646 = vld [vmem:[#allocation8 + $0x1818] sm:$0xff]
    %v1647 = vld [vmem:[#allocation8 + $0x1820] sm:$0xff]
    %v1648 = vld [vmem:[#allocation8 + $0x1828] sm:$0xff]
    %v1649 = vld [vmem:[#allocation8 + $0x1830] sm:$0xff]
    %v1650 = vld [vmem:[#allocation8 + $0x1838] sm:$0xff]
    %v1651 = vld [vmem:[#allocation8 + $0x1840] sm:$0xff]
    %v1652 = vld [vmem:[#allocation8 + $0x1848] sm:$0xff]
    %v1653 = vld [vmem:[#allocation8 + $0x1850] sm:$0xff]
    %v1654 = vld [vmem:[#allocation8 + $0x1858] sm:$0xff]
    %v1655 = vld [vmem:[#allocation8 + $0x1860] sm:$0xff]
    %v1656 = vld [vmem:[#allocation8 + $0x1868] sm:$0xff]
    %v1657 = vld [vmem:[#allocation8 + $0x1870] sm:$0xff]
    %v1658 = vld [vmem:[#allocation8 + $0x1878] sm:$0xff]
    %v1659 = vld [vmem:[#allocation8 + $0x1880] sm:$0xff]
    %v1660 = vld [vmem:[#allocation8 + $0x1888] sm:$0xff]
    %v1661 = vld [vmem:[#allocation8 + $0x1890] sm:$0xff]
    %v1662 = vld [vmem:[#allocation8 + $0x1898] sm:$0xff]
    %v1663 = vld [vmem:[#allocation8 + $0x18a0] sm:$0xff]
    %v1664 = vld [vmem:[#allocation8 + $0x18a8] sm:$0xff]
    %v1665 = vld [vmem:[#allocation8 + $0x18b0] sm:$0xff]
    %v1666 = vld [vmem:[#allocation8 + $0x18b8] sm:$0xff]
    %v1667 = vld [vmem:[#allocation8 + $0x18c0] sm:$0xff]
    %v1668 = vld [vmem:[#allocation8 + $0x18c8] sm:$0xff]
    %v1669 = vld [vmem:[#allocation8 + $0x18d0] sm:$0xff]
    %v1670 = vld [vmem:[#allocation8 + $0x18d8] sm:$0xff]
    %v1671 = vld [vmem:[#allocation8 + $0x18e0] sm:$0xff]
    %v1672 = vld [vmem:[#allocation8 + $0x18e8] sm:$0xff]
    %v1673 = vld [vmem:[#allocation8 + $0x18f0] sm:$0xff]
    %v1674 = vld [vmem:[#allocation8 + $0x18f8] sm:$0xff]
    %v1675 = vld [vmem:[#allocation10] sm:$0xff]
    %v1676 = vld [vmem:[#allocation10 + $0x8] sm:$0x3]
    %v1679 = vlaneseq
    %v1680 = vshrl.u32 %v1679, 7
    %v1681 = vsub.s32 0, %v1680
    %v1682 = vrot.slane %v1675, %v1681
    %v1683 = vlaneseq
    %v1684 = vshrl.u32 %v1683, 7
    %v1685 = vsub.s32 1, %v1684
    %v1686 = vrot.slane %v1675, %v1685
    %v1687 = vlaneseq
    %v1688 = vshrl.u32 %v1687, 7
    %v1689 = vsub.s32 2, %v1688
    %v1690 = vrot.slane %v1675, %v1689
    %v1691 = vlaneseq
    %v1692 = vshrl.u32 %v1691, 7
    %v1693 = vsub.s32 3, %v1692
    %v1694 = vrot.slane %v1675, %v1693
    %v1695 = vlaneseq
    %v1696 = vshrl.u32 %v1695, 7
    %v1697 = vsub.s32 4, %v1696
    %v1698 = vrot.slane %v1675, %v1697
    %v1699 = vlaneseq
    %v1700 = vshrl.u32 %v1699, 7
    %v1701 = vsub.s32 5, %v1700
    %v1702 = vrot.slane %v1675, %v1701
    %v1703 = vlaneseq
    %v1704 = vshrl.u32 %v1703, 7
    %v1705 = vsub.s32 6, %v1704
    %v1706 = vrot.slane %v1675, %v1705
    %v1707 = vlaneseq
    %v1708 = vshrl.u32 %v1707, 7
    %v1709 = vsub.s32 7, %v1708
    %v1710 = vrot.slane %v1675, %v1709
    %v1711 = vlaneseq
    %v1712 = vshrl.u32 %v1711, 7
    %v1713 = vsub.s32 0, %v1712
    %v1714 = vrot.slane %v1676, %v1713
    %v1715 = vlaneseq
    %v1716 = vshrl.u32 %v1715, 7
    %v1717 = vsub.s32 1, %v1716
    %v1718 = vrot.slane %v1676, %v1717
    %v2529 = vunpack.c.l.b16 %v875
    %v2530 = vunpack.c.h.b16 %v875
    %v2531 = vunpack.c.l.b16 %v876
    %v2532 = vunpack.c.h.b16 %v876
    %v2533 = vunpack.c.l.b16 %v877
    %v2534 = vunpack.c.h.b16 %v877
    %v2535 = vunpack.c.l.b16 %v878
    %v2536 = vunpack.c.h.b16 %v878
    %v2537 = vunpack.c.l.b16 %v879
    %v2538 = vunpack.c.h.b16 %v879
    %v2539 = vunpack.c.l.b16 %v880
    %v2540 = vunpack.c.h.b16 %v880
    %v2541 = vunpack.c.l.b16 %v881
    %v2542 = vunpack.c.h.b16 %v881
    %v2543 = vunpack.c.l.b16 %v882
    %v2544 = vunpack.c.h.b16 %v882
    %v2545 = vunpack.c.l.b16 %v883
    %v2546 = vunpack.c.h.b16 %v883
    %v2547 = vunpack.c.l.b16 %v884
    %v2548 = vunpack.c.h.b16 %v884
    %v2549 = vunpack.c.l.b16 %v885
    %v2550 = vunpack.c.h.b16 %v885
    %v2551 = vunpack.c.l.b16 %v886
    %v2552 = vunpack.c.h.b16 %v886
    %v2553 = vunpack.c.l.b16 %v887
    %v2554 = vunpack.c.h.b16 %v887
    %v2555 = vunpack.c.l.b16 %v888
    %v2556 = vunpack.c.h.b16 %v888
    %v2557 = vunpack.c.l.b16 %v889
    %v2558 = vunpack.c.h.b16 %v889
    %v2559 = vunpack.c.l.b16 %v890
    %v2560 = vunpack.c.h.b16 %v890
    %v2561 = vunpack.c.l.b16 %v891
    %v2562 = vunpack.c.h.b16 %v891
    %v2563 = vunpack.c.l.b16 %v892
    %v2564 = vunpack.c.h.b16 %v892
    %v2565 = vunpack.c.l.b16 %v893
    %v2566 = vunpack.c.h.b16 %v893
    %v2567 = vunpack.c.l.b16 %v894
    %v2568 = vunpack.c.h.b16 %v894
    %v2569 = vunpack.c.l.b16 %v895
    %v2570 = vunpack.c.h.b16 %v895
    %v2571 = vunpack.c.l.b16 %v896
    %v2572 = vunpack.c.h.b16 %v896
    %v2573 = vunpack.c.l.b16 %v897
    %v2574 = vunpack.c.h.b16 %v897
    %v2575 = vunpack.c.l.b16 %v898
    %v2576 = vunpack.c.h.b16 %v898
    %v2577 = vunpack.c.l.b16 %v899
    %v2578 = vunpack.c.h.b16 %v899
    %v2579 = vunpack.c.l.b16 %v900
    %v2580 = vunpack.c.h.b16 %v900
    %v2581 = vunpack.c.l.b16 %v901
    %v2582 = vunpack.c.h.b16 %v901
    %v2583 = vunpack.c.l.b16 %v902
    %v2584 = vunpack.c.h.b16 %v902
    %v2585 = vunpack.c.l.b16 %v903
    %v2586 = vunpack.c.h.b16 %v903
    %v2587 = vunpack.c.l.b16 %v904
    %v2588 = vunpack.c.h.b16 %v904
    %v2589 = vunpack.c.l.b16 %v905
    %v2590 = vunpack.c.h.b16 %v905
    %v2591 = vunpack.c.l.b16 %v906
    %v2592 = vunpack.c.h.b16 %v906
    %v2593 = vunpack.c.l.b16 %v907
    %v2594 = vunpack.c.h.b16 %v907
    %v2595 = vunpack.c.l.b16 %v908
    %v2596 = vunpack.c.h.b16 %v908
    %v2597 = vunpack.c.l.b16 %v909
    %v2598 = vunpack.c.h.b16 %v909
    %v2599 = vunpack.c.l.b16 %v910
    %v2600 = vunpack.c.h.b16 %v910
    %v2601 = vunpack.c.l.b16 %v911
    %v2602 = vunpack.c.h.b16 %v911
    %v2603 = vunpack.c.l.b16 %v912
    %v2604 = vunpack.c.h.b16 %v912
    %v2605 = vunpack.c.l.b16 %v913
    %v2606 = vunpack.c.h.b16 %v913
    %v2607 = vunpack.c.l.b16 %v914
    %v2608 = vunpack.c.h.b16 %v914
    %v2609 = vunpack.c.l.b16 %v915
    %v2610 = vunpack.c.h.b16 %v915
    %v2611 = vunpack.c.l.b16 %v916
    %v2612 = vunpack.c.h.b16 %v916
    %v2613 = vunpack.c.l.b16 %v917
    %v2614 = vunpack.c.h.b16 %v917
    %v2615 = vunpack.c.l.b16 %v918
    %v2616 = vunpack.c.h.b16 %v918
    %v2617 = vunpack.c.l.b16 %v919
    %v2618 = vunpack.c.h.b16 %v919
    %v2619 = vunpack.c.l.b16 %v920
    %v2620 = vunpack.c.h.b16 %v920
    %v2621 = vunpack.c.l.b16 %v921
    %v2622 = vunpack.c.h.b16 %v921
    %v2623 = vunpack.c.l.b16 %v922
    %v2624 = vunpack.c.h.b16 %v922
    %v2625 = vunpack.c.l.b16 %v923
    %v2626 = vunpack.c.h.b16 %v923
    %v2627 = vunpack.c.l.b16 %v924
    %v2628 = vunpack.c.h.b16 %v924
    %v2629 = vunpack.c.l.b16 %v925
    %v2630 = vunpack.c.h.b16 %v925
    %v2631 = vunpack.c.l.b16 %v926
    %v2632 = vunpack.c.h.b16 %v926
    %v2633 = vunpack.c.l.b16 %v927
    %v2634 = vunpack.c.h.b16 %v927
    %v2635 = vunpack.c.l.b16 %v928
    %v2636 = vunpack.c.h.b16 %v928
    %v2637 = vunpack.c.l.b16 %v929
    %v2638 = vunpack.c.h.b16 %v929
    %v2639 = vunpack.c.l.b16 %v930
    %v2640 = vunpack.c.h.b16 %v930
    %v2641 = vunpack.c.l.b16 %v931
    %v2642 = vunpack.c.h.b16 %v931
    %v2643 = vunpack.c.l.b16 %v932
    %v2644 = vunpack.c.h.b16 %v932
    %v2645 = vunpack.c.l.b16 %v933
    %v2646 = vunpack.c.h.b16 %v933
    %v2647 = vunpack.c.l.b16 %v934
    %v2648 = vunpack.c.h.b16 %v934
    %v2649 = vunpack.c.l.b16 %v935
    %v2650 = vunpack.c.h.b16 %v935
    %v2651 = vunpack.c.l.b16 %v936
    %v2652 = vunpack.c.h.b16 %v936
    %v2653 = vunpack.c.l.b16 %v937
    %v2654 = vunpack.c.h.b16 %v937
    %v2655 = vunpack.c.l.b16 %v938
    %v2656 = vunpack.c.h.b16 %v938
    %v2657 = vunpack.c.l.b16 %v939
    %v2658 = vunpack.c.h.b16 %v939
    %v2659 = vunpack.c.l.b16 %v940
    %v2660 = vunpack.c.h.b16 %v940
    %v2661 = vunpack.c.l.b16 %v941
    %v2662 = vunpack.c.h.b16 %v941
    %v2663 = vunpack.c.l.b16 %v942
    %v2664 = vunpack.c.h.b16 %v942
    %v2665 = vunpack.c.l.b16 %v943
    %v2666 = vunpack.c.h.b16 %v943
    %v2667 = vunpack.c.l.b16 %v944
    %v2668 = vunpack.c.h.b16 %v944
    %v2669 = vunpack.c.l.b16 %v945
    %v2670 = vunpack.c.h.b16 %v945
    %v2671 = vunpack.c.l.b16 %v946
    %v2672 = vunpack.c.h.b16 %v946
    %v2673 = vunpack.c.l.b16 %v947
    %v2674 = vunpack.c.h.b16 %v947
    %v2675 = vunpack.c.l.b16 %v948
    %v2676 = vunpack.c.h.b16 %v948
    %v2677 = vunpack.c.l.b16 %v949
    %v2678 = vunpack.c.h.b16 %v949
    %v2679 = vunpack.c.l.b16 %v950
    %v2680 = vunpack.c.h.b16 %v950
    %v2681 = vunpack.c.l.b16 %v951
    %v2682 = vunpack.c.h.b16 %v951
    %v2683 = vunpack.c.l.b16 %v952
    %v2684 = vunpack.c.h.b16 %v952
    %v2685 = vunpack.c.l.b16 %v953
    %v2686 = vunpack.c.h.b16 %v953
    %v2687 = vunpack.c.l.b16 %v954
    %v2688 = vunpack.c.h.b16 %v954
    %v2689 = vunpack.c.l.b16 %v955
    %v2690 = vunpack.c.h.b16 %v955
    %v2691 = vunpack.c.l.b16 %v956
    %v2692 = vunpack.c.h.b16 %v956
    %v2693 = vunpack.c.l.b16 %v957
    %v2694 = vunpack.c.h.b16 %v957
    %v2695 = vunpack.c.l.b16 %v958
    %v2696 = vunpack.c.h.b16 %v958
    %v2697 = vunpack.c.l.b16 %v959
    %v2698 = vunpack.c.h.b16 %v959
    %v2699 = vunpack.c.l.b16 %v960
    %v2700 = vunpack.c.h.b16 %v960
    %v2701 = vunpack.c.l.b16 %v961
    %v2702 = vunpack.c.h.b16 %v961
    %v2703 = vunpack.c.l.b16 %v962
    %v2704 = vunpack.c.h.b16 %v962
    %v2705 = vunpack.c.l.b16 %v963
    %v2706 = vunpack.c.h.b16 %v963
    %v2707 = vunpack.c.l.b16 %v964
    %v2708 = vunpack.c.h.b16 %v964
    %v2709 = vunpack.c.l.b16 %v965
    %v2710 = vunpack.c.h.b16 %v965
    %v2711 = vunpack.c.l.b16 %v966
    %v2712 = vunpack.c.h.b16 %v966
    %v2713 = vunpack.c.l.b16 %v967
    %v2714 = vunpack.c.h.b16 %v967
    %v2715 = vunpack.c.l.b16 %v968
    %v2716 = vunpack.c.h.b16 %v968
    %v2717 = vunpack.c.l.b16 %v969
    %v2718 = vunpack.c.h.b16 %v969
    %v2719 = vunpack.c.l.b16 %v970
    %v2720 = vunpack.c.h.b16 %v970
    %v2721 = vunpack.c.l.b16 %v971
    %v2722 = vunpack.c.h.b16 %v971
    %v2723 = vunpack.c.l.b16 %v972
    %v2724 = vunpack.c.h.b16 %v972
    %v2725 = vunpack.c.l.b16 %v973
    %v2726 = vunpack.c.h.b16 %v973
    %v2727 = vunpack.c.l.b16 %v974
    %v2728 = vunpack.c.h.b16 %v974
    %v2729 = vunpack.c.l.b16 %v975
    %v2730 = vunpack.c.h.b16 %v975
    %v2731 = vunpack.c.l.b16 %v976
    %v2732 = vunpack.c.h.b16 %v976
    %v2733 = vunpack.c.l.b16 %v977
    %v2734 = vunpack.c.h.b16 %v977
    %v2735 = vunpack.c.l.b16 %v978
    %v2736 = vunpack.c.h.b16 %v978
    %v2737 = vunpack.c.l.b16 %v979
    %v2738 = vunpack.c.h.b16 %v979
    %v2739 = vunpack.c.l.b16 %v980
    %v2740 = vunpack.c.h.b16 %v980
    %v2741 = vunpack.c.l.b16 %v981
    %v2742 = vunpack.c.h.b16 %v981
    %v2743 = vunpack.c.l.b16 %v982
    %v2744 = vunpack.c.h.b16 %v982
    %v2745 = vunpack.c.l.b16 %v983
    %v2746 = vunpack.c.h.b16 %v983
    %v2747 = vunpack.c.l.b16 %v984
    %v2748 = vunpack.c.h.b16 %v984
    %v2749 = vunpack.c.l.b16 %v985
    %v2750 = vunpack.c.h.b16 %v985
    %v2751 = vunpack.c.l.b16 %v986
    %v2752 = vunpack.c.h.b16 %v986
    %v2753 = vunpack.c.l.b16 %v987
    %v2754 = vunpack.c.h.b16 %v987
    %v2755 = vunpack.c.l.b16 %v988
    %v2756 = vunpack.c.h.b16 %v988
    %v2757 = vunpack.c.l.b16 %v989
    %v2758 = vunpack.c.h.b16 %v989
    %v2759 = vunpack.c.l.b16 %v990
    %v2760 = vunpack.c.h.b16 %v990
    %v2761 = vunpack.c.l.b16 %v991
    %v2762 = vunpack.c.h.b16 %v991
    %v2763 = vunpack.c.l.b16 %v992
    %v2764 = vunpack.c.h.b16 %v992
    %v2765 = vunpack.c.l.b16 %v993
    %v2766 = vunpack.c.h.b16 %v993
    %v2767 = vunpack.c.l.b16 %v994
    %v2768 = vunpack.c.h.b16 %v994
    %v2769 = vunpack.c.l.b16 %v995
    %v2770 = vunpack.c.h.b16 %v995
    %v2771 = vunpack.c.l.b16 %v996
    %v2772 = vunpack.c.h.b16 %v996
    %v2773 = vunpack.c.l.b16 %v997
    %v2774 = vunpack.c.h.b16 %v997
    %v2775 = vunpack.c.l.b16 %v998
    %v2776 = vunpack.c.h.b16 %v998
    %v2777 = vunpack.c.l.b16 %v999
    %v2778 = vunpack.c.h.b16 %v999
    %v2779 = vunpack.c.l.b16 %v1000
    %v2780 = vunpack.c.h.b16 %v1000
    %v2781 = vunpack.c.l.b16 %v1001
    %v2782 = vunpack.c.h.b16 %v1001
    %v2783 = vunpack.c.l.b16 %v1002
    %v2784 = vunpack.c.h.b16 %v1002
    %v2785 = vunpack.c.l.b16 %v1003
    %v2786 = vunpack.c.h.b16 %v1003
    %v2787 = vunpack.c.l.b16 %v1004
    %v2788 = vunpack.c.h.b16 %v1004
    %v2789 = vunpack.c.l.b16 %v1005
    %v2790 = vunpack.c.h.b16 %v1005
    %v2791 = vunpack.c.l.b16 %v1006
    %v2792 = vunpack.c.h.b16 %v1006
    %v2793 = vunpack.c.l.b16 %v1007
    %v2794 = vunpack.c.h.b16 %v1007
    %v2795 = vunpack.c.l.b16 %v1008
    %v2796 = vunpack.c.h.b16 %v1008
    %v2797 = vunpack.c.l.b16 %v1009
    %v2798 = vunpack.c.h.b16 %v1009
    %v2799 = vunpack.c.l.b16 %v1010
    %v2800 = vunpack.c.h.b16 %v1010
    %v2801 = vunpack.c.l.b16 %v1011
    %v2802 = vunpack.c.h.b16 %v1011
    %v2803 = vunpack.c.l.b16 %v1012
    %v2804 = vunpack.c.h.b16 %v1012
    %v2805 = vunpack.c.l.b16 %v1013
    %v2806 = vunpack.c.h.b16 %v1013
    %v2807 = vunpack.c.l.b16 %v1014
    %v2808 = vunpack.c.h.b16 %v1014
    %v2809 = vunpack.c.l.b16 %v1015
    %v2810 = vunpack.c.h.b16 %v1015
    %v2811 = vunpack.c.l.b16 %v1016
    %v2812 = vunpack.c.h.b16 %v1016
    %v2813 = vunpack.c.l.b16 %v1017
    %v2814 = vunpack.c.h.b16 %v1017
    %v2815 = vunpack.c.l.b16 %v1018
    %v2816 = vunpack.c.h.b16 %v1018
    %v2817 = vunpack.c.l.b16 %v1019
    %v2818 = vunpack.c.h.b16 %v1019
    %v2819 = vunpack.c.l.b16 %v1020
    %v2820 = vunpack.c.h.b16 %v1020
    %v2821 = vunpack.c.l.b16 %v1021
    %v2822 = vunpack.c.h.b16 %v1021
    %v2823 = vunpack.c.l.b16 %v1022
    %v2824 = vunpack.c.h.b16 %v1022
    %v2825 = vunpack.c.l.b16 %v1023
    %v2826 = vunpack.c.h.b16 %v1023
    %v2827 = vunpack.c.l.b16 %v1024
    %v2828 = vunpack.c.h.b16 %v1024
    %v2829 = vunpack.c.l.b16 %v1025
    %v2830 = vunpack.c.h.b16 %v1025
    %v2831 = vunpack.c.l.b16 %v1026
    %v2832 = vunpack.c.h.b16 %v1026
    %v2833 = vunpack.c.l.b16 %v1027
    %v2834 = vunpack.c.h.b16 %v1027
    %v2835 = vunpack.c.l.b16 %v1028
    %v2836 = vunpack.c.h.b16 %v1028
    %v2837 = vunpack.c.l.b16 %v1029
    %v2838 = vunpack.c.h.b16 %v1029
    %v2839 = vunpack.c.l.b16 %v1030
    %v2840 = vunpack.c.h.b16 %v1030
    %v2841 = vunpack.c.l.b16 %v1031
    %v2842 = vunpack.c.h.b16 %v1031
    %v2843 = vunpack.c.l.b16 %v1032
    %v2844 = vunpack.c.h.b16 %v1032
    %v2845 = vunpack.c.l.b16 %v1033
    %v2846 = vunpack.c.h.b16 %v1033
    %v2847 = vunpack.c.l.b16 %v1034
    %v2848 = vunpack.c.h.b16 %v1034
    %v2849 = vunpack.c.l.b16 %v1035
    %v2850 = vunpack.c.h.b16 %v1035
    %v2851 = vunpack.c.l.b16 %v1036
    %v2852 = vunpack.c.h.b16 %v1036
    %v2853 = vunpack.c.l.b16 %v1037
    %v2854 = vunpack.c.h.b16 %v1037
    %v2855 = vunpack.c.l.b16 %v1038
    %v2856 = vunpack.c.h.b16 %v1038
    %v2857 = vunpack.c.l.b16 %v1039
    %v2858 = vunpack.c.h.b16 %v1039
    %v2859 = vunpack.c.l.b16 %v1040
    %v2860 = vunpack.c.h.b16 %v1040
    %v2861 = vunpack.c.l.b16 %v1041
    %v2862 = vunpack.c.h.b16 %v1041
    %v2863 = vunpack.c.l.b16 %v1042
    %v2864 = vunpack.c.h.b16 %v1042
    %v2865 = vunpack.c.l.b16 %v1043
    %v2866 = vunpack.c.h.b16 %v1043
    %v2867 = vunpack.c.l.b16 %v1044
    %v2868 = vunpack.c.h.b16 %v1044
    %v2869 = vunpack.c.l.b16 %v1045
    %v2870 = vunpack.c.h.b16 %v1045
    %v2871 = vunpack.c.l.b16 %v1046
    %v2872 = vunpack.c.h.b16 %v1046
    %v2873 = vunpack.c.l.b16 %v1047
    %v2874 = vunpack.c.h.b16 %v1047
    %v2875 = vunpack.c.l.b16 %v1048
    %v2876 = vunpack.c.h.b16 %v1048
    %v2877 = vunpack.c.l.b16 %v1049
    %v2878 = vunpack.c.h.b16 %v1049
    %v2879 = vunpack.c.l.b16 %v1050
    %v2880 = vunpack.c.h.b16 %v1050
    %v2881 = vunpack.c.l.b16 %v1051
    %v2882 = vunpack.c.h.b16 %v1051
    %v2883 = vunpack.c.l.b16 %v1052
    %v2884 = vunpack.c.h.b16 %v1052
    %v2885 = vunpack.c.l.b16 %v1053
    %v2886 = vunpack.c.h.b16 %v1053
    %v2887 = vunpack.c.l.b16 %v1054
    %v2888 = vunpack.c.h.b16 %v1054
    %v2889 = vunpack.c.l.b16 %v1055
    %v2890 = vunpack.c.h.b16 %v1055
    %v2891 = vunpack.c.l.b16 %v1056
    %v2892 = vunpack.c.h.b16 %v1056
    %v2893 = vunpack.c.l.b16 %v1057
    %v2894 = vunpack.c.h.b16 %v1057
    %v2895 = vunpack.c.l.b16 %v1058
    %v2896 = vunpack.c.h.b16 %v1058
    %v2897 = vunpack.c.l.b16 %v1059
    %v2898 = vunpack.c.h.b16 %v1059
    %v2899 = vunpack.c.l.b16 %v1060
    %v2900 = vunpack.c.h.b16 %v1060
    %v2901 = vunpack.c.l.b16 %v1061
    %v2902 = vunpack.c.h.b16 %v1061
    %v2903 = vunpack.c.l.b16 %v1062
    %v2904 = vunpack.c.h.b16 %v1062
    %v2905 = vunpack.c.l.b16 %v1063
    %v2906 = vunpack.c.h.b16 %v1063
    %v2907 = vunpack.c.l.b16 %v1064
    %v2908 = vunpack.c.h.b16 %v1064
    %v2909 = vunpack.c.l.b16 %v1065
    %v2910 = vunpack.c.h.b16 %v1065
    %v2911 = vunpack.c.l.b16 %v1066
    %v2912 = vunpack.c.h.b16 %v1066
    %v2913 = vunpack.c.l.b16 %v1067
    %v2914 = vunpack.c.h.b16 %v1067
    %v2915 = vunpack.c.l.b16 %v1068
    %v2916 = vunpack.c.h.b16 %v1068
    %v2917 = vunpack.c.l.b16 %v1069
    %v2918 = vunpack.c.h.b16 %v1069
    %v2919 = vunpack.c.l.b16 %v1070
    %v2920 = vunpack.c.h.b16 %v1070
    %v2921 = vunpack.c.l.b16 %v1071
    %v2922 = vunpack.c.h.b16 %v1071
    %v2923 = vunpack.c.l.b16 %v1072
    %v2924 = vunpack.c.h.b16 %v1072
    %v2925 = vunpack.c.l.b16 %v1073
    %v2926 = vunpack.c.h.b16 %v1073
    %v2927 = vunpack.c.l.b16 %v1074
    %v2928 = vunpack.c.h.b16 %v1074
    %v2929 = vunpack.c.l.b16 %v1075
    %v2930 = vunpack.c.h.b16 %v1075
    %v2931 = vunpack.c.l.b16 %v1076
    %v2932 = vunpack.c.h.b16 %v1076
    %v2933 = vunpack.c.l.b16 %v1077
    %v2934 = vunpack.c.h.b16 %v1077
    %v2935 = vunpack.c.l.b16 %v1078
    %v2936 = vunpack.c.h.b16 %v1078
    %v2937 = vunpack.c.l.b16 %v1079
    %v2938 = vunpack.c.h.b16 %v1079
    %v2939 = vunpack.c.l.b16 %v1080
    %v2940 = vunpack.c.h.b16 %v1080
    %v2941 = vunpack.c.l.b16 %v1081
    %v2942 = vunpack.c.h.b16 %v1081
    %v2943 = vunpack.c.l.b16 %v1082
    %v2944 = vunpack.c.h.b16 %v1082
    %v2945 = vunpack.c.l.b16 %v1083
    %v2946 = vunpack.c.h.b16 %v1083
    %v2947 = vunpack.c.l.b16 %v1084
    %v2948 = vunpack.c.h.b16 %v1084
    %v2949 = vunpack.c.l.b16 %v1085
    %v2950 = vunpack.c.h.b16 %v1085
    %v2951 = vunpack.c.l.b16 %v1086
    %v2952 = vunpack.c.h.b16 %v1086
    %v2953 = vunpack.c.l.b16 %v1087
    %v2954 = vunpack.c.h.b16 %v1087
    %v2955 = vunpack.c.l.b16 %v1088
    %v2956 = vunpack.c.h.b16 %v1088
    %v2957 = vunpack.c.l.b16 %v1089
    %v2958 = vunpack.c.h.b16 %v1089
    %v2959 = vunpack.c.l.b16 %v1090
    %v2960 = vunpack.c.h.b16 %v1090
    %v2961 = vunpack.c.l.b16 %v1091
    %v2962 = vunpack.c.h.b16 %v1091
    %v2963 = vunpack.c.l.b16 %v1092
    %v2964 = vunpack.c.h.b16 %v1092
    %v2965 = vunpack.c.l.b16 %v1093
    %v2966 = vunpack.c.h.b16 %v1093
    %v2967 = vunpack.c.l.b16 %v1094
    %v2968 = vunpack.c.h.b16 %v1094
    %v2969 = vunpack.c.l.b16 %v1095
    %v2970 = vunpack.c.h.b16 %v1095
    %v2971 = vunpack.c.l.b16 %v1096
    %v2972 = vunpack.c.h.b16 %v1096
    %v2973 = vunpack.c.l.b16 %v1097
    %v2974 = vunpack.c.h.b16 %v1097
    %v2975 = vunpack.c.l.b16 %v1098
    %v2976 = vunpack.c.h.b16 %v1098
    %v2977 = vunpack.c.l.b16 %v1099
    %v2978 = vunpack.c.h.b16 %v1099
    %v2979 = vunpack.c.l.b16 %v1100
    %v2980 = vunpack.c.h.b16 %v1100
    %v2981 = vunpack.c.l.b16 %v1101
    %v2982 = vunpack.c.h.b16 %v1101
    %v2983 = vunpack.c.l.b16 %v1102
    %v2984 = vunpack.c.h.b16 %v1102
    %v2985 = vunpack.c.l.b16 %v1103
    %v2986 = vunpack.c.h.b16 %v1103
    %v2987 = vunpack.c.l.b16 %v1104
    %v2988 = vunpack.c.h.b16 %v1104
    %v2989 = vunpack.c.l.b16 %v1105
    %v2990 = vunpack.c.h.b16 %v1105
    %v2991 = vunpack.c.l.b16 %v1106
    %v2992 = vunpack.c.h.b16 %v1106
    %v2993 = vunpack.c.l.b16 %v1107
    %v2994 = vunpack.c.h.b16 %v1107
    %v2995 = vunpack.c.l.b16 %v1108
    %v2996 = vunpack.c.h.b16 %v1108
    %v2997 = vunpack.c.l.b16 %v1109
    %v2998 = vunpack.c.h.b16 %v1109
    %v2999 = vunpack.c.l.b16 %v1110
    %v3000 = vunpack.c.h.b16 %v1110
    %v3001 = vunpack.c.l.b16 %v1111
    %v3002 = vunpack.c.h.b16 %v1111
    %v3003 = vunpack.c.l.b16 %v1112
    %v3004 = vunpack.c.h.b16 %v1112
    %v3005 = vunpack.c.l.b16 %v1113
    %v3006 = vunpack.c.h.b16 %v1113
    %v3007 = vunpack.c.l.b16 %v1114
    %v3008 = vunpack.c.h.b16 %v1114
    %v3009 = vunpack.c.l.b16 %v1115
    %v3010 = vunpack.c.h.b16 %v1115
    %v3011 = vunpack.c.l.b16 %v1116
    %v3012 = vunpack.c.h.b16 %v1116
    %v3013 = vunpack.c.l.b16 %v1117
    %v3014 = vunpack.c.h.b16 %v1117
    %v3015 = vunpack.c.l.b16 %v1118
    %v3016 = vunpack.c.h.b16 %v1118
    %v3017 = vunpack.c.l.b16 %v1119
    %v3018 = vunpack.c.h.b16 %v1119
    %v3019 = vunpack.c.l.b16 %v1120
    %v3020 = vunpack.c.h.b16 %v1120
    %v3021 = vunpack.c.l.b16 %v1121
    %v3022 = vunpack.c.h.b16 %v1121
    %v3023 = vunpack.c.l.b16 %v1122
    %v3024 = vunpack.c.h.b16 %v1122
    %v3025 = vunpack.c.l.b16 %v1123
    %v3026 = vunpack.c.h.b16 %v1123
    %v3027 = vunpack.c.l.b16 %v1124
    %v3028 = vunpack.c.h.b16 %v1124
    %v3029 = vunpack.c.l.b16 %v1125
    %v3030 = vunpack.c.h.b16 %v1125
    %v3031 = vunpack.c.l.b16 %v1126
    %v3032 = vunpack.c.h.b16 %v1126
    %v3033 = vunpack.c.l.b16 %v1127
    %v3034 = vunpack.c.h.b16 %v1127
    %v3035 = vunpack.c.l.b16 %v1128
    %v3036 = vunpack.c.h.b16 %v1128
    %v3037 = vunpack.c.l.b16 %v1129
    %v3038 = vunpack.c.h.b16 %v1129
    %v3039 = vunpack.c.l.b16 %v1130
    %v3040 = vunpack.c.h.b16 %v1130
    %v3041 = vunpack.c.l.b16 %v1131
    %v3042 = vunpack.c.h.b16 %v1131
    %v3043 = vunpack.c.l.b16 %v1132
    %v3044 = vunpack.c.h.b16 %v1132
    %v3045 = vunpack.c.l.b16 %v1133
    %v3046 = vunpack.c.h.b16 %v1133
    %v3047 = vunpack.c.l.b16 %v1134
    %v3048 = vunpack.c.h.b16 %v1134
    %v3049 = vunpack.c.l.b16 %v1135
    %v3050 = vunpack.c.h.b16 %v1135
    %v3051 = vunpack.c.l.b16 %v1136
    %v3052 = vunpack.c.h.b16 %v1136
    %v3053 = vunpack.c.l.b16 %v1137
    %v3054 = vunpack.c.h.b16 %v1137
    %v3055 = vunpack.c.l.b16 %v1138
    %v3056 = vunpack.c.h.b16 %v1138
    %v3057 = vunpack.c.l.b16 %v1139
    %v3058 = vunpack.c.h.b16 %v1139
    %v3059 = vunpack.c.l.b16 %v1140
    %v3060 = vunpack.c.h.b16 %v1140
    %v3061 = vunpack.c.l.b16 %v1141
    %v3062 = vunpack.c.h.b16 %v1141
    %v3063 = vunpack.c.l.b16 %v1142
    %v3064 = vunpack.c.h.b16 %v1142
    %v3065 = vunpack.c.l.b16 %v1143
    %v3066 = vunpack.c.h.b16 %v1143
    %v3067 = vunpack.c.l.b16 %v1144
    %v3068 = vunpack.c.h.b16 %v1144
    %v3069 = vunpack.c.l.b16 %v1145
    %v3070 = vunpack.c.h.b16 %v1145
    %v3071 = vunpack.c.l.b16 %v1146
    %v3072 = vunpack.c.h.b16 %v1146
    %v3073 = vunpack.c.l.b16 %v1147
    %v3074 = vunpack.c.h.b16 %v1147
    %v3075 = vunpack.c.l.b16 %v1148
    %v3076 = vunpack.c.h.b16 %v1148
    %v3077 = vunpack.c.l.b16 %v1149
    %v3078 = vunpack.c.h.b16 %v1149
    %v3079 = vunpack.c.l.b16 %v1150
    %v3080 = vunpack.c.h.b16 %v1150
    %v3081 = vunpack.c.l.b16 %v1151
    %v3082 = vunpack.c.h.b16 %v1151
    %v3083 = vunpack.c.l.b16 %v1152
    %v3084 = vunpack.c.h.b16 %v1152
    %v3085 = vunpack.c.l.b16 %v1153
    %v3086 = vunpack.c.h.b16 %v1153
    %v3087 = vunpack.c.l.b16 %v1154
    %v3088 = vunpack.c.h.b16 %v1154
    %v3089 = vunpack.c.l.b16 %v1155
    %v3090 = vunpack.c.h.b16 %v1155
    %v3091 = vunpack.c.l.b16 %v1156
    %v3092 = vunpack.c.h.b16 %v1156
    %v3093 = vunpack.c.l.b16 %v1157
    %v3094 = vunpack.c.h.b16 %v1157
    %v3095 = vunpack.c.l.b16 %v1158
    %v3096 = vunpack.c.h.b16 %v1158
    %v3097 = vunpack.c.l.b16 %v1159
    %v3098 = vunpack.c.h.b16 %v1159
    %v3099 = vunpack.c.l.b16 %v1160
    %v3100 = vunpack.c.h.b16 %v1160
    %v3101 = vunpack.c.l.b16 %v1161
    %v3102 = vunpack.c.h.b16 %v1161
    %v3103 = vunpack.c.l.b16 %v1162
    %v3104 = vunpack.c.h.b16 %v1162
    %v3105 = vunpack.c.l.b16 %v1163
    %v3106 = vunpack.c.h.b16 %v1163
    %v3107 = vunpack.c.l.b16 %v1164
    %v3108 = vunpack.c.h.b16 %v1164
    %v3109 = vunpack.c.l.b16 %v1165
    %v3110 = vunpack.c.h.b16 %v1165
    %v3111 = vunpack.c.l.b16 %v1166
    %v3112 = vunpack.c.h.b16 %v1166
    %v3113 = vunpack.c.l.b16 %v1167
    %v3114 = vunpack.c.h.b16 %v1167
    %v3115 = vunpack.c.l.b16 %v1168
    %v3116 = vunpack.c.h.b16 %v1168
    %v3117 = vunpack.c.l.b16 %v1169
    %v3118 = vunpack.c.h.b16 %v1169
    %v3119 = vunpack.c.l.b16 %v1170
    %v3120 = vunpack.c.h.b16 %v1170
    %v3121 = vunpack.c.l.b16 %v1171
    %v3122 = vunpack.c.h.b16 %v1171
    %v3123 = vunpack.c.l.b16 %v1172
    %v3124 = vunpack.c.h.b16 %v1172
    %v3125 = vunpack.c.l.b16 %v1173
    %v3126 = vunpack.c.h.b16 %v1173
    %v3127 = vunpack.c.l.b16 %v1174
    %v3128 = vunpack.c.h.b16 %v1174
    %v3129 = vunpack.c.l.b16 %v1175
    %v3130 = vunpack.c.h.b16 %v1175
    %v3131 = vunpack.c.l.b16 %v1176
    %v3132 = vunpack.c.h.b16 %v1176
    %v3133 = vunpack.c.l.b16 %v1177
    %v3134 = vunpack.c.h.b16 %v1177
    %v3135 = vunpack.c.l.b16 %v1178
    %v3136 = vunpack.c.h.b16 %v1178
    %v3137 = vunpack.c.l.b16 %v1179
    %v3138 = vunpack.c.h.b16 %v1179
    %v3139 = vunpack.c.l.b16 %v1180
    %v3140 = vunpack.c.h.b16 %v1180
    %v3141 = vunpack.c.l.b16 %v1181
    %v3142 = vunpack.c.h.b16 %v1181
    %v3143 = vunpack.c.l.b16 %v1182
    %v3144 = vunpack.c.h.b16 %v1182
    %v3145 = vunpack.c.l.b16 %v1183
    %v3146 = vunpack.c.h.b16 %v1183
    %v3147 = vunpack.c.l.b16 %v1184
    %v3148 = vunpack.c.h.b16 %v1184
    %v3149 = vunpack.c.l.b16 %v1185
    %v3150 = vunpack.c.h.b16 %v1185
    %v3151 = vunpack.c.l.b16 %v1186
    %v3152 = vunpack.c.h.b16 %v1186
    %v3153 = vunpack.c.l.b16 %v1187
    %v3154 = vunpack.c.h.b16 %v1187
    %v3155 = vunpack.c.l.b16 %v1188
    %v3156 = vunpack.c.h.b16 %v1188
    %v3157 = vunpack.c.l.b16 %v1189
    %v3158 = vunpack.c.h.b16 %v1189
    %v3159 = vunpack.c.l.b16 %v1190
    %v3160 = vunpack.c.h.b16 %v1190
    %v3161 = vunpack.c.l.b16 %v1191
    %v3162 = vunpack.c.h.b16 %v1191
    %v3163 = vunpack.c.l.b16 %v1192
    %v3164 = vunpack.c.h.b16 %v1192
    %v3165 = vunpack.c.l.b16 %v1193
    %v3166 = vunpack.c.h.b16 %v1193
    %v3167 = vunpack.c.l.b16 %v1194
    %v3168 = vunpack.c.h.b16 %v1194
    %v3169 = vunpack.c.l.b16 %v1195
    %v3170 = vunpack.c.h.b16 %v1195
    %v3171 = vunpack.c.l.b16 %v1196
    %v3172 = vunpack.c.h.b16 %v1196
    %v3173 = vunpack.c.l.b16 %v1197
    %v3174 = vunpack.c.h.b16 %v1197
    %v3175 = vunpack.c.l.b16 %v1198
    %v3176 = vunpack.c.h.b16 %v1198
    %v3177 = vunpack.c.l.b16 %v1199
    %v3178 = vunpack.c.h.b16 %v1199
    %v3179 = vunpack.c.l.b16 %v1200
    %v3180 = vunpack.c.h.b16 %v1200
    %v3181 = vunpack.c.l.b16 %v1201
    %v3182 = vunpack.c.h.b16 %v1201
    %v3183 = vunpack.c.l.b16 %v1202
    %v3184 = vunpack.c.h.b16 %v1202
    %v3185 = vunpack.c.l.b16 %v1203
    %v3186 = vunpack.c.h.b16 %v1203
    %v3187 = vunpack.c.l.b16 %v1204
    %v3188 = vunpack.c.h.b16 %v1204
    %v3189 = vunpack.c.l.b16 %v1205
    %v3190 = vunpack.c.h.b16 %v1205
    %v3191 = vunpack.c.l.b16 %v1206
    %v3192 = vunpack.c.h.b16 %v1206
    %v3193 = vunpack.c.l.b16 %v1207
    %v3194 = vunpack.c.h.b16 %v1207
    %v3195 = vunpack.c.l.b16 %v1208
    %v3196 = vunpack.c.h.b16 %v1208
    %v3197 = vunpack.c.l.b16 %v1209
    %v3198 = vunpack.c.h.b16 %v1209
    %v3199 = vunpack.c.l.b16 %v1210
    %v3200 = vunpack.c.h.b16 %v1210
    %v3201 = vunpack.c.l.b16 %v1211
    %v3202 = vunpack.c.h.b16 %v1211
    %v3203 = vunpack.c.l.b16 %v1212
    %v3204 = vunpack.c.h.b16 %v1212
    %v3205 = vunpack.c.l.b16 %v1213
    %v3206 = vunpack.c.h.b16 %v1213
    %v3207 = vunpack.c.l.b16 %v1214
    %v3208 = vunpack.c.h.b16 %v1214
    %v3209 = vunpack.c.l.b16 %v1215
    %v3210 = vunpack.c.h.b16 %v1215
    %v3211 = vunpack.c.l.b16 %v1216
    %v3212 = vunpack.c.h.b16 %v1216
    %v3213 = vunpack.c.l.b16 %v1217
    %v3214 = vunpack.c.h.b16 %v1217
    %v3215 = vunpack.c.l.b16 %v1218
    %v3216 = vunpack.c.h.b16 %v1218
    %v3217 = vunpack.c.l.b16 %v1219
    %v3218 = vunpack.c.h.b16 %v1219
    %v3219 = vunpack.c.l.b16 %v1220
    %v3220 = vunpack.c.h.b16 %v1220
    %v3221 = vunpack.c.l.b16 %v1221
    %v3222 = vunpack.c.h.b16 %v1221
    %v3223 = vunpack.c.l.b16 %v1222
    %v3224 = vunpack.c.h.b16 %v1222
    %v3225 = vunpack.c.l.b16 %v1223
    %v3226 = vunpack.c.h.b16 %v1223
    %v3227 = vunpack.c.l.b16 %v1224
    %v3228 = vunpack.c.h.b16 %v1224
    %v3229 = vunpack.c.l.b16 %v1225
    %v3230 = vunpack.c.h.b16 %v1225
    %v3231 = vunpack.c.l.b16 %v1226
    %v3232 = vunpack.c.h.b16 %v1226
    %v3233 = vunpack.c.l.b16 %v1227
    %v3234 = vunpack.c.h.b16 %v1227
    %v3235 = vunpack.c.l.b16 %v1228
    %v3236 = vunpack.c.h.b16 %v1228
    %v3237 = vunpack.c.l.b16 %v1229
    %v3238 = vunpack.c.h.b16 %v1229
    %v3239 = vunpack.c.l.b16 %v1230
    %v3240 = vunpack.c.h.b16 %v1230
    %v3241 = vunpack.c.l.b16 %v1231
    %v3242 = vunpack.c.h.b16 %v1231
    %v3243 = vunpack.c.l.b16 %v1232
    %v3244 = vunpack.c.h.b16 %v1232
    %v3245 = vunpack.c.l.b16 %v1233
    %v3246 = vunpack.c.h.b16 %v1233
    %v3247 = vunpack.c.l.b16 %v1234
    %v3248 = vunpack.c.h.b16 %v1234
    %v3249 = vunpack.c.l.b16 %v1235
    %v3250 = vunpack.c.h.b16 %v1235
    %v3251 = vunpack.c.l.b16 %v1236
    %v3252 = vunpack.c.h.b16 %v1236
    %v3253 = vunpack.c.l.b16 %v1237
    %v3254 = vunpack.c.h.b16 %v1237
    %v3255 = vunpack.c.l.b16 %v1238
    %v3256 = vunpack.c.h.b16 %v1238
    %v3257 = vunpack.c.l.b16 %v1239
    %v3258 = vunpack.c.h.b16 %v1239
    %v3259 = vunpack.c.l.b16 %v1240
    %v3260 = vunpack.c.h.b16 %v1240
    %v3261 = vunpack.c.l.b16 %v1241
    %v3262 = vunpack.c.h.b16 %v1241
    %v3263 = vunpack.c.l.b16 %v1242
    %v3264 = vunpack.c.h.b16 %v1242
    %v3265 = vunpack.c.l.b16 %v1243
    %v3266 = vunpack.c.h.b16 %v1243
    %v3267 = vunpack.c.l.b16 %v1244
    %v3268 = vunpack.c.h.b16 %v1244
    %v3269 = vunpack.c.l.b16 %v1245
    %v3270 = vunpack.c.h.b16 %v1245
    %v3271 = vunpack.c.l.b16 %v1246
    %v3272 = vunpack.c.h.b16 %v1246
    %v3273 = vunpack.c.l.b16 %v1247
    %v3274 = vunpack.c.h.b16 %v1247
    %v3275 = vunpack.c.l.b16 %v1248
    %v3276 = vunpack.c.h.b16 %v1248
    %v3277 = vunpack.c.l.b16 %v1249
    %v3278 = vunpack.c.h.b16 %v1249
    %v3279 = vunpack.c.l.b16 %v1250
    %v3280 = vunpack.c.h.b16 %v1250
    %v3281 = vunpack.c.l.b16 %v1251
    %v3282 = vunpack.c.h.b16 %v1251
    %v3283 = vunpack.c.l.b16 %v1252
    %v3284 = vunpack.c.h.b16 %v1252
    %v3285 = vunpack.c.l.b16 %v1253
    %v3286 = vunpack.c.h.b16 %v1253
    %v3287 = vunpack.c.l.b16 %v1254
    %v3288 = vunpack.c.h.b16 %v1254
    %v3289 = vunpack.c.l.b16 %v1255
    %v3290 = vunpack.c.h.b16 %v1255
    %v3291 = vunpack.c.l.b16 %v1256
    %v3292 = vunpack.c.h.b16 %v1256
    %v3293 = vunpack.c.l.b16 %v1257
    %v3294 = vunpack.c.h.b16 %v1257
    %v3295 = vunpack.c.l.b16 %v1258
    %v3296 = vunpack.c.h.b16 %v1258
    %v3297 = vunpack.c.l.b16 %v1259
    %v3298 = vunpack.c.h.b16 %v1259
    %v3299 = vunpack.c.l.b16 %v1260
    %v3300 = vunpack.c.h.b16 %v1260
    %v3301 = vunpack.c.l.b16 %v1261
    %v3302 = vunpack.c.h.b16 %v1261
    %v3303 = vunpack.c.l.b16 %v1262
    %v3304 = vunpack.c.h.b16 %v1262
    %v3305 = vunpack.c.l.b16 %v1263
    %v3306 = vunpack.c.h.b16 %v1263
    %v3307 = vunpack.c.l.b16 %v1264
    %v3308 = vunpack.c.h.b16 %v1264
    %v3309 = vunpack.c.l.b16 %v1265
    %v3310 = vunpack.c.h.b16 %v1265
    %v3311 = vunpack.c.l.b16 %v1266
    %v3312 = vunpack.c.h.b16 %v1266
    %v3313 = vunpack.c.l.b16 %v1267
    %v3314 = vunpack.c.h.b16 %v1267
    %v3315 = vunpack.c.l.b16 %v1268
    %v3316 = vunpack.c.h.b16 %v1268
    %v3317 = vunpack.c.l.b16 %v1269
    %v3318 = vunpack.c.h.b16 %v1269
    %v3319 = vunpack.c.l.b16 %v1270
    %v3320 = vunpack.c.h.b16 %v1270
    %v3321 = vunpack.c.l.b16 %v1271
    %v3322 = vunpack.c.h.b16 %v1271
    %v3323 = vunpack.c.l.b16 %v1272
    %v3324 = vunpack.c.h.b16 %v1272
    %v3325 = vunpack.c.l.b16 %v1273
    %v3326 = vunpack.c.h.b16 %v1273
    %v3327 = vunpack.c.l.b16 %v1274
    %v3328 = vunpack.c.h.b16 %v1274
    %v3329 = vunpack.c.l.b16 %v1275
    %v3330 = vunpack.c.h.b16 %v1275
    %v3331 = vunpack.c.l.b16 %v1276
    %v3332 = vunpack.c.h.b16 %v1276
    %v3333 = vunpack.c.l.b16 %v1277
    %v3334 = vunpack.c.h.b16 %v1277
    %v3335 = vunpack.c.l.b16 %v1278
    %v3336 = vunpack.c.h.b16 %v1278
    %v3337 = vunpack.c.l.b16 %v1279
    %v3338 = vunpack.c.h.b16 %v1279
    %v3339 = vunpack.c.l.b16 %v1280
    %v3340 = vunpack.c.h.b16 %v1280
    %v3341 = vunpack.c.l.b16 %v1281
    %v3342 = vunpack.c.h.b16 %v1281
    %v3343 = vunpack.c.l.b16 %v1282
    %v3344 = vunpack.c.h.b16 %v1282
    %v3345 = vunpack.c.l.b16 %v1283
    %v3346 = vunpack.c.h.b16 %v1283
    %v3347 = vunpack.c.l.b16 %v1284
    %v3348 = vunpack.c.h.b16 %v1284
    %v3349 = vunpack.c.l.b16 %v1285
    %v3350 = vunpack.c.h.b16 %v1285
    %v3351 = vunpack.c.l.b16 %v1286
    %v3352 = vunpack.c.h.b16 %v1286
    %v3353 = vunpack.c.l.b16 %v1287
    %v3354 = vunpack.c.h.b16 %v1287
    %v3355 = vunpack.c.l.b16 %v1288
    %v3356 = vunpack.c.h.b16 %v1288
    %v3357 = vunpack.c.l.b16 %v1289
    %v3358 = vunpack.c.h.b16 %v1289
    %v3359 = vunpack.c.l.b16 %v1290
    %v3360 = vunpack.c.h.b16 %v1290
    %v3361 = vunpack.c.l.b16 %v1291
    %v3362 = vunpack.c.h.b16 %v1291
    %v3363 = vunpack.c.l.b16 %v1292
    %v3364 = vunpack.c.h.b16 %v1292
    %v3365 = vunpack.c.l.b16 %v1293
    %v3366 = vunpack.c.h.b16 %v1293
    %v3367 = vunpack.c.l.b16 %v1294
    %v3368 = vunpack.c.h.b16 %v1294
    %v3369 = vunpack.c.l.b16 %v1295
    %v3370 = vunpack.c.h.b16 %v1295
    %v3371 = vunpack.c.l.b16 %v1296
    %v3372 = vunpack.c.h.b16 %v1296
    %v3373 = vunpack.c.l.b16 %v1297
    %v3374 = vunpack.c.h.b16 %v1297
    %v3375 = vunpack.c.l.b16 %v1298
    %v3376 = vunpack.c.h.b16 %v1298
    %v3377 = vunpack.c.l.b16 %v1299
    %v3378 = vunpack.c.h.b16 %v1299
    %v3379 = vunpack.c.l.b16 %v1300
    %v3380 = vunpack.c.h.b16 %v1300
    %v3381 = vunpack.c.l.b16 %v1301
    %v3382 = vunpack.c.h.b16 %v1301
    %v3383 = vunpack.c.l.b16 %v1302
    %v3384 = vunpack.c.h.b16 %v1302
    %v3385 = vunpack.c.l.b16 %v1303
    %v3386 = vunpack.c.h.b16 %v1303
    %v3387 = vunpack.c.l.b16 %v1304
    %v3388 = vunpack.c.h.b16 %v1304
    %v3389 = vunpack.c.l.b16 %v1305
    %v3390 = vunpack.c.h.b16 %v1305
    %v3391 = vunpack.c.l.b16 %v1306
    %v3392 = vunpack.c.h.b16 %v1306
    %v3393 = vunpack.c.l.b16 %v1307
    %v3394 = vunpack.c.h.b16 %v1307
    %v3395 = vunpack.c.l.b16 %v1308
    %v3396 = vunpack.c.h.b16 %v1308
    %v3397 = vunpack.c.l.b16 %v1309
    %v3398 = vunpack.c.h.b16 %v1309
    %v3399 = vunpack.c.l.b16 %v1310
    %v3400 = vunpack.c.h.b16 %v1310
    %v3401 = vunpack.c.l.b16 %v1311
    %v3402 = vunpack.c.h.b16 %v1311
    %v3403 = vunpack.c.l.b16 %v1312
    %v3404 = vunpack.c.h.b16 %v1312
    %v3405 = vunpack.c.l.b16 %v1313
    %v3406 = vunpack.c.h.b16 %v1313
    %v3407 = vunpack.c.l.b16 %v1314
    %v3408 = vunpack.c.h.b16 %v1314
    %v3409 = vunpack.c.l.b16 %v1315
    %v3410 = vunpack.c.h.b16 %v1315
    %v3411 = vunpack.c.l.b16 %v1316
    %v3412 = vunpack.c.h.b16 %v1316
    %v3413 = vunpack.c.l.b16 %v1317
    %v3414 = vunpack.c.h.b16 %v1317
    %v3415 = vunpack.c.l.b16 %v1318
    %v3416 = vunpack.c.h.b16 %v1318
    %v3417 = vunpack.c.l.b16 %v1319
    %v3418 = vunpack.c.h.b16 %v1319
    %v3419 = vunpack.c.l.b16 %v1320
    %v3420 = vunpack.c.h.b16 %v1320
    %v3421 = vunpack.c.l.b16 %v1321
    %v3422 = vunpack.c.h.b16 %v1321
    %v3423 = vunpack.c.l.b16 %v1322
    %v3424 = vunpack.c.h.b16 %v1322
    %v3425 = vunpack.c.l.b16 %v1323
    %v3426 = vunpack.c.h.b16 %v1323
    %v3427 = vunpack.c.l.b16 %v1324
    %v3428 = vunpack.c.h.b16 %v1324
    %v3429 = vunpack.c.l.b16 %v1325
    %v3430 = vunpack.c.h.b16 %v1325
    %v3431 = vunpack.c.l.b16 %v1326
    %v3432 = vunpack.c.h.b16 %v1326
    %v3433 = vunpack.c.l.b16 %v1327
    %v3434 = vunpack.c.h.b16 %v1327
    %v3435 = vunpack.c.l.b16 %v1328
    %v3436 = vunpack.c.h.b16 %v1328
    %v3437 = vunpack.c.l.b16 %v1329
    %v3438 = vunpack.c.h.b16 %v1329
    %v3439 = vunpack.c.l.b16 %v1330
    %v3440 = vunpack.c.h.b16 %v1330
    %v3441 = vunpack.c.l.b16 %v1331
    %v3442 = vunpack.c.h.b16 %v1331
    %v3443 = vunpack.c.l.b16 %v1332
    %v3444 = vunpack.c.h.b16 %v1332
    %v3445 = vunpack.c.l.b16 %v1333
    %v3446 = vunpack.c.h.b16 %v1333
    %v3447 = vunpack.c.l.b16 %v1334
    %v3448 = vunpack.c.h.b16 %v1334
    %v3449 = vunpack.c.l.b16 %v1335
    %v3450 = vunpack.c.h.b16 %v1335
    %v3451 = vunpack.c.l.b16 %v1336
    %v3452 = vunpack.c.h.b16 %v1336
    %v3453 = vunpack.c.l.b16 %v1337
    %v3454 = vunpack.c.h.b16 %v1337
    %v3455 = vunpack.c.l.b16 %v1338
    %v3456 = vunpack.c.h.b16 %v1338
    %v3457 = vunpack.c.l.b16 %v1339
    %v3458 = vunpack.c.h.b16 %v1339
    %v3459 = vunpack.c.l.b16 %v1340
    %v3460 = vunpack.c.h.b16 %v1340
    %v3461 = vunpack.c.l.b16 %v1341
    %v3462 = vunpack.c.h.b16 %v1341
    %v3463 = vunpack.c.l.b16 %v1342
    %v3464 = vunpack.c.h.b16 %v1342
    %v3465 = vunpack.c.l.b16 %v1343
    %v3466 = vunpack.c.h.b16 %v1343
    %v3467 = vunpack.c.l.b16 %v1344
    %v3468 = vunpack.c.h.b16 %v1344
    %v3469 = vunpack.c.l.b16 %v1345
    %v3470 = vunpack.c.h.b16 %v1345
    %v3471 = vunpack.c.l.b16 %v1346
    %v3472 = vunpack.c.h.b16 %v1346
    %v3473 = vunpack.c.l.b16 %v1347
    %v3474 = vunpack.c.h.b16 %v1347
    %v3475 = vunpack.c.l.b16 %v1348
    %v3476 = vunpack.c.h.b16 %v1348
    %v3477 = vunpack.c.l.b16 %v1349
    %v3478 = vunpack.c.h.b16 %v1349
    %v3479 = vunpack.c.l.b16 %v1350
    %v3480 = vunpack.c.h.b16 %v1350
    %v3481 = vunpack.c.l.b16 %v1351
    %v3482 = vunpack.c.h.b16 %v1351
    %v3483 = vunpack.c.l.b16 %v1352
    %v3484 = vunpack.c.h.b16 %v1352
    %v3485 = vunpack.c.l.b16 %v1353
    %v3486 = vunpack.c.h.b16 %v1353
    %v3487 = vunpack.c.l.b16 %v1354
    %v3488 = vunpack.c.h.b16 %v1354
    %v3489 = vunpack.c.l.b16 %v1355
    %v3490 = vunpack.c.h.b16 %v1355
    %v3491 = vunpack.c.l.b16 %v1356
    %v3492 = vunpack.c.h.b16 %v1356
    %v3493 = vunpack.c.l.b16 %v1357
    %v3494 = vunpack.c.h.b16 %v1357
    %v3495 = vunpack.c.l.b16 %v1358
    %v3496 = vunpack.c.h.b16 %v1358
    %v3497 = vunpack.c.l.b16 %v1359
    %v3498 = vunpack.c.h.b16 %v1359
    %v3499 = vunpack.c.l.b16 %v1360
    %v3500 = vunpack.c.h.b16 %v1360
    %v3501 = vunpack.c.l.b16 %v1361
    %v3502 = vunpack.c.h.b16 %v1361
    %v3503 = vunpack.c.l.b16 %v1362
    %v3504 = vunpack.c.h.b16 %v1362
    %v3505 = vunpack.c.l.b16 %v1363
    %v3506 = vunpack.c.h.b16 %v1363
    %v3507 = vunpack.c.l.b16 %v1364
    %v3508 = vunpack.c.h.b16 %v1364
    %v3509 = vunpack.c.l.b16 %v1365
    %v3510 = vunpack.c.h.b16 %v1365
    %v3511 = vunpack.c.l.b16 %v1366
    %v3512 = vunpack.c.h.b16 %v1366
    %v3513 = vunpack.c.l.b16 %v1367
    %v3514 = vunpack.c.h.b16 %v1367
    %v3515 = vunpack.c.l.b16 %v1368
    %v3516 = vunpack.c.h.b16 %v1368
    %v3517 = vunpack.c.l.b16 %v1369
    %v3518 = vunpack.c.h.b16 %v1369
    %v3519 = vunpack.c.l.b16 %v1370
    %v3520 = vunpack.c.h.b16 %v1370
    %v3521 = vunpack.c.l.b16 %v1371
    %v3522 = vunpack.c.h.b16 %v1371
    %v3523 = vunpack.c.l.b16 %v1372
    %v3524 = vunpack.c.h.b16 %v1372
    %v3525 = vunpack.c.l.b16 %v1373
    %v3526 = vunpack.c.h.b16 %v1373
    %v3527 = vunpack.c.l.b16 %v1374
    %v3528 = vunpack.c.h.b16 %v1374
    %v3529 = vunpack.c.l.b16 %v1375
    %v3530 = vunpack.c.h.b16 %v1375
    %v3531 = vunpack.c.l.b16 %v1376
    %v3532 = vunpack.c.h.b16 %v1376
    %v3533 = vunpack.c.l.b16 %v1377
    %v3534 = vunpack.c.h.b16 %v1377
    %v3535 = vunpack.c.l.b16 %v1378
    %v3536 = vunpack.c.h.b16 %v1378
    %v3537 = vunpack.c.l.b16 %v1379
    %v3538 = vunpack.c.h.b16 %v1379
    %v3539 = vunpack.c.l.b16 %v1380
    %v3540 = vunpack.c.h.b16 %v1380
    %v3541 = vunpack.c.l.b16 %v1381
    %v3542 = vunpack.c.h.b16 %v1381
    %v3543 = vunpack.c.l.b16 %v1382
    %v3544 = vunpack.c.h.b16 %v1382
    %v3545 = vunpack.c.l.b16 %v1383
    %v3546 = vunpack.c.h.b16 %v1383
    %v3547 = vunpack.c.l.b16 %v1384
    %v3548 = vunpack.c.h.b16 %v1384
    %v3549 = vunpack.c.l.b16 %v1385
    %v3550 = vunpack.c.h.b16 %v1385
    %v3551 = vunpack.c.l.b16 %v1386
    %v3552 = vunpack.c.h.b16 %v1386
    %v3553 = vunpack.c.l.b16 %v1387
    %v3554 = vunpack.c.h.b16 %v1387
    %v3555 = vunpack.c.l.b16 %v1388
    %v3556 = vunpack.c.h.b16 %v1388
    %v3557 = vunpack.c.l.b16 %v1389
    %v3558 = vunpack.c.h.b16 %v1389
    %v3559 = vunpack.c.l.b16 %v1390
    %v3560 = vunpack.c.h.b16 %v1390
    %v3561 = vunpack.c.l.b16 %v1391
    %v3562 = vunpack.c.h.b16 %v1391
    %v3563 = vunpack.c.l.b16 %v1392
    %v3564 = vunpack.c.h.b16 %v1392
    %v3565 = vunpack.c.l.b16 %v1393
    %v3566 = vunpack.c.h.b16 %v1393
    %v3567 = vunpack.c.l.b16 %v1394
    %v3568 = vunpack.c.h.b16 %v1394
    %v3569 = vunpack.c.l.b16 %v1395
    %v3570 = vunpack.c.h.b16 %v1395
    %v3571 = vunpack.c.l.b16 %v1396
    %v3572 = vunpack.c.h.b16 %v1396
    %v3573 = vunpack.c.l.b16 %v1397
    %v3574 = vunpack.c.h.b16 %v1397
    %v3575 = vunpack.c.l.b16 %v1398
    %v3576 = vunpack.c.h.b16 %v1398
    %v3577 = vunpack.c.l.b16 %v1399
    %v3578 = vunpack.c.h.b16 %v1399
    %v3579 = vunpack.c.l.b16 %v1400
    %v3580 = vunpack.c.h.b16 %v1400
    %v3581 = vunpack.c.l.b16 %v1401
    %v3582 = vunpack.c.h.b16 %v1401
    %v3583 = vunpack.c.l.b16 %v1402
    %v3584 = vunpack.c.h.b16 %v1402
    %v3585 = vunpack.c.l.b16 %v1403
    %v3586 = vunpack.c.h.b16 %v1403
    %v3587 = vunpack.c.l.b16 %v1404
    %v3588 = vunpack.c.h.b16 %v1404
    %v3589 = vunpack.c.l.b16 %v1405
    %v3590 = vunpack.c.h.b16 %v1405
    %v3591 = vunpack.c.l.b16 %v1406
    %v3592 = vunpack.c.h.b16 %v1406
    %v3593 = vunpack.c.l.b16 %v1407
    %v3594 = vunpack.c.h.b16 %v1407
    %v3595 = vunpack.c.l.b16 %v1408
    %v3596 = vunpack.c.h.b16 %v1408
    %v3597 = vunpack.c.l.b16 %v1409
    %v3598 = vunpack.c.h.b16 %v1409
    %v3599 = vunpack.c.l.b16 %v1410
    %v3600 = vunpack.c.h.b16 %v1410
    %v3601 = vunpack.c.l.b16 %v1411
    %v3602 = vunpack.c.h.b16 %v1411
    %v3603 = vunpack.c.l.b16 %v1412
    %v3604 = vunpack.c.h.b16 %v1412
    %v3605 = vunpack.c.l.b16 %v1413
    %v3606 = vunpack.c.h.b16 %v1413
    %v3607 = vunpack.c.l.b16 %v1414
    %v3608 = vunpack.c.h.b16 %v1414
    %v3609 = vunpack.c.l.b16 %v1415
    %v3610 = vunpack.c.h.b16 %v1415
    %v3611 = vunpack.c.l.b16 %v1416
    %v3612 = vunpack.c.h.b16 %v1416
    %v3613 = vunpack.c.l.b16 %v1417
    %v3614 = vunpack.c.h.b16 %v1417
    %v3615 = vunpack.c.l.b16 %v1418
    %v3616 = vunpack.c.h.b16 %v1418
    %v3617 = vunpack.c.l.b16 %v1419
    %v3618 = vunpack.c.h.b16 %v1419
    %v3619 = vunpack.c.l.b16 %v1420
    %v3620 = vunpack.c.h.b16 %v1420
    %v3621 = vunpack.c.l.b16 %v1421
    %v3622 = vunpack.c.h.b16 %v1421
    %v3623 = vunpack.c.l.b16 %v1422
    %v3624 = vunpack.c.h.b16 %v1422
    %v3625 = vunpack.c.l.b16 %v1423
    %v3626 = vunpack.c.h.b16 %v1423
    %v3627 = vunpack.c.l.b16 %v1424
    %v3628 = vunpack.c.h.b16 %v1424
    %v3629 = vunpack.c.l.b16 %v1425
    %v3630 = vunpack.c.h.b16 %v1425
    %v3631 = vunpack.c.l.b16 %v1426
    %v3632 = vunpack.c.h.b16 %v1426
    %v3633 = vunpack.c.l.b16 %v1427
    %v3634 = vunpack.c.h.b16 %v1427
    %v3635 = vunpack.c.l.b16 %v1428
    %v3636 = vunpack.c.h.b16 %v1428
    %v3637 = vunpack.c.l.b16 %v1429
    %v3638 = vunpack.c.h.b16 %v1429
    %v3639 = vunpack.c.l.b16 %v1430
    %v3640 = vunpack.c.h.b16 %v1430
    %v3641 = vunpack.c.l.b16 %v1431
    %v3642 = vunpack.c.h.b16 %v1431
    %v3643 = vunpack.c.l.b16 %v1432
    %v3644 = vunpack.c.h.b16 %v1432
    %v3645 = vunpack.c.l.b16 %v1433
    %v3646 = vunpack.c.h.b16 %v1433
    %v3647 = vunpack.c.l.b16 %v1434
    %v3648 = vunpack.c.h.b16 %v1434
    %v3649 = vunpack.c.l.b16 %v1435
    %v3650 = vunpack.c.h.b16 %v1435
    %v3651 = vunpack.c.l.b16 %v1436
    %v3652 = vunpack.c.h.b16 %v1436
    %v3653 = vunpack.c.l.b16 %v1437
    %v3654 = vunpack.c.h.b16 %v1437
    %v3655 = vunpack.c.l.b16 %v1438
    %v3656 = vunpack.c.h.b16 %v1438
    %v3657 = vunpack.c.l.b16 %v1439
    %v3658 = vunpack.c.h.b16 %v1439
    %v3659 = vunpack.c.l.b16 %v1440
    %v3660 = vunpack.c.h.b16 %v1440
    %v3661 = vunpack.c.l.b16 %v1441
    %v3662 = vunpack.c.h.b16 %v1441
    %v3663 = vunpack.c.l.b16 %v1442
    %v3664 = vunpack.c.h.b16 %v1442
    %v3665 = vunpack.c.l.b16 %v1443
    %v3666 = vunpack.c.h.b16 %v1443
    %v3667 = vunpack.c.l.b16 %v1444
    %v3668 = vunpack.c.h.b16 %v1444
    %v3669 = vunpack.c.l.b16 %v1445
    %v3670 = vunpack.c.h.b16 %v1445
    %v3671 = vunpack.c.l.b16 %v1446
    %v3672 = vunpack.c.h.b16 %v1446
    %v3673 = vunpack.c.l.b16 %v1447
    %v3674 = vunpack.c.h.b16 %v1447
    %v3675 = vunpack.c.l.b16 %v1448
    %v3676 = vunpack.c.h.b16 %v1448
    %v3677 = vunpack.c.l.b16 %v1449
    %v3678 = vunpack.c.h.b16 %v1449
    %v3679 = vunpack.c.l.b16 %v1450
    %v3680 = vunpack.c.h.b16 %v1450
    %v3681 = vunpack.c.l.b16 %v1451
    %v3682 = vunpack.c.h.b16 %v1451
    %v3683 = vunpack.c.l.b16 %v1452
    %v3684 = vunpack.c.h.b16 %v1452
    %v3685 = vunpack.c.l.b16 %v1453
    %v3686 = vunpack.c.h.b16 %v1453
    %v3687 = vunpack.c.l.b16 %v1454
    %v3688 = vunpack.c.h.b16 %v1454
    %v3689 = vunpack.c.l.b16 %v1455
    %v3690 = vunpack.c.h.b16 %v1455
    %v3691 = vunpack.c.l.b16 %v1456
    %v3692 = vunpack.c.h.b16 %v1456
    %v3693 = vunpack.c.l.b16 %v1457
    %v3694 = vunpack.c.h.b16 %v1457
    %v3695 = vunpack.c.l.b16 %v1458
    %v3696 = vunpack.c.h.b16 %v1458
    %v3697 = vunpack.c.l.b16 %v1459
    %v3698 = vunpack.c.h.b16 %v1459
    %v3699 = vunpack.c.l.b16 %v1460
    %v3700 = vunpack.c.h.b16 %v1460
    %v3701 = vunpack.c.l.b16 %v1461
    %v3702 = vunpack.c.h.b16 %v1461
    %v3703 = vunpack.c.l.b16 %v1462
    %v3704 = vunpack.c.h.b16 %v1462
    %v3705 = vunpack.c.l.b16 %v1463
    %v3706 = vunpack.c.h.b16 %v1463
    %v3707 = vunpack.c.l.b16 %v1464
    %v3708 = vunpack.c.h.b16 %v1464
    %v3709 = vunpack.c.l.b16 %v1465
    %v3710 = vunpack.c.h.b16 %v1465
    %v3711 = vunpack.c.l.b16 %v1466
    %v3712 = vunpack.c.h.b16 %v1466
    %v3713 = vunpack.c.l.b16 %v1467
    %v3714 = vunpack.c.h.b16 %v1467
    %v3715 = vunpack.c.l.b16 %v1468
    %v3716 = vunpack.c.h.b16 %v1468
    %v3717 = vunpack.c.l.b16 %v1469
    %v3718 = vunpack.c.h.b16 %v1469
    %v3719 = vunpack.c.l.b16 %v1470
    %v3720 = vunpack.c.h.b16 %v1470
    %v3721 = vunpack.c.l.b16 %v1471
    %v3722 = vunpack.c.h.b16 %v1471
    %v3723 = vunpack.c.l.b16 %v1472
    %v3724 = vunpack.c.h.b16 %v1472
    %v3725 = vunpack.c.l.b16 %v1473
    %v3726 = vunpack.c.h.b16 %v1473
    %v3727 = vunpack.c.l.b16 %v1474
    %v3728 = vunpack.c.h.b16 %v1474
    %v3729 = vunpack.c.l.b16 %v1475
    %v3730 = vunpack.c.h.b16 %v1475
    %v3731 = vunpack.c.l.b16 %v1476
    %v3732 = vunpack.c.h.b16 %v1476
    %v3733 = vunpack.c.l.b16 %v1477
    %v3734 = vunpack.c.h.b16 %v1477
    %v3735 = vunpack.c.l.b16 %v1478
    %v3736 = vunpack.c.h.b16 %v1478
    %v3737 = vunpack.c.l.b16 %v1479
    %v3738 = vunpack.c.h.b16 %v1479
    %v3739 = vunpack.c.l.b16 %v1480
    %v3740 = vunpack.c.h.b16 %v1480
    %v3741 = vunpack.c.l.b16 %v1481
    %v3742 = vunpack.c.h.b16 %v1481
    %v3743 = vunpack.c.l.b16 %v1482
    %v3744 = vunpack.c.h.b16 %v1482
    %v3745 = vunpack.c.l.b16 %v1483
    %v3746 = vunpack.c.h.b16 %v1483
    %v3747 = vunpack.c.l.b16 %v1484
    %v3748 = vunpack.c.h.b16 %v1484
    %v3749 = vunpack.c.l.b16 %v1485
    %v3750 = vunpack.c.h.b16 %v1485
    %v3751 = vunpack.c.l.b16 %v1486
    %v3752 = vunpack.c.h.b16 %v1486
    %v3753 = vunpack.c.l.b16 %v1487
    %v3754 = vunpack.c.h.b16 %v1487
    %v3755 = vunpack.c.l.b16 %v1488
    %v3756 = vunpack.c.h.b16 %v1488
    %v3757 = vunpack.c.l.b16 %v1489
    %v3758 = vunpack.c.h.b16 %v1489
    %v3759 = vunpack.c.l.b16 %v1490
    %v3760 = vunpack.c.h.b16 %v1490
    %v3761 = vunpack.c.l.b16 %v1491
    %v3762 = vunpack.c.h.b16 %v1491
    %v3763 = vunpack.c.l.b16 %v1492
    %v3764 = vunpack.c.h.b16 %v1492
    %v3765 = vunpack.c.l.b16 %v1493
    %v3766 = vunpack.c.h.b16 %v1493
    %v3767 = vunpack.c.l.b16 %v1494
    %v3768 = vunpack.c.h.b16 %v1494
    %v3769 = vunpack.c.l.b16 %v1495
    %v3770 = vunpack.c.h.b16 %v1495
    %v3771 = vunpack.c.l.b16 %v1496
    %v3772 = vunpack.c.h.b16 %v1496
    %v3773 = vunpack.c.l.b16 %v1497
    %v3774 = vunpack.c.h.b16 %v1497
    %v3775 = vunpack.c.l.b16 %v1498
    %v3776 = vunpack.c.h.b16 %v1498
    %v3777 = vunpack.c.l.b16 %v1499
    %v3778 = vunpack.c.h.b16 %v1499
    %v3779 = vunpack.c.l.b16 %v1500
    %v3780 = vunpack.c.h.b16 %v1500
    %v3781 = vunpack.c.l.b16 %v1501
    %v3782 = vunpack.c.h.b16 %v1501
    %v3783 = vunpack.c.l.b16 %v1502
    %v3784 = vunpack.c.h.b16 %v1502
    %v3785 = vunpack.c.l.b16 %v1503
    %v3786 = vunpack.c.h.b16 %v1503
    %v3787 = vunpack.c.l.b16 %v1504
    %v3788 = vunpack.c.h.b16 %v1504
    %v3789 = vunpack.c.l.b16 %v1505
    %v3790 = vunpack.c.h.b16 %v1505
    %v3791 = vunpack.c.l.b16 %v1506
    %v3792 = vunpack.c.h.b16 %v1506
    %v3793 = vunpack.c.l.b16 %v1507
    %v3794 = vunpack.c.h.b16 %v1507
    %v3795 = vunpack.c.l.b16 %v1508
    %v3796 = vunpack.c.h.b16 %v1508
    %v3797 = vunpack.c.l.b16 %v1509
    %v3798 = vunpack.c.h.b16 %v1509
    %v3799 = vunpack.c.l.b16 %v1510
    %v3800 = vunpack.c.h.b16 %v1510
    %v3801 = vunpack.c.l.b16 %v1511
    %v3802 = vunpack.c.h.b16 %v1511
    %v3803 = vunpack.c.l.b16 %v1512
    %v3804 = vunpack.c.h.b16 %v1512
    %v3805 = vunpack.c.l.b16 %v1513
    %v3806 = vunpack.c.h.b16 %v1513
    %v3807 = vunpack.c.l.b16 %v1514
    %v3808 = vunpack.c.h.b16 %v1514
    %v3809 = vunpack.c.l.b16 %v1515
    %v3810 = vunpack.c.h.b16 %v1515
    %v3811 = vunpack.c.l.b16 %v1516
    %v3812 = vunpack.c.h.b16 %v1516
    %v3813 = vunpack.c.l.b16 %v1517
    %v3814 = vunpack.c.h.b16 %v1517
    %v3815 = vunpack.c.l.b16 %v1518
    %v3816 = vunpack.c.h.b16 %v1518
    %v3817 = vunpack.c.l.b16 %v1519
    %v3818 = vunpack.c.h.b16 %v1519
    %v3819 = vunpack.c.l.b16 %v1520
    %v3820 = vunpack.c.h.b16 %v1520
    %v3821 = vunpack.c.l.b16 %v1521
    %v3822 = vunpack.c.h.b16 %v1521
    %v3823 = vunpack.c.l.b16 %v1522
    %v3824 = vunpack.c.h.b16 %v1522
    %v3825 = vunpack.c.l.b16 %v1523
    %v3826 = vunpack.c.h.b16 %v1523
    %v3827 = vunpack.c.l.b16 %v1524
    %v3828 = vunpack.c.h.b16 %v1524
    %v3829 = vunpack.c.l.b16 %v1525
    %v3830 = vunpack.c.h.b16 %v1525
    %v3831 = vunpack.c.l.b16 %v1526
    %v3832 = vunpack.c.h.b16 %v1526
    %v3833 = vunpack.c.l.b16 %v1527
    %v3834 = vunpack.c.h.b16 %v1527
    %v3835 = vunpack.c.l.b16 %v1528
    %v3836 = vunpack.c.h.b16 %v1528
    %v3837 = vunpack.c.l.b16 %v1529
    %v3838 = vunpack.c.h.b16 %v1529
    %v3839 = vunpack.c.l.b16 %v1530
    %v3840 = vunpack.c.h.b16 %v1530
    %v3841 = vunpack.c.l.b16 %v1531
    %v3842 = vunpack.c.h.b16 %v1531
    %v3843 = vunpack.c.l.b16 %v1532
    %v3844 = vunpack.c.h.b16 %v1532
    %v3845 = vunpack.c.l.b16 %v1533
    %v3846 = vunpack.c.h.b16 %v1533
    %v3847 = vunpack.c.l.b16 %v1534
    %v3848 = vunpack.c.h.b16 %v1534
    %v3849 = vunpack.c.l.b16 %v1535
    %v3850 = vunpack.c.h.b16 %v1535
    %v3851 = vunpack.c.l.b16 %v1536
    %v3852 = vunpack.c.h.b16 %v1536
    %v3853 = vunpack.c.l.b16 %v1537
    %v3854 = vunpack.c.h.b16 %v1537
    %v3855 = vunpack.c.l.b16 %v1538
    %v3856 = vunpack.c.h.b16 %v1538
    %v3857 = vunpack.c.l.b16 %v1539
    %v3858 = vunpack.c.h.b16 %v1539
    %v3859 = vunpack.c.l.b16 %v1540
    %v3860 = vunpack.c.h.b16 %v1540
    %v3861 = vunpack.c.l.b16 %v1541
    %v3862 = vunpack.c.h.b16 %v1541
    %v3863 = vunpack.c.l.b16 %v1542
    %v3864 = vunpack.c.h.b16 %v1542
    %v3865 = vunpack.c.l.b16 %v1543
    %v3866 = vunpack.c.h.b16 %v1543
    %v3867 = vunpack.c.l.b16 %v1544
    %v3868 = vunpack.c.h.b16 %v1544
    %v3869 = vunpack.c.l.b16 %v1545
    %v3870 = vunpack.c.h.b16 %v1545
    %v3871 = vunpack.c.l.b16 %v1546
    %v3872 = vunpack.c.h.b16 %v1546
    %v3873 = vunpack.c.l.b16 %v1547
    %v3874 = vunpack.c.h.b16 %v1547
    %v3875 = vunpack.c.l.b16 %v1548
    %v3876 = vunpack.c.h.b16 %v1548
    %v3877 = vunpack.c.l.b16 %v1549
    %v3878 = vunpack.c.h.b16 %v1549
    %v3879 = vunpack.c.l.b16 %v1550
    %v3880 = vunpack.c.h.b16 %v1550
    %v3881 = vunpack.c.l.b16 %v1551
    %v3882 = vunpack.c.h.b16 %v1551
    %v3883 = vunpack.c.l.b16 %v1552
    %v3884 = vunpack.c.h.b16 %v1552
    %v3885 = vunpack.c.l.b16 %v1553
    %v3886 = vunpack.c.h.b16 %v1553
    %v3887 = vunpack.c.l.b16 %v1554
    %v3888 = vunpack.c.h.b16 %v1554
    %v3889 = vunpack.c.l.b16 %v1555
    %v3890 = vunpack.c.h.b16 %v1555
    %v3891 = vunpack.c.l.b16 %v1556
    %v3892 = vunpack.c.h.b16 %v1556
    %v3893 = vunpack.c.l.b16 %v1557
    %v3894 = vunpack.c.h.b16 %v1557
    %v3895 = vunpack.c.l.b16 %v1558
    %v3896 = vunpack.c.h.b16 %v1558
    %v3897 = vunpack.c.l.b16 %v1559
    %v3898 = vunpack.c.h.b16 %v1559
    %v3899 = vunpack.c.l.b16 %v1560
    %v3900 = vunpack.c.h.b16 %v1560
    %v3901 = vunpack.c.l.b16 %v1561
    %v3902 = vunpack.c.h.b16 %v1561
    %v3903 = vunpack.c.l.b16 %v1562
    %v3904 = vunpack.c.h.b16 %v1562
    %v3905 = vunpack.c.l.b16 %v1563
    %v3906 = vunpack.c.h.b16 %v1563
    %v3907 = vunpack.c.l.b16 %v1564
    %v3908 = vunpack.c.h.b16 %v1564
    %v3909 = vunpack.c.l.b16 %v1565
    %v3910 = vunpack.c.h.b16 %v1565
    %v3911 = vunpack.c.l.b16 %v1566
    %v3912 = vunpack.c.h.b16 %v1566
    %v3913 = vunpack.c.l.b16 %v1567
    %v3914 = vunpack.c.h.b16 %v1567
    %v3915 = vunpack.c.l.b16 %v1568
    %v3916 = vunpack.c.h.b16 %v1568
    %v3917 = vunpack.c.l.b16 %v1569
    %v3918 = vunpack.c.h.b16 %v1569
    %v3919 = vunpack.c.l.b16 %v1570
    %v3920 = vunpack.c.h.b16 %v1570
    %v3921 = vunpack.c.l.b16 %v1571
    %v3922 = vunpack.c.h.b16 %v1571
    %v3923 = vunpack.c.l.b16 %v1572
    %v3924 = vunpack.c.h.b16 %v1572
    %v3925 = vunpack.c.l.b16 %v1573
    %v3926 = vunpack.c.h.b16 %v1573
    %v3927 = vunpack.c.l.b16 %v1574
    %v3928 = vunpack.c.h.b16 %v1574
    %v3929 = vunpack.c.l.b16 %v1575
    %v3930 = vunpack.c.h.b16 %v1575
    %v3931 = vunpack.c.l.b16 %v1576
    %v3932 = vunpack.c.h.b16 %v1576
    %v3933 = vunpack.c.l.b16 %v1577
    %v3934 = vunpack.c.h.b16 %v1577
    %v3935 = vunpack.c.l.b16 %v1578
    %v3936 = vunpack.c.h.b16 %v1578
    %v3937 = vunpack.c.l.b16 %v1579
    %v3938 = vunpack.c.h.b16 %v1579
    %v3939 = vunpack.c.l.b16 %v1580
    %v3940 = vunpack.c.h.b16 %v1580
    %v3941 = vunpack.c.l.b16 %v1581
    %v3942 = vunpack.c.h.b16 %v1581
    %v3943 = vunpack.c.l.b16 %v1582
    %v3944 = vunpack.c.h.b16 %v1582
    %v3945 = vunpack.c.l.b16 %v1583
    %v3946 = vunpack.c.h.b16 %v1583
    %v3947 = vunpack.c.l.b16 %v1584
    %v3948 = vunpack.c.h.b16 %v1584
    %v3949 = vunpack.c.l.b16 %v1585
    %v3950 = vunpack.c.h.b16 %v1585
    %v3951 = vunpack.c.l.b16 %v1586
    %v3952 = vunpack.c.h.b16 %v1586
    %v3953 = vunpack.c.l.b16 %v1587
    %v3954 = vunpack.c.h.b16 %v1587
    %v3955 = vunpack.c.l.b16 %v1588
    %v3956 = vunpack.c.h.b16 %v1588
    %v3957 = vunpack.c.l.b16 %v1589
    %v3958 = vunpack.c.h.b16 %v1589
    %v3959 = vunpack.c.l.b16 %v1590
    %v3960 = vunpack.c.h.b16 %v1590
    %v3961 = vunpack.c.l.b16 %v1591
    %v3962 = vunpack.c.h.b16 %v1591
    %v3963 = vunpack.c.l.b16 %v1592
    %v3964 = vunpack.c.h.b16 %v1592
    %v3965 = vunpack.c.l.b16 %v1593
    %v3966 = vunpack.c.h.b16 %v1593
    %v3967 = vunpack.c.l.b16 %v1594
    %v3968 = vunpack.c.h.b16 %v1594
    %v3969 = vunpack.c.l.b16 %v1595
    %v3970 = vunpack.c.h.b16 %v1595
    %v3971 = vunpack.c.l.b16 %v1596
    %v3972 = vunpack.c.h.b16 %v1596
    %v3973 = vunpack.c.l.b16 %v1597
    %v3974 = vunpack.c.h.b16 %v1597
    %v3975 = vunpack.c.l.b16 %v1598
    %v3976 = vunpack.c.h.b16 %v1598
    %v3977 = vunpack.c.l.b16 %v1599
    %v3978 = vunpack.c.h.b16 %v1599
    %v3979 = vunpack.c.l.b16 %v1600
    %v3980 = vunpack.c.h.b16 %v1600
    %v3981 = vunpack.c.l.b16 %v1601
    %v3982 = vunpack.c.h.b16 %v1601
    %v3983 = vunpack.c.l.b16 %v1602
    %v3984 = vunpack.c.h.b16 %v1602
    %v3985 = vunpack.c.l.b16 %v1603
    %v3986 = vunpack.c.h.b16 %v1603
    %v3987 = vunpack.c.l.b16 %v1604
    %v3988 = vunpack.c.h.b16 %v1604
    %v3989 = vunpack.c.l.b16 %v1605
    %v3990 = vunpack.c.h.b16 %v1605
    %v3991 = vunpack.c.l.b16 %v1606
    %v3992 = vunpack.c.h.b16 %v1606
    %v3993 = vunpack.c.l.b16 %v1607
    %v3994 = vunpack.c.h.b16 %v1607
    %v3995 = vunpack.c.l.b16 %v1608
    %v3996 = vunpack.c.h.b16 %v1608
    %v3997 = vunpack.c.l.b16 %v1609
    %v3998 = vunpack.c.h.b16 %v1609
    %v3999 = vunpack.c.l.b16 %v1610
    %v4000 = vunpack.c.h.b16 %v1610
    %v4001 = vunpack.c.l.b16 %v1611
    %v4002 = vunpack.c.h.b16 %v1611
    %v4003 = vunpack.c.l.b16 %v1612
    %v4004 = vunpack.c.h.b16 %v1612
    %v4005 = vunpack.c.l.b16 %v1613
    %v4006 = vunpack.c.h.b16 %v1613
    %v4007 = vunpack.c.l.b16 %v1614
    %v4008 = vunpack.c.h.b16 %v1614
    %v4009 = vunpack.c.l.b16 %v1615
    %v4010 = vunpack.c.h.b16 %v1615
    %v4011 = vunpack.c.l.b16 %v1616
    %v4012 = vunpack.c.h.b16 %v1616
    %v4013 = vunpack.c.l.b16 %v1617
    %v4014 = vunpack.c.h.b16 %v1617
    %v4015 = vunpack.c.l.b16 %v1618
    %v4016 = vunpack.c.h.b16 %v1618
    %v4017 = vunpack.c.l.b16 %v1619
    %v4018 = vunpack.c.h.b16 %v1619
    %v4019 = vunpack.c.l.b16 %v1620
    %v4020 = vunpack.c.h.b16 %v1620
    %v4021 = vunpack.c.l.b16 %v1621
    %v4022 = vunpack.c.h.b16 %v1621
    %v4023 = vunpack.c.l.b16 %v1622
    %v4024 = vunpack.c.h.b16 %v1622
    %v4025 = vunpack.c.l.b16 %v1623
    %v4026 = vunpack.c.h.b16 %v1623
    %v4027 = vunpack.c.l.b16 %v1624
    %v4028 = vunpack.c.h.b16 %v1624
    %v4029 = vunpack.c.l.b16 %v1625
    %v4030 = vunpack.c.h.b16 %v1625
    %v4031 = vunpack.c.l.b16 %v1626
    %v4032 = vunpack.c.h.b16 %v1626
    %v4033 = vunpack.c.l.b16 %v1627
    %v4034 = vunpack.c.h.b16 %v1627
    %v4035 = vunpack.c.l.b16 %v1628
    %v4036 = vunpack.c.h.b16 %v1628
    %v4037 = vunpack.c.l.b16 %v1629
    %v4038 = vunpack.c.h.b16 %v1629
    %v4039 = vunpack.c.l.b16 %v1630
    %v4040 = vunpack.c.h.b16 %v1630
    %v4041 = vunpack.c.l.b16 %v1631
    %v4042 = vunpack.c.h.b16 %v1631
    %v4043 = vunpack.c.l.b16 %v1632
    %v4044 = vunpack.c.h.b16 %v1632
    %v4045 = vunpack.c.l.b16 %v1633
    %v4046 = vunpack.c.h.b16 %v1633
    %v4047 = vunpack.c.l.b16 %v1634
    %v4048 = vunpack.c.h.b16 %v1634
    %v4049 = vunpack.c.l.b16 %v1635
    %v4050 = vunpack.c.h.b16 %v1635
    %v4051 = vunpack.c.l.b16 %v1636
    %v4052 = vunpack.c.h.b16 %v1636
    %v4053 = vunpack.c.l.b16 %v1637
    %v4054 = vunpack.c.h.b16 %v1637
    %v4055 = vunpack.c.l.b16 %v1638
    %v4056 = vunpack.c.h.b16 %v1638
    %v4057 = vunpack.c.l.b16 %v1639
    %v4058 = vunpack.c.h.b16 %v1639
    %v4059 = vunpack.c.l.b16 %v1640
    %v4060 = vunpack.c.h.b16 %v1640
    %v4061 = vunpack.c.l.b16 %v1641
    %v4062 = vunpack.c.h.b16 %v1641
    %v4063 = vunpack.c.l.b16 %v1642
    %v4064 = vunpack.c.h.b16 %v1642
    %v4065 = vunpack.c.l.b16 %v1643
    %v4066 = vunpack.c.h.b16 %v1643
    %v4067 = vunpack.c.l.b16 %v1644
    %v4068 = vunpack.c.h.b16 %v1644
    %v4069 = vunpack.c.l.b16 %v1645
    %v4070 = vunpack.c.h.b16 %v1645
    %v4071 = vunpack.c.l.b16 %v1646
    %v4072 = vunpack.c.h.b16 %v1646
    %v4073 = vunpack.c.l.b16 %v1647
    %v4074 = vunpack.c.h.b16 %v1647
    %v4075 = vunpack.c.l.b16 %v1648
    %v4076 = vunpack.c.h.b16 %v1648
    %v4077 = vunpack.c.l.b16 %v1649
    %v4078 = vunpack.c.h.b16 %v1649
    %v4079 = vunpack.c.l.b16 %v1650
    %v4080 = vunpack.c.h.b16 %v1650
    %v4081 = vunpack.c.l.b16 %v1651
    %v4082 = vunpack.c.h.b16 %v1651
    %v4083 = vunpack.c.l.b16 %v1652
    %v4084 = vunpack.c.h.b16 %v1652
    %v4085 = vunpack.c.l.b16 %v1653
    %v4086 = vunpack.c.h.b16 %v1653
    %v4087 = vunpack.c.l.b16 %v1654
    %v4088 = vunpack.c.h.b16 %v1654
    %v4089 = vunpack.c.l.b16 %v1655
    %v4090 = vunpack.c.h.b16 %v1655
    %v4091 = vunpack.c.l.b16 %v1656
    %v4092 = vunpack.c.h.b16 %v1656
    %v4093 = vunpack.c.l.b16 %v1657
    %v4094 = vunpack.c.h.b16 %v1657
    %v4095 = vunpack.c.l.b16 %v1658
    %v4096 = vunpack.c.h.b16 %v1658
    %v4097 = vunpack.c.l.b16 %v1659
    %v4098 = vunpack.c.h.b16 %v1659
    %v4099 = vunpack.c.l.b16 %v1660
    %v4100 = vunpack.c.h.b16 %v1660
    %v4101 = vunpack.c.l.b16 %v1661
    %v4102 = vunpack.c.h.b16 %v1661
    %v4103 = vunpack.c.l.b16 %v1662
    %v4104 = vunpack.c.h.b16 %v1662
    %v4105 = vunpack.c.l.b16 %v1663
    %v4106 = vunpack.c.h.b16 %v1663
    %v4107 = vunpack.c.l.b16 %v1664
    %v4108 = vunpack.c.h.b16 %v1664
    %v4109 = vunpack.c.l.b16 %v1665
    %v4110 = vunpack.c.h.b16 %v1665
    %v4111 = vunpack.c.l.b16 %v1666
    %v4112 = vunpack.c.h.b16 %v1666
    %v4113 = vunpack.c.l.b16 %v1667
    %v4114 = vunpack.c.h.b16 %v1667
    %v4115 = vunpack.c.l.b16 %v1668
    %v4116 = vunpack.c.h.b16 %v1668
    %v4117 = vunpack.c.l.b16 %v1669
    %v4118 = vunpack.c.h.b16 %v1669
    %v4119 = vunpack.c.l.b16 %v1670
    %v4120 = vunpack.c.h.b16 %v1670
    %v4121 = vunpack.c.l.b16 %v1671
    %v4122 = vunpack.c.h.b16 %v1671
    %v4123 = vunpack.c.l.b16 %v1672
    %v4124 = vunpack.c.h.b16 %v1672
    %v4125 = vunpack.c.l.b16 %v1673
    %v4126 = vunpack.c.h.b16 %v1673
    %v4127 = vunpack.c.l.b16 %v1674
    %v4128 = vunpack.c.h.b16 %v1674
    %v4129 = vpack.c.b16 %v2539, %v2529
    %v4130 = vpack.c.b16 %v2540, %v2530
    %v4131 = vpack.c.b16 %v2541, %v2531
    %v4132 = vpack.c.b16 %v2542, %v2532
    %v4133 = vpack.c.b16 %v2543, %v2533
    %v4134 = vpack.c.b16 %v2544, %v2534
    %v4135 = vpack.c.b16 %v2545, %v2535
    %v4136 = vpack.c.b16 %v2546, %v2536
    %v4137 = vpack.c.b16 %v2547, %v2537
    %v4138 = vpack.c.b16 %v2548, %v2538
    %v4139 = vpack.c.b16 %v2559, %v2549
    %v4140 = vpack.c.b16 %v2560, %v2550
    %v4141 = vpack.c.b16 %v2561, %v2551
    %v4142 = vpack.c.b16 %v2562, %v2552
    %v4143 = vpack.c.b16 %v2563, %v2553
    %v4144 = vpack.c.b16 %v2564, %v2554
    %v4145 = vpack.c.b16 %v2565, %v2555
    %v4146 = vpack.c.b16 %v2566, %v2556
    %v4147 = vpack.c.b16 %v2567, %v2557
    %v4148 = vpack.c.b16 %v2568, %v2558
    %v4149 = vpack.c.b16 %v2579, %v2569
    %v4150 = vpack.c.b16 %v2580, %v2570
    %v4151 = vpack.c.b16 %v2581, %v2571
    %v4152 = vpack.c.b16 %v2582, %v2572
    %v4153 = vpack.c.b16 %v2583, %v2573
    %v4154 = vpack.c.b16 %v2584, %v2574
    %v4155 = vpack.c.b16 %v2585, %v2575
    %v4156 = vpack.c.b16 %v2586, %v2576
    %v4157 = vpack.c.b16 %v2587, %v2577
    %v4158 = vpack.c.b16 %v2588, %v2578
    %v4159 = vpack.c.b16 %v2599, %v2589
    %v4160 = vpack.c.b16 %v2600, %v2590
    %v4161 = vpack.c.b16 %v2601, %v2591
    %v4162 = vpack.c.b16 %v2602, %v2592
    %v4163 = vpack.c.b16 %v2603, %v2593
    %v4164 = vpack.c.b16 %v2604, %v2594
    %v4165 = vpack.c.b16 %v2605, %v2595
    %v4166 = vpack.c.b16 %v2606, %v2596
    %v4167 = vpack.c.b16 %v2607, %v2597
    %v4168 = vpack.c.b16 %v2608, %v2598
    %v4169 = vpack.c.b16 %v2619, %v2609
    %v4170 = vpack.c.b16 %v2620, %v2610
    %v4171 = vpack.c.b16 %v2621, %v2611
    %v4172 = vpack.c.b16 %v2622, %v2612
    %v4173 = vpack.c.b16 %v2623, %v2613
    %v4174 = vpack.c.b16 %v2624, %v2614
    %v4175 = vpack.c.b16 %v2625, %v2615
    %v4176 = vpack.c.b16 %v2626, %v2616
    %v4177 = vpack.c.b16 %v2627, %v2617
    %v4178 = vpack.c.b16 %v2628, %v2618
    %v4179 = vpack.c.b16 %v2639, %v2629
    %v4180 = vpack.c.b16 %v2640, %v2630
    %v4181 = vpack.c.b16 %v2641, %v2631
    %v4182 = vpack.c.b16 %v2642, %v2632
    %v4183 = vpack.c.b16 %v2643, %v2633
    %v4184 = vpack.c.b16 %v2644, %v2634
    %v4185 = vpack.c.b16 %v2645, %v2635
    %v4186 = vpack.c.b16 %v2646, %v2636
    %v4187 = vpack.c.b16 %v2647, %v2637
    %v4188 = vpack.c.b16 %v2648, %v2638
    %v4189 = vpack.c.b16 %v2659, %v2649
    %v4190 = vpack.c.b16 %v2660, %v2650
    %v4191 = vpack.c.b16 %v2661, %v2651
    %v4192 = vpack.c.b16 %v2662, %v2652
    %v4193 = vpack.c.b16 %v2663, %v2653
    %v4194 = vpack.c.b16 %v2664, %v2654
    %v4195 = vpack.c.b16 %v2665, %v2655
    %v4196 = vpack.c.b16 %v2666, %v2656
    %v4197 = vpack.c.b16 %v2667, %v2657
    %v4198 = vpack.c.b16 %v2668, %v2658
    %v4199 = vpack.c.b16 %v2679, %v2669
    %v4200 = vpack.c.b16 %v2680, %v2670
    %v4201 = vpack.c.b16 %v2681, %v2671
    %v4202 = vpack.c.b16 %v2682, %v2672
    %v4203 = vpack.c.b16 %v2683, %v2673
    %v4204 = vpack.c.b16 %v2684, %v2674
    %v4205 = vpack.c.b16 %v2685, %v2675
    %v4206 = vpack.c.b16 %v2686, %v2676
    %v4207 = vpack.c.b16 %v2687, %v2677
    %v4208 = vpack.c.b16 %v2688, %v2678
    %v4209 = vpack.c.b16 %v2699, %v2689
    %v4210 = vpack.c.b16 %v2700, %v2690
    %v4211 = vpack.c.b16 %v2701, %v2691
    %v4212 = vpack.c.b16 %v2702, %v2692
    %v4213 = vpack.c.b16 %v2703, %v2693
    %v4214 = vpack.c.b16 %v2704, %v2694
    %v4215 = vpack.c.b16 %v2705, %v2695
    %v4216 = vpack.c.b16 %v2706, %v2696
    %v4217 = vpack.c.b16 %v2707, %v2697
    %v4218 = vpack.c.b16 %v2708, %v2698
    %v4219 = vpack.c.b16 %v2719, %v2709
    %v4220 = vpack.c.b16 %v2720, %v2710
    %v4221 = vpack.c.b16 %v2721, %v2711
    %v4222 = vpack.c.b16 %v2722, %v2712
    %v4223 = vpack.c.b16 %v2723, %v2713
    %v4224 = vpack.c.b16 %v2724, %v2714
    %v4225 = vpack.c.b16 %v2725, %v2715
    %v4226 = vpack.c.b16 %v2726, %v2716
    %v4227 = vpack.c.b16 %v2727, %v2717
    %v4228 = vpack.c.b16 %v2728, %v2718
    %v4229 = vpack.c.b16 %v2739, %v2729
    %v4230 = vpack.c.b16 %v2740, %v2730
    %v4231 = vpack.c.b16 %v2741, %v2731
    %v4232 = vpack.c.b16 %v2742, %v2732
    %v4233 = vpack.c.b16 %v2743, %v2733
    %v4234 = vpack.c.b16 %v2744, %v2734
    %v4235 = vpack.c.b16 %v2745, %v2735
    %v4236 = vpack.c.b16 %v2746, %v2736
    %v4237 = vpack.c.b16 %v2747, %v2737
    %v4238 = vpack.c.b16 %v2748, %v2738
    %v4239 = vpack.c.b16 %v2759, %v2749
    %v4240 = vpack.c.b16 %v2760, %v2750
    %v4241 = vpack.c.b16 %v2761, %v2751
    %v4242 = vpack.c.b16 %v2762, %v2752
    %v4243 = vpack.c.b16 %v2763, %v2753
    %v4244 = vpack.c.b16 %v2764, %v2754
    %v4245 = vpack.c.b16 %v2765, %v2755
    %v4246 = vpack.c.b16 %v2766, %v2756
    %v4247 = vpack.c.b16 %v2767, %v2757
    %v4248 = vpack.c.b16 %v2768, %v2758
    %v4249 = vpack.c.b16 %v2779, %v2769
    %v4250 = vpack.c.b16 %v2780, %v2770
    %v4251 = vpack.c.b16 %v2781, %v2771
    %v4252 = vpack.c.b16 %v2782, %v2772
    %v4253 = vpack.c.b16 %v2783, %v2773
    %v4254 = vpack.c.b16 %v2784, %v2774
    %v4255 = vpack.c.b16 %v2785, %v2775
    %v4256 = vpack.c.b16 %v2786, %v2776
    %v4257 = vpack.c.b16 %v2787, %v2777
    %v4258 = vpack.c.b16 %v2788, %v2778
    %v4259 = vpack.c.b16 %v2799, %v2789
    %v4260 = vpack.c.b16 %v2800, %v2790
    %v4261 = vpack.c.b16 %v2801, %v2791
    %v4262 = vpack.c.b16 %v2802, %v2792
    %v4263 = vpack.c.b16 %v2803, %v2793
    %v4264 = vpack.c.b16 %v2804, %v2794
    %v4265 = vpack.c.b16 %v2805, %v2795
    %v4266 = vpack.c.b16 %v2806, %v2796
    %v4267 = vpack.c.b16 %v2807, %v2797
    %v4268 = vpack.c.b16 %v2808, %v2798
    %v4269 = vpack.c.b16 %v2819, %v2809
    %v4270 = vpack.c.b16 %v2820, %v2810
    %v4271 = vpack.c.b16 %v2821, %v2811
    %v4272 = vpack.c.b16 %v2822, %v2812
    %v4273 = vpack.c.b16 %v2823, %v2813
    %v4274 = vpack.c.b16 %v2824, %v2814
    %v4275 = vpack.c.b16 %v2825, %v2815
    %v4276 = vpack.c.b16 %v2826, %v2816
    %v4277 = vpack.c.b16 %v2827, %v2817
    %v4278 = vpack.c.b16 %v2828, %v2818
    %v4279 = vpack.c.b16 %v2839, %v2829
    %v4280 = vpack.c.b16 %v2840, %v2830
    %v4281 = vpack.c.b16 %v2841, %v2831
    %v4282 = vpack.c.b16 %v2842, %v2832
    %v4283 = vpack.c.b16 %v2843, %v2833
    %v4284 = vpack.c.b16 %v2844, %v2834
    %v4285 = vpack.c.b16 %v2845, %v2835
    %v4286 = vpack.c.b16 %v2846, %v2836
    %v4287 = vpack.c.b16 %v2847, %v2837
    %v4288 = vpack.c.b16 %v2848, %v2838
    %v4289 = vpack.c.b16 %v2859, %v2849
    %v4290 = vpack.c.b16 %v2860, %v2850
    %v4291 = vpack.c.b16 %v2861, %v2851
    %v4292 = vpack.c.b16 %v2862, %v2852
    %v4293 = vpack.c.b16 %v2863, %v2853
    %v4294 = vpack.c.b16 %v2864, %v2854
    %v4295 = vpack.c.b16 %v2865, %v2855
    %v4296 = vpack.c.b16 %v2866, %v2856
    %v4297 = vpack.c.b16 %v2867, %v2857
    %v4298 = vpack.c.b16 %v2868, %v2858
    %v4299 = vpack.c.b16 %v2879, %v2869
    %v4300 = vpack.c.b16 %v2880, %v2870
    %v4301 = vpack.c.b16 %v2881, %v2871
    %v4302 = vpack.c.b16 %v2882, %v2872
    %v4303 = vpack.c.b16 %v2883, %v2873
    %v4304 = vpack.c.b16 %v2884, %v2874
    %v4305 = vpack.c.b16 %v2885, %v2875
    %v4306 = vpack.c.b16 %v2886, %v2876
    %v4307 = vpack.c.b16 %v2887, %v2877
    %v4308 = vpack.c.b16 %v2888, %v2878
    %v4309 = vpack.c.b16 %v2899, %v2889
    %v4310 = vpack.c.b16 %v2900, %v2890
    %v4311 = vpack.c.b16 %v2901, %v2891
    %v4312 = vpack.c.b16 %v2902, %v2892
    %v4313 = vpack.c.b16 %v2903, %v2893
    %v4314 = vpack.c.b16 %v2904, %v2894
    %v4315 = vpack.c.b16 %v2905, %v2895
    %v4316 = vpack.c.b16 %v2906, %v2896
    %v4317 = vpack.c.b16 %v2907, %v2897
    %v4318 = vpack.c.b16 %v2908, %v2898
    %v4319 = vpack.c.b16 %v2919, %v2909
    %v4320 = vpack.c.b16 %v2920, %v2910
    %v4321 = vpack.c.b16 %v2921, %v2911
    %v4322 = vpack.c.b16 %v2922, %v2912
    %v4323 = vpack.c.b16 %v2923, %v2913
    %v4324 = vpack.c.b16 %v2924, %v2914
    %v4325 = vpack.c.b16 %v2925, %v2915
    %v4326 = vpack.c.b16 %v2926, %v2916
    %v4327 = vpack.c.b16 %v2927, %v2917
    %v4328 = vpack.c.b16 %v2928, %v2918
    %v4329 = vpack.c.b16 %v2939, %v2929
    %v4330 = vpack.c.b16 %v2940, %v2930
    %v4331 = vpack.c.b16 %v2941, %v2931
    %v4332 = vpack.c.b16 %v2942, %v2932
    %v4333 = vpack.c.b16 %v2943, %v2933
    %v4334 = vpack.c.b16 %v2944, %v2934
    %v4335 = vpack.c.b16 %v2945, %v2935
    %v4336 = vpack.c.b16 %v2946, %v2936
    %v4337 = vpack.c.b16 %v2947, %v2937
    %v4338 = vpack.c.b16 %v2948, %v2938
    %v4339 = vpack.c.b16 %v2959, %v2949
    %v4340 = vpack.c.b16 %v2960, %v2950
    %v4341 = vpack.c.b16 %v2961, %v2951
    %v4342 = vpack.c.b16 %v2962, %v2952
    %v4343 = vpack.c.b16 %v2963, %v2953
    %v4344 = vpack.c.b16 %v2964, %v2954
    %v4345 = vpack.c.b16 %v2965, %v2955
    %v4346 = vpack.c.b16 %v2966, %v2956
    %v4347 = vpack.c.b16 %v2967, %v2957
    %v4348 = vpack.c.b16 %v2968, %v2958
    %v4349 = vpack.c.b16 %v2979, %v2969
    %v4350 = vpack.c.b16 %v2980, %v2970
    %v4351 = vpack.c.b16 %v2981, %v2971
    %v4352 = vpack.c.b16 %v2982, %v2972
    %v4353 = vpack.c.b16 %v2983, %v2973
    %v4354 = vpack.c.b16 %v2984, %v2974
    %v4355 = vpack.c.b16 %v2985, %v2975
    %v4356 = vpack.c.b16 %v2986, %v2976
    %v4357 = vpack.c.b16 %v2987, %v2977
    %v4358 = vpack.c.b16 %v2988, %v2978
    %v4359 = vpack.c.b16 %v2999, %v2989
    %v4360 = vpack.c.b16 %v3000, %v2990
    %v4361 = vpack.c.b16 %v3001, %v2991
    %v4362 = vpack.c.b16 %v3002, %v2992
    %v4363 = vpack.c.b16 %v3003, %v2993
    %v4364 = vpack.c.b16 %v3004, %v2994
    %v4365 = vpack.c.b16 %v3005, %v2995
    %v4366 = vpack.c.b16 %v3006, %v2996
    %v4367 = vpack.c.b16 %v3007, %v2997
    %v4368 = vpack.c.b16 %v3008, %v2998
    %v4369 = vpack.c.b16 %v3019, %v3009
    %v4370 = vpack.c.b16 %v3020, %v3010
    %v4371 = vpack.c.b16 %v3021, %v3011
    %v4372 = vpack.c.b16 %v3022, %v3012
    %v4373 = vpack.c.b16 %v3023, %v3013
    %v4374 = vpack.c.b16 %v3024, %v3014
    %v4375 = vpack.c.b16 %v3025, %v3015
    %v4376 = vpack.c.b16 %v3026, %v3016
    %v4377 = vpack.c.b16 %v3027, %v3017
    %v4378 = vpack.c.b16 %v3028, %v3018
    %v4379 = vpack.c.b16 %v3039, %v3029
    %v4380 = vpack.c.b16 %v3040, %v3030
    %v4381 = vpack.c.b16 %v3041, %v3031
    %v4382 = vpack.c.b16 %v3042, %v3032
    %v4383 = vpack.c.b16 %v3043, %v3033
    %v4384 = vpack.c.b16 %v3044, %v3034
    %v4385 = vpack.c.b16 %v3045, %v3035
    %v4386 = vpack.c.b16 %v3046, %v3036
    %v4387 = vpack.c.b16 %v3047, %v3037
    %v4388 = vpack.c.b16 %v3048, %v3038
    %v4389 = vpack.c.b16 %v3059, %v3049
    %v4390 = vpack.c.b16 %v3060, %v3050
    %v4391 = vpack.c.b16 %v3061, %v3051
    %v4392 = vpack.c.b16 %v3062, %v3052
    %v4393 = vpack.c.b16 %v3063, %v3053
    %v4394 = vpack.c.b16 %v3064, %v3054
    %v4395 = vpack.c.b16 %v3065, %v3055
    %v4396 = vpack.c.b16 %v3066, %v3056
    %v4397 = vpack.c.b16 %v3067, %v3057
    %v4398 = vpack.c.b16 %v3068, %v3058
    %v4399 = vpack.c.b16 %v3079, %v3069
    %v4400 = vpack.c.b16 %v3080, %v3070
    %v4401 = vpack.c.b16 %v3081, %v3071
    %v4402 = vpack.c.b16 %v3082, %v3072
    %v4403 = vpack.c.b16 %v3083, %v3073
    %v4404 = vpack.c.b16 %v3084, %v3074
    %v4405 = vpack.c.b16 %v3085, %v3075
    %v4406 = vpack.c.b16 %v3086, %v3076
    %v4407 = vpack.c.b16 %v3087, %v3077
    %v4408 = vpack.c.b16 %v3088, %v3078
    %v4409 = vpack.c.b16 %v3099, %v3089
    %v4410 = vpack.c.b16 %v3100, %v3090
    %v4411 = vpack.c.b16 %v3101, %v3091
    %v4412 = vpack.c.b16 %v3102, %v3092
    %v4413 = vpack.c.b16 %v3103, %v3093
    %v4414 = vpack.c.b16 %v3104, %v3094
    %v4415 = vpack.c.b16 %v3105, %v3095
    %v4416 = vpack.c.b16 %v3106, %v3096
    %v4417 = vpack.c.b16 %v3107, %v3097
    %v4418 = vpack.c.b16 %v3108, %v3098
    %v4419 = vpack.c.b16 %v3119, %v3109
    %v4420 = vpack.c.b16 %v3120, %v3110
    %v4421 = vpack.c.b16 %v3121, %v3111
    %v4422 = vpack.c.b16 %v3122, %v3112
    %v4423 = vpack.c.b16 %v3123, %v3113
    %v4424 = vpack.c.b16 %v3124, %v3114
    %v4425 = vpack.c.b16 %v3125, %v3115
    %v4426 = vpack.c.b16 %v3126, %v3116
    %v4427 = vpack.c.b16 %v3127, %v3117
    %v4428 = vpack.c.b16 %v3128, %v3118
    %v4429 = vpack.c.b16 %v3139, %v3129
    %v4430 = vpack.c.b16 %v3140, %v3130
    %v4431 = vpack.c.b16 %v3141, %v3131
    %v4432 = vpack.c.b16 %v3142, %v3132
    %v4433 = vpack.c.b16 %v3143, %v3133
    %v4434 = vpack.c.b16 %v3144, %v3134
    %v4435 = vpack.c.b16 %v3145, %v3135
    %v4436 = vpack.c.b16 %v3146, %v3136
    %v4437 = vpack.c.b16 %v3147, %v3137
    %v4438 = vpack.c.b16 %v3148, %v3138
    %v4439 = vpack.c.b16 %v3159, %v3149
    %v4440 = vpack.c.b16 %v3160, %v3150
    %v4441 = vpack.c.b16 %v3161, %v3151
    %v4442 = vpack.c.b16 %v3162, %v3152
    %v4443 = vpack.c.b16 %v3163, %v3153
    %v4444 = vpack.c.b16 %v3164, %v3154
    %v4445 = vpack.c.b16 %v3165, %v3155
    %v4446 = vpack.c.b16 %v3166, %v3156
    %v4447 = vpack.c.b16 %v3167, %v3157
    %v4448 = vpack.c.b16 %v3168, %v3158
    %v4449 = vpack.c.b16 %v3179, %v3169
    %v4450 = vpack.c.b16 %v3180, %v3170
    %v4451 = vpack.c.b16 %v3181, %v3171
    %v4452 = vpack.c.b16 %v3182, %v3172
    %v4453 = vpack.c.b16 %v3183, %v3173
    %v4454 = vpack.c.b16 %v3184, %v3174
    %v4455 = vpack.c.b16 %v3185, %v3175
    %v4456 = vpack.c.b16 %v3186, %v3176
    %v4457 = vpack.c.b16 %v3187, %v3177
    %v4458 = vpack.c.b16 %v3188, %v3178
    %v4459 = vpack.c.b16 %v3199, %v3189
    %v4460 = vpack.c.b16 %v3200, %v3190
    %v4461 = vpack.c.b16 %v3201, %v3191
    %v4462 = vpack.c.b16 %v3202, %v3192
    %v4463 = vpack.c.b16 %v3203, %v3193
    %v4464 = vpack.c.b16 %v3204, %v3194
    %v4465 = vpack.c.b16 %v3205, %v3195
    %v4466 = vpack.c.b16 %v3206, %v3196
    %v4467 = vpack.c.b16 %v3207, %v3197
    %v4468 = vpack.c.b16 %v3208, %v3198
    %v4469 = vpack.c.b16 %v3219, %v3209
    %v4470 = vpack.c.b16 %v3220, %v3210
    %v4471 = vpack.c.b16 %v3221, %v3211
    %v4472 = vpack.c.b16 %v3222, %v3212
    %v4473 = vpack.c.b16 %v3223, %v3213
    %v4474 = vpack.c.b16 %v3224, %v3214
    %v4475 = vpack.c.b16 %v3225, %v3215
    %v4476 = vpack.c.b16 %v3226, %v3216
    %v4477 = vpack.c.b16 %v3227, %v3217
    %v4478 = vpack.c.b16 %v3228, %v3218
    %v4479 = vpack.c.b16 %v3239, %v3229
    %v4480 = vpack.c.b16 %v3240, %v3230
    %v4481 = vpack.c.b16 %v3241, %v3231
    %v4482 = vpack.c.b16 %v3242, %v3232
    %v4483 = vpack.c.b16 %v3243, %v3233
    %v4484 = vpack.c.b16 %v3244, %v3234
    %v4485 = vpack.c.b16 %v3245, %v3235
    %v4486 = vpack.c.b16 %v3246, %v3236
    %v4487 = vpack.c.b16 %v3247, %v3237
    %v4488 = vpack.c.b16 %v3248, %v3238
    %v4489 = vpack.c.b16 %v3259, %v3249
    %v4490 = vpack.c.b16 %v3260, %v3250
    %v4491 = vpack.c.b16 %v3261, %v3251
    %v4492 = vpack.c.b16 %v3262, %v3252
    %v4493 = vpack.c.b16 %v3263, %v3253
    %v4494 = vpack.c.b16 %v3264, %v3254
    %v4495 = vpack.c.b16 %v3265, %v3255
    %v4496 = vpack.c.b16 %v3266, %v3256
    %v4497 = vpack.c.b16 %v3267, %v3257
    %v4498 = vpack.c.b16 %v3268, %v3258
    %v4499 = vpack.c.b16 %v3279, %v3269
    %v4500 = vpack.c.b16 %v3280, %v3270
    %v4501 = vpack.c.b16 %v3281, %v3271
    %v4502 = vpack.c.b16 %v3282, %v3272
    %v4503 = vpack.c.b16 %v3283, %v3273
    %v4504 = vpack.c.b16 %v3284, %v3274
    %v4505 = vpack.c.b16 %v3285, %v3275
    %v4506 = vpack.c.b16 %v3286, %v3276
    %v4507 = vpack.c.b16 %v3287, %v3277
    %v4508 = vpack.c.b16 %v3288, %v3278
    %v4509 = vpack.c.b16 %v3299, %v3289
    %v4510 = vpack.c.b16 %v3300, %v3290
    %v4511 = vpack.c.b16 %v3301, %v3291
    %v4512 = vpack.c.b16 %v3302, %v3292
    %v4513 = vpack.c.b16 %v3303, %v3293
    %v4514 = vpack.c.b16 %v3304, %v3294
    %v4515 = vpack.c.b16 %v3305, %v3295
    %v4516 = vpack.c.b16 %v3306, %v3296
    %v4517 = vpack.c.b16 %v3307, %v3297
    %v4518 = vpack.c.b16 %v3308, %v3298
    %v4519 = vpack.c.b16 %v3319, %v3309
    %v4520 = vpack.c.b16 %v3320, %v3310
    %v4521 = vpack.c.b16 %v3321, %v3311
    %v4522 = vpack.c.b16 %v3322, %v3312
    %v4523 = vpack.c.b16 %v3323, %v3313
    %v4524 = vpack.c.b16 %v3324, %v3314
    %v4525 = vpack.c.b16 %v3325, %v3315
    %v4526 = vpack.c.b16 %v3326, %v3316
    %v4527 = vpack.c.b16 %v3327, %v3317
    %v4528 = vpack.c.b16 %v3328, %v3318
    %v4529 = vpack.c.b16 %v3339, %v3329
    %v4530 = vpack.c.b16 %v3340, %v3330
    %v4531 = vpack.c.b16 %v3341, %v3331
    %v4532 = vpack.c.b16 %v3342, %v3332
    %v4533 = vpack.c.b16 %v3343, %v3333
    %v4534 = vpack.c.b16 %v3344, %v3334
    %v4535 = vpack.c.b16 %v3345, %v3335
    %v4536 = vpack.c.b16 %v3346, %v3336
    %v4537 = vpack.c.b16 %v3347, %v3337
    %v4538 = vpack.c.b16 %v3348, %v3338
    %v4539 = vpack.c.b16 %v3359, %v3349
    %v4540 = vpack.c.b16 %v3360, %v3350
    %v4541 = vpack.c.b16 %v3361, %v3351
    %v4542 = vpack.c.b16 %v3362, %v3352
    %v4543 = vpack.c.b16 %v3363, %v3353
    %v4544 = vpack.c.b16 %v3364, %v3354
    %v4545 = vpack.c.b16 %v3365, %v3355
    %v4546 = vpack.c.b16 %v3366, %v3356
    %v4547 = vpack.c.b16 %v3367, %v3357
    %v4548 = vpack.c.b16 %v3368, %v3358
    %v4549 = vpack.c.b16 %v3379, %v3369
    %v4550 = vpack.c.b16 %v3380, %v3370
    %v4551 = vpack.c.b16 %v3381, %v3371
    %v4552 = vpack.c.b16 %v3382, %v3372
    %v4553 = vpack.c.b16 %v3383, %v3373
    %v4554 = vpack.c.b16 %v3384, %v3374
    %v4555 = vpack.c.b16 %v3385, %v3375
    %v4556 = vpack.c.b16 %v3386, %v3376
    %v4557 = vpack.c.b16 %v3387, %v3377
    %v4558 = vpack.c.b16 %v3388, %v3378
    %v4559 = vpack.c.b16 %v3399, %v3389
    %v4560 = vpack.c.b16 %v3400, %v3390
    %v4561 = vpack.c.b16 %v3401, %v3391
    %v4562 = vpack.c.b16 %v3402, %v3392
    %v4563 = vpack.c.b16 %v3403, %v3393
    %v4564 = vpack.c.b16 %v3404, %v3394
    %v4565 = vpack.c.b16 %v3405, %v3395
    %v4566 = vpack.c.b16 %v3406, %v3396
    %v4567 = vpack.c.b16 %v3407, %v3397
    %v4568 = vpack.c.b16 %v3408, %v3398
    %v4569 = vpack.c.b16 %v3419, %v3409
    %v4570 = vpack.c.b16 %v3420, %v3410
    %v4571 = vpack.c.b16 %v3421, %v3411
    %v4572 = vpack.c.b16 %v3422, %v3412
    %v4573 = vpack.c.b16 %v3423, %v3413
    %v4574 = vpack.c.b16 %v3424, %v3414
    %v4575 = vpack.c.b16 %v3425, %v3415
    %v4576 = vpack.c.b16 %v3426, %v3416
    %v4577 = vpack.c.b16 %v3427, %v3417
    %v4578 = vpack.c.b16 %v3428, %v3418
    %v4579 = vpack.c.b16 %v3439, %v3429
    %v4580 = vpack.c.b16 %v3440, %v3430
    %v4581 = vpack.c.b16 %v3441, %v3431
    %v4582 = vpack.c.b16 %v3442, %v3432
    %v4583 = vpack.c.b16 %v3443, %v3433
    %v4584 = vpack.c.b16 %v3444, %v3434
    %v4585 = vpack.c.b16 %v3445, %v3435
    %v4586 = vpack.c.b16 %v3446, %v3436
    %v4587 = vpack.c.b16 %v3447, %v3437
    %v4588 = vpack.c.b16 %v3448, %v3438
    %v4589 = vpack.c.b16 %v3459, %v3449
    %v4590 = vpack.c.b16 %v3460, %v3450
    %v4591 = vpack.c.b16 %v3461, %v3451
    %v4592 = vpack.c.b16 %v3462, %v3452
    %v4593 = vpack.c.b16 %v3463, %v3453
    %v4594 = vpack.c.b16 %v3464, %v3454
    %v4595 = vpack.c.b16 %v3465, %v3455
    %v4596 = vpack.c.b16 %v3466, %v3456
    %v4597 = vpack.c.b16 %v3467, %v3457
    %v4598 = vpack.c.b16 %v3468, %v3458
    %v4599 = vpack.c.b16 %v3479, %v3469
    %v4600 = vpack.c.b16 %v3480, %v3470
    %v4601 = vpack.c.b16 %v3481, %v3471
    %v4602 = vpack.c.b16 %v3482, %v3472
    %v4603 = vpack.c.b16 %v3483, %v3473
    %v4604 = vpack.c.b16 %v3484, %v3474
    %v4605 = vpack.c.b16 %v3485, %v3475
    %v4606 = vpack.c.b16 %v3486, %v3476
    %v4607 = vpack.c.b16 %v3487, %v3477
    %v4608 = vpack.c.b16 %v3488, %v3478
    %v4609 = vpack.c.b16 %v3499, %v3489
    %v4610 = vpack.c.b16 %v3500, %v3490
    %v4611 = vpack.c.b16 %v3501, %v3491
    %v4612 = vpack.c.b16 %v3502, %v3492
    %v4613 = vpack.c.b16 %v3503, %v3493
    %v4614 = vpack.c.b16 %v3504, %v3494
    %v4615 = vpack.c.b16 %v3505, %v3495
    %v4616 = vpack.c.b16 %v3506, %v3496
    %v4617 = vpack.c.b16 %v3507, %v3497
    %v4618 = vpack.c.b16 %v3508, %v3498
    %v4619 = vpack.c.b16 %v3519, %v3509
    %v4620 = vpack.c.b16 %v3520, %v3510
    %v4621 = vpack.c.b16 %v3521, %v3511
    %v4622 = vpack.c.b16 %v3522, %v3512
    %v4623 = vpack.c.b16 %v3523, %v3513
    %v4624 = vpack.c.b16 %v3524, %v3514
    %v4625 = vpack.c.b16 %v3525, %v3515
    %v4626 = vpack.c.b16 %v3526, %v3516
    %v4627 = vpack.c.b16 %v3527, %v3517
    %v4628 = vpack.c.b16 %v3528, %v3518
    %v4629 = vpack.c.b16 %v3539, %v3529
    %v4630 = vpack.c.b16 %v3540, %v3530
    %v4631 = vpack.c.b16 %v3541, %v3531
    %v4632 = vpack.c.b16 %v3542, %v3532
    %v4633 = vpack.c.b16 %v3543, %v3533
    %v4634 = vpack.c.b16 %v3544, %v3534
    %v4635 = vpack.c.b16 %v3545, %v3535
    %v4636 = vpack.c.b16 %v3546, %v3536
    %v4637 = vpack.c.b16 %v3547, %v3537
    %v4638 = vpack.c.b16 %v3548, %v3538
    %v4639 = vpack.c.b16 %v3559, %v3549
    %v4640 = vpack.c.b16 %v3560, %v3550
    %v4641 = vpack.c.b16 %v3561, %v3551
    %v4642 = vpack.c.b16 %v3562, %v3552
    %v4643 = vpack.c.b16 %v3563, %v3553
    %v4644 = vpack.c.b16 %v3564, %v3554
    %v4645 = vpack.c.b16 %v3565, %v3555
    %v4646 = vpack.c.b16 %v3566, %v3556
    %v4647 = vpack.c.b16 %v3567, %v3557
    %v4648 = vpack.c.b16 %v3568, %v3558
    %v4649 = vpack.c.b16 %v3579, %v3569
    %v4650 = vpack.c.b16 %v3580, %v3570
    %v4651 = vpack.c.b16 %v3581, %v3571
    %v4652 = vpack.c.b16 %v3582, %v3572
    %v4653 = vpack.c.b16 %v3583, %v3573
    %v4654 = vpack.c.b16 %v3584, %v3574
    %v4655 = vpack.c.b16 %v3585, %v3575
    %v4656 = vpack.c.b16 %v3586, %v3576
    %v4657 = vpack.c.b16 %v3587, %v3577
    %v4658 = vpack.c.b16 %v3588, %v3578
    %v4659 = vpack.c.b16 %v3599, %v3589
    %v4660 = vpack.c.b16 %v3600, %v3590
    %v4661 = vpack.c.b16 %v3601, %v3591
    %v4662 = vpack.c.b16 %v3602, %v3592
    %v4663 = vpack.c.b16 %v3603, %v3593
    %v4664 = vpack.c.b16 %v3604, %v3594
    %v4665 = vpack.c.b16 %v3605, %v3595
    %v4666 = vpack.c.b16 %v3606, %v3596
    %v4667 = vpack.c.b16 %v3607, %v3597
    %v4668 = vpack.c.b16 %v3608, %v3598
    %v4669 = vpack.c.b16 %v3619, %v3609
    %v4670 = vpack.c.b16 %v3620, %v3610
    %v4671 = vpack.c.b16 %v3621, %v3611
    %v4672 = vpack.c.b16 %v3622, %v3612
    %v4673 = vpack.c.b16 %v3623, %v3613
    %v4674 = vpack.c.b16 %v3624, %v3614
    %v4675 = vpack.c.b16 %v3625, %v3615
    %v4676 = vpack.c.b16 %v3626, %v3616
    %v4677 = vpack.c.b16 %v3627, %v3617
    %v4678 = vpack.c.b16 %v3628, %v3618
    %v4679 = vpack.c.b16 %v3639, %v3629
    %v4680 = vpack.c.b16 %v3640, %v3630
    %v4681 = vpack.c.b16 %v3641, %v3631
    %v4682 = vpack.c.b16 %v3642, %v3632
    %v4683 = vpack.c.b16 %v3643, %v3633
    %v4684 = vpack.c.b16 %v3644, %v3634
    %v4685 = vpack.c.b16 %v3645, %v3635
    %v4686 = vpack.c.b16 %v3646, %v3636
    %v4687 = vpack.c.b16 %v3647, %v3637
    %v4688 = vpack.c.b16 %v3648, %v3638
    %v4689 = vpack.c.b16 %v3659, %v3649
    %v4690 = vpack.c.b16 %v3660, %v3650
    %v4691 = vpack.c.b16 %v3661, %v3651
    %v4692 = vpack.c.b16 %v3662, %v3652
    %v4693 = vpack.c.b16 %v3663, %v3653
    %v4694 = vpack.c.b16 %v3664, %v3654
    %v4695 = vpack.c.b16 %v3665, %v3655
    %v4696 = vpack.c.b16 %v3666, %v3656
    %v4697 = vpack.c.b16 %v3667, %v3657
    %v4698 = vpack.c.b16 %v3668, %v3658
    %v4699 = vpack.c.b16 %v3679, %v3669
    %v4700 = vpack.c.b16 %v3680, %v3670
    %v4701 = vpack.c.b16 %v3681, %v3671
    %v4702 = vpack.c.b16 %v3682, %v3672
    %v4703 = vpack.c.b16 %v3683, %v3673
    %v4704 = vpack.c.b16 %v3684, %v3674
    %v4705 = vpack.c.b16 %v3685, %v3675
    %v4706 = vpack.c.b16 %v3686, %v3676
    %v4707 = vpack.c.b16 %v3687, %v3677
    %v4708 = vpack.c.b16 %v3688, %v3678
    %v4709 = vpack.c.b16 %v3699, %v3689
    %v4710 = vpack.c.b16 %v3700, %v3690
    %v4711 = vpack.c.b16 %v3701, %v3691
    %v4712 = vpack.c.b16 %v3702, %v3692
    %v4713 = vpack.c.b16 %v3703, %v3693
    %v4714 = vpack.c.b16 %v3704, %v3694
    %v4715 = vpack.c.b16 %v3705, %v3695
    %v4716 = vpack.c.b16 %v3706, %v3696
    %v4717 = vpack.c.b16 %v3707, %v3697
    %v4718 = vpack.c.b16 %v3708, %v3698
    %v4719 = vpack.c.b16 %v3719, %v3709
    %v4720 = vpack.c.b16 %v3720, %v3710
    %v4721 = vpack.c.b16 %v3721, %v3711
    %v4722 = vpack.c.b16 %v3722, %v3712
    %v4723 = vpack.c.b16 %v3723, %v3713
    %v4724 = vpack.c.b16 %v3724, %v3714
    %v4725 = vpack.c.b16 %v3725, %v3715
    %v4726 = vpack.c.b16 %v3726, %v3716
    %v4727 = vpack.c.b16 %v3727, %v3717
    %v4728 = vpack.c.b16 %v3728, %v3718
    %v4729 = vpack.c.b16 %v3739, %v3729
    %v4730 = vpack.c.b16 %v3740, %v3730
    %v4731 = vpack.c.b16 %v3741, %v3731
    %v4732 = vpack.c.b16 %v3742, %v3732
    %v4733 = vpack.c.b16 %v3743, %v3733
    %v4734 = vpack.c.b16 %v3744, %v3734
    %v4735 = vpack.c.b16 %v3745, %v3735
    %v4736 = vpack.c.b16 %v3746, %v3736
    %v4737 = vpack.c.b16 %v3747, %v3737
    %v4738 = vpack.c.b16 %v3748, %v3738
    %v4739 = vpack.c.b16 %v3759, %v3749
    %v4740 = vpack.c.b16 %v3760, %v3750
    %v4741 = vpack.c.b16 %v3761, %v3751
    %v4742 = vpack.c.b16 %v3762, %v3752
    %v4743 = vpack.c.b16 %v3763, %v3753
    %v4744 = vpack.c.b16 %v3764, %v3754
    %v4745 = vpack.c.b16 %v3765, %v3755
    %v4746 = vpack.c.b16 %v3766, %v3756
    %v4747 = vpack.c.b16 %v3767, %v3757
    %v4748 = vpack.c.b16 %v3768, %v3758
    %v4749 = vpack.c.b16 %v3779, %v3769
    %v4750 = vpack.c.b16 %v3780, %v3770
    %v4751 = vpack.c.b16 %v3781, %v3771
    %v4752 = vpack.c.b16 %v3782, %v3772
    %v4753 = vpack.c.b16 %v3783, %v3773
    %v4754 = vpack.c.b16 %v3784, %v3774
    %v4755 = vpack.c.b16 %v3785, %v3775
    %v4756 = vpack.c.b16 %v3786, %v3776
    %v4757 = vpack.c.b16 %v3787, %v3777
    %v4758 = vpack.c.b16 %v3788, %v3778
    %v4759 = vpack.c.b16 %v3799, %v3789
    %v4760 = vpack.c.b16 %v3800, %v3790
    %v4761 = vpack.c.b16 %v3801, %v3791
    %v4762 = vpack.c.b16 %v3802, %v3792
    %v4763 = vpack.c.b16 %v3803, %v3793
    %v4764 = vpack.c.b16 %v3804, %v3794
    %v4765 = vpack.c.b16 %v3805, %v3795
    %v4766 = vpack.c.b16 %v3806, %v3796
    %v4767 = vpack.c.b16 %v3807, %v3797
    %v4768 = vpack.c.b16 %v3808, %v3798
    %v4769 = vpack.c.b16 %v3819, %v3809
    %v4770 = vpack.c.b16 %v3820, %v3810
    %v4771 = vpack.c.b16 %v3821, %v3811
    %v4772 = vpack.c.b16 %v3822, %v3812
    %v4773 = vpack.c.b16 %v3823, %v3813
    %v4774 = vpack.c.b16 %v3824, %v3814
    %v4775 = vpack.c.b16 %v3825, %v3815
    %v4776 = vpack.c.b16 %v3826, %v3816
    %v4777 = vpack.c.b16 %v3827, %v3817
    %v4778 = vpack.c.b16 %v3828, %v3818
    %v4779 = vpack.c.b16 %v3839, %v3829
    %v4780 = vpack.c.b16 %v3840, %v3830
    %v4781 = vpack.c.b16 %v3841, %v3831
    %v4782 = vpack.c.b16 %v3842, %v3832
    %v4783 = vpack.c.b16 %v3843, %v3833
    %v4784 = vpack.c.b16 %v3844, %v3834
    %v4785 = vpack.c.b16 %v3845, %v3835
    %v4786 = vpack.c.b16 %v3846, %v3836
    %v4787 = vpack.c.b16 %v3847, %v3837
    %v4788 = vpack.c.b16 %v3848, %v3838
    %v4789 = vpack.c.b16 %v3859, %v3849
    %v4790 = vpack.c.b16 %v3860, %v3850
    %v4791 = vpack.c.b16 %v3861, %v3851
    %v4792 = vpack.c.b16 %v3862, %v3852
    %v4793 = vpack.c.b16 %v3863, %v3853
    %v4794 = vpack.c.b16 %v3864, %v3854
    %v4795 = vpack.c.b16 %v3865, %v3855
    %v4796 = vpack.c.b16 %v3866, %v3856
    %v4797 = vpack.c.b16 %v3867, %v3857
    %v4798 = vpack.c.b16 %v3868, %v3858
    %v4799 = vpack.c.b16 %v3879, %v3869
    %v4800 = vpack.c.b16 %v3880, %v3870
    %v4801 = vpack.c.b16 %v3881, %v3871
    %v4802 = vpack.c.b16 %v3882, %v3872
    %v4803 = vpack.c.b16 %v3883, %v3873
    %v4804 = vpack.c.b16 %v3884, %v3874
    %v4805 = vpack.c.b16 %v3885, %v3875
    %v4806 = vpack.c.b16 %v3886, %v3876
    %v4807 = vpack.c.b16 %v3887, %v3877
    %v4808 = vpack.c.b16 %v3888, %v3878
    %v4809 = vpack.c.b16 %v3899, %v3889
    %v4810 = vpack.c.b16 %v3900, %v3890
    %v4811 = vpack.c.b16 %v3901, %v3891
    %v4812 = vpack.c.b16 %v3902, %v3892
    %v4813 = vpack.c.b16 %v3903, %v3893
    %v4814 = vpack.c.b16 %v3904, %v3894
    %v4815 = vpack.c.b16 %v3905, %v3895
    %v4816 = vpack.c.b16 %v3906, %v3896
    %v4817 = vpack.c.b16 %v3907, %v3897
    %v4818 = vpack.c.b16 %v3908, %v3898
    %v4819 = vpack.c.b16 %v3919, %v3909
    %v4820 = vpack.c.b16 %v3920, %v3910
    %v4821 = vpack.c.b16 %v3921, %v3911
    %v4822 = vpack.c.b16 %v3922, %v3912
    %v4823 = vpack.c.b16 %v3923, %v3913
    %v4824 = vpack.c.b16 %v3924, %v3914
    %v4825 = vpack.c.b16 %v3925, %v3915
    %v4826 = vpack.c.b16 %v3926, %v3916
    %v4827 = vpack.c.b16 %v3927, %v3917
    %v4828 = vpack.c.b16 %v3928, %v3918
    %v4829 = vpack.c.b16 %v3939, %v3929
    %v4830 = vpack.c.b16 %v3940, %v3930
    %v4831 = vpack.c.b16 %v3941, %v3931
    %v4832 = vpack.c.b16 %v3942, %v3932
    %v4833 = vpack.c.b16 %v3943, %v3933
    %v4834 = vpack.c.b16 %v3944, %v3934
    %v4835 = vpack.c.b16 %v3945, %v3935
    %v4836 = vpack.c.b16 %v3946, %v3936
    %v4837 = vpack.c.b16 %v3947, %v3937
    %v4838 = vpack.c.b16 %v3948, %v3938
    %v4839 = vpack.c.b16 %v3959, %v3949
    %v4840 = vpack.c.b16 %v3960, %v3950
    %v4841 = vpack.c.b16 %v3961, %v3951
    %v4842 = vpack.c.b16 %v3962, %v3952
    %v4843 = vpack.c.b16 %v3963, %v3953
    %v4844 = vpack.c.b16 %v3964, %v3954
    %v4845 = vpack.c.b16 %v3965, %v3955
    %v4846 = vpack.c.b16 %v3966, %v3956
    %v4847 = vpack.c.b16 %v3967, %v3957
    %v4848 = vpack.c.b16 %v3968, %v3958
    %v4849 = vpack.c.b16 %v3979, %v3969
    %v4850 = vpack.c.b16 %v3980, %v3970
    %v4851 = vpack.c.b16 %v3981, %v3971
    %v4852 = vpack.c.b16 %v3982, %v3972
    %v4853 = vpack.c.b16 %v3983, %v3973
    %v4854 = vpack.c.b16 %v3984, %v3974
    %v4855 = vpack.c.b16 %v3985, %v3975
    %v4856 = vpack.c.b16 %v3986, %v3976
    %v4857 = vpack.c.b16 %v3987, %v3977
    %v4858 = vpack.c.b16 %v3988, %v3978
    %v4859 = vpack.c.b16 %v3999, %v3989
    %v4860 = vpack.c.b16 %v4000, %v3990
    %v4861 = vpack.c.b16 %v4001, %v3991
    %v4862 = vpack.c.b16 %v4002, %v3992
    %v4863 = vpack.c.b16 %v4003, %v3993
    %v4864 = vpack.c.b16 %v4004, %v3994
    %v4865 = vpack.c.b16 %v4005, %v3995
    %v4866 = vpack.c.b16 %v4006, %v3996
    %v4867 = vpack.c.b16 %v4007, %v3997
    %v4868 = vpack.c.b16 %v4008, %v3998
    %v4869 = vpack.c.b16 %v4019, %v4009
    %v4870 = vpack.c.b16 %v4020, %v4010
    %v4871 = vpack.c.b16 %v4021, %v4011
    %v4872 = vpack.c.b16 %v4022, %v4012
    %v4873 = vpack.c.b16 %v4023, %v4013
    %v4874 = vpack.c.b16 %v4024, %v4014
    %v4875 = vpack.c.b16 %v4025, %v4015
    %v4876 = vpack.c.b16 %v4026, %v4016
    %v4877 = vpack.c.b16 %v4027, %v4017
    %v4878 = vpack.c.b16 %v4028, %v4018
    %v4879 = vpack.c.b16 %v4039, %v4029
    %v4880 = vpack.c.b16 %v4040, %v4030
    %v4881 = vpack.c.b16 %v4041, %v4031
    %v4882 = vpack.c.b16 %v4042, %v4032
    %v4883 = vpack.c.b16 %v4043, %v4033
    %v4884 = vpack.c.b16 %v4044, %v4034
    %v4885 = vpack.c.b16 %v4045, %v4035
    %v4886 = vpack.c.b16 %v4046, %v4036
    %v4887 = vpack.c.b16 %v4047, %v4037
    %v4888 = vpack.c.b16 %v4048, %v4038
    %v4889 = vpack.c.b16 %v4059, %v4049
    %v4890 = vpack.c.b16 %v4060, %v4050
    %v4891 = vpack.c.b16 %v4061, %v4051
    %v4892 = vpack.c.b16 %v4062, %v4052
    %v4893 = vpack.c.b16 %v4063, %v4053
    %v4894 = vpack.c.b16 %v4064, %v4054
    %v4895 = vpack.c.b16 %v4065, %v4055
    %v4896 = vpack.c.b16 %v4066, %v4056
    %v4897 = vpack.c.b16 %v4067, %v4057
    %v4898 = vpack.c.b16 %v4068, %v4058
    %v4899 = vpack.c.b16 %v4079, %v4069
    %v4900 = vpack.c.b16 %v4080, %v4070
    %v4901 = vpack.c.b16 %v4081, %v4071
    %v4902 = vpack.c.b16 %v4082, %v4072
    %v4903 = vpack.c.b16 %v4083, %v4073
    %v4904 = vpack.c.b16 %v4084, %v4074
    %v4905 = vpack.c.b16 %v4085, %v4075
    %v4906 = vpack.c.b16 %v4086, %v4076
    %v4907 = vpack.c.b16 %v4087, %v4077
    %v4908 = vpack.c.b16 %v4088, %v4078
    %v4909 = vpack.c.b16 %v4099, %v4089
    %v4910 = vpack.c.b16 %v4100, %v4090
    %v4911 = vpack.c.b16 %v4101, %v4091
    %v4912 = vpack.c.b16 %v4102, %v4092
    %v4913 = vpack.c.b16 %v4103, %v4093
    %v4914 = vpack.c.b16 %v4104, %v4094
    %v4915 = vpack.c.b16 %v4105, %v4095
    %v4916 = vpack.c.b16 %v4106, %v4096
    %v4917 = vpack.c.b16 %v4107, %v4097
    %v4918 = vpack.c.b16 %v4108, %v4098
    %v4919 = vpack.c.b16 %v4119, %v4109
    %v4920 = vpack.c.b16 %v4120, %v4110
    %v4921 = vpack.c.b16 %v4121, %v4111
    %v4922 = vpack.c.b16 %v4122, %v4112
    %v4923 = vpack.c.b16 %v4123, %v4113
    %v4924 = vpack.c.b16 %v4124, %v4114
    %v4925 = vpack.c.b16 %v4125, %v4115
    %v4926 = vpack.c.b16 %v4126, %v4116
    %v4927 = vpack.c.b16 %v4127, %v4117
    %v4928 = vpack.c.b16 %v4128, %v4118
    %5729 = vmatprep.subr.bf16.mxu0 %v4130
    %5730 = vmatpush1.bf16.msra.mxu0 %v4129
    %5731 = vmatprep.subr.bf16.mxu0 %v4140
    %5732 = vmatpush1.bf16.msra.mxu0 %v4139
    %5733 = vmatprep.subr.bf16.mxu0 %v4150
    %5734 = vmatpush1.bf16.msra.mxu0 %v4149
    %5735 = vmatprep.subr.bf16.mxu0 %v4160
    %5736 = vmatpush1.bf16.msra.mxu0 %v4159
    %5737 = vmatprep.subr.bf16.mxu0 %v4170
    %5738 = vmatpush1.bf16.msra.mxu0 %v4169
    %5739 = vmatprep.subr.bf16.mxu0 %v4180
    %5740 = vmatpush1.bf16.msra.mxu0 %v4179
    %5741 = vmatprep.subr.bf16.mxu0 %v4190
    %5742 = vmatpush1.bf16.msra.mxu0 %v4189
    %5743 = vmatprep.subr.bf16.mxu0 %v4200
    %5744 = vmatpush1.bf16.msra.mxu0 %v4199
    %5745 = vmatprep.subr.bf16.mxu0 %v4210
    %5746 = vmatpush1.bf16.msra.mxu0 %v4209
    %5747 = vmatprep.subr.bf16.mxu0 %v4220
    %5748 = vmatpush1.bf16.msra.mxu0 %v4219
    %5749 = vmatprep.subr.bf16.mxu0 %v4230
    %5750 = vmatpush1.bf16.msra.mxu0 %v4229
    %5751 = vmatprep.subr.bf16.mxu0 %v4240
    %5752 = vmatpush1.bf16.msra.mxu0 %v4239
    %5753 = vmatprep.subr.bf16.mxu0 %v4250
    %5754 = vmatpush1.bf16.msra.mxu0 %v4249
    %5755 = vmatprep.subr.bf16.mxu0 %v4260
    %5756 = vmatpush1.bf16.msra.mxu0 %v4259
    %5757 = vmatprep.subr.bf16.mxu0 %v4270
    %5758 = vmatpush1.bf16.msra.mxu0 %v4269
    %5759 = vmatprep.subr.bf16.mxu0 %v4280
    %5760 = vmatpush1.bf16.msra.mxu0 %v4279
    %5761 = vmatprep.mubr.bf16.mxu0 %v866
    %5762 = vmatmul.mubr.bf16.gmra.mrb[0].mxu0 %v865
    %v5763 = vpop.f32.mrb[0].mxu0
    %v5764 = vadd.f32 %v1682, %v5763
    %v5765 = vpop.f32.mrb[0].mxu0
    %v5766 = vadd.f32 %v1686, %v5765
    %v5767 = vpop.f32.mrb[0].mxu0
    %v5768 = vpop.f32.mrb[0].mxu0
    %5769 = vdwg.mxu0
    %5770 = vmatprep.subr.bf16.mxu0 %v4290
    %5771 = vmatpush1.bf16.msra.mxu0 %v4289
    %5772 = vmatprep.subr.bf16.mxu0 %v4300
    %5773 = vmatpush1.bf16.msra.mxu0 %v4299
    %5774 = vmatprep.subr.bf16.mxu0 %v4310
    %5775 = vmatpush1.bf16.msra.mxu0 %v4309
    %5776 = vmatprep.subr.bf16.mxu0 %v4320
    %5777 = vmatpush1.bf16.msra.mxu0 %v4319
    %5778 = vmatprep.subr.bf16.mxu0 %v4330
    %5779 = vmatpush1.bf16.msra.mxu0 %v4329
    %5780 = vmatprep.subr.bf16.mxu0 %v4340
    %5781 = vmatpush1.bf16.msra.mxu0 %v4339
    %5782 = vmatprep.subr.bf16.mxu0 %v4350
    %5783 = vmatpush1.bf16.msra.mxu0 %v4349
    %5784 = vmatprep.subr.bf16.mxu0 %v4360
    %5785 = vmatpush1.bf16.msra.mxu0 %v4359
    %5786 = vmatprep.subr.bf16.mxu0 %v4370
    %5787 = vmatpush1.bf16.msra.mxu0 %v4369
    %5788 = vmatprep.subr.bf16.mxu0 %v4380
    %5789 = vmatpush1.bf16.msra.mxu0 %v4379
    %5790 = vmatprep.subr.bf16.mxu0 %v4390
    %5791 = vmatpush1.bf16.msra.mxu0 %v4389
    %5792 = vmatprep.subr.bf16.mxu0 %v4400
    %5793 = vmatpush1.bf16.msra.mxu0 %v4399
    %5794 = vmatprep.subr.bf16.mxu0 %v4410
    %5795 = vmatpush1.bf16.msra.mxu0 %v4409
    %5796 = vmatprep.subr.bf16.mxu0 %v4420
    %5797 = vmatpush1.bf16.msra.mxu0 %v4419
    %5798 = vmatprep.subr.bf16.mxu0 %v4430
    %5799 = vmatpush1.bf16.msra.mxu0 %v4429
    %5800 = vmatprep.subr.bf16.mxu0 %v4440
    %5801 = vmatpush1.bf16.msra.mxu0 %v4439
    %5802 = vmatprep.mubr.bf16.mxu0 %v868
    %5803 = vmatmul.mubr.bf16.gmra.mrb[0].mxu0 %v867
    %v5804 = vpop.f32.mrb[0].mxu0
    %v5805 = vadd.f32 %v5764, %v5804
    %v5806 = vpop.f32.mrb[0].mxu0
    %v5807 = vadd.f32 %v5766, %v5806
    %v5808 = vpop.f32.mrb[0].mxu0
    %v5809 = vpop.f32.mrb[0].mxu0
    %5810 = vdwg.mxu0
    %5811 = vmatprep.subr.bf16.mxu0 %v4450
    %5812 = vmatpush1.bf16.msra.mxu0 %v4449
    %5813 = vmatprep.subr.bf16.mxu0 %v4460
    %5814 = vmatpush1.bf16.msra.mxu0 %v4459
    %5815 = vmatprep.subr.bf16.mxu0 %v4470
    %5816 = vmatpush1.bf16.msra.mxu0 %v4469
    %5817 = vmatprep.subr.bf16.mxu0 %v4480
    %5818 = vmatpush1.bf16.msra.mxu0 %v4479
    %5819 = vmatprep.subr.bf16.mxu0 %v4490
    %5820 = vmatpush1.bf16.msra.mxu0 %v4489
    %5821 = vmatprep.subr.bf16.mxu0 %v4500
    %5822 = vmatpush1.bf16.msra.mxu0 %v4499
    %5823 = vmatprep.subr.bf16.mxu0 %v4510
    %5824 = vmatpush1.bf16.msra.mxu0 %v4509
    %5825 = vmatprep.subr.bf16.mxu0 %v4520
    %5826 = vmatpush1.bf16.msra.mxu0 %v4519
    %5827 = vmatprep.subr.bf16.mxu0 %v4530
    %5828 = vmatpush1.bf16.msra.mxu0 %v4529
    %5829 = vmatprep.subr.bf16.mxu0 %v4540
    %5830 = vmatpush1.bf16.msra.mxu0 %v4539
    %5831 = vmatprep.subr.bf16.mxu0 %v4550
    %5832 = vmatpush1.bf16.msra.mxu0 %v4549
    %5833 = vmatprep.subr.bf16.mxu0 %v4560
    %5834 = vmatpush1.bf16.msra.mxu0 %v4559
    %5835 = vmatprep.subr.bf16.mxu0 %v4570
    %5836 = vmatpush1.bf16.msra.mxu0 %v4569
    %5837 = vmatprep.subr.bf16.mxu0 %v4580
    %5838 = vmatpush1.bf16.msra.mxu0 %v4579
    %5839 = vmatprep.subr.bf16.mxu0 %v4590
    %5840 = vmatpush1.bf16.msra.mxu0 %v4589
    %5841 = vmatprep.subr.bf16.mxu0 %v4600
    %5842 = vmatpush1.bf16.msra.mxu0 %v4599
    %5843 = vmatprep.mubr.bf16.mxu0 %v870
    %5844 = vmatmul.mubr.bf16.gmra.mrb[0].mxu0 %v869
    %v5845 = vpop.f32.mrb[0].mxu0
    %v5846 = vadd.f32 %v5805, %v5845
    %v5847 = vpop.f32.mrb[0].mxu0
    %v5848 = vadd.f32 %v5807, %v5847
    %v5849 = vpop.f32.mrb[0].mxu0
    %v5850 = vpop.f32.mrb[0].mxu0
    %5851 = vdwg.mxu0
    %5852 = vmatprep.subr.bf16.mxu0 %v4610
    %5853 = vmatpush1.bf16.msra.mxu0 %v4609
    %5854 = vmatprep.subr.bf16.mxu0 %v4620
    %5855 = vmatpush1.bf16.msra.mxu0 %v4619
    %5856 = vmatprep.subr.bf16.mxu0 %v4630
    %5857 = vmatpush1.bf16.msra.mxu0 %v4629
    %5858 = vmatprep.subr.bf16.mxu0 %v4640
    %5859 = vmatpush1.bf16.msra.mxu0 %v4639
    %5860 = vmatprep.subr.bf16.mxu0 %v4650
    %5861 = vmatpush1.bf16.msra.mxu0 %v4649
    %5862 = vmatprep.subr.bf16.mxu0 %v4660
    %5863 = vmatpush1.bf16.msra.mxu0 %v4659
    %5864 = vmatprep.subr.bf16.mxu0 %v4670
    %5865 = vmatpush1.bf16.msra.mxu0 %v4669
    %5866 = vmatprep.subr.bf16.mxu0 %v4680
    %5867 = vmatpush1.bf16.msra.mxu0 %v4679
    %5868 = vmatprep.subr.bf16.mxu0 %v4690
    %5869 = vmatpush1.bf16.msra.mxu0 %v4689
    %5870 = vmatprep.subr.bf16.mxu0 %v4700
    %5871 = vmatpush1.bf16.msra.mxu0 %v4699
    %5872 = vmatprep.subr.bf16.mxu0 %v4710
    %5873 = vmatpush1.bf16.msra.mxu0 %v4709
    %5874 = vmatprep.subr.bf16.mxu0 %v4720
    %5875 = vmatpush1.bf16.msra.mxu0 %v4719
    %5876 = vmatprep.subr.bf16.mxu0 %v4730
    %5877 = vmatpush1.bf16.msra.mxu0 %v4729
    %5878 = vmatprep.subr.bf16.mxu0 %v4740
    %5879 = vmatpush1.bf16.msra.mxu0 %v4739
    %5880 = vmatprep.subr.bf16.mxu0 %v4750
    %5881 = vmatpush1.bf16.msra.mxu0 %v4749
    %5882 = vmatprep.subr.bf16.mxu0 %v4760
    %5883 = vmatpush1.bf16.msra.mxu0 %v4759
    %5884 = vmatprep.mubr.bf16.mxu0 %v872
    %5885 = vmatmul.mubr.bf16.gmra.mrb[0].mxu0 %v871
    %v5886 = vpop.f32.mrb[0].mxu0
    %v5887 = vadd.f32 %v5846, %v5886
    %v5888 = vpop.f32.mrb[0].mxu0
    %v5889 = vadd.f32 %v5848, %v5888
    %v5890 = vpop.f32.mrb[0].mxu0
    %v5891 = vpop.f32.mrb[0].mxu0
    %5892 = vdwg.mxu0
    %5893 = vmatprep.subr.bf16.mxu0 %v4770
    %5894 = vmatpush1.bf16.msra.mxu0 %v4769
    %5895 = vmatprep.subr.bf16.mxu0 %v4780
    %5896 = vmatpush1.bf16.msra.mxu0 %v4779
    %5897 = vmatprep.subr.bf16.mxu0 %v4790
    %5898 = vmatpush1.bf16.msra.mxu0 %v4789
    %5899 = vmatprep.subr.bf16.mxu0 %v4800
    %5900 = vmatpush1.bf16.msra.mxu0 %v4799
    %5901 = vmatprep.subr.bf16.mxu0 %v4810
    %5902 = vmatpush1.bf16.msra.mxu0 %v4809
    %5903 = vmatprep.subr.bf16.mxu0 %v4820
    %5904 = vmatpush1.bf16.msra.mxu0 %v4819
    %5905 = vmatprep.subr.bf16.mxu0 %v4830
    %5906 = vmatpush1.bf16.msra.mxu0 %v4829
    %5907 = vmatprep.subr.bf16.mxu0 %v4840
    %5908 = vmatpush1.bf16.msra.mxu0 %v4839
    %5909 = vmatprep.subr.bf16.mxu0 %v4850
    %5910 = vmatpush1.bf16.msra.mxu0 %v4849
    %5911 = vmatprep.subr.bf16.mxu0 %v4860
    %5912 = vmatpush1.bf16.msra.mxu0 %v4859
    %5913 = vmatprep.subr.bf16.mxu0 %v4870
    %5914 = vmatpush1.bf16.msra.mxu0 %v4869
    %5915 = vmatprep.subr.bf16.mxu0 %v4880
    %5916 = vmatpush1.bf16.msra.mxu0 %v4879
    %5917 = vmatprep.subr.bf16.mxu0 %v4890
    %5918 = vmatpush1.bf16.msra.mxu0 %v4889
    %5919 = vmatprep.subr.bf16.mxu0 %v4900
    %5920 = vmatpush1.bf16.msra.mxu0 %v4899
    %5921 = vmatprep.subr.bf16.mxu0 %v4910
    %5922 = vmatpush1.bf16.msra.mxu0 %v4909
    %5923 = vmatprep.subr.bf16.mxu0 %v4920
    %5924 = vmatpush1.bf16.msra.mxu0 %v4919
    %5925 = vmatprep.mubr.bf16.mxu0 %v874
    %5926 = vmatmul.mubr.bf16.gmra.mrb[0].mxu0 %v873
    %v5927 = vpop.f32.mrb[0].mxu0
    %v5928 = vadd.f32 %v5887, %v5927
    %v5929 = vpop.f32.mrb[0].mxu0
    %v5930 = vadd.f32 %v5889, %v5929
    %v5931 = vpop.f32.mrb[0].mxu0
    %v5932 = vpop.f32.mrb[0].mxu0
    %5933 = vdwg.mxu0
    %5934 = vmatprep.subr.bf16.mxu0 %v4132
    %5935 = vmatpush1.bf16.msra.mxu0 %v4131
    %5936 = vmatprep.subr.bf16.mxu0 %v4142
    %5937 = vmatpush1.bf16.msra.mxu0 %v4141
    %5938 = vmatprep.subr.bf16.mxu0 %v4152
    %5939 = vmatpush1.bf16.msra.mxu0 %v4151
    %5940 = vmatprep.subr.bf16.mxu0 %v4162
    %5941 = vmatpush1.bf16.msra.mxu0 %v4161
    %5942 = vmatprep.subr.bf16.mxu0 %v4172
    %5943 = vmatpush1.bf16.msra.mxu0 %v4171
    %5944 = vmatprep.subr.bf16.mxu0 %v4182
    %5945 = vmatpush1.bf16.msra.mxu0 %v4181
    %5946 = vmatprep.subr.bf16.mxu0 %v4192
    %5947 = vmatpush1.bf16.msra.mxu0 %v4191
    %5948 = vmatprep.subr.bf16.mxu0 %v4202
    %5949 = vmatpush1.bf16.msra.mxu0 %v4201
    %5950 = vmatprep.subr.bf16.mxu0 %v4212
    %5951 = vmatpush1.bf16.msra.mxu0 %v4211
    %5952 = vmatprep.subr.bf16.mxu0 %v4222
    %5953 = vmatpush1.bf16.msra.mxu0 %v4221
    %5954 = vmatprep.subr.bf16.mxu0 %v4232
    %5955 = vmatpush1.bf16.msra.mxu0 %v4231
    %5956 = vmatprep.subr.bf16.mxu0 %v4242
    %5957 = vmatpush1.bf16.msra.mxu0 %v4241
    %5958 = vmatprep.subr.bf16.mxu0 %v4252
    %5959 = vmatpush1.bf16.msra.mxu0 %v4251
    %5960 = vmatprep.subr.bf16.mxu0 %v4262
    %5961 = vmatpush1.bf16.msra.mxu0 %v4261
    %5962 = vmatprep.subr.bf16.mxu0 %v4272
    %5963 = vmatpush1.bf16.msra.mxu0 %v4271
    %5964 = vmatprep.subr.bf16.mxu0 %v4282
    %5965 = vmatpush1.bf16.msra.mxu0 %v4281
    %5966 = vmatprep.mubr.bf16.mxu0 %v866
    %5967 = vmatmul.mubr.bf16.gmra.mrb[0].mxu0 %v865
    %v5968 = vpop.f32.mrb[0].mxu0
    %v5969 = vadd.f32 %v1690, %v5968
    %v5970 = vpop.f32.mrb[0].mxu0
    %v5971 = vadd.f32 %v1694, %v5970
    %v5972 = vpop.f32.mrb[0].mxu0
    %v5973 = vpop.f32.mrb[0].mxu0
    %5974 = vdwg.mxu0
    %5975 = vmatprep.subr.bf16.mxu0 %v4292
    %5976 = vmatpush1.bf16.msra.mxu0 %v4291
    %5977 = vmatprep.subr.bf16.mxu0 %v4302
    %5978 = vmatpush1.bf16.msra.mxu0 %v4301
    %5979 = vmatprep.subr.bf16.mxu0 %v4312
    %5980 = vmatpush1.bf16.msra.mxu0 %v4311
    %5981 = vmatprep.subr.bf16.mxu0 %v4322
    %5982 = vmatpush1.bf16.msra.mxu0 %v4321
    %5983 = vmatprep.subr.bf16.mxu0 %v4332
    %5984 = vmatpush1.bf16.msra.mxu0 %v4331
    %5985 = vmatprep.subr.bf16.mxu0 %v4342
    %5986 = vmatpush1.bf16.msra.mxu0 %v4341
    %5987 = vmatprep.subr.bf16.mxu0 %v4352
    %5988 = vmatpush1.bf16.msra.mxu0 %v4351
    %5989 = vmatprep.subr.bf16.mxu0 %v4362
    %5990 = vmatpush1.bf16.msra.mxu0 %v4361
    %5991 = vmatprep.subr.bf16.mxu0 %v4372
    %5992 = vmatpush1.bf16.msra.mxu0 %v4371
    %5993 = vmatprep.subr.bf16.mxu0 %v4382
    %5994 = vmatpush1.bf16.msra.mxu0 %v4381
    %5995 = vmatprep.subr.bf16.mxu0 %v4392
    %5996 = vmatpush1.bf16.msra.mxu0 %v4391
    %5997 = vmatprep.subr.bf16.mxu0 %v4402
    %5998 = vmatpush1.bf16.msra.mxu0 %v4401
    %5999 = vmatprep.subr.bf16.mxu0 %v4412
    %6000 = vmatpush1.bf16.msra.mxu0 %v4411
    %6001 = vmatprep.subr.bf16.mxu0 %v4422
    %6002 = vmatpush1.bf16.msra.mxu0 %v4421
    %6003 = vmatprep.subr.bf16.mxu0 %v4432
    %6004 = vmatpush1.bf16.msra.mxu0 %v4431
    %6005 = vmatprep.subr.bf16.mxu0 %v4442
    %6006 = vmatpush1.bf16.msra.mxu0 %v4441
    %6007 = vmatprep.mubr.bf16.mxu0 %v868
    %6008 = vmatmul.mubr.bf16.gmra.mrb[0].mxu0 %v867
    %v6009 = vpop.f32.mrb[0].mxu0
    %v6010 = vadd.f32 %v5969, %v6009
    %v6011 = vpop.f32.mrb[0].mxu0
    %v6012 = vadd.f32 %v5971, %v6011
    %v6013 = vpop.f32.mrb[0].mxu0
    %v6014 = vpop.f32.mrb[0].mxu0
    %6015 = vdwg.mxu0
    %6016 = vmatprep.subr.bf16.mxu0 %v4452
    %6017 = vmatpush1.bf16.msra.mxu0 %v4451
    %6018 = vmatprep.subr.bf16.mxu0 %v4462
    %6019 = vmatpush1.bf16.msra.mxu0 %v4461
    %6020 = vmatprep.subr.bf16.mxu0 %v4472
    %6021 = vmatpush1.bf16.msra.mxu0 %v4471
    %6022 = vmatprep.subr.bf16.mxu0 %v4482
    %6023 = vmatpush1.bf16.msra.mxu0 %v4481
    %6024 = vmatprep.subr.bf16.mxu0 %v4492
    %6025 = vmatpush1.bf16.msra.mxu0 %v4491
    %6026 = vmatprep.subr.bf16.mxu0 %v4502
    %6027 = vmatpush1.bf16.msra.mxu0 %v4501
    %6028 = vmatprep.subr.bf16.mxu0 %v4512
    %6029 = vmatpush1.bf16.msra.mxu0 %v4511
    %6030 = vmatprep.subr.bf16.mxu0 %v4522
    %6031 = vmatpush1.bf16.msra.mxu0 %v4521
    %6032 = vmatprep.subr.bf16.mxu0 %v4532
    %6033 = vmatpush1.bf16.msra.mxu0 %v4531
    %6034 = vmatprep.subr.bf16.mxu0 %v4542
    %6035 = vmatpush1.bf16.msra.mxu0 %v4541
    %6036 = vmatprep.subr.bf16.mxu0 %v4552
    %6037 = vmatpush1.bf16.msra.mxu0 %v4551
    %6038 = vmatprep.subr.bf16.mxu0 %v4562
    %6039 = vmatpush1.bf16.msra.mxu0 %v4561
    %6040 = vmatprep.subr.bf16.mxu0 %v4572
    %6041 = vmatpush1.bf16.msra.mxu0 %v4571
    %6042 = vmatprep.subr.bf16.mxu0 %v4582
    %6043 = vmatpush1.bf16.msra.mxu0 %v4581
    %6044 = vmatprep.subr.bf16.mxu0 %v4592
    %6045 = vmatpush1.bf16.msra.mxu0 %v4591
    %6046 = vmatprep.subr.bf16.mxu0 %v4602
    %6047 = vmatpush1.bf16.msra.mxu0 %v4601
    %6048 = vmatprep.mubr.bf16.mxu0 %v870
    %6049 = vmatmul.mubr.bf16.gmra.mrb[0].mxu0 %v869
    %v6050 = vpop.f32.mrb[0].mxu0
    %v6051 = vadd.f32 %v6010, %v6050
    %v6052 = vpop.f32.mrb[0].mxu0
    %v6053 = vadd.f32 %v6012, %v6052
    %v6054 = vpop.f32.mrb[0].mxu0
    %v6055 = vpop.f32.mrb[0].mxu0
    %6056 = vdwg.mxu0
    %6057 = vmatprep.subr.bf16.mxu0 %v4612
    %6058 = vmatpush1.bf16.msra.mxu0 %v4611
    %6059 = vmatprep.subr.bf16.mxu0 %v4622
    %6060 = vmatpush1.bf16.msra.mxu0 %v4621
    %6061 = vmatprep.subr.bf16.mxu0 %v4632
    %6062 = vmatpush1.bf16.msra.mxu0 %v4631
    %6063 = vmatprep.subr.bf16.mxu0 %v4642
    %6064 = vmatpush1.bf16.msra.mxu0 %v4641
    %6065 = vmatprep.subr.bf16.mxu0 %v4652
    %6066 = vmatpush1.bf16.msra.mxu0 %v4651
    %6067 = vmatprep.subr.bf16.mxu0 %v4662
    %6068 = vmatpush1.bf16.msra.mxu0 %v4661
    %6069 = vmatprep.subr.bf16.mxu0 %v4672
    %6070 = vmatpush1.bf16.msra.mxu0 %v4671
    %6071 = vmatprep.subr.bf16.mxu0 %v4682
    %6072 = vmatpush1.bf16.msra.mxu0 %v4681
    %6073 = vmatprep.subr.bf16.mxu0 %v4692
    %6074 = vmatpush1.bf16.msra.mxu0 %v4691
    %6075 = vmatprep.subr.bf16.mxu0 %v4702
    %6076 = vmatpush1.bf16.msra.mxu0 %v4701
    %6077 = vmatprep.subr.bf16.mxu0 %v4712
    %6078 = vmatpush1.bf16.msra.mxu0 %v4711
    %6079 = vmatprep.subr.bf16.mxu0 %v4722
    %6080 = vmatpush1.bf16.msra.mxu0 %v4721
    %6081 = vmatprep.subr.bf16.mxu0 %v4732
    %6082 = vmatpush1.bf16.msra.mxu0 %v4731
    %6083 = vmatprep.subr.bf16.mxu0 %v4742
    %6084 = vmatpush1.bf16.msra.mxu0 %v4741
    %6085 = vmatprep.subr.bf16.mxu0 %v4752
    %6086 = vmatpush1.bf16.msra.mxu0 %v4751
    %6087 = vmatprep.subr.bf16.mxu0 %v4762
    %6088 = vmatpush1.bf16.msra.mxu0 %v4761
    %6089 = vmatprep.mubr.bf16.mxu0 %v872
    %6090 = vmatmul.mubr.bf16.gmra.mrb[0].mxu0 %v871
    %v6091 = vpop.f32.mrb[0].mxu0
    %v6092 = vadd.f32 %v6051, %v6091
    %v6093 = vpop.f32.mrb[0].mxu0
    %v6094 = vadd.f32 %v6053, %v6093
    %v6095 = vpop.f32.mrb[0].mxu0
    %v6096 = vpop.f32.mrb[0].mxu0
    %6097 = vdwg.mxu0
    %6098 = vmatprep.subr.bf16.mxu0 %v4772
    %6099 = vmatpush1.bf16.msra.mxu0 %v4771
    %6100 = vmatprep.subr.bf16.mxu0 %v4782
    %6101 = vmatpush1.bf16.msra.mxu0 %v4781
    %6102 = vmatprep.subr.bf16.mxu0 %v4792
    %6103 = vmatpush1.bf16.msra.mxu0 %v4791
    %6104 = vmatprep.subr.bf16.mxu0 %v4802
    %6105 = vmatpush1.bf16.msra.mxu0 %v4801
    %6106 = vmatprep.subr.bf16.mxu0 %v4812
    %6107 = vmatpush1.bf16.msra.mxu0 %v4811
    %6108 = vmatprep.subr.bf16.mxu0 %v4822
    %6109 = vmatpush1.bf16.msra.mxu0 %v4821
    %6110 = vmatprep.subr.bf16.mxu0 %v4832
    %6111 = vmatpush1.bf16.msra.mxu0 %v4831
    %6112 = vmatprep.subr.bf16.mxu0 %v4842
    %6113 = vmatpush1.bf16.msra.mxu0 %v4841
    %6114 = vmatprep.subr.bf16.mxu0 %v4852
    %6115 = vmatpush1.bf16.msra.mxu0 %v4851
    %6116 = vmatprep.subr.bf16.mxu0 %v4862
    %6117 = vmatpush1.bf16.msra.mxu0 %v4861
    %6118 = vmatprep.subr.bf16.mxu0 %v4872
    %6119 = vmatpush1.bf16.msra.mxu0 %v4871
    %6120 = vmatprep.subr.bf16.mxu0 %v4882
    %6121 = vmatpush1.bf16.msra.mxu0 %v4881
    %6122 = vmatprep.subr.bf16.mxu0 %v4892
    %6123 = vmatpush1.bf16.msra.mxu0 %v4891
    %6124 = vmatprep.subr.bf16.mxu0 %v4902
    %6125 = vmatpush1.bf16.msra.mxu0 %v4901
    %6126 = vmatprep.subr.bf16.mxu0 %v4912
    %6127 = vmatpush1.bf16.msra.mxu0 %v4911
    %6128 = vmatprep.subr.bf16.mxu0 %v4922
    %6129 = vmatpush1.bf16.msra.mxu0 %v4921
    %6130 = vmatprep.mubr.bf16.mxu0 %v874
    %6131 = vmatmul.mubr.bf16.gmra.mrb[0].mxu0 %v873
    %v6132 = vpop.f32.mrb[0].mxu0
    %v6133 = vadd.f32 %v6092, %v6132
    %v6134 = vpop.f32.mrb[0].mxu0
    %v6135 = vadd.f32 %v6094, %v6134
    %v6136 = vpop.f32.mrb[0].mxu0
    %v6137 = vpop.f32.mrb[0].mxu0
    %6138 = vdwg.mxu0
    %6139 = vmatprep.subr.bf16.mxu0 %v4134
    %6140 = vmatpush1.bf16.msra.mxu0 %v4133
    %6141 = vmatprep.subr.bf16.mxu0 %v4144
    %6142 = vmatpush1.bf16.msra.mxu0 %v4143
    %6143 = vmatprep.subr.bf16.mxu0 %v4154
    %6144 = vmatpush1.bf16.msra.mxu0 %v4153
    %6145 = vmatprep.subr.bf16.mxu0 %v4164
    %6146 = vmatpush1.bf16.msra.mxu0 %v4163
    %6147 = vmatprep.subr.bf16.mxu0 %v4174
    %6148 = vmatpush1.bf16.msra.mxu0 %v4173
    %6149 = vmatprep.subr.bf16.mxu0 %v4184
    %6150 = vmatpush1.bf16.msra.mxu0 %v4183
    %6151 = vmatprep.subr.bf16.mxu0 %v4194
    %6152 = vmatpush1.bf16.msra.mxu0 %v4193
    %6153 = vmatprep.subr.bf16.mxu0 %v4204
    %6154 = vmatpush1.bf16.msra.mxu0 %v4203
    %6155 = vmatprep.subr.bf16.mxu0 %v4214
    %6156 = vmatpush1.bf16.msra.mxu0 %v4213
    %6157 = vmatprep.subr.bf16.mxu0 %v4224
    %6158 = vmatpush1.bf16.msra.mxu0 %v4223
    %6159 = vmatprep.subr.bf16.mxu0 %v4234
    %6160 = vmatpush1.bf16.msra.mxu0 %v4233
    %6161 = vmatprep.subr.bf16.mxu0 %v4244
    %6162 = vmatpush1.bf16.msra.mxu0 %v4243
    %6163 = vmatprep.subr.bf16.mxu0 %v4254
    %6164 = vmatpush1.bf16.msra.mxu0 %v4253
    %6165 = vmatprep.subr.bf16.mxu0 %v4264
    %6166 = vmatpush1.bf16.msra.mxu0 %v4263
    %6167 = vmatprep.subr.bf16.mxu0 %v4274
    %6168 = vmatpush1.bf16.msra.mxu0 %v4273
    %6169 = vmatprep.subr.bf16.mxu0 %v4284
    %6170 = vmatpush1.bf16.msra.mxu0 %v4283
    %6171 = vmatprep.mubr.bf16.mxu0 %v866
    %6172 = vmatmul.mubr.bf16.gmra.mrb[0].mxu0 %v865
    %v6173 = vpop.f32.mrb[0].mxu0
    %v6174 = vadd.f32 %v1698, %v6173
    %v6175 = vpop.f32.mrb[0].mxu0
    %v6176 = vadd.f32 %v1702, %v6175
    %v6177 = vpop.f32.mrb[0].mxu0
    %v6178 = vpop.f32.mrb[0].mxu0
    %6179 = vdwg.mxu0
    %6180 = vmatprep.subr.bf16.mxu0 %v4294
    %6181 = vmatpush1.bf16.msra.mxu0 %v4293
    %6182 = vmatprep.subr.bf16.mxu0 %v4304
    %6183 = vmatpush1.bf16.msra.mxu0 %v4303
    %6184 = vmatprep.subr.bf16.mxu0 %v4314
    %6185 = vmatpush1.bf16.msra.mxu0 %v4313
    %6186 = vmatprep.subr.bf16.mxu0 %v4324
    %6187 = vmatpush1.bf16.msra.mxu0 %v4323
    %6188 = vmatprep.subr.bf16.mxu0 %v4334
    %6189 = vmatpush1.bf16.msra.mxu0 %v4333
    %6190 = vmatprep.subr.bf16.mxu0 %v4344
    %6191 = vmatpush1.bf16.msra.mxu0 %v4343
    %6192 = vmatprep.subr.bf16.mxu0 %v4354
    %6193 = vmatpush1.bf16.msra.mxu0 %v4353
    %6194 = vmatprep.subr.bf16.mxu0 %v4364
    %6195 = vmatpush1.bf16.msra.mxu0 %v4363
    %6196 = vmatprep.subr.bf16.mxu0 %v4374
    %6197 = vmatpush1.bf16.msra.mxu0 %v4373
    %6198 = vmatprep.subr.bf16.mxu0 %v4384
    %6199 = vmatpush1.bf16.msra.mxu0 %v4383
    %6200 = vmatprep.subr.bf16.mxu0 %v4394
    %6201 = vmatpush1.bf16.msra.mxu0 %v4393
    %6202 = vmatprep.subr.bf16.mxu0 %v4404
    %6203 = vmatpush1.bf16.msra.mxu0 %v4403
    %6204 = vmatprep.subr.bf16.mxu0 %v4414
    %6205 = vmatpush1.bf16.msra.mxu0 %v4413
    %6206 = vmatprep.subr.bf16.mxu0 %v4424
    %6207 = vmatpush1.bf16.msra.mxu0 %v4423
    %6208 = vmatprep.subr.bf16.mxu0 %v4434
    %6209 = vmatpush1.bf16.msra.mxu0 %v4433
    %6210 = vmatprep.subr.bf16.mxu0 %v4444
    %6211 = vmatpush1.bf16.msra.mxu0 %v4443
    %6212 = vmatprep.mubr.bf16.mxu0 %v868
    %6213 = vmatmul.mubr.bf16.gmra.mrb[0].mxu0 %v867
    %v6214 = vpop.f32.mrb[0].mxu0
    %v6215 = vadd.f32 %v6174, %v6214
    %v6216 = vpop.f32.mrb[0].mxu0
    %v6217 = vadd.f32 %v6176, %v6216
    %v6218 = vpop.f32.mrb[0].mxu0
    %v6219 = vpop.f32.mrb[0].mxu0
    %6220 = vdwg.mxu0
    %6221 = vmatprep.subr.bf16.mxu0 %v4454
    %6222 = vmatpush1.bf16.msra.mxu0 %v4453
    %6223 = vmatprep.subr.bf16.mxu0 %v4464
    %6224 = vmatpush1.bf16.msra.mxu0 %v4463
    %6225 = vmatprep.subr.bf16.mxu0 %v4474
    %6226 = vmatpush1.bf16.msra.mxu0 %v4473
    %6227 = vmatprep.subr.bf16.mxu0 %v4484
    %6228 = vmatpush1.bf16.msra.mxu0 %v4483
    %6229 = vmatprep.subr.bf16.mxu0 %v4494
    %6230 = vmatpush1.bf16.msra.mxu0 %v4493
    %6231 = vmatprep.subr.bf16.mxu0 %v4504
    %6232 = vmatpush1.bf16.msra.mxu0 %v4503
    %6233 = vmatprep.subr.bf16.mxu0 %v4514
    %6234 = vmatpush1.bf16.msra.mxu0 %v4513
    %6235 = vmatprep.subr.bf16.mxu0 %v4524
    %6236 = vmatpush1.bf16.msra.mxu0 %v4523
    %6237 = vmatprep.subr.bf16.mxu0 %v4534
    %6238 = vmatpush1.bf16.msra.mxu0 %v4533
    %6239 = vmatprep.subr.bf16.mxu0 %v4544
    %6240 = vmatpush1.bf16.msra.mxu0 %v4543
    %6241 = vmatprep.subr.bf16.mxu0 %v4554
    %6242 = vmatpush1.bf16.msra.mxu0 %v4553
    %6243 = vmatprep.subr.bf16.mxu0 %v4564
    %6244 = vmatpush1.bf16.msra.mxu0 %v4563
    %6245 = vmatprep.subr.bf16.mxu0 %v4574
    %6246 = vmatpush1.bf16.msra.mxu0 %v4573
    %6247 = vmatprep.subr.bf16.mxu0 %v4584
    %6248 = vmatpush1.bf16.msra.mxu0 %v4583
    %6249 = vmatprep.subr.bf16.mxu0 %v4594
    %6250 = vmatpush1.bf16.msra.mxu0 %v4593
    %6251 = vmatprep.subr.bf16.mxu0 %v4604
    %6252 = vmatpush1.bf16.msra.mxu0 %v4603
    %6253 = vmatprep.mubr.bf16.mxu0 %v870
    %6254 = vmatmul.mubr.bf16.gmra.mrb[0].mxu0 %v869
    %v6255 = vpop.f32.mrb[0].mxu0
    %v6256 = vadd.f32 %v6215, %v6255
    %v6257 = vpop.f32.mrb[0].mxu0
    %v6258 = vadd.f32 %v6217, %v6257
    %v6259 = vpop.f32.mrb[0].mxu0
    %v6260 = vpop.f32.mrb[0].mxu0
    %6261 = vdwg.mxu0
    %6262 = vmatprep.subr.bf16.mxu0 %v4614
    %6263 = vmatpush1.bf16.msra.mxu0 %v4613
    %6264 = vmatprep.subr.bf16.mxu0 %v4624
    %6265 = vmatpush1.bf16.msra.mxu0 %v4623
    %6266 = vmatprep.subr.bf16.mxu0 %v4634
    %6267 = vmatpush1.bf16.msra.mxu0 %v4633
    %6268 = vmatprep.subr.bf16.mxu0 %v4644
    %6269 = vmatpush1.bf16.msra.mxu0 %v4643
    %6270 = vmatprep.subr.bf16.mxu0 %v4654
    %6271 = vmatpush1.bf16.msra.mxu0 %v4653
    %6272 = vmatprep.subr.bf16.mxu0 %v4664
    %6273 = vmatpush1.bf16.msra.mxu0 %v4663
    %6274 = vmatprep.subr.bf16.mxu0 %v4674
    %6275 = vmatpush1.bf16.msra.mxu0 %v4673
    %6276 = vmatprep.subr.bf16.mxu0 %v4684
    %6277 = vmatpush1.bf16.msra.mxu0 %v4683
    %6278 = vmatprep.subr.bf16.mxu0 %v4694
    %6279 = vmatpush1.bf16.msra.mxu0 %v4693
    %6280 = vmatprep.subr.bf16.mxu0 %v4704
    %6281 = vmatpush1.bf16.msra.mxu0 %v4703
    %6282 = vmatprep.subr.bf16.mxu0 %v4714
    %6283 = vmatpush1.bf16.msra.mxu0 %v4713
    %6284 = vmatprep.subr.bf16.mxu0 %v4724
    %6285 = vmatpush1.bf16.msra.mxu0 %v4723
    %6286 = vmatprep.subr.bf16.mxu0 %v4734
    %6287 = vmatpush1.bf16.msra.mxu0 %v4733
    %6288 = vmatprep.subr.bf16.mxu0 %v4744
    %6289 = vmatpush1.bf16.msra.mxu0 %v4743
    %6290 = vmatprep.subr.bf16.mxu0 %v4754
    %6291 = vmatpush1.bf16.msra.mxu0 %v4753
    %6292 = vmatprep.subr.bf16.mxu0 %v4764
    %6293 = vmatpush1.bf16.msra.mxu0 %v4763
    %6294 = vmatprep.mubr.bf16.mxu0 %v872
    %6295 = vmatmul.mubr.bf16.gmra.mrb[0].mxu0 %v871
    %v6296 = vpop.f32.mrb[0].mxu0
    %v6297 = vadd.f32 %v6256, %v6296
    %v6298 = vpop.f32.mrb[0].mxu0
    %v6299 = vadd.f32 %v6258, %v6298
    %v6300 = vpop.f32.mrb[0].mxu0
    %v6301 = vpop.f32.mrb[0].mxu0
    %6302 = vdwg.mxu0
    %6303 = vmatprep.subr.bf16.mxu0 %v4774
    %6304 = vmatpush1.bf16.msra.mxu0 %v4773
    %6305 = vmatprep.subr.bf16.mxu0 %v4784
    %6306 = vmatpush1.bf16.msra.mxu0 %v4783
    %6307 = vmatprep.subr.bf16.mxu0 %v4794
    %6308 = vmatpush1.bf16.msra.mxu0 %v4793
    %6309 = vmatprep.subr.bf16.mxu0 %v4804
    %6310 = vmatpush1.bf16.msra.mxu0 %v4803
    %6311 = vmatprep.subr.bf16.mxu0 %v4814
    %6312 = vmatpush1.bf16.msra.mxu0 %v4813
    %6313 = vmatprep.subr.bf16.mxu0 %v4824
    %6314 = vmatpush1.bf16.msra.mxu0 %v4823
    %6315 = vmatprep.subr.bf16.mxu0 %v4834
    %6316 = vmatpush1.bf16.msra.mxu0 %v4833
    %6317 = vmatprep.subr.bf16.mxu0 %v4844
    %6318 = vmatpush1.bf16.msra.mxu0 %v4843
    %6319 = vmatprep.subr.bf16.mxu0 %v4854
    %6320 = vmatpush1.bf16.msra.mxu0 %v4853
    %6321 = vmatprep.subr.bf16.mxu0 %v4864
    %6322 = vmatpush1.bf16.msra.mxu0 %v4863
    %6323 = vmatprep.subr.bf16.mxu0 %v4874
    %6324 = vmatpush1.bf16.msra.mxu0 %v4873
    %6325 = vmatprep.subr.bf16.mxu0 %v4884
    %6326 = vmatpush1.bf16.msra.mxu0 %v4883
    %6327 = vmatprep.subr.bf16.mxu0 %v4894
    %6328 = vmatpush1.bf16.msra.mxu0 %v4893
    %6329 = vmatprep.subr.bf16.mxu0 %v4904
    %6330 = vmatpush1.bf16.msra.mxu0 %v4903
    %6331 = vmatprep.subr.bf16.mxu0 %v4914
    %6332 = vmatpush1.bf16.msra.mxu0 %v4913
    %6333 = vmatprep.subr.bf16.mxu0 %v4924
    %6334 = vmatpush1.bf16.msra.mxu0 %v4923
    %6335 = vmatprep.mubr.bf16.mxu0 %v874
    %6336 = vmatmul.mubr.bf16.gmra.mrb[0].mxu0 %v873
    %v6337 = vpop.f32.mrb[0].mxu0
    %v6338 = vadd.f32 %v6297, %v6337
    %v6339 = vpop.f32.mrb[0].mxu0
    %v6340 = vadd.f32 %v6299, %v6339
    %v6341 = vpop.f32.mrb[0].mxu0
    %v6342 = vpop.f32.mrb[0].mxu0
    %6343 = vdwg.mxu0
    %6344 = vmatprep.subr.bf16.mxu0 %v4136
    %6345 = vmatpush1.bf16.msra.mxu0 %v4135
    %6346 = vmatprep.subr.bf16.mxu0 %v4146
    %6347 = vmatpush1.bf16.msra.mxu0 %v4145
    %6348 = vmatprep.subr.bf16.mxu0 %v4156
    %6349 = vmatpush1.bf16.msra.mxu0 %v4155
    %6350 = vmatprep.subr.bf16.mxu0 %v4166
    %6351 = vmatpush1.bf16.msra.mxu0 %v4165
    %6352 = vmatprep.subr.bf16.mxu0 %v4176
    %6353 = vmatpush1.bf16.msra.mxu0 %v4175
    %6354 = vmatprep.subr.bf16.mxu0 %v4186
    %6355 = vmatpush1.bf16.msra.mxu0 %v4185
    %6356 = vmatprep.subr.bf16.mxu0 %v4196
    %6357 = vmatpush1.bf16.msra.mxu0 %v4195
    %6358 = vmatprep.subr.bf16.mxu0 %v4206
    %6359 = vmatpush1.bf16.msra.mxu0 %v4205
    %6360 = vmatprep.subr.bf16.mxu0 %v4216
    %6361 = vmatpush1.bf16.msra.mxu0 %v4215
    %6362 = vmatprep.subr.bf16.mxu0 %v4226
    %6363 = vmatpush1.bf16.msra.mxu0 %v4225
    %6364 = vmatprep.subr.bf16.mxu0 %v4236
    %6365 = vmatpush1.bf16.msra.mxu0 %v4235
    %6366 = vmatprep.subr.bf16.mxu0 %v4246
    %6367 = vmatpush1.bf16.msra.mxu0 %v4245
    %6368 = vmatprep.subr.bf16.mxu0 %v4256
    %6369 = vmatpush1.bf16.msra.mxu0 %v4255
    %6370 = vmatprep.subr.bf16.mxu0 %v4266
    %6371 = vmatpush1.bf16.msra.mxu0 %v4265
    %6372 = vmatprep.subr.bf16.mxu0 %v4276
    %6373 = vmatpush1.bf16.msra.mxu0 %v4275
    %6374 = vmatprep.subr.bf16.mxu0 %v4286
    %6375 = vmatpush1.bf16.msra.mxu0 %v4285
    %6376 = vmatprep.mubr.bf16.mxu0 %v866
    %6377 = vmatmul.mubr.bf16.gmra.mrb[0].mxu0 %v865
    %v6378 = vpop.f32.mrb[0].mxu0
    %v6379 = vadd.f32 %v1706, %v6378
    %v6380 = vpop.f32.mrb[0].mxu0
    %v6381 = vadd.f32 %v1710, %v6380
    %v6382 = vpop.f32.mrb[0].mxu0
    %v6383 = vpop.f32.mrb[0].mxu0
    %6384 = vdwg.mxu0
    %6385 = vmatprep.subr.bf16.mxu0 %v4296
    %6386 = vmatpush1.bf16.msra.mxu0 %v4295
    %6387 = vmatprep.subr.bf16.mxu0 %v4306
    %6388 = vmatpush1.bf16.msra.mxu0 %v4305
    %6389 = vmatprep.subr.bf16.mxu0 %v4316
    %6390 = vmatpush1.bf16.msra.mxu0 %v4315
    %6391 = vmatprep.subr.bf16.mxu0 %v4326
    %6392 = vmatpush1.bf16.msra.mxu0 %v4325
    %6393 = vmatprep.subr.bf16.mxu0 %v4336
    %6394 = vmatpush1.bf16.msra.mxu0 %v4335
    %6395 = vmatprep.subr.bf16.mxu0 %v4346
    %6396 = vmatpush1.bf16.msra.mxu0 %v4345
    %6397 = vmatprep.subr.bf16.mxu0 %v4356
    %6398 = vmatpush1.bf16.msra.mxu0 %v4355
    %6399 = vmatprep.subr.bf16.mxu0 %v4366
    %6400 = vmatpush1.bf16.msra.mxu0 %v4365
    %6401 = vmatprep.subr.bf16.mxu0 %v4376
    %6402 = vmatpush1.bf16.msra.mxu0 %v4375
    %6403 = vmatprep.subr.bf16.mxu0 %v4386
    %6404 = vmatpush1.bf16.msra.mxu0 %v4385
    %6405 = vmatprep.subr.bf16.mxu0 %v4396
    %6406 = vmatpush1.bf16.msra.mxu0 %v4395
    %6407 = vmatprep.subr.bf16.mxu0 %v4406
    %6408 = vmatpush1.bf16.msra.mxu0 %v4405
    %6409 = vmatprep.subr.bf16.mxu0 %v4416
    %6410 = vmatpush1.bf16.msra.mxu0 %v4415
    %6411 = vmatprep.subr.bf16.mxu0 %v4426
    %6412 = vmatpush1.bf16.msra.mxu0 %v4425
    %6413 = vmatprep.subr.bf16.mxu0 %v4436
    %6414 = vmatpush1.bf16.msra.mxu0 %v4435
    %6415 = vmatprep.subr.bf16.mxu0 %v4446
    %6416 = vmatpush1.bf16.msra.mxu0 %v4445
    %6417 = vmatprep.mubr.bf16.mxu0 %v868
    %6418 = vmatmul.mubr.bf16.gmra.mrb[0].mxu0 %v867
    %v6419 = vpop.f32.mrb[0].mxu0
    %v6420 = vadd.f32 %v6379, %v6419
    %v6421 = vpop.f32.mrb[0].mxu0
    %v6422 = vadd.f32 %v6381, %v6421
    %v6423 = vpop.f32.mrb[0].mxu0
    %v6424 = vpop.f32.mrb[0].mxu0
    %6425 = vdwg.mxu0
    %6426 = vmatprep.subr.bf16.mxu0 %v4456
    %6427 = vmatpush1.bf16.msra.mxu0 %v4455
    %6428 = vmatprep.subr.bf16.mxu0 %v4466
    %6429 = vmatpush1.bf16.msra.mxu0 %v4465
    %6430 = vmatprep.subr.bf16.mxu0 %v4476
    %6431 = vmatpush1.bf16.msra.mxu0 %v4475
    %6432 = vmatprep.subr.bf16.mxu0 %v4486
    %6433 = vmatpush1.bf16.msra.mxu0 %v4485
    %6434 = vmatprep.subr.bf16.mxu0 %v4496
    %6435 = vmatpush1.bf16.msra.mxu0 %v4495
    %6436 = vmatprep.subr.bf16.mxu0 %v4506
    %6437 = vmatpush1.bf16.msra.mxu0 %v4505
    %6438 = vmatprep.subr.bf16.mxu0 %v4516
    %6439 = vmatpush1.bf16.msra.mxu0 %v4515
    %6440 = vmatprep.subr.bf16.mxu0 %v4526
    %6441 = vmatpush1.bf16.msra.mxu0 %v4525
    %6442 = vmatprep.subr.bf16.mxu0 %v4536
    %6443 = vmatpush1.bf16.msra.mxu0 %v4535
    %6444 = vmatprep.subr.bf16.mxu0 %v4546
    %6445 = vmatpush1.bf16.msra.mxu0 %v4545
    %6446 = vmatprep.subr.bf16.mxu0 %v4556
    %6447 = vmatpush1.bf16.msra.mxu0 %v4555
    %6448 = vmatprep.subr.bf16.mxu0 %v4566
    %6449 = vmatpush1.bf16.msra.mxu0 %v4565
    %6450 = vmatprep.subr.bf16.mxu0 %v4576
    %6451 = vmatpush1.bf16.msra.mxu0 %v4575
    %6452 = vmatprep.subr.bf16.mxu0 %v4586
    %6453 = vmatpush1.bf16.msra.mxu0 %v4585
    %6454 = vmatprep.subr.bf16.mxu0 %v4596
    %6455 = vmatpush1.bf16.msra.mxu0 %v4595
    %6456 = vmatprep.subr.bf16.mxu0 %v4606
    %6457 = vmatpush1.bf16.msra.mxu0 %v4605
    %6458 = vmatprep.mubr.bf16.mxu0 %v870
    %6459 = vmatmul.mubr.bf16.gmra.mrb[0].mxu0 %v869
    %v6460 = vpop.f32.mrb[0].mxu0
    %v6461 = vadd.f32 %v6420, %v6460
    %v6462 = vpop.f32.mrb[0].mxu0
    %v6463 = vadd.f32 %v6422, %v6462
    %v6464 = vpop.f32.mrb[0].mxu0
    %v6465 = vpop.f32.mrb[0].mxu0
    %6466 = vdwg.mxu0
    %6467 = vmatprep.subr.bf16.mxu0 %v4616
    %6468 = vmatpush1.bf16.msra.mxu0 %v4615
    %6469 = vmatprep.subr.bf16.mxu0 %v4626
    %6470 = vmatpush1.bf16.msra.mxu0 %v4625
    %6471 = vmatprep.subr.bf16.mxu0 %v4636
    %6472 = vmatpush1.bf16.msra.mxu0 %v4635
    %6473 = vmatprep.subr.bf16.mxu0 %v4646
    %6474 = vmatpush1.bf16.msra.mxu0 %v4645
    %6475 = vmatprep.subr.bf16.mxu0 %v4656
    %6476 = vmatpush1.bf16.msra.mxu0 %v4655
    %6477 = vmatprep.subr.bf16.mxu0 %v4666
    %6478 = vmatpush1.bf16.msra.mxu0 %v4665
    %6479 = vmatprep.subr.bf16.mxu0 %v4676
    %6480 = vmatpush1.bf16.msra.mxu0 %v4675
    %6481 = vmatprep.subr.bf16.mxu0 %v4686
    %6482 = vmatpush1.bf16.msra.mxu0 %v4685
    %6483 = vmatprep.subr.bf16.mxu0 %v4696
    %6484 = vmatpush1.bf16.msra.mxu0 %v4695
    %6485 = vmatprep.subr.bf16.mxu0 %v4706
    %6486 = vmatpush1.bf16.msra.mxu0 %v4705
    %6487 = vmatprep.subr.bf16.mxu0 %v4716
    %6488 = vmatpush1.bf16.msra.mxu0 %v4715
    %6489 = vmatprep.subr.bf16.mxu0 %v4726
    %6490 = vmatpush1.bf16.msra.mxu0 %v4725
    %6491 = vmatprep.subr.bf16.mxu0 %v4736
    %6492 = vmatpush1.bf16.msra.mxu0 %v4735
    %6493 = vmatprep.subr.bf16.mxu0 %v4746
    %6494 = vmatpush1.bf16.msra.mxu0 %v4745
    %6495 = vmatprep.subr.bf16.mxu0 %v4756
    %6496 = vmatpush1.bf16.msra.mxu0 %v4755
    %6497 = vmatprep.subr.bf16.mxu0 %v4766
    %6498 = vmatpush1.bf16.msra.mxu0 %v4765
    %6499 = vmatprep.mubr.bf16.mxu0 %v872
    %6500 = vmatmul.mubr.bf16.gmra.mrb[0].mxu0 %v871
    %v6501 = vpop.f32.mrb[0].mxu0
    %v6502 = vadd.f32 %v6461, %v6501
    %v6503 = vpop.f32.mrb[0].mxu0
    %v6504 = vadd.f32 %v6463, %v6503
    %v6505 = vpop.f32.mrb[0].mxu0
    %v6506 = vpop.f32.mrb[0].mxu0
    %6507 = vdwg.mxu0
    %6508 = vmatprep.subr.bf16.mxu0 %v4776
    %6509 = vmatpush1.bf16.msra.mxu0 %v4775
    %6510 = vmatprep.subr.bf16.mxu0 %v4786
    %6511 = vmatpush1.bf16.msra.mxu0 %v4785
    %6512 = vmatprep.subr.bf16.mxu0 %v4796
    %6513 = vmatpush1.bf16.msra.mxu0 %v4795
    %6514 = vmatprep.subr.bf16.mxu0 %v4806
    %6515 = vmatpush1.bf16.msra.mxu0 %v4805
    %6516 = vmatprep.subr.bf16.mxu0 %v4816
    %6517 = vmatpush1.bf16.msra.mxu0 %v4815
    %6518 = vmatprep.subr.bf16.mxu0 %v4826
    %6519 = vmatpush1.bf16.msra.mxu0 %v4825
    %6520 = vmatprep.subr.bf16.mxu0 %v4836
    %6521 = vmatpush1.bf16.msra.mxu0 %v4835
    %6522 = vmatprep.subr.bf16.mxu0 %v4846
    %6523 = vmatpush1.bf16.msra.mxu0 %v4845
    %6524 = vmatprep.subr.bf16.mxu0 %v4856
    %6525 = vmatpush1.bf16.msra.mxu0 %v4855
    %6526 = vmatprep.subr.bf16.mxu0 %v4866
    %6527 = vmatpush1.bf16.msra.mxu0 %v4865
    %6528 = vmatprep.subr.bf16.mxu0 %v4876
    %6529 = vmatpush1.bf16.msra.mxu0 %v4875
    %6530 = vmatprep.subr.bf16.mxu0 %v4886
    %6531 = vmatpush1.bf16.msra.mxu0 %v4885
    %6532 = vmatprep.subr.bf16.mxu0 %v4896
    %6533 = vmatpush1.bf16.msra.mxu0 %v4895
    %6534 = vmatprep.subr.bf16.mxu0 %v4906
    %6535 = vmatpush1.bf16.msra.mxu0 %v4905
    %6536 = vmatprep.subr.bf16.mxu0 %v4916
    %6537 = vmatpush1.bf16.msra.mxu0 %v4915
    %6538 = vmatprep.subr.bf16.mxu0 %v4926
    %6539 = vmatpush1.bf16.msra.mxu0 %v4925
    %6540 = vmatprep.mubr.bf16.mxu0 %v874
    %6541 = vmatmul.mubr.bf16.gmra.mrb[0].mxu0 %v873
    %v6542 = vpop.f32.mrb[0].mxu0
    %v6543 = vadd.f32 %v6502, %v6542
    %v6544 = vpop.f32.mrb[0].mxu0
    %v6545 = vadd.f32 %v6504, %v6544
    %v6546 = vpop.f32.mrb[0].mxu0
    %v6547 = vpop.f32.mrb[0].mxu0
    %6548 = vdwg.mxu0
    %6549 = vmatprep.subr.bf16.mxu0 %v4138
    %6550 = vmatpush1.bf16.msra.mxu0 %v4137
    %6551 = vmatprep.subr.bf16.mxu0 %v4148
    %6552 = vmatpush1.bf16.msra.mxu0 %v4147
    %6553 = vmatprep.subr.bf16.mxu0 %v4158
    %6554 = vmatpush1.bf16.msra.mxu0 %v4157
    %6555 = vmatprep.subr.bf16.mxu0 %v4168
    %6556 = vmatpush1.bf16.msra.mxu0 %v4167
    %6557 = vmatprep.subr.bf16.mxu0 %v4178
    %6558 = vmatpush1.bf16.msra.mxu0 %v4177
    %6559 = vmatprep.subr.bf16.mxu0 %v4188
    %6560 = vmatpush1.bf16.msra.mxu0 %v4187
    %6561 = vmatprep.subr.bf16.mxu0 %v4198
    %6562 = vmatpush1.bf16.msra.mxu0 %v4197
    %6563 = vmatprep.subr.bf16.mxu0 %v4208
    %6564 = vmatpush1.bf16.msra.mxu0 %v4207
    %6565 = vmatprep.subr.bf16.mxu0 %v4218
    %6566 = vmatpush1.bf16.msra.mxu0 %v4217
    %6567 = vmatprep.subr.bf16.mxu0 %v4228
    %6568 = vmatpush1.bf16.msra.mxu0 %v4227
    %6569 = vmatprep.subr.bf16.mxu0 %v4238
    %6570 = vmatpush1.bf16.msra.mxu0 %v4237
    %6571 = vmatprep.subr.bf16.mxu0 %v4248
    %6572 = vmatpush1.bf16.msra.mxu0 %v4247
    %6573 = vmatprep.subr.bf16.mxu0 %v4258
    %6574 = vmatpush1.bf16.msra.mxu0 %v4257
    %6575 = vmatprep.subr.bf16.mxu0 %v4268
    %6576 = vmatpush1.bf16.msra.mxu0 %v4267
    %6577 = vmatprep.subr.bf16.mxu0 %v4278
    %6578 = vmatpush1.bf16.msra.mxu0 %v4277
    %6579 = vmatprep.subr.bf16.mxu0 %v4288
    %6580 = vmatpush1.bf16.msra.mxu0 %v4287
    %6581 = vmatprep.mubr.bf16.mxu0 %v866
    %6582 = vmatmul.mubr.bf16.gmra.mrb[0].mxu0 %v865
    %v6583 = vpop.f32.mrb[0].mxu0
    %v6584 = vadd.f32 %v1714, %v6583
    %v6585 = vpop.f32.mrb[0].mxu0
    %v6586 = vadd.f32 %v1718, %v6585
    %v6587 = vpop.f32.mrb[0].mxu0
    %v6588 = vpop.f32.mrb[0].mxu0
    %6589 = vdwg.mxu0
    %6590 = vmatprep.subr.bf16.mxu0 %v4298
    %6591 = vmatpush1.bf16.msra.mxu0 %v4297
    %6592 = vmatprep.subr.bf16.mxu0 %v4308
    %6593 = vmatpush1.bf16.msra.mxu0 %v4307
    %6594 = vmatprep.subr.bf16.mxu0 %v4318
    %6595 = vmatpush1.bf16.msra.mxu0 %v4317
    %6596 = vmatprep.subr.bf16.mxu0 %v4328
    %6597 = vmatpush1.bf16.msra.mxu0 %v4327
    %6598 = vmatprep.subr.bf16.mxu0 %v4338
    %6599 = vmatpush1.bf16.msra.mxu0 %v4337
    %6600 = vmatprep.subr.bf16.mxu0 %v4348
    %6601 = vmatpush1.bf16.msra.mxu0 %v4347
    %6602 = vmatprep.subr.bf16.mxu0 %v4358
    %6603 = vmatpush1.bf16.msra.mxu0 %v4357
    %6604 = vmatprep.subr.bf16.mxu0 %v4368
    %6605 = vmatpush1.bf16.msra.mxu0 %v4367
    %6606 = vmatprep.subr.bf16.mxu0 %v4378
    %6607 = vmatpush1.bf16.msra.mxu0 %v4377
    %6608 = vmatprep.subr.bf16.mxu0 %v4388
    %6609 = vmatpush1.bf16.msra.mxu0 %v4387
    %6610 = vmatprep.subr.bf16.mxu0 %v4398
    %6611 = vmatpush1.bf16.msra.mxu0 %v4397
    %6612 = vmatprep.subr.bf16.mxu0 %v4408
    %6613 = vmatpush1.bf16.msra.mxu0 %v4407
    %6614 = vmatprep.subr.bf16.mxu0 %v4418
    %6615 = vmatpush1.bf16.msra.mxu0 %v4417
    %6616 = vmatprep.subr.bf16.mxu0 %v4428
    %6617 = vmatpush1.bf16.msra.mxu0 %v4427
    %6618 = vmatprep.subr.bf16.mxu0 %v4438
    %6619 = vmatpush1.bf16.msra.mxu0 %v4437
    %6620 = vmatprep.subr.bf16.mxu0 %v4448
    %6621 = vmatpush1.bf16.msra.mxu0 %v4447
    %6622 = vmatprep.mubr.bf16.mxu0 %v868
    %6623 = vmatmul.mubr.bf16.gmra.mrb[0].mxu0 %v867
    %v6624 = vpop.f32.mrb[0].mxu0
    %v6625 = vadd.f32 %v6584, %v6624
    %v6626 = vpop.f32.mrb[0].mxu0
    %v6627 = vadd.f32 %v6586, %v6626
    %v6628 = vpop.f32.mrb[0].mxu0
    %v6629 = vpop.f32.mrb[0].mxu0
    %6630 = vdwg.mxu0
    %6631 = vmatprep.subr.bf16.mxu0 %v4458
    %6632 = vmatpush1.bf16.msra.mxu0 %v4457
    %6633 = vmatprep.subr.bf16.mxu0 %v4468
    %6634 = vmatpush1.bf16.msra.mxu0 %v4467
    %6635 = vmatprep.subr.bf16.mxu0 %v4478
    %6636 = vmatpush1.bf16.msra.mxu0 %v4477
    %6637 = vmatprep.subr.bf16.mxu0 %v4488
    %6638 = vmatpush1.bf16.msra.mxu0 %v4487
    %6639 = vmatprep.subr.bf16.mxu0 %v4498
    %6640 = vmatpush1.bf16.msra.mxu0 %v4497
    %6641 = vmatprep.subr.bf16.mxu0 %v4508
    %6642 = vmatpush1.bf16.msra.mxu0 %v4507
    %6643 = vmatprep.subr.bf16.mxu0 %v4518
    %6644 = vmatpush1.bf16.msra.mxu0 %v4517
    %6645 = vmatprep.subr.bf16.mxu0 %v4528
    %6646 = vmatpush1.bf16.msra.mxu0 %v4527
    %6647 = vmatprep.subr.bf16.mxu0 %v4538
    %6648 = vmatpush1.bf16.msra.mxu0 %v4537
    %6649 = vmatprep.subr.bf16.mxu0 %v4548
    %6650 = vmatpush1.bf16.msra.mxu0 %v4547
    %6651 = vmatprep.subr.bf16.mxu0 %v4558
    %6652 = vmatpush1.bf16.msra.mxu0 %v4557
    %6653 = vmatprep.subr.bf16.mxu0 %v4568
    %6654 = vmatpush1.bf16.msra.mxu0 %v4567
    %6655 = vmatprep.subr.bf16.mxu0 %v4578
    %6656 = vmatpush1.bf16.msra.mxu0 %v4577
    %6657 = vmatprep.subr.bf16.mxu0 %v4588
    %6658 = vmatpush1.bf16.msra.mxu0 %v4587
    %6659 = vmatprep.subr.bf16.mxu0 %v4598
    %6660 = vmatpush1.bf16.msra.mxu0 %v4597
    %6661 = vmatprep.subr.bf16.mxu0 %v4608
    %6662 = vmatpush1.bf16.msra.mxu0 %v4607
    %6663 = vmatprep.mubr.bf16.mxu0 %v870
    %6664 = vmatmul.mubr.bf16.gmra.mrb[0].mxu0 %v869
    %v6665 = vpop.f32.mrb[0].mxu0
    %v6666 = vadd.f32 %v6625, %v6665
    %v6667 = vpop.f32.mrb[0].mxu0
    %v6668 = vadd.f32 %v6627, %v6667
    %v6669 = vpop.f32.mrb[0].mxu0
    %v6670 = vpop.f32.mrb[0].mxu0
    %6671 = vdwg.mxu0
    %6672 = vmatprep.subr.bf16.mxu0 %v4618
    %6673 = vmatpush1.bf16.msra.mxu0 %v4617
    %6674 = vmatprep.subr.bf16.mxu0 %v4628
    %6675 = vmatpush1.bf16.msra.mxu0 %v4627
    %6676 = vmatprep.subr.bf16.mxu0 %v4638
    %6677 = vmatpush1.bf16.msra.mxu0 %v4637
    %6678 = vmatprep.subr.bf16.mxu0 %v4648
    %6679 = vmatpush1.bf16.msra.mxu0 %v4647
    %6680 = vmatprep.subr.bf16.mxu0 %v4658
    %6681 = vmatpush1.bf16.msra.mxu0 %v4657
    %6682 = vmatprep.subr.bf16.mxu0 %v4668
    %6683 = vmatpush1.bf16.msra.mxu0 %v4667
    %6684 = vmatprep.subr.bf16.mxu0 %v4678
    %6685 = vmatpush1.bf16.msra.mxu0 %v4677
    %6686 = vmatprep.subr.bf16.mxu0 %v4688
    %6687 = vmatpush1.bf16.msra.mxu0 %v4687
    %6688 = vmatprep.subr.bf16.mxu0 %v4698
    %6689 = vmatpush1.bf16.msra.mxu0 %v4697
    %6690 = vmatprep.subr.bf16.mxu0 %v4708
    %6691 = vmatpush1.bf16.msra.mxu0 %v4707
    %6692 = vmatprep.subr.bf16.mxu0 %v4718
    %6693 = vmatpush1.bf16.msra.mxu0 %v4717
    %6694 = vmatprep.subr.bf16.mxu0 %v4728
    %6695 = vmatpush1.bf16.msra.mxu0 %v4727
    %6696 = vmatprep.subr.bf16.mxu0 %v4738
    %6697 = vmatpush1.bf16.msra.mxu0 %v4737
    %6698 = vmatprep.subr.bf16.mxu0 %v4748
    %6699 = vmatpush1.bf16.msra.mxu0 %v4747
    %6700 = vmatprep.subr.bf16.mxu0 %v4758
    %6701 = vmatpush1.bf16.msra.mxu0 %v4757
    %6702 = vmatprep.subr.bf16.mxu0 %v4768
    %6703 = vmatpush1.bf16.msra.mxu0 %v4767
    %6704 = vmatprep.mubr.bf16.mxu0 %v872
    %6705 = vmatmul.mubr.bf16.gmra.mrb[0].mxu0 %v871
    %v6706 = vpop.f32.mrb[0].mxu0
    %v6707 = vadd.f32 %v6666, %v6706
    %v6708 = vpop.f32.mrb[0].mxu0
    %v6709 = vadd.f32 %v6668, %v6708
    %v6710 = vpop.f32.mrb[0].mxu0
    %v6711 = vpop.f32.mrb[0].mxu0
    %6712 = vdwg.mxu0
    %6713 = vmatprep.subr.bf16.mxu0 %v4778
    %6714 = vmatpush1.bf16.msra.mxu0 %v4777
    %6715 = vmatprep.subr.bf16.mxu0 %v4788
    %6716 = vmatpush1.bf16.msra.mxu0 %v4787
    %6717 = vmatprep.subr.bf16.mxu0 %v4798
    %6718 = vmatpush1.bf16.msra.mxu0 %v4797
    %6719 = vmatprep.subr.bf16.mxu0 %v4808
    %6720 = vmatpush1.bf16.msra.mxu0 %v4807
    %6721 = vmatprep.subr.bf16.mxu0 %v4818
    %6722 = vmatpush1.bf16.msra.mxu0 %v4817
    %6723 = vmatprep.subr.bf16.mxu0 %v4828
    %6724 = vmatpush1.bf16.msra.mxu0 %v4827
    %6725 = vmatprep.subr.bf16.mxu0 %v4838
    %6726 = vmatpush1.bf16.msra.mxu0 %v4837
    %6727 = vmatprep.subr.bf16.mxu0 %v4848
    %6728 = vmatpush1.bf16.msra.mxu0 %v4847
    %6729 = vmatprep.subr.bf16.mxu0 %v4858
    %6730 = vmatpush1.bf16.msra.mxu0 %v4857
    %6731 = vmatprep.subr.bf16.mxu0 %v4868
    %6732 = vmatpush1.bf16.msra.mxu0 %v4867
    %6733 = vmatprep.subr.bf16.mxu0 %v4878
    %6734 = vmatpush1.bf16.msra.mxu0 %v4877
    %6735 = vmatprep.subr.bf16.mxu0 %v4888
    %6736 = vmatpush1.bf16.msra.mxu0 %v4887
    %6737 = vmatprep.subr.bf16.mxu0 %v4898
    %6738 = vmatpush1.bf16.msra.mxu0 %v4897
    %6739 = vmatprep.subr.bf16.mxu0 %v4908
    %6740 = vmatpush1.bf16.msra.mxu0 %v4907
    %6741 = vmatprep.subr.bf16.mxu0 %v4918
    %6742 = vmatpush1.bf16.msra.mxu0 %v4917
    %6743 = vmatprep.subr.bf16.mxu0 %v4928
    %6744 = vmatpush1.bf16.msra.mxu0 %v4927
    %6745 = vmatprep.mubr.bf16.mxu0 %v874
    %6746 = vmatmul.mubr.bf16.gmra.mrb[0].mxu0 %v873
    %v6747 = vpop.f32.mrb[0].mxu0
    %v6748 = vadd.f32 %v6707, %v6747
    %v6749 = vpop.f32.mrb[0].mxu0
    %v6750 = vadd.f32 %v6709, %v6749
    %v6751 = vpop.f32.mrb[0].mxu0
    %v6752 = vpop.f32.mrb[0].mxu0
    %6753 = vdwg.mxu0
    %v6754 = vmax.f32 %v5928, 0.0
    %v6755 = vmax.f32 %v5930, 0.0
    %v6756 = vmax.f32 %v6133, 0.0
    %v6757 = vmax.f32 %v6135, 0.0
    %v6758 = vmax.f32 %v6338, 0.0
    %v6759 = vmax.f32 %v6340, 0.0
    %v6760 = vmax.f32 %v6543, 0.0
    %v6761 = vmax.f32 %v6545, 0.0
    %v6762 = vmax.f32 %v6748, 0.0
    %v6763 = vmax.f32 %v6750, 0.0
    %v6764 = vpack.c.bf16 %v6754, %v6754
    %v6765 = vpack.c.bf16 %v6755, %v6755
    %v6766 = vpack.c.bf16 %v6756, %v6756
    %v6767 = vpack.c.bf16 %v6757, %v6757
    %v6768 = vpack.c.bf16 %v6758, %v6758
    %v6769 = vpack.c.bf16 %v6759, %v6759
    %v6770 = vpack.c.bf16 %v6760, %v6760
    %v6771 = vpack.c.bf16 %v6761, %v6761
    %v6772 = vpack.c.bf16 %v6762, %v6762
    %v6773 = vpack.c.bf16 %v6763, %v6763
    %v6774 = vld [vmem:[#allocation11] sm:$0xff]
    %v6775 = vld [vmem:[#allocation11 + $0x8] sm:$0xff]
    %v6776 = vld [vmem:[#allocation11 + $0x10] sm:$0xff]
    %v6777 = vld [vmem:[#allocation11 + $0x18] sm:$0xf]
    %v6778 = vld [vmem:[#allocation11 + $0x1c] sm:$0xff]
    %v6779 = vld [vmem:[#allocation11 + $0x24] sm:$0xff]
    %v6780 = vld [vmem:[#allocation11 + $0x2c] sm:$0xff]
    %v6781 = vld [vmem:[#allocation11 + $0x34] sm:$0xf]
    %v6782 = vld [vmem:[#allocation11 + $0x38] sm:$0xff]
    %v6783 = vld [vmem:[#allocation11 + $0x40] sm:$0xff]
    %v6784 = vld [vmem:[#allocation11 + $0x48] sm:$0xff]
    %v6785 = vld [vmem:[#allocation11 + $0x50] sm:$0xf]
    %v6786 = vld [vmem:[#allocation11 + $0x54] sm:$0xff]
    %v6787 = vld [vmem:[#allocation11 + $0x5c] sm:$0xff]
    %v6788 = vld [vmem:[#allocation11 + $0x64] sm:$0xff]
    %v6789 = vld [vmem:[#allocation11 + $0x6c] sm:$0xf]
    %v6790 = vld [vmem:[#allocation11 + $0x70] sm:$0xff]
    %v6791 = vld [vmem:[#allocation11 + $0x78] sm:$0xff]
    %v6792 = vld [vmem:[#allocation11 + $0x80] sm:$0xff]
    %v6793 = vld [vmem:[#allocation11 + $0x88] sm:$0xf]
    %v6794 = vld [vmem:[#allocation11 + $0x8c] sm:$0xff]
    %v6795 = vld [vmem:[#allocation11 + $0x94] sm:$0xff]
    %v6796 = vld [vmem:[#allocation11 + $0x9c] sm:$0xff]
    %v6797 = vld [vmem:[#allocation11 + $0xa4] sm:$0xf]
    %v6798 = vld [vmem:[#allocation11 + $0xa8] sm:$0xff]
    %v6799 = vld [vmem:[#allocation11 + $0xb0] sm:$0xff]
    %v6800 = vld [vmem:[#allocation11 + $0xb8] sm:$0xff]
    %v6801 = vld [vmem:[#allocation11 + $0xc0] sm:$0xf]
    %v6802 = vld [vmem:[#allocation11 + $0xc4] sm:$0xff]
    %v6803 = vld [vmem:[#allocation11 + $0xcc] sm:$0xff]
    %v6804 = vld [vmem:[#allocation11 + $0xd4] sm:$0xff]
    %v6805 = vld [vmem:[#allocation11 + $0xdc] sm:$0xf]
    %v6806 = vld [vmem:[#allocation11 + $0xe0] sm:$0xff]
    %v6807 = vld [vmem:[#allocation11 + $0xe8] sm:$0xff]
    %v6808 = vld [vmem:[#allocation11 + $0xf0] sm:$0xff]
    %v6809 = vld [vmem:[#allocation11 + $0xf8] sm:$0xf]
    %v6810 = vld [vmem:[#allocation11 + $0xfc] sm:$0xff]
    %v6811 = vld [vmem:[#allocation11 + $0x104] sm:$0xff]
    %v6812 = vld [vmem:[#allocation11 + $0x10c] sm:$0xff]
    %v6813 = vld [vmem:[#allocation11 + $0x114] sm:$0xf]
    %v6814 = vld [vmem:[#allocation11 + $0x118] sm:$0xff]
    %v6815 = vld [vmem:[#allocation11 + $0x120] sm:$0xff]
    %v6816 = vld [vmem:[#allocation11 + $0x128] sm:$0xff]
    %v6817 = vld [vmem:[#allocation11 + $0x130] sm:$0xf]
    %v6818 = vld [vmem:[#allocation11 + $0x134] sm:$0xff]
    %v6819 = vld [vmem:[#allocation11 + $0x13c] sm:$0xff]
    %v6820 = vld [vmem:[#allocation11 + $0x144] sm:$0xff]
    %v6821 = vld [vmem:[#allocation11 + $0x14c] sm:$0xf]
    %v6822 = vld [vmem:[#allocation11 + $0x150] sm:$0xff]
    %v6823 = vld [vmem:[#allocation11 + $0x158] sm:$0xff]
    %v6824 = vld [vmem:[#allocation11 + $0x160] sm:$0xff]
    %v6825 = vld [vmem:[#allocation11 + $0x168] sm:$0xf]
    %v6826 = vld [vmem:[#allocation11 + $0x16c] sm:$0xff]
    %v6827 = vld [vmem:[#allocation11 + $0x174] sm:$0xff]
    %v6828 = vld [vmem:[#allocation11 + $0x17c] sm:$0xff]
    %v6829 = vld [vmem:[#allocation11 + $0x184] sm:$0xf]
    %v6830 = vld [vmem:[#allocation11 + $0x188] sm:$0xff]
    %v6831 = vld [vmem:[#allocation11 + $0x190] sm:$0xff]
    %v6832 = vld [vmem:[#allocation11 + $0x198] sm:$0xff]
    %v6833 = vld [vmem:[#allocation11 + $0x1a0] sm:$0xf]
    %v6834 = vld [vmem:[#allocation11 + $0x1a4] sm:$0xff]
    %v6835 = vld [vmem:[#allocation11 + $0x1ac] sm:$0xff]
    %v6836 = vld [vmem:[#allocation11 + $0x1b4] sm:$0xff]
    %v6837 = vld [vmem:[#allocation11 + $0x1bc] sm:$0xf]
    %v6838 = vld [vmem:[#allocation11 + $0x1c0] sm:$0xff]
    %v6839 = vld [vmem:[#allocation11 + $0x1c8] sm:$0xff]
    %v6840 = vld [vmem:[#allocation11 + $0x1d0] sm:$0xff]
    %v6841 = vld [vmem:[#allocation11 + $0x1d8] sm:$0xf]
    %v6842 = vld [vmem:[#allocation11 + $0x1dc] sm:$0xff]
    %v6843 = vld [vmem:[#allocation11 + $0x1e4] sm:$0xff]
    %v6844 = vld [vmem:[#allocation11 + $0x1ec] sm:$0xff]
    %v6845 = vld [vmem:[#allocation11 + $0x1f4] sm:$0xf]
    %v6846 = vld [vmem:[#allocation11 + $0x1f8] sm:$0xff]
    %v6847 = vld [vmem:[#allocation11 + $0x200] sm:$0xff]
    %v6848 = vld [vmem:[#allocation11 + $0x208] sm:$0xff]
    %v6849 = vld [vmem:[#allocation11 + $0x210] sm:$0xf]
    %v6850 = vld [vmem:[#allocation11 + $0x214] sm:$0xff]
    %v6851 = vld [vmem:[#allocation11 + $0x21c] sm:$0xff]
    %v6852 = vld [vmem:[#allocation11 + $0x224] sm:$0xff]
    %v6853 = vld [vmem:[#allocation11 + $0x22c] sm:$0xf]
    %v6854 = vld [vmem:[#allocation11 + $0x230] sm:$0xff]
    %v6855 = vld [vmem:[#allocation11 + $0x238] sm:$0xff]
    %v6856 = vld [vmem:[#allocation11 + $0x240] sm:$0xff]
    %v6857 = vld [vmem:[#allocation11 + $0x248] sm:$0xf]
    %v6858 = vld [vmem:[#allocation11 + $0x24c] sm:$0xff]
    %v6859 = vld [vmem:[#allocation11 + $0x254] sm:$0xff]
    %v6860 = vld [vmem:[#allocation11 + $0x25c] sm:$0xff]
    %v6861 = vld [vmem:[#allocation11 + $0x264] sm:$0xf]
    %v6862 = vld [vmem:[#allocation11 + $0x268] sm:$0xff]
    %v6863 = vld [vmem:[#allocation11 + $0x270] sm:$0xff]
    %v6864 = vld [vmem:[#allocation11 + $0x278] sm:$0xff]
    %v6865 = vld [vmem:[#allocation11 + $0x280] sm:$0xf]
    %v6866 = vld [vmem:[#allocation11 + $0x284] sm:$0xff]
    %v6867 = vld [vmem:[#allocation11 + $0x28c] sm:$0xff]
    %v6868 = vld [vmem:[#allocation11 + $0x294] sm:$0xff]
    %v6869 = vld [vmem:[#allocation11 + $0x29c] sm:$0xf]
    %v6870 = vld [vmem:[#allocation11 + $0x2a0] sm:$0xff]
    %v6871 = vld [vmem:[#allocation11 + $0x2a8] sm:$0xff]
    %v6872 = vld [vmem:[#allocation11 + $0x2b0] sm:$0xff]
    %v6873 = vld [vmem:[#allocation11 + $0x2b8] sm:$0xf]
    %v6874 = vld [vmem:[#allocation11 + $0x2bc] sm:$0xff]
    %v6875 = vld [vmem:[#allocation11 + $0x2c4] sm:$0xff]
    %v6876 = vld [vmem:[#allocation11 + $0x2cc] sm:$0xff]
    %v6877 = vld [vmem:[#allocation11 + $0x2d4] sm:$0xf]
    %v6878 = vld [vmem:[#allocation11 + $0x2d8] sm:$0xff]
    %v6879 = vld [vmem:[#allocation11 + $0x2e0] sm:$0xff]
    %v6880 = vld [vmem:[#allocation11 + $0x2e8] sm:$0xff]
    %v6881 = vld [vmem:[#allocation11 + $0x2f0] sm:$0xf]
    %v6882 = vld [vmem:[#allocation11 + $0x2f4] sm:$0xff]
    %v6883 = vld [vmem:[#allocation11 + $0x2fc] sm:$0xff]
    %v6884 = vld [vmem:[#allocation11 + $0x304] sm:$0xff]
    %v6885 = vld [vmem:[#allocation11 + $0x30c] sm:$0xf]
    %v6886 = vld [vmem:[#allocation11 + $0x310] sm:$0xff]
    %v6887 = vld [vmem:[#allocation11 + $0x318] sm:$0xff]
    %v6888 = vld [vmem:[#allocation11 + $0x320] sm:$0xff]
    %v6889 = vld [vmem:[#allocation11 + $0x328] sm:$0xf]
    %v6890 = vld [vmem:[#allocation11 + $0x32c] sm:$0xff]
    %v6891 = vld [vmem:[#allocation11 + $0x334] sm:$0xff]
    %v6892 = vld [vmem:[#allocation11 + $0x33c] sm:$0xff]
    %v6893 = vld [vmem:[#allocation11 + $0x344] sm:$0xf]
    %v6894 = vld [vmem:[#allocation11 + $0x348] sm:$0xff]
    %v6895 = vld [vmem:[#allocation11 + $0x350] sm:$0xff]
    %v6896 = vld [vmem:[#allocation11 + $0x358] sm:$0xff]
    %v6897 = vld [vmem:[#allocation11 + $0x360] sm:$0xf]
    %v6898 = vld [vmem:[#allocation11 + $0x364] sm:$0xff]
    %v6899 = vld [vmem:[#allocation11 + $0x36c] sm:$0xff]
    %v6900 = vld [vmem:[#allocation11 + $0x374] sm:$0xff]
    %v6901 = vld [vmem:[#allocation11 + $0x37c] sm:$0xf]
    %v6902 = vld [vmem:[#allocation11 + $0x380] sm:$0xff]
    %v6903 = vld [vmem:[#allocation11 + $0x388] sm:$0xff]
    %v6904 = vld [vmem:[#allocation11 + $0x390] sm:$0xff]
    %v6905 = vld [vmem:[#allocation11 + $0x398] sm:$0xf]
    %v6906 = vld [vmem:[#allocation11 + $0x39c] sm:$0xff]
    %v6907 = vld [vmem:[#allocation11 + $0x3a4] sm:$0xff]
    %v6908 = vld [vmem:[#allocation11 + $0x3ac] sm:$0xff]
    %v6909 = vld [vmem:[#allocation11 + $0x3b4] sm:$0xf]
    %v6910 = vld [vmem:[#allocation11 + $0x3b8] sm:$0xff]
    %v6911 = vld [vmem:[#allocation11 + $0x3c0] sm:$0xff]
    %v6912 = vld [vmem:[#allocation11 + $0x3c8] sm:$0xff]
    %v6913 = vld [vmem:[#allocation11 + $0x3d0] sm:$0xf]
    %v6914 = vld [vmem:[#allocation11 + $0x3d4] sm:$0xff]
    %v6915 = vld [vmem:[#allocation11 + $0x3dc] sm:$0xff]
    %v6916 = vld [vmem:[#allocation11 + $0x3e4] sm:$0xff]
    %v6917 = vld [vmem:[#allocation11 + $0x3ec] sm:$0xf]
    %v6918 = vld [vmem:[#allocation11 + $0x3f0] sm:$0xff]
    %v6919 = vld [vmem:[#allocation11 + $0x3f8] sm:$0xff]
    %v6920 = vld [vmem:[#allocation11 + $0x400] sm:$0xff]
    %v6921 = vld [vmem:[#allocation11 + $0x408] sm:$0xf]
    %v6922 = vld [vmem:[#allocation11 + $0x40c] sm:$0xff]
    %v6923 = vld [vmem:[#allocation11 + $0x414] sm:$0xff]
    %v6924 = vld [vmem:[#allocation11 + $0x41c] sm:$0xff]
    %v6925 = vld [vmem:[#allocation11 + $0x424] sm:$0xf]
    %v6926 = vld [vmem:[#allocation11 + $0x428] sm:$0xff]
    %v6927 = vld [vmem:[#allocation11 + $0x430] sm:$0xff]
    %v6928 = vld [vmem:[#allocation11 + $0x438] sm:$0xff]
    %v6929 = vld [vmem:[#allocation11 + $0x440] sm:$0xf]
    %v6930 = vld [vmem:[#allocation11 + $0x444] sm:$0xff]
    %v6931 = vld [vmem:[#allocation11 + $0x44c] sm:$0xff]
    %v6932 = vld [vmem:[#allocation11 + $0x454] sm:$0xff]
    %v6933 = vld [vmem:[#allocation11 + $0x45c] sm:$0xf]
    %v6934 = vld [vmem:[#allocation11 + $0x460] sm:$0xff]
    %v6935 = vld [vmem:[#allocation11 + $0x468] sm:$0xff]
    %v6936 = vld [vmem:[#allocation11 + $0x470] sm:$0xff]
    %v6937 = vld [vmem:[#allocation11 + $0x478] sm:$0xf]
    %v6938 = vld [vmem:[#allocation11 + $0x47c] sm:$0xff]
    %v6939 = vld [vmem:[#allocation11 + $0x484] sm:$0xff]
    %v6940 = vld [vmem:[#allocation11 + $0x48c] sm:$0xff]
    %v6941 = vld [vmem:[#allocation11 + $0x494] sm:$0xf]
    %v6942 = vld [vmem:[#allocation11 + $0x498] sm:$0xff]
    %v6943 = vld [vmem:[#allocation11 + $0x4a0] sm:$0xff]
    %v6944 = vld [vmem:[#allocation11 + $0x4a8] sm:$0xff]
    %v6945 = vld [vmem:[#allocation11 + $0x4b0] sm:$0xf]
    %v6946 = vld [vmem:[#allocation11 + $0x4b4] sm:$0xff]
    %v6947 = vld [vmem:[#allocation11 + $0x4bc] sm:$0xff]
    %v6948 = vld [vmem:[#allocation11 + $0x4c4] sm:$0xff]
    %v6949 = vld [vmem:[#allocation11 + $0x4cc] sm:$0xf]
    %v6950 = vld [vmem:[#allocation11 + $0x4d0] sm:$0xff]
    %v6951 = vld [vmem:[#allocation11 + $0x4d8] sm:$0xff]
    %v6952 = vld [vmem:[#allocation11 + $0x4e0] sm:$0xff]
    %v6953 = vld [vmem:[#allocation11 + $0x4e8] sm:$0xf]
    %v6954 = vld [vmem:[#allocation11 + $0x4ec] sm:$0xff]
    %v6955 = vld [vmem:[#allocation11 + $0x4f4] sm:$0xff]
    %v6956 = vld [vmem:[#allocation11 + $0x4fc] sm:$0xff]
    %v6957 = vld [vmem:[#allocation11 + $0x504] sm:$0xf]
    %v6958 = vld [vmem:[#allocation11 + $0x508] sm:$0xff]
    %v6959 = vld [vmem:[#allocation11 + $0x510] sm:$0xff]
    %v6960 = vld [vmem:[#allocation11 + $0x518] sm:$0xff]
    %v6961 = vld [vmem:[#allocation11 + $0x520] sm:$0xf]
    %v6962 = vld [vmem:[#allocation11 + $0x524] sm:$0xff]
    %v6963 = vld [vmem:[#allocation11 + $0x52c] sm:$0xff]
    %v6964 = vld [vmem:[#allocation11 + $0x534] sm:$0xff]
    %v6965 = vld [vmem:[#allocation11 + $0x53c] sm:$0xf]
    %v6966 = vld [vmem:[#allocation11 + $0x540] sm:$0xff]
    %v6967 = vld [vmem:[#allocation11 + $0x548] sm:$0xff]
    %v6968 = vld [vmem:[#allocation11 + $0x550] sm:$0xff]
    %v6969 = vld [vmem:[#allocation11 + $0x558] sm:$0xf]
    %v6970 = vld [vmem:[#allocation11 + $0x55c] sm:$0xff]
    %v6971 = vld [vmem:[#allocation11 + $0x564] sm:$0xff]
    %v6972 = vld [vmem:[#allocation11 + $0x56c] sm:$0xff]
    %v6973 = vld [vmem:[#allocation11 + $0x574] sm:$0xf]
    %v6974 = vld [vmem:[#allocation11 + $0x578] sm:$0xff]
    %v6975 = vld [vmem:[#allocation11 + $0x580] sm:$0xff]
    %v6976 = vld [vmem:[#allocation11 + $0x588] sm:$0xff]
    %v6977 = vld [vmem:[#allocation11 + $0x590] sm:$0xf]
    %v6978 = vld [vmem:[#allocation11 + $0x594] sm:$0xff]
    %v6979 = vld [vmem:[#allocation11 + $0x59c] sm:$0xff]
    %v6980 = vld [vmem:[#allocation11 + $0x5a4] sm:$0xff]
    %v6981 = vld [vmem:[#allocation11 + $0x5ac] sm:$0xf]
    %v6982 = vld [vmem:[#allocation11 + $0x5b0] sm:$0xff]
    %v6983 = vld [vmem:[#allocation11 + $0x5b8] sm:$0xff]
    %v6984 = vld [vmem:[#allocation11 + $0x5c0] sm:$0xff]
    %v6985 = vld [vmem:[#allocation11 + $0x5c8] sm:$0xf]
    %v6986 = vld [vmem:[#allocation11 + $0x5cc] sm:$0xff]
    %v6987 = vld [vmem:[#allocation11 + $0x5d4] sm:$0xff]
    %v6988 = vld [vmem:[#allocation11 + $0x5dc] sm:$0xff]
    %v6989 = vld [vmem:[#allocation11 + $0x5e4] sm:$0xf]
    %v6990 = vld [vmem:[#allocation11 + $0x5e8] sm:$0xff]
    %v6991 = vld [vmem:[#allocation11 + $0x5f0] sm:$0xff]
    %v6992 = vld [vmem:[#allocation11 + $0x5f8] sm:$0xff]
    %v6993 = vld [vmem:[#allocation11 + $0x600] sm:$0xf]
    %v6994 = vld [vmem:[#allocation11 + $0x604] sm:$0xff]
    %v6995 = vld [vmem:[#allocation11 + $0x60c] sm:$0xff]
    %v6996 = vld [vmem:[#allocation11 + $0x614] sm:$0xff]
    %v6997 = vld [vmem:[#allocation11 + $0x61c] sm:$0xf]
    %v6998 = vld [vmem:[#allocation11 + $0x620] sm:$0xff]
    %v6999 = vld [vmem:[#allocation11 + $0x628] sm:$0xff]
    %v7000 = vld [vmem:[#allocation11 + $0x630] sm:$0xff]
    %v7001 = vld [vmem:[#allocation11 + $0x638] sm:$0xf]
    %v7002 = vld [vmem:[#allocation11 + $0x63c] sm:$0xff]
    %v7003 = vld [vmem:[#allocation11 + $0x644] sm:$0xff]
    %v7004 = vld [vmem:[#allocation11 + $0x64c] sm:$0xff]
    %v7005 = vld [vmem:[#allocation11 + $0x654] sm:$0xf]
    %v7006 = vld [vmem:[#allocation11 + $0x658] sm:$0xff]
    %v7007 = vld [vmem:[#allocation11 + $0x660] sm:$0xff]
    %v7008 = vld [vmem:[#allocation11 + $0x668] sm:$0xff]
    %v7009 = vld [vmem:[#allocation11 + $0x670] sm:$0xf]
    %v7010 = vld [vmem:[#allocation11 + $0x674] sm:$0xff]
    %v7011 = vld [vmem:[#allocation11 + $0x67c] sm:$0xff]
    %v7012 = vld [vmem:[#allocation11 + $0x684] sm:$0xff]
    %v7013 = vld [vmem:[#allocation11 + $0x68c] sm:$0xf]
    %v7014 = vld [vmem:[#allocation11 + $0x690] sm:$0xff]
    %v7015 = vld [vmem:[#allocation11 + $0x698] sm:$0xff]
    %v7016 = vld [vmem:[#allocation11 + $0x6a0] sm:$0xff]
    %v7017 = vld [vmem:[#allocation11 + $0x6a8] sm:$0xf]
    %v7018 = vld [vmem:[#allocation11 + $0x6ac] sm:$0xff]
    %v7019 = vld [vmem:[#allocation11 + $0x6b4] sm:$0xff]
    %v7020 = vld [vmem:[#allocation11 + $0x6bc] sm:$0xff]
    %v7021 = vld [vmem:[#allocation11 + $0x6c4] sm:$0xf]
    %v7022 = vld [vmem:[#allocation11 + $0x6c8] sm:$0xff]
    %v7023 = vld [vmem:[#allocation11 + $0x6d0] sm:$0xff]
    %v7024 = vld [vmem:[#allocation11 + $0x6d8] sm:$0xff]
    %v7025 = vld [vmem:[#allocation11 + $0x6e0] sm:$0xf]
    %v7026 = vld [vmem:[#allocation11 + $0x6e4] sm:$0xff]
    %v7027 = vld [vmem:[#allocation11 + $0x6ec] sm:$0xff]
    %v7028 = vld [vmem:[#allocation11 + $0x6f4] sm:$0xff]
    %v7029 = vld [vmem:[#allocation11 + $0x6fc] sm:$0xf]
    %v7030 = vld [vmem:[#allocation11 + $0x700] sm:$0xff]
    %v7031 = vld [vmem:[#allocation11 + $0x708] sm:$0xff]
    %v7032 = vld [vmem:[#allocation11 + $0x710] sm:$0xff]
    %v7033 = vld [vmem:[#allocation11 + $0x718] sm:$0xf]
    %v7034 = vld [vmem:[#allocation11 + $0x71c] sm:$0xff]
    %v7035 = vld [vmem:[#allocation11 + $0x724] sm:$0xff]
    %v7036 = vld [vmem:[#allocation11 + $0x72c] sm:$0xff]
    %v7037 = vld [vmem:[#allocation11 + $0x734] sm:$0xf]
    %v7038 = vld [vmem:[#allocation11 + $0x738] sm:$0xff]
    %v7039 = vld [vmem:[#allocation11 + $0x740] sm:$0xff]
    %v7040 = vld [vmem:[#allocation11 + $0x748] sm:$0xff]
    %v7041 = vld [vmem:[#allocation11 + $0x750] sm:$0xf]
    %v7042 = vld [vmem:[#allocation11 + $0x754] sm:$0xff]
    %v7043 = vld [vmem:[#allocation11 + $0x75c] sm:$0xff]
    %v7044 = vld [vmem:[#allocation11 + $0x764] sm:$0xff]
    %v7045 = vld [vmem:[#allocation11 + $0x76c] sm:$0xf]
    %v7046 = vld [vmem:[#allocation11 + $0x770] sm:$0xff]
    %v7047 = vld [vmem:[#allocation11 + $0x778] sm:$0xff]
    %v7048 = vld [vmem:[#allocation11 + $0x780] sm:$0xff]
    %v7049 = vld [vmem:[#allocation11 + $0x788] sm:$0xf]
    %v7050 = vld [vmem:[#allocation11 + $0x78c] sm:$0xff]
    %v7051 = vld [vmem:[#allocation11 + $0x794] sm:$0xff]
    %v7052 = vld [vmem:[#allocation11 + $0x79c] sm:$0xff]
    %v7053 = vld [vmem:[#allocation11 + $0x7a4] sm:$0xf]
    %v7054 = vld [vmem:[#allocation11 + $0x7a8] sm:$0xff]
    %v7055 = vld [vmem:[#allocation11 + $0x7b0] sm:$0xff]
    %v7056 = vld [vmem:[#allocation11 + $0x7b8] sm:$0xff]
    %v7057 = vld [vmem:[#allocation11 + $0x7c0] sm:$0xf]
    %v7058 = vld [vmem:[#allocation11 + $0x7c4] sm:$0xff]
    %v7059 = vld [vmem:[#allocation11 + $0x7cc] sm:$0xff]
    %v7060 = vld [vmem:[#allocation11 + $0x7d4] sm:$0xff]
    %v7061 = vld [vmem:[#allocation11 + $0x7dc] sm:$0xf]
    %v7062 = vld [vmem:[#allocation11 + $0x7e0] sm:$0xff]
    %v7063 = vld [vmem:[#allocation11 + $0x7e8] sm:$0xff]
    %v7064 = vld [vmem:[#allocation11 + $0x7f0] sm:$0xff]
    %v7065 = vld [vmem:[#allocation11 + $0x7f8] sm:$0xf]
    %v7066 = vld [vmem:[#allocation11 + $0x7fc] sm:$0xff]
    %v7067 = vld [vmem:[#allocation11 + $0x804] sm:$0xff]
    %v7068 = vld [vmem:[#allocation11 + $0x80c] sm:$0xff]
    %v7069 = vld [vmem:[#allocation11 + $0x814] sm:$0xf]
    %v7070 = vld [vmem:[#allocation11 + $0x818] sm:$0xff]
    %v7071 = vld [vmem:[#allocation11 + $0x820] sm:$0xff]
    %v7072 = vld [vmem:[#allocation11 + $0x828] sm:$0xff]
    %v7073 = vld [vmem:[#allocation11 + $0x830] sm:$0xf]
    %v7074 = vld [vmem:[#allocation11 + $0x834] sm:$0xff]
    %v7075 = vld [vmem:[#allocation11 + $0x83c] sm:$0xff]
    %v7076 = vld [vmem:[#allocation11 + $0x844] sm:$0xff]
    %v7077 = vld [vmem:[#allocation11 + $0x84c] sm:$0xf]
    %v7078 = vld [vmem:[#allocation11 + $0x850] sm:$0xff]
    %v7079 = vld [vmem:[#allocation11 + $0x858] sm:$0xff]
    %v7080 = vld [vmem:[#allocation11 + $0x860] sm:$0xff]
    %v7081 = vld [vmem:[#allocation11 + $0x868] sm:$0xf]
    %v7082 = vld [vmem:[#allocation11 + $0x86c] sm:$0xff]
    %v7083 = vld [vmem:[#allocation11 + $0x874] sm:$0xff]
    %v7084 = vld [vmem:[#allocation11 + $0x87c] sm:$0xff]
    %v7085 = vld [vmem:[#allocation11 + $0x884] sm:$0xf]
    %v7086 = vld [vmem:[#allocation11 + $0x888] sm:$0xff]
    %v7087 = vld [vmem:[#allocation11 + $0x890] sm:$0xff]
    %v7088 = vld [vmem:[#allocation11 + $0x898] sm:$0xff]
    %v7089 = vld [vmem:[#allocation11 + $0x8a0] sm:$0xf]
    %v7090 = vld [vmem:[#allocation11 + $0x8a4] sm:$0xff]
    %v7091 = vld [vmem:[#allocation11 + $0x8ac] sm:$0xff]
    %v7092 = vld [vmem:[#allocation11 + $0x8b4] sm:$0xff]
    %v7093 = vld [vmem:[#allocation11 + $0x8bc] sm:$0xf]
    %v7094 = vld [vmem:[#allocation11 + $0x8c0] sm:$0xff]
    %v7095 = vld [vmem:[#allocation11 + $0x8c8] sm:$0xff]
    %v7096 = vld [vmem:[#allocation11 + $0x8d0] sm:$0xff]
    %v7097 = vld [vmem:[#allocation11 + $0x8d8] sm:$0xf]
    %v7098 = vld [vmem:[#allocation11 + $0x8dc] sm:$0xff]
    %v7099 = vld [vmem:[#allocation11 + $0x8e4] sm:$0xff]
    %v7100 = vld [vmem:[#allocation11 + $0x8ec] sm:$0xff]
    %v7101 = vld [vmem:[#allocation11 + $0x8f4] sm:$0xf]
    %v7102 = vld [vmem:[#allocation11 + $0x8f8] sm:$0xff]
    %v7103 = vld [vmem:[#allocation11 + $0x900] sm:$0xff]
    %v7104 = vld [vmem:[#allocation11 + $0x908] sm:$0xff]
    %v7105 = vld [vmem:[#allocation11 + $0x910] sm:$0xf]
    %v7106 = vld [vmem:[#allocation11 + $0x914] sm:$0xff]
    %v7107 = vld [vmem:[#allocation11 + $0x91c] sm:$0xff]
    %v7108 = vld [vmem:[#allocation11 + $0x924] sm:$0xff]
    %v7109 = vld [vmem:[#allocation11 + $0x92c] sm:$0xf]
    %v7110 = vld [vmem:[#allocation11 + $0x930] sm:$0xff]
    %v7111 = vld [vmem:[#allocation11 + $0x938] sm:$0xff]
    %v7112 = vld [vmem:[#allocation11 + $0x940] sm:$0xff]
    %v7113 = vld [vmem:[#allocation11 + $0x948] sm:$0xf]
    %v7114 = vld [vmem:[#allocation11 + $0x94c] sm:$0xff]
    %v7115 = vld [vmem:[#allocation11 + $0x954] sm:$0xff]
    %v7116 = vld [vmem:[#allocation11 + $0x95c] sm:$0xff]
    %v7117 = vld [vmem:[#allocation11 + $0x964] sm:$0xf]
    %v7118 = vld [vmem:[#allocation11 + $0x968] sm:$0xff]
    %v7119 = vld [vmem:[#allocation11 + $0x970] sm:$0xff]
    %v7120 = vld [vmem:[#allocation11 + $0x978] sm:$0xff]
    %v7121 = vld [vmem:[#allocation11 + $0x980] sm:$0xf]
    %v7122 = vld [vmem:[#allocation11 + $0x984] sm:$0xff]
    %v7123 = vld [vmem:[#allocation11 + $0x98c] sm:$0xff]
    %v7124 = vld [vmem:[#allocation11 + $0x994] sm:$0xff]
    %v7125 = vld [vmem:[#allocation11 + $0x99c] sm:$0xf]
    %v7126 = vld [vmem:[#allocation11 + $0x9a0] sm:$0xff]
    %v7127 = vld [vmem:[#allocation11 + $0x9a8] sm:$0xff]
    %v7128 = vld [vmem:[#allocation11 + $0x9b0] sm:$0xff]
    %v7129 = vld [vmem:[#allocation11 + $0x9b8] sm:$0xf]
    %v7130 = vld [vmem:[#allocation11 + $0x9bc] sm:$0xff]
    %v7131 = vld [vmem:[#allocation11 + $0x9c4] sm:$0xff]
    %v7132 = vld [vmem:[#allocation11 + $0x9cc] sm:$0xff]
    %v7133 = vld [vmem:[#allocation11 + $0x9d4] sm:$0xf]
    %v7134 = vld [vmem:[#allocation11 + $0x9d8] sm:$0xff]
    %v7135 = vld [vmem:[#allocation11 + $0x9e0] sm:$0xff]
    %v7136 = vld [vmem:[#allocation11 + $0x9e8] sm:$0xff]
    %v7137 = vld [vmem:[#allocation11 + $0x9f0] sm:$0xf]
    %v7138 = vld [vmem:[#allocation11 + $0x9f4] sm:$0xff]
    %v7139 = vld [vmem:[#allocation11 + $0x9fc] sm:$0xff]
    %v7140 = vld [vmem:[#allocation11 + $0xa04] sm:$0xff]
    %v7141 = vld [vmem:[#allocation11 + $0xa0c] sm:$0xf]
    %v7142 = vld [vmem:[#allocation11 + $0xa10] sm:$0xff]
    %v7143 = vld [vmem:[#allocation11 + $0xa18] sm:$0xff]
    %v7144 = vld [vmem:[#allocation11 + $0xa20] sm:$0xff]
    %v7145 = vld [vmem:[#allocation11 + $0xa28] sm:$0xf]
    %v7146 = vld [vmem:[#allocation11 + $0xa2c] sm:$0xff]
    %v7147 = vld [vmem:[#allocation11 + $0xa34] sm:$0xff]
    %v7148 = vld [vmem:[#allocation11 + $0xa3c] sm:$0xff]
    %v7149 = vld [vmem:[#allocation11 + $0xa44] sm:$0xf]
    %v7150 = vld [vmem:[#allocation11 + $0xa48] sm:$0xff]
    %v7151 = vld [vmem:[#allocation11 + $0xa50] sm:$0xff]
    %v7152 = vld [vmem:[#allocation11 + $0xa58] sm:$0xff]
    %v7153 = vld [vmem:[#allocation11 + $0xa60] sm:$0xf]
    %v7154 = vld [vmem:[#allocation11 + $0xa64] sm:$0xff]
    %v7155 = vld [vmem:[#allocation11 + $0xa6c] sm:$0xff]
    %v7156 = vld [vmem:[#allocation11 + $0xa74] sm:$0xff]
    %v7157 = vld [vmem:[#allocation11 + $0xa7c] sm:$0xf]
    %v7158 = vld [vmem:[#allocation11 + $0xa80] sm:$0xff]
    %v7159 = vld [vmem:[#allocation11 + $0xa88] sm:$0xff]
    %v7160 = vld [vmem:[#allocation11 + $0xa90] sm:$0xff]
    %v7161 = vld [vmem:[#allocation11 + $0xa98] sm:$0xf]
    %v7162 = vld [vmem:[#allocation11 + $0xa9c] sm:$0xff]
    %v7163 = vld [vmem:[#allocation11 + $0xaa4] sm:$0xff]
    %v7164 = vld [vmem:[#allocation11 + $0xaac] sm:$0xff]
    %v7165 = vld [vmem:[#allocation11 + $0xab4] sm:$0xf]
    %v7166 = vld [vmem:[#allocation11 + $0xab8] sm:$0xff]
    %v7167 = vld [vmem:[#allocation11 + $0xac0] sm:$0xff]
    %v7168 = vld [vmem:[#allocation11 + $0xac8] sm:$0xff]
    %v7169 = vld [vmem:[#allocation11 + $0xad0] sm:$0xf]
    %v7170 = vld [vmem:[#allocation11 + $0xad4] sm:$0xff]
    %v7171 = vld [vmem:[#allocation11 + $0xadc] sm:$0xff]
    %v7172 = vld [vmem:[#allocation11 + $0xae4] sm:$0xff]
    %v7173 = vld [vmem:[#allocation11 + $0xaec] sm:$0xf]
    %v7174 = vld [vmem:[#allocation11 + $0xaf0] sm:$0xff]
    %v7175 = vld [vmem:[#allocation11 + $0xaf8] sm:$0xff]
    %v7176 = vld [vmem:[#allocation11 + $0xb00] sm:$0xff]
    %v7177 = vld [vmem:[#allocation11 + $0xb08] sm:$0xf]
    %v7178 = vld [vmem:[#allocation11 + $0xb0c] sm:$0xff]
    %v7179 = vld [vmem:[#allocation11 + $0xb14] sm:$0xff]
    %v7180 = vld [vmem:[#allocation11 + $0xb1c] sm:$0xff]
    %v7181 = vld [vmem:[#allocation11 + $0xb24] sm:$0xf]
    %v7182 = vld [vmem:[#allocation11 + $0xb28] sm:$0xff]
    %v7183 = vld [vmem:[#allocation11 + $0xb30] sm:$0xff]
    %v7184 = vld [vmem:[#allocation11 + $0xb38] sm:$0xff]
    %v7185 = vld [vmem:[#allocation11 + $0xb40] sm:$0xf]
    %v7186 = vld [vmem:[#allocation11 + $0xb44] sm:$0xff]
    %v7187 = vld [vmem:[#allocation11 + $0xb4c] sm:$0xff]
    %v7188 = vld [vmem:[#allocation11 + $0xb54] sm:$0xff]
    %v7189 = vld [vmem:[#allocation11 + $0xb5c] sm:$0xf]
    %v7190 = vld [vmem:[#allocation11 + $0xb60] sm:$0xff]
    %v7191 = vld [vmem:[#allocation11 + $0xb68] sm:$0xff]
    %v7192 = vld [vmem:[#allocation11 + $0xb70] sm:$0xff]
    %v7193 = vld [vmem:[#allocation11 + $0xb78] sm:$0xf]
    %v7194 = vld [vmem:[#allocation11 + $0xb7c] sm:$0xff]
    %v7195 = vld [vmem:[#allocation11 + $0xb84] sm:$0xff]
    %v7196 = vld [vmem:[#allocation11 + $0xb8c] sm:$0xff]
    %v7197 = vld [vmem:[#allocation11 + $0xb94] sm:$0xf]
    %v7198 = vld [vmem:[#allocation11 + $0xb98] sm:$0xff]
    %v7199 = vld [vmem:[#allocation11 + $0xba0] sm:$0xff]
    %v7200 = vld [vmem:[#allocation11 + $0xba8] sm:$0xff]
    %v7201 = vld [vmem:[#allocation11 + $0xbb0] sm:$0xf]
    %v7202 = vld [vmem:[#allocation11 + $0xbb4] sm:$0xff]
    %v7203 = vld [vmem:[#allocation11 + $0xbbc] sm:$0xff]
    %v7204 = vld [vmem:[#allocation11 + $0xbc4] sm:$0xff]
    %v7205 = vld [vmem:[#allocation11 + $0xbcc] sm:$0xf]
    %v7206 = vld [vmem:[#allocation11 + $0xbd0] sm:$0xff]
    %v7207 = vld [vmem:[#allocation11 + $0xbd8] sm:$0xff]
    %v7208 = vld [vmem:[#allocation11 + $0xbe0] sm:$0xff]
    %v7209 = vld [vmem:[#allocation11 + $0xbe8] sm:$0xf]
    %v7210 = vld [vmem:[#allocation11 + $0xbec] sm:$0xff]
    %v7211 = vld [vmem:[#allocation11 + $0xbf4] sm:$0xff]
    %v7212 = vld [vmem:[#allocation11 + $0xbfc] sm:$0xff]
    %v7213 = vld [vmem:[#allocation11 + $0xc04] sm:$0xf]
    %v7214 = vld [vmem:[#allocation11 + $0xc08] sm:$0xff]
    %v7215 = vld [vmem:[#allocation11 + $0xc10] sm:$0xff]
    %v7216 = vld [vmem:[#allocation11 + $0xc18] sm:$0xff]
    %v7217 = vld [vmem:[#allocation11 + $0xc20] sm:$0xf]
    %v7218 = vld [vmem:[#allocation11 + $0xc24] sm:$0xff]
    %v7219 = vld [vmem:[#allocation11 + $0xc2c] sm:$0xff]
    %v7220 = vld [vmem:[#allocation11 + $0xc34] sm:$0xff]
    %v7221 = vld [vmem:[#allocation11 + $0xc3c] sm:$0xf]
    %v7222 = vld [vmem:[#allocation11 + $0xc40] sm:$0xff]
    %v7223 = vld [vmem:[#allocation11 + $0xc48] sm:$0xff]
    %v7224 = vld [vmem:[#allocation11 + $0xc50] sm:$0xff]
    %v7225 = vld [vmem:[#allocation11 + $0xc58] sm:$0xf]
    %v7226 = vld [vmem:[#allocation11 + $0xc5c] sm:$0xff]
    %v7227 = vld [vmem:[#allocation11 + $0xc64] sm:$0xff]
    %v7228 = vld [vmem:[#allocation11 + $0xc6c] sm:$0xff]
    %v7229 = vld [vmem:[#allocation11 + $0xc74] sm:$0xf]
    %v7230 = vld [vmem:[#allocation11 + $0xc78] sm:$0xff]
    %v7231 = vld [vmem:[#allocation11 + $0xc80] sm:$0xff]
    %v7232 = vld [vmem:[#allocation11 + $0xc88] sm:$0xff]
    %v7233 = vld [vmem:[#allocation11 + $0xc90] sm:$0xf]
    %v7234 = vld [vmem:[#allocation11 + $0xc94] sm:$0xff]
    %v7235 = vld [vmem:[#allocation11 + $0xc9c] sm:$0xff]
    %v7236 = vld [vmem:[#allocation11 + $0xca4] sm:$0xff]
    %v7237 = vld [vmem:[#allocation11 + $0xcac] sm:$0xf]
    %v7238 = vld [vmem:[#allocation11 + $0xcb0] sm:$0xff]
    %v7239 = vld [vmem:[#allocation11 + $0xcb8] sm:$0xff]
    %v7240 = vld [vmem:[#allocation11 + $0xcc0] sm:$0xff]
    %v7241 = vld [vmem:[#allocation11 + $0xcc8] sm:$0xf]
    %v7242 = vld [vmem:[#allocation11 + $0xccc] sm:$0xff]
    %v7243 = vld [vmem:[#allocation11 + $0xcd4] sm:$0xff]
    %v7244 = vld [vmem:[#allocation11 + $0xcdc] sm:$0xff]
    %v7245 = vld [vmem:[#allocation11 + $0xce4] sm:$0xf]
    %v7246 = vld [vmem:[#allocation11 + $0xce8] sm:$0xff]
    %v7247 = vld [vmem:[#allocation11 + $0xcf0] sm:$0xff]
    %v7248 = vld [vmem:[#allocation11 + $0xcf8] sm:$0xff]
    %v7249 = vld [vmem:[#allocation11 + $0xd00] sm:$0xf]
    %v7250 = vld [vmem:[#allocation11 + $0xd04] sm:$0xff]
    %v7251 = vld [vmem:[#allocation11 + $0xd0c] sm:$0xff]
    %v7252 = vld [vmem:[#allocation11 + $0xd14] sm:$0xff]
    %v7253 = vld [vmem:[#allocation11 + $0xd1c] sm:$0xf]
    %v7254 = vld [vmem:[#allocation11 + $0xd20] sm:$0xff]
    %v7255 = vld [vmem:[#allocation11 + $0xd28] sm:$0xff]
    %v7256 = vld [vmem:[#allocation11 + $0xd30] sm:$0xff]
    %v7257 = vld [vmem:[#allocation11 + $0xd38] sm:$0xf]
    %v7258 = vld [vmem:[#allocation11 + $0xd3c] sm:$0xff]
    %v7259 = vld [vmem:[#allocation11 + $0xd44] sm:$0xff]
    %v7260 = vld [vmem:[#allocation11 + $0xd4c] sm:$0xff]
    %v7261 = vld [vmem:[#allocation11 + $0xd54] sm:$0xf]
    %v7262 = vld [vmem:[#allocation11 + $0xd58] sm:$0xff]
    %v7263 = vld [vmem:[#allocation11 + $0xd60] sm:$0xff]
    %v7264 = vld [vmem:[#allocation11 + $0xd68] sm:$0xff]
    %v7265 = vld [vmem:[#allocation11 + $0xd70] sm:$0xf]
    %v7266 = vld [vmem:[#allocation11 + $0xd74] sm:$0xff]
    %v7267 = vld [vmem:[#allocation11 + $0xd7c] sm:$0xff]
    %v7268 = vld [vmem:[#allocation11 + $0xd84] sm:$0xff]
    %v7269 = vld [vmem:[#allocation11 + $0xd8c] sm:$0xf]
    %v7270 = vld [vmem:[#allocation11 + $0xd90] sm:$0xff]
    %v7271 = vld [vmem:[#allocation11 + $0xd98] sm:$0xff]
    %v7272 = vld [vmem:[#allocation11 + $0xda0] sm:$0xff]
    %v7273 = vld [vmem:[#allocation11 + $0xda8] sm:$0xf]
    %v7274 = vld [vmem:[#allocation11 + $0xdac] sm:$0xff]
    %v7275 = vld [vmem:[#allocation11 + $0xdb4] sm:$0xff]
    %v7276 = vld [vmem:[#allocation11 + $0xdbc] sm:$0xff]
    %v7277 = vld [vmem:[#allocation11 + $0xdc4] sm:$0xf]
    %v7278 = vld [vmem:[#allocation11 + $0xdc8] sm:$0xff]
    %v7279 = vld [vmem:[#allocation11 + $0xdd0] sm:$0xff]
    %v7280 = vld [vmem:[#allocation11 + $0xdd8] sm:$0xff]
    %v7281 = vld [vmem:[#allocation11 + $0xde0] sm:$0xf]
    %v7282 = vld [vmem:[#allocation11 + $0xde4] sm:$0xff]
    %v7283 = vld [vmem:[#allocation11 + $0xdec] sm:$0xff]
    %v7284 = vld [vmem:[#allocation11 + $0xdf4] sm:$0xff]
    %v7285 = vld [vmem:[#allocation11 + $0xdfc] sm:$0xf]
    %v7286 = vld [vmem:[#allocation11 + $0xe00] sm:$0xff]
    %v7287 = vld [vmem:[#allocation11 + $0xe08] sm:$0xff]
    %v7288 = vld [vmem:[#allocation11 + $0xe10] sm:$0xff]
    %v7289 = vld [vmem:[#allocation11 + $0xe18] sm:$0xf]
    %v7290 = vld [vmem:[#allocation11 + $0xe1c] sm:$0xff]
    %v7291 = vld [vmem:[#allocation11 + $0xe24] sm:$0xff]
    %v7292 = vld [vmem:[#allocation11 + $0xe2c] sm:$0xff]
    %v7293 = vld [vmem:[#allocation11 + $0xe34] sm:$0xf]
    %v7294 = vld [vmem:[#allocation11 + $0xe38] sm:$0xff]
    %v7295 = vld [vmem:[#allocation11 + $0xe40] sm:$0xff]
    %v7296 = vld [vmem:[#allocation11 + $0xe48] sm:$0xff]
    %v7297 = vld [vmem:[#allocation11 + $0xe50] sm:$0xf]
    %v7298 = vld [vmem:[#allocation11 + $0xe54] sm:$0xff]
    %v7299 = vld [vmem:[#allocation11 + $0xe5c] sm:$0xff]
    %v7300 = vld [vmem:[#allocation11 + $0xe64] sm:$0xff]
    %v7301 = vld [vmem:[#allocation11 + $0xe6c] sm:$0xf]
    %v7302 = vld [vmem:[#allocation11 + $0xe70] sm:$0xff]
    %v7303 = vld [vmem:[#allocation11 + $0xe78] sm:$0xff]
    %v7304 = vld [vmem:[#allocation11 + $0xe80] sm:$0xff]
    %v7305 = vld [vmem:[#allocation11 + $0xe88] sm:$0xf]
    %v7306 = vld [vmem:[#allocation11 + $0xe8c] sm:$0xff]
    %v7307 = vld [vmem:[#allocation11 + $0xe94] sm:$0xff]
    %v7308 = vld [vmem:[#allocation11 + $0xe9c] sm:$0xff]
    %v7309 = vld [vmem:[#allocation11 + $0xea4] sm:$0xf]
    %v7310 = vld [vmem:[#allocation11 + $0xea8] sm:$0xff]
    %v7311 = vld [vmem:[#allocation11 + $0xeb0] sm:$0xff]
    %v7312 = vld [vmem:[#allocation11 + $0xeb8] sm:$0xff]
    %v7313 = vld [vmem:[#allocation11 + $0xec0] sm:$0xf]
    %v7314 = vld [vmem:[#allocation11 + $0xec4] sm:$0xff]
    %v7315 = vld [vmem:[#allocation11 + $0xecc] sm:$0xff]
    %v7316 = vld [vmem:[#allocation11 + $0xed4] sm:$0xff]
    %v7317 = vld [vmem:[#allocation11 + $0xedc] sm:$0xf]
    %v7318 = vld [vmem:[#allocation11 + $0xee0] sm:$0xff]
    %v7319 = vld [vmem:[#allocation11 + $0xee8] sm:$0xff]
    %v7320 = vld [vmem:[#allocation11 + $0xef0] sm:$0xff]
    %v7321 = vld [vmem:[#allocation11 + $0xef8] sm:$0xf]
    %v7322 = vld [vmem:[#allocation11 + $0xefc] sm:$0xff]
    %v7323 = vld [vmem:[#allocation11 + $0xf04] sm:$0xff]
    %v7324 = vld [vmem:[#allocation11 + $0xf0c] sm:$0xff]
    %v7325 = vld [vmem:[#allocation11 + $0xf14] sm:$0xf]
    %v7326 = vld [vmem:[#allocation11 + $0xf18] sm:$0xff]
    %v7327 = vld [vmem:[#allocation11 + $0xf20] sm:$0xff]
    %v7328 = vld [vmem:[#allocation11 + $0xf28] sm:$0xff]
    %v7329 = vld [vmem:[#allocation11 + $0xf30] sm:$0xf]
    %v7330 = vld [vmem:[#allocation11 + $0xf34] sm:$0xff]
    %v7331 = vld [vmem:[#allocation11 + $0xf3c] sm:$0xff]
    %v7332 = vld [vmem:[#allocation11 + $0xf44] sm:$0xff]
    %v7333 = vld [vmem:[#allocation11 + $0xf4c] sm:$0xf]
    %v7334 = vld [vmem:[#allocation11 + $0xf50] sm:$0xff]
    %v7335 = vld [vmem:[#allocation11 + $0xf58] sm:$0xff]
    %v7336 = vld [vmem:[#allocation11 + $0xf60] sm:$0xff]
    %v7337 = vld [vmem:[#allocation11 + $0xf68] sm:$0xf]
    %v7338 = vld [vmem:[#allocation11 + $0xf6c] sm:$0xff]
    %v7339 = vld [vmem:[#allocation11 + $0xf74] sm:$0xff]
    %v7340 = vld [vmem:[#allocation11 + $0xf7c] sm:$0xff]
    %v7341 = vld [vmem:[#allocation11 + $0xf84] sm:$0xf]
    %v7342 = vld [vmem:[#allocation11 + $0xf88] sm:$0xff]
    %v7343 = vld [vmem:[#allocation11 + $0xf90] sm:$0xff]
    %v7344 = vld [vmem:[#allocation11 + $0xf98] sm:$0xff]
    %v7345 = vld [vmem:[#allocation11 + $0xfa0] sm:$0xf]
    %v7346 = vld [vmem:[#allocation11 + $0xfa4] sm:$0xff]
    %v7347 = vld [vmem:[#allocation11 + $0xfac] sm:$0xff]
    %v7348 = vld [vmem:[#allocation11 + $0xfb4] sm:$0xff]
    %v7349 = vld [vmem:[#allocation11 + $0xfbc] sm:$0xf]
    %v7350 = vld [vmem:[#allocation11 + $0xfc0] sm:$0xff]
    %v7351 = vld [vmem:[#allocation11 + $0xfc8] sm:$0xff]
    %v7352 = vld [vmem:[#allocation11 + $0xfd0] sm:$0xff]
    %v7353 = vld [vmem:[#allocation11 + $0xfd8] sm:$0xf]
    %v7354 = vld [vmem:[#allocation11 + $0xfdc] sm:$0xff]
    %v7355 = vld [vmem:[#allocation11 + $0xfe4] sm:$0xff]
    %v7356 = vld [vmem:[#allocation11 + $0xfec] sm:$0xff]
    %v7357 = vld [vmem:[#allocation11 + $0xff4] sm:$0xf]
    %v7358 = vld [vmem:[#allocation11 + $0xff8] sm:$0xff]
    %v7359 = vld [vmem:[#allocation11 + $0x1000] sm:$0xff]
    %v7360 = vld [vmem:[#allocation11 + $0x1008] sm:$0xff]
    %v7361 = vld [vmem:[#allocation11 + $0x1010] sm:$0xf]
    %v7362 = vld [vmem:[#allocation11 + $0x1014] sm:$0xff]
    %v7363 = vld [vmem:[#allocation11 + $0x101c] sm:$0xff]
    %v7364 = vld [vmem:[#allocation11 + $0x1024] sm:$0xff]
    %v7365 = vld [vmem:[#allocation11 + $0x102c] sm:$0xf]
    %v7366 = vld [vmem:[#allocation11 + $0x1030] sm:$0xff]
    %v7367 = vld [vmem:[#allocation11 + $0x1038] sm:$0xff]
    %v7368 = vld [vmem:[#allocation11 + $0x1040] sm:$0xff]
    %v7369 = vld [vmem:[#allocation11 + $0x1048] sm:$0xf]
    %v7370 = vld [vmem:[#allocation11 + $0x104c] sm:$0xff]
    %v7371 = vld [vmem:[#allocation11 + $0x1054] sm:$0xff]
    %v7372 = vld [vmem:[#allocation11 + $0x105c] sm:$0xff]
    %v7373 = vld [vmem:[#allocation11 + $0x1064] sm:$0xf]
    %v7374 = vld [vmem:[#allocation11 + $0x1068] sm:$0xff]
    %v7375 = vld [vmem:[#allocation11 + $0x1070] sm:$0xff]
    %v7376 = vld [vmem:[#allocation11 + $0x1078] sm:$0xff]
    %v7377 = vld [vmem:[#allocation11 + $0x1080] sm:$0xf]
    %v7378 = vld [vmem:[#allocation11 + $0x1084] sm:$0xff]
    %v7379 = vld [vmem:[#allocation11 + $0x108c] sm:$0xff]
    %v7380 = vld [vmem:[#allocation11 + $0x1094] sm:$0xff]
    %v7381 = vld [vmem:[#allocation11 + $0x109c] sm:$0xf]
    %v7382 = vld [vmem:[#allocation11 + $0x10a0] sm:$0xff]
    %v7383 = vld [vmem:[#allocation11 + $0x10a8] sm:$0xff]
    %v7384 = vld [vmem:[#allocation11 + $0x10b0] sm:$0xff]
    %v7385 = vld [vmem:[#allocation11 + $0x10b8] sm:$0xf]
    %v7386 = vld [vmem:[#allocation11 + $0x10bc] sm:$0xff]
    %v7387 = vld [vmem:[#allocation11 + $0x10c4] sm:$0xff]
    %v7388 = vld [vmem:[#allocation11 + $0x10cc] sm:$0xff]
    %v7389 = vld [vmem:[#allocation11 + $0x10d4] sm:$0xf]
    %v7390 = vld [vmem:[#allocation11 + $0x10d8] sm:$0xff]
    %v7391 = vld [vmem:[#allocation11 + $0x10e0] sm:$0xff]
    %v7392 = vld [vmem:[#allocation11 + $0x10e8] sm:$0xff]
    %v7393 = vld [vmem:[#allocation11 + $0x10f0] sm:$0xf]
    %v7394 = vld [vmem:[#allocation11 + $0x10f4] sm:$0xff]
    %v7395 = vld [vmem:[#allocation11 + $0x10fc] sm:$0xff]
    %v7396 = vld [vmem:[#allocation11 + $0x1104] sm:$0xff]
    %v7397 = vld [vmem:[#allocation11 + $0x110c] sm:$0xf]
    %v7398 = vld [vmem:[#allocation11 + $0x1110] sm:$0xff]
    %v7399 = vld [vmem:[#allocation11 + $0x1118] sm:$0xff]
    %v7400 = vld [vmem:[#allocation11 + $0x1120] sm:$0xff]
    %v7401 = vld [vmem:[#allocation11 + $0x1128] sm:$0xf]
    %v7402 = vld [vmem:[#allocation11 + $0x112c] sm:$0xff]
    %v7403 = vld [vmem:[#allocation11 + $0x1134] sm:$0xff]
    %v7404 = vld [vmem:[#allocation11 + $0x113c] sm:$0xff]
    %v7405 = vld [vmem:[#allocation11 + $0x1144] sm:$0xf]
    %v7406 = vld [vmem:[#allocation11 + $0x1148] sm:$0xff]
    %v7407 = vld [vmem:[#allocation11 + $0x1150] sm:$0xff]
    %v7408 = vld [vmem:[#allocation11 + $0x1158] sm:$0xff]
    %v7409 = vld [vmem:[#allocation11 + $0x1160] sm:$0xf]
    %v7410 = vld [vmem:[#allocation11 + $0x1164] sm:$0xff]
    %v7411 = vld [vmem:[#allocation11 + $0x116c] sm:$0xff]
    %v7412 = vld [vmem:[#allocation11 + $0x1174] sm:$0xff]
    %v7413 = vld [vmem:[#allocation11 + $0x117c] sm:$0xf]
    %v7414 = vld [vmem:[#allocation13] sm:$0xff]
    %v7416 = vlaneseq
    %v7417 = vshrl.u32 %v7416, 7
    %v7418 = vsub.s32 0, %v7417
    %v7419 = vrot.slane %v7414, %v7418
    %v7420 = vlaneseq
    %v7421 = vshrl.u32 %v7420, 7
    %v7422 = vsub.s32 1, %v7421
    %v7423 = vrot.slane %v7414, %v7422
    %v7424 = vlaneseq
    %v7425 = vshrl.u32 %v7424, 7
    %v7426 = vsub.s32 2, %v7425
    %v7427 = vrot.slane %v7414, %v7426
    %v7428 = vlaneseq
    %v7429 = vshrl.u32 %v7428, 7
    %v7430 = vsub.s32 3, %v7429
    %v7431 = vrot.slane %v7414, %v7430
    %v7432 = vlaneseq
    %v7433 = vshrl.u32 %v7432, 7
    %v7434 = vsub.s32 4, %v7433
    %v7435 = vrot.slane %v7414, %v7434
    %v7436 = vlaneseq
    %v7437 = vshrl.u32 %v7436, 7
    %v7438 = vsub.s32 5, %v7437
    %v7439 = vrot.slane %v7414, %v7438
    %v7440 = vlaneseq
    %v7441 = vshrl.u32 %v7440, 7
    %v7442 = vsub.s32 6, %v7441
    %v7443 = vrot.slane %v7414, %v7442
    %v8091 = vunpack.c.l.b16 %v6774
    %v8092 = vunpack.c.h.b16 %v6774
    %v8093 = vunpack.c.l.b16 %v6775
    %v8094 = vunpack.c.h.b16 %v6775
    %v8095 = vunpack.c.l.b16 %v6776
    %v8096 = vunpack.c.h.b16 %v6776
    %v8097 = vunpack.c.l.b16 %v6777
    %v8098 = vunpack.c.l.b16 %v6778
    %v8099 = vunpack.c.h.b16 %v6778
    %v8100 = vunpack.c.l.b16 %v6779
    %v8101 = vunpack.c.h.b16 %v6779
    %v8102 = vunpack.c.l.b16 %v6780
    %v8103 = vunpack.c.h.b16 %v6780
    %v8104 = vunpack.c.l.b16 %v6781
    %v8105 = vunpack.c.l.b16 %v6782
    %v8106 = vunpack.c.h.b16 %v6782
    %v8107 = vunpack.c.l.b16 %v6783
    %v8108 = vunpack.c.h.b16 %v6783
    %v8109 = vunpack.c.l.b16 %v6784
    %v8110 = vunpack.c.h.b16 %v6784
    %v8111 = vunpack.c.l.b16 %v6785
    %v8112 = vunpack.c.l.b16 %v6786
    %v8113 = vunpack.c.h.b16 %v6786
    %v8114 = vunpack.c.l.b16 %v6787
    %v8115 = vunpack.c.h.b16 %v6787
    %v8116 = vunpack.c.l.b16 %v6788
    %v8117 = vunpack.c.h.b16 %v6788
    %v8118 = vunpack.c.l.b16 %v6789
    %v8119 = vunpack.c.l.b16 %v6790
    %v8120 = vunpack.c.h.b16 %v6790
    %v8121 = vunpack.c.l.b16 %v6791
    %v8122 = vunpack.c.h.b16 %v6791
    %v8123 = vunpack.c.l.b16 %v6792
    %v8124 = vunpack.c.h.b16 %v6792
    %v8125 = vunpack.c.l.b16 %v6793
    %v8126 = vunpack.c.l.b16 %v6794
    %v8127 = vunpack.c.h.b16 %v6794
    %v8128 = vunpack.c.l.b16 %v6795
    %v8129 = vunpack.c.h.b16 %v6795
    %v8130 = vunpack.c.l.b16 %v6796
    %v8131 = vunpack.c.h.b16 %v6796
    %v8132 = vunpack.c.l.b16 %v6797
    %v8133 = vunpack.c.l.b16 %v6798
    %v8134 = vunpack.c.h.b16 %v6798
    %v8135 = vunpack.c.l.b16 %v6799
    %v8136 = vunpack.c.h.b16 %v6799
    %v8137 = vunpack.c.l.b16 %v6800
    %v8138 = vunpack.c.h.b16 %v6800
    %v8139 = vunpack.c.l.b16 %v6801
    %v8140 = vunpack.c.l.b16 %v6802
    %v8141 = vunpack.c.h.b16 %v6802
    %v8142 = vunpack.c.l.b16 %v6803
    %v8143 = vunpack.c.h.b16 %v6803
    %v8144 = vunpack.c.l.b16 %v6804
    %v8145 = vunpack.c.h.b16 %v6804
    %v8146 = vunpack.c.l.b16 %v6805
    %v8147 = vunpack.c.l.b16 %v6806
    %v8148 = vunpack.c.h.b16 %v6806
    %v8149 = vunpack.c.l.b16 %v6807
    %v8150 = vunpack.c.h.b16 %v6807
    %v8151 = vunpack.c.l.b16 %v6808
    %v8152 = vunpack.c.h.b16 %v6808
    %v8153 = vunpack.c.l.b16 %v6809
    %v8154 = vunpack.c.l.b16 %v6810
    %v8155 = vunpack.c.h.b16 %v6810
    %v8156 = vunpack.c.l.b16 %v6811
    %v8157 = vunpack.c.h.b16 %v6811
    %v8158 = vunpack.c.l.b16 %v6812
    %v8159 = vunpack.c.h.b16 %v6812
    %v8160 = vunpack.c.l.b16 %v6813
    %v8161 = vunpack.c.l.b16 %v6814
    %v8162 = vunpack.c.h.b16 %v6814
    %v8163 = vunpack.c.l.b16 %v6815
    %v8164 = vunpack.c.h.b16 %v6815
    %v8165 = vunpack.c.l.b16 %v6816
    %v8166 = vunpack.c.h.b16 %v6816
    %v8167 = vunpack.c.l.b16 %v6817
    %v8168 = vunpack.c.l.b16 %v6818
    %v8169 = vunpack.c.h.b16 %v6818
    %v8170 = vunpack.c.l.b16 %v6819
    %v8171 = vunpack.c.h.b16 %v6819
    %v8172 = vunpack.c.l.b16 %v6820
    %v8173 = vunpack.c.h.b16 %v6820
    %v8174 = vunpack.c.l.b16 %v6821
    %v8175 = vunpack.c.l.b16 %v6822
    %v8176 = vunpack.c.h.b16 %v6822
    %v8177 = vunpack.c.l.b16 %v6823
    %v8178 = vunpack.c.h.b16 %v6823
    %v8179 = vunpack.c.l.b16 %v6824
    %v8180 = vunpack.c.h.b16 %v6824
    %v8181 = vunpack.c.l.b16 %v6825
    %v8182 = vunpack.c.l.b16 %v6826
    %v8183 = vunpack.c.h.b16 %v6826
    %v8184 = vunpack.c.l.b16 %v6827
    %v8185 = vunpack.c.h.b16 %v6827
    %v8186 = vunpack.c.l.b16 %v6828
    %v8187 = vunpack.c.h.b16 %v6828
    %v8188 = vunpack.c.l.b16 %v6829
    %v8189 = vunpack.c.l.b16 %v6830
    %v8190 = vunpack.c.h.b16 %v6830
    %v8191 = vunpack.c.l.b16 %v6831
    %v8192 = vunpack.c.h.b16 %v6831
    %v8193 = vunpack.c.l.b16 %v6832
    %v8194 = vunpack.c.h.b16 %v6832
    %v8195 = vunpack.c.l.b16 %v6833
    %v8196 = vunpack.c.l.b16 %v6834
    %v8197 = vunpack.c.h.b16 %v6834
    %v8198 = vunpack.c.l.b16 %v6835
    %v8199 = vunpack.c.h.b16 %v6835
    %v8200 = vunpack.c.l.b16 %v6836
    %v8201 = vunpack.c.h.b16 %v6836
    %v8202 = vunpack.c.l.b16 %v6837
    %v8203 = vunpack.c.l.b16 %v6838
    %v8204 = vunpack.c.h.b16 %v6838
    %v8205 = vunpack.c.l.b16 %v6839
    %v8206 = vunpack.c.h.b16 %v6839
    %v8207 = vunpack.c.l.b16 %v6840
    %v8208 = vunpack.c.h.b16 %v6840
    %v8209 = vunpack.c.l.b16 %v6841
    %v8210 = vunpack.c.l.b16 %v6842
    %v8211 = vunpack.c.h.b16 %v6842
    %v8212 = vunpack.c.l.b16 %v6843
    %v8213 = vunpack.c.h.b16 %v6843
    %v8214 = vunpack.c.l.b16 %v6844
    %v8215 = vunpack.c.h.b16 %v6844
    %v8216 = vunpack.c.l.b16 %v6845
    %v8217 = vunpack.c.l.b16 %v6846
    %v8218 = vunpack.c.h.b16 %v6846
    %v8219 = vunpack.c.l.b16 %v6847
    %v8220 = vunpack.c.h.b16 %v6847
    %v8221 = vunpack.c.l.b16 %v6848
    %v8222 = vunpack.c.h.b16 %v6848
    %v8223 = vunpack.c.l.b16 %v6849
    %v8224 = vunpack.c.l.b16 %v6850
    %v8225 = vunpack.c.h.b16 %v6850
    %v8226 = vunpack.c.l.b16 %v6851
    %v8227 = vunpack.c.h.b16 %v6851
    %v8228 = vunpack.c.l.b16 %v6852
    %v8229 = vunpack.c.h.b16 %v6852
    %v8230 = vunpack.c.l.b16 %v6853
    %v8231 = vunpack.c.l.b16 %v6854
    %v8232 = vunpack.c.h.b16 %v6854
    %v8233 = vunpack.c.l.b16 %v6855
    %v8234 = vunpack.c.h.b16 %v6855
    %v8235 = vunpack.c.l.b16 %v6856
    %v8236 = vunpack.c.h.b16 %v6856
    %v8237 = vunpack.c.l.b16 %v6857
    %v8238 = vunpack.c.l.b16 %v6858
    %v8239 = vunpack.c.h.b16 %v6858
    %v8240 = vunpack.c.l.b16 %v6859
    %v8241 = vunpack.c.h.b16 %v6859
    %v8242 = vunpack.c.l.b16 %v6860
    %v8243 = vunpack.c.h.b16 %v6860
    %v8244 = vunpack.c.l.b16 %v6861
    %v8245 = vunpack.c.l.b16 %v6862
    %v8246 = vunpack.c.h.b16 %v6862
    %v8247 = vunpack.c.l.b16 %v6863
    %v8248 = vunpack.c.h.b16 %v6863
    %v8249 = vunpack.c.l.b16 %v6864
    %v8250 = vunpack.c.h.b16 %v6864
    %v8251 = vunpack.c.l.b16 %v6865
    %v8252 = vunpack.c.l.b16 %v6866
    %v8253 = vunpack.c.h.b16 %v6866
    %v8254 = vunpack.c.l.b16 %v6867
    %v8255 = vunpack.c.h.b16 %v6867
    %v8256 = vunpack.c.l.b16 %v6868
    %v8257 = vunpack.c.h.b16 %v6868
    %v8258 = vunpack.c.l.b16 %v6869
    %v8259 = vunpack.c.l.b16 %v6870
    %v8260 = vunpack.c.h.b16 %v6870
    %v8261 = vunpack.c.l.b16 %v6871
    %v8262 = vunpack.c.h.b16 %v6871
    %v8263 = vunpack.c.l.b16 %v6872
    %v8264 = vunpack.c.h.b16 %v6872
    %v8265 = vunpack.c.l.b16 %v6873
    %v8266 = vunpack.c.l.b16 %v6874
    %v8267 = vunpack.c.h.b16 %v6874
    %v8268 = vunpack.c.l.b16 %v6875
    %v8269 = vunpack.c.h.b16 %v6875
    %v8270 = vunpack.c.l.b16 %v6876
    %v8271 = vunpack.c.h.b16 %v6876
    %v8272 = vunpack.c.l.b16 %v6877
    %v8273 = vunpack.c.l.b16 %v6878
    %v8274 = vunpack.c.h.b16 %v6878
    %v8275 = vunpack.c.l.b16 %v6879
    %v8276 = vunpack.c.h.b16 %v6879
    %v8277 = vunpack.c.l.b16 %v6880
    %v8278 = vunpack.c.h.b16 %v6880
    %v8279 = vunpack.c.l.b16 %v6881
    %v8280 = vunpack.c.l.b16 %v6882
    %v8281 = vunpack.c.h.b16 %v6882
    %v8282 = vunpack.c.l.b16 %v6883
    %v8283 = vunpack.c.h.b16 %v6883
    %v8284 = vunpack.c.l.b16 %v6884
    %v8285 = vunpack.c.h.b16 %v6884
    %v8286 = vunpack.c.l.b16 %v6885
    %v8287 = vunpack.c.l.b16 %v6886
    %v8288 = vunpack.c.h.b16 %v6886
    %v8289 = vunpack.c.l.b16 %v6887
    %v8290 = vunpack.c.h.b16 %v6887
    %v8291 = vunpack.c.l.b16 %v6888
    %v8292 = vunpack.c.h.b16 %v6888
    %v8293 = vunpack.c.l.b16 %v6889
    %v8294 = vunpack.c.l.b16 %v6890
    %v8295 = vunpack.c.h.b16 %v6890
    %v8296 = vunpack.c.l.b16 %v6891
    %v8297 = vunpack.c.h.b16 %v6891
    %v8298 = vunpack.c.l.b16 %v6892
    %v8299 = vunpack.c.h.b16 %v6892
    %v8300 = vunpack.c.l.b16 %v6893
    %v8301 = vunpack.c.l.b16 %v6894
    %v8302 = vunpack.c.h.b16 %v6894
    %v8303 = vunpack.c.l.b16 %v6895
    %v8304 = vunpack.c.h.b16 %v6895
    %v8305 = vunpack.c.l.b16 %v6896
    %v8306 = vunpack.c.h.b16 %v6896
    %v8307 = vunpack.c.l.b16 %v6897
    %v8308 = vunpack.c.l.b16 %v6898
    %v8309 = vunpack.c.h.b16 %v6898
    %v8310 = vunpack.c.l.b16 %v6899
    %v8311 = vunpack.c.h.b16 %v6899
    %v8312 = vunpack.c.l.b16 %v6900
    %v8313 = vunpack.c.h.b16 %v6900
    %v8314 = vunpack.c.l.b16 %v6901
    %v8315 = vunpack.c.l.b16 %v6902
    %v8316 = vunpack.c.h.b16 %v6902
    %v8317 = vunpack.c.l.b16 %v6903
    %v8318 = vunpack.c.h.b16 %v6903
    %v8319 = vunpack.c.l.b16 %v6904
    %v8320 = vunpack.c.h.b16 %v6904
    %v8321 = vunpack.c.l.b16 %v6905
    %v8322 = vunpack.c.l.b16 %v6906
    %v8323 = vunpack.c.h.b16 %v6906
    %v8324 = vunpack.c.l.b16 %v6907
    %v8325 = vunpack.c.h.b16 %v6907
    %v8326 = vunpack.c.l.b16 %v6908
    %v8327 = vunpack.c.h.b16 %v6908
    %v8328 = vunpack.c.l.b16 %v6909
    %v8329 = vunpack.c.l.b16 %v6910
    %v8330 = vunpack.c.h.b16 %v6910
    %v8331 = vunpack.c.l.b16 %v6911
    %v8332 = vunpack.c.h.b16 %v6911
    %v8333 = vunpack.c.l.b16 %v6912
    %v8334 = vunpack.c.h.b16 %v6912
    %v8335 = vunpack.c.l.b16 %v6913
    %v8336 = vunpack.c.l.b16 %v6914
    %v8337 = vunpack.c.h.b16 %v6914
    %v8338 = vunpack.c.l.b16 %v6915
    %v8339 = vunpack.c.h.b16 %v6915
    %v8340 = vunpack.c.l.b16 %v6916
    %v8341 = vunpack.c.h.b16 %v6916
    %v8342 = vunpack.c.l.b16 %v6917
    %v8343 = vunpack.c.l.b16 %v6918
    %v8344 = vunpack.c.h.b16 %v6918
    %v8345 = vunpack.c.l.b16 %v6919
    %v8346 = vunpack.c.h.b16 %v6919
    %v8347 = vunpack.c.l.b16 %v6920
    %v8348 = vunpack.c.h.b16 %v6920
    %v8349 = vunpack.c.l.b16 %v6921
    %v8350 = vunpack.c.l.b16 %v6922
    %v8351 = vunpack.c.h.b16 %v6922
    %v8352 = vunpack.c.l.b16 %v6923
    %v8353 = vunpack.c.h.b16 %v6923
    %v8354 = vunpack.c.l.b16 %v6924
    %v8355 = vunpack.c.h.b16 %v6924
    %v8356 = vunpack.c.l.b16 %v6925
    %v8357 = vunpack.c.l.b16 %v6926
    %v8358 = vunpack.c.h.b16 %v6926
    %v8359 = vunpack.c.l.b16 %v6927
    %v8360 = vunpack.c.h.b16 %v6927
    %v8361 = vunpack.c.l.b16 %v6928
    %v8362 = vunpack.c.h.b16 %v6928
    %v8363 = vunpack.c.l.b16 %v6929
    %v8364 = vunpack.c.l.b16 %v6930
    %v8365 = vunpack.c.h.b16 %v6930
    %v8366 = vunpack.c.l.b16 %v6931
    %v8367 = vunpack.c.h.b16 %v6931
    %v8368 = vunpack.c.l.b16 %v6932
    %v8369 = vunpack.c.h.b16 %v6932
    %v8370 = vunpack.c.l.b16 %v6933
    %v8371 = vunpack.c.l.b16 %v6934
    %v8372 = vunpack.c.h.b16 %v6934
    %v8373 = vunpack.c.l.b16 %v6935
    %v8374 = vunpack.c.h.b16 %v6935
    %v8375 = vunpack.c.l.b16 %v6936
    %v8376 = vunpack.c.h.b16 %v6936
    %v8377 = vunpack.c.l.b16 %v6937
    %v8378 = vunpack.c.l.b16 %v6938
    %v8379 = vunpack.c.h.b16 %v6938
    %v8380 = vunpack.c.l.b16 %v6939
    %v8381 = vunpack.c.h.b16 %v6939
    %v8382 = vunpack.c.l.b16 %v6940
    %v8383 = vunpack.c.h.b16 %v6940
    %v8384 = vunpack.c.l.b16 %v6941
    %v8385 = vunpack.c.l.b16 %v6942
    %v8386 = vunpack.c.h.b16 %v6942
    %v8387 = vunpack.c.l.b16 %v6943
    %v8388 = vunpack.c.h.b16 %v6943
    %v8389 = vunpack.c.l.b16 %v6944
    %v8390 = vunpack.c.h.b16 %v6944
    %v8391 = vunpack.c.l.b16 %v6945
    %v8392 = vunpack.c.l.b16 %v6946
    %v8393 = vunpack.c.h.b16 %v6946
    %v8394 = vunpack.c.l.b16 %v6947
    %v8395 = vunpack.c.h.b16 %v6947
    %v8396 = vunpack.c.l.b16 %v6948
    %v8397 = vunpack.c.h.b16 %v6948
    %v8398 = vunpack.c.l.b16 %v6949
    %v8399 = vunpack.c.l.b16 %v6950
    %v8400 = vunpack.c.h.b16 %v6950
    %v8401 = vunpack.c.l.b16 %v6951
    %v8402 = vunpack.c.h.b16 %v6951
    %v8403 = vunpack.c.l.b16 %v6952
    %v8404 = vunpack.c.h.b16 %v6952
    %v8405 = vunpack.c.l.b16 %v6953
    %v8406 = vunpack.c.l.b16 %v6954
    %v8407 = vunpack.c.h.b16 %v6954
    %v8408 = vunpack.c.l.b16 %v6955
    %v8409 = vunpack.c.h.b16 %v6955
    %v8410 = vunpack.c.l.b16 %v6956
    %v8411 = vunpack.c.h.b16 %v6956
    %v8412 = vunpack.c.l.b16 %v6957
    %v8413 = vunpack.c.l.b16 %v6958
    %v8414 = vunpack.c.h.b16 %v6958
    %v8415 = vunpack.c.l.b16 %v6959
    %v8416 = vunpack.c.h.b16 %v6959
    %v8417 = vunpack.c.l.b16 %v6960
    %v8418 = vunpack.c.h.b16 %v6960
    %v8419 = vunpack.c.l.b16 %v6961
    %v8420 = vunpack.c.l.b16 %v6962
    %v8421 = vunpack.c.h.b16 %v6962
    %v8422 = vunpack.c.l.b16 %v6963
    %v8423 = vunpack.c.h.b16 %v6963
    %v8424 = vunpack.c.l.b16 %v6964
    %v8425 = vunpack.c.h.b16 %v6964
    %v8426 = vunpack.c.l.b16 %v6965
    %v8427 = vunpack.c.l.b16 %v6966
    %v8428 = vunpack.c.h.b16 %v6966
    %v8429 = vunpack.c.l.b16 %v6967
    %v8430 = vunpack.c.h.b16 %v6967
    %v8431 = vunpack.c.l.b16 %v6968
    %v8432 = vunpack.c.h.b16 %v6968
    %v8433 = vunpack.c.l.b16 %v6969
    %v8434 = vunpack.c.l.b16 %v6970
    %v8435 = vunpack.c.h.b16 %v6970
    %v8436 = vunpack.c.l.b16 %v6971
    %v8437 = vunpack.c.h.b16 %v6971
    %v8438 = vunpack.c.l.b16 %v6972
    %v8439 = vunpack.c.h.b16 %v6972
    %v8440 = vunpack.c.l.b16 %v6973
    %v8441 = vunpack.c.l.b16 %v6974
    %v8442 = vunpack.c.h.b16 %v6974
    %v8443 = vunpack.c.l.b16 %v6975
    %v8444 = vunpack.c.h.b16 %v6975
    %v8445 = vunpack.c.l.b16 %v6976
    %v8446 = vunpack.c.h.b16 %v6976
    %v8447 = vunpack.c.l.b16 %v6977
    %v8448 = vunpack.c.l.b16 %v6978
    %v8449 = vunpack.c.h.b16 %v6978
    %v8450 = vunpack.c.l.b16 %v6979
    %v8451 = vunpack.c.h.b16 %v6979
    %v8452 = vunpack.c.l.b16 %v6980
    %v8453 = vunpack.c.h.b16 %v6980
    %v8454 = vunpack.c.l.b16 %v6981
    %v8455 = vunpack.c.l.b16 %v6982
    %v8456 = vunpack.c.h.b16 %v6982
    %v8457 = vunpack.c.l.b16 %v6983
    %v8458 = vunpack.c.h.b16 %v6983
    %v8459 = vunpack.c.l.b16 %v6984
    %v8460 = vunpack.c.h.b16 %v6984
    %v8461 = vunpack.c.l.b16 %v6985
    %v8462 = vunpack.c.l.b16 %v6986
    %v8463 = vunpack.c.h.b16 %v6986
    %v8464 = vunpack.c.l.b16 %v6987
    %v8465 = vunpack.c.h.b16 %v6987
    %v8466 = vunpack.c.l.b16 %v6988
    %v8467 = vunpack.c.h.b16 %v6988
    %v8468 = vunpack.c.l.b16 %v6989
    %v8469 = vunpack.c.l.b16 %v6990
    %v8470 = vunpack.c.h.b16 %v6990
    %v8471 = vunpack.c.l.b16 %v6991
    %v8472 = vunpack.c.h.b16 %v6991
    %v8473 = vunpack.c.l.b16 %v6992
    %v8474 = vunpack.c.h.b16 %v6992
    %v8475 = vunpack.c.l.b16 %v6993
    %v8476 = vunpack.c.l.b16 %v6994
    %v8477 = vunpack.c.h.b16 %v6994
    %v8478 = vunpack.c.l.b16 %v6995
    %v8479 = vunpack.c.h.b16 %v6995
    %v8480 = vunpack.c.l.b16 %v6996
    %v8481 = vunpack.c.h.b16 %v6996
    %v8482 = vunpack.c.l.b16 %v6997
    %v8483 = vunpack.c.l.b16 %v6998
    %v8484 = vunpack.c.h.b16 %v6998
    %v8485 = vunpack.c.l.b16 %v6999
    %v8486 = vunpack.c.h.b16 %v6999
    %v8487 = vunpack.c.l.b16 %v7000
    %v8488 = vunpack.c.h.b16 %v7000
    %v8489 = vunpack.c.l.b16 %v7001
    %v8490 = vunpack.c.l.b16 %v7002
    %v8491 = vunpack.c.h.b16 %v7002
    %v8492 = vunpack.c.l.b16 %v7003
    %v8493 = vunpack.c.h.b16 %v7003
    %v8494 = vunpack.c.l.b16 %v7004
    %v8495 = vunpack.c.h.b16 %v7004
    %v8496 = vunpack.c.l.b16 %v7005
    %v8497 = vunpack.c.l.b16 %v7006
    %v8498 = vunpack.c.h.b16 %v7006
    %v8499 = vunpack.c.l.b16 %v7007
    %v8500 = vunpack.c.h.b16 %v7007
    %v8501 = vunpack.c.l.b16 %v7008
    %v8502 = vunpack.c.h.b16 %v7008
    %v8503 = vunpack.c.l.b16 %v7009
    %v8504 = vunpack.c.l.b16 %v7010
    %v8505 = vunpack.c.h.b16 %v7010
    %v8506 = vunpack.c.l.b16 %v7011
    %v8507 = vunpack.c.h.b16 %v7011
    %v8508 = vunpack.c.l.b16 %v7012
    %v8509 = vunpack.c.h.b16 %v7012
    %v8510 = vunpack.c.l.b16 %v7013
    %v8511 = vunpack.c.l.b16 %v7014
    %v8512 = vunpack.c.h.b16 %v7014
    %v8513 = vunpack.c.l.b16 %v7015
    %v8514 = vunpack.c.h.b16 %v7015
    %v8515 = vunpack.c.l.b16 %v7016
    %v8516 = vunpack.c.h.b16 %v7016
    %v8517 = vunpack.c.l.b16 %v7017
    %v8518 = vunpack.c.l.b16 %v7018
    %v8519 = vunpack.c.h.b16 %v7018
    %v8520 = vunpack.c.l.b16 %v7019
    %v8521 = vunpack.c.h.b16 %v7019
    %v8522 = vunpack.c.l.b16 %v7020
    %v8523 = vunpack.c.h.b16 %v7020
    %v8524 = vunpack.c.l.b16 %v7021
    %v8525 = vunpack.c.l.b16 %v7022
    %v8526 = vunpack.c.h.b16 %v7022
    %v8527 = vunpack.c.l.b16 %v7023
    %v8528 = vunpack.c.h.b16 %v7023
    %v8529 = vunpack.c.l.b16 %v7024
    %v8530 = vunpack.c.h.b16 %v7024
    %v8531 = vunpack.c.l.b16 %v7025
    %v8532 = vunpack.c.l.b16 %v7026
    %v8533 = vunpack.c.h.b16 %v7026
    %v8534 = vunpack.c.l.b16 %v7027
    %v8535 = vunpack.c.h.b16 %v7027
    %v8536 = vunpack.c.l.b16 %v7028
    %v8537 = vunpack.c.h.b16 %v7028
    %v8538 = vunpack.c.l.b16 %v7029
    %v8539 = vunpack.c.l.b16 %v7030
    %v8540 = vunpack.c.h.b16 %v7030
    %v8541 = vunpack.c.l.b16 %v7031
    %v8542 = vunpack.c.h.b16 %v7031
    %v8543 = vunpack.c.l.b16 %v7032
    %v8544 = vunpack.c.h.b16 %v7032
    %v8545 = vunpack.c.l.b16 %v7033
    %v8546 = vunpack.c.l.b16 %v7034
    %v8547 = vunpack.c.h.b16 %v7034
    %v8548 = vunpack.c.l.b16 %v7035
    %v8549 = vunpack.c.h.b16 %v7035
    %v8550 = vunpack.c.l.b16 %v7036
    %v8551 = vunpack.c.h.b16 %v7036
    %v8552 = vunpack.c.l.b16 %v7037
    %v8553 = vunpack.c.l.b16 %v7038
    %v8554 = vunpack.c.h.b16 %v7038
    %v8555 = vunpack.c.l.b16 %v7039
    %v8556 = vunpack.c.h.b16 %v7039
    %v8557 = vunpack.c.l.b16 %v7040
    %v8558 = vunpack.c.h.b16 %v7040
    %v8559 = vunpack.c.l.b16 %v7041
    %v8560 = vunpack.c.l.b16 %v7042
    %v8561 = vunpack.c.h.b16 %v7042
    %v8562 = vunpack.c.l.b16 %v7043
    %v8563 = vunpack.c.h.b16 %v7043
    %v8564 = vunpack.c.l.b16 %v7044
    %v8565 = vunpack.c.h.b16 %v7044
    %v8566 = vunpack.c.l.b16 %v7045
    %v8567 = vunpack.c.l.b16 %v7046
    %v8568 = vunpack.c.h.b16 %v7046
    %v8569 = vunpack.c.l.b16 %v7047
    %v8570 = vunpack.c.h.b16 %v7047
    %v8571 = vunpack.c.l.b16 %v7048
    %v8572 = vunpack.c.h.b16 %v7048
    %v8573 = vunpack.c.l.b16 %v7049
    %v8574 = vunpack.c.l.b16 %v7050
    %v8575 = vunpack.c.h.b16 %v7050
    %v8576 = vunpack.c.l.b16 %v7051
    %v8577 = vunpack.c.h.b16 %v7051
    %v8578 = vunpack.c.l.b16 %v7052
    %v8579 = vunpack.c.h.b16 %v7052
    %v8580 = vunpack.c.l.b16 %v7053
    %v8581 = vunpack.c.l.b16 %v7054
    %v8582 = vunpack.c.h.b16 %v7054
    %v8583 = vunpack.c.l.b16 %v7055
    %v8584 = vunpack.c.h.b16 %v7055
    %v8585 = vunpack.c.l.b16 %v7056
    %v8586 = vunpack.c.h.b16 %v7056
    %v8587 = vunpack.c.l.b16 %v7057
    %v8588 = vunpack.c.l.b16 %v7058
    %v8589 = vunpack.c.h.b16 %v7058
    %v8590 = vunpack.c.l.b16 %v7059
    %v8591 = vunpack.c.h.b16 %v7059
    %v8592 = vunpack.c.l.b16 %v7060
    %v8593 = vunpack.c.h.b16 %v7060
    %v8594 = vunpack.c.l.b16 %v7061
    %v8595 = vunpack.c.l.b16 %v7062
    %v8596 = vunpack.c.h.b16 %v7062
    %v8597 = vunpack.c.l.b16 %v7063
    %v8598 = vunpack.c.h.b16 %v7063
    %v8599 = vunpack.c.l.b16 %v7064
    %v8600 = vunpack.c.h.b16 %v7064
    %v8601 = vunpack.c.l.b16 %v7065
    %v8602 = vunpack.c.l.b16 %v7066
    %v8603 = vunpack.c.h.b16 %v7066
    %v8604 = vunpack.c.l.b16 %v7067
    %v8605 = vunpack.c.h.b16 %v7067
    %v8606 = vunpack.c.l.b16 %v7068
    %v8607 = vunpack.c.h.b16 %v7068
    %v8608 = vunpack.c.l.b16 %v7069
    %v8609 = vunpack.c.l.b16 %v7070
    %v8610 = vunpack.c.h.b16 %v7070
    %v8611 = vunpack.c.l.b16 %v7071
    %v8612 = vunpack.c.h.b16 %v7071
    %v8613 = vunpack.c.l.b16 %v7072
    %v8614 = vunpack.c.h.b16 %v7072
    %v8615 = vunpack.c.l.b16 %v7073
    %v8616 = vunpack.c.l.b16 %v7074
    %v8617 = vunpack.c.h.b16 %v7074
    %v8618 = vunpack.c.l.b16 %v7075
    %v8619 = vunpack.c.h.b16 %v7075
    %v8620 = vunpack.c.l.b16 %v7076
    %v8621 = vunpack.c.h.b16 %v7076
    %v8622 = vunpack.c.l.b16 %v7077
    %v8623 = vunpack.c.l.b16 %v7078
    %v8624 = vunpack.c.h.b16 %v7078
    %v8625 = vunpack.c.l.b16 %v7079
    %v8626 = vunpack.c.h.b16 %v7079
    %v8627 = vunpack.c.l.b16 %v7080
    %v8628 = vunpack.c.h.b16 %v7080
    %v8629 = vunpack.c.l.b16 %v7081
    %v8630 = vunpack.c.l.b16 %v7082
    %v8631 = vunpack.c.h.b16 %v7082
    %v8632 = vunpack.c.l.b16 %v7083
    %v8633 = vunpack.c.h.b16 %v7083
    %v8634 = vunpack.c.l.b16 %v7084
    %v8635 = vunpack.c.h.b16 %v7084
    %v8636 = vunpack.c.l.b16 %v7085
    %v8637 = vunpack.c.l.b16 %v7086
    %v8638 = vunpack.c.h.b16 %v7086
    %v8639 = vunpack.c.l.b16 %v7087
    %v8640 = vunpack.c.h.b16 %v7087
    %v8641 = vunpack.c.l.b16 %v7088
    %v8642 = vunpack.c.h.b16 %v7088
    %v8643 = vunpack.c.l.b16 %v7089
    %v8644 = vunpack.c.l.b16 %v7090
    %v8645 = vunpack.c.h.b16 %v7090
    %v8646 = vunpack.c.l.b16 %v7091
    %v8647 = vunpack.c.h.b16 %v7091
    %v8648 = vunpack.c.l.b16 %v7092
    %v8649 = vunpack.c.h.b16 %v7092
    %v8650 = vunpack.c.l.b16 %v7093
    %v8651 = vunpack.c.l.b16 %v7094
    %v8652 = vunpack.c.h.b16 %v7094
    %v8653 = vunpack.c.l.b16 %v7095
    %v8654 = vunpack.c.h.b16 %v7095
    %v8655 = vunpack.c.l.b16 %v7096
    %v8656 = vunpack.c.h.b16 %v7096
    %v8657 = vunpack.c.l.b16 %v7097
    %v8658 = vunpack.c.l.b16 %v7098
    %v8659 = vunpack.c.h.b16 %v7098
    %v8660 = vunpack.c.l.b16 %v7099
    %v8661 = vunpack.c.h.b16 %v7099
    %v8662 = vunpack.c.l.b16 %v7100
    %v8663 = vunpack.c.h.b16 %v7100
    %v8664 = vunpack.c.l.b16 %v7101
    %v8665 = vunpack.c.l.b16 %v7102
    %v8666 = vunpack.c.h.b16 %v7102
    %v8667 = vunpack.c.l.b16 %v7103
    %v8668 = vunpack.c.h.b16 %v7103
    %v8669 = vunpack.c.l.b16 %v7104
    %v8670 = vunpack.c.h.b16 %v7104
    %v8671 = vunpack.c.l.b16 %v7105
    %v8672 = vunpack.c.l.b16 %v7106
    %v8673 = vunpack.c.h.b16 %v7106
    %v8674 = vunpack.c.l.b16 %v7107
    %v8675 = vunpack.c.h.b16 %v7107
    %v8676 = vunpack.c.l.b16 %v7108
    %v8677 = vunpack.c.h.b16 %v7108
    %v8678 = vunpack.c.l.b16 %v7109
    %v8679 = vunpack.c.l.b16 %v7110
    %v8680 = vunpack.c.h.b16 %v7110
    %v8681 = vunpack.c.l.b16 %v7111
    %v8682 = vunpack.c.h.b16 %v7111
    %v8683 = vunpack.c.l.b16 %v7112
    %v8684 = vunpack.c.h.b16 %v7112
    %v8685 = vunpack.c.l.b16 %v7113
    %v8686 = vunpack.c.l.b16 %v7114
    %v8687 = vunpack.c.h.b16 %v7114
    %v8688 = vunpack.c.l.b16 %v7115
    %v8689 = vunpack.c.h.b16 %v7115
    %v8690 = vunpack.c.l.b16 %v7116
    %v8691 = vunpack.c.h.b16 %v7116
    %v8692 = vunpack.c.l.b16 %v7117
    %v8693 = vunpack.c.l.b16 %v7118
    %v8694 = vunpack.c.h.b16 %v7118
    %v8695 = vunpack.c.l.b16 %v7119
    %v8696 = vunpack.c.h.b16 %v7119
    %v8697 = vunpack.c.l.b16 %v7120
    %v8698 = vunpack.c.h.b16 %v7120
    %v8699 = vunpack.c.l.b16 %v7121
    %v8700 = vunpack.c.l.b16 %v7122
    %v8701 = vunpack.c.h.b16 %v7122
    %v8702 = vunpack.c.l.b16 %v7123
    %v8703 = vunpack.c.h.b16 %v7123
    %v8704 = vunpack.c.l.b16 %v7124
    %v8705 = vunpack.c.h.b16 %v7124
    %v8706 = vunpack.c.l.b16 %v7125
    %v8707 = vunpack.c.l.b16 %v7126
    %v8708 = vunpack.c.h.b16 %v7126
    %v8709 = vunpack.c.l.b16 %v7127
    %v8710 = vunpack.c.h.b16 %v7127
    %v8711 = vunpack.c.l.b16 %v7128
    %v8712 = vunpack.c.h.b16 %v7128
    %v8713 = vunpack.c.l.b16 %v7129
    %v8714 = vunpack.c.l.b16 %v7130
    %v8715 = vunpack.c.h.b16 %v7130
    %v8716 = vunpack.c.l.b16 %v7131
    %v8717 = vunpack.c.h.b16 %v7131
    %v8718 = vunpack.c.l.b16 %v7132
    %v8719 = vunpack.c.h.b16 %v7132
    %v8720 = vunpack.c.l.b16 %v7133
    %v8721 = vunpack.c.l.b16 %v7134
    %v8722 = vunpack.c.h.b16 %v7134
    %v8723 = vunpack.c.l.b16 %v7135
    %v8724 = vunpack.c.h.b16 %v7135
    %v8725 = vunpack.c.l.b16 %v7136
    %v8726 = vunpack.c.h.b16 %v7136
    %v8727 = vunpack.c.l.b16 %v7137
    %v8728 = vunpack.c.l.b16 %v7138
    %v8729 = vunpack.c.h.b16 %v7138
    %v8730 = vunpack.c.l.b16 %v7139
    %v8731 = vunpack.c.h.b16 %v7139
    %v8732 = vunpack.c.l.b16 %v7140
    %v8733 = vunpack.c.h.b16 %v7140
    %v8734 = vunpack.c.l.b16 %v7141
    %v8735 = vunpack.c.l.b16 %v7142
    %v8736 = vunpack.c.h.b16 %v7142
    %v8737 = vunpack.c.l.b16 %v7143
    %v8738 = vunpack.c.h.b16 %v7143
    %v8739 = vunpack.c.l.b16 %v7144
    %v8740 = vunpack.c.h.b16 %v7144
    %v8741 = vunpack.c.l.b16 %v7145
    %v8742 = vunpack.c.l.b16 %v7146
    %v8743 = vunpack.c.h.b16 %v7146
    %v8744 = vunpack.c.l.b16 %v7147
    %v8745 = vunpack.c.h.b16 %v7147
    %v8746 = vunpack.c.l.b16 %v7148
    %v8747 = vunpack.c.h.b16 %v7148
    %v8748 = vunpack.c.l.b16 %v7149
    %v8749 = vunpack.c.l.b16 %v7150
    %v8750 = vunpack.c.h.b16 %v7150
    %v8751 = vunpack.c.l.b16 %v7151
    %v8752 = vunpack.c.h.b16 %v7151
    %v8753 = vunpack.c.l.b16 %v7152
    %v8754 = vunpack.c.h.b16 %v7152
    %v8755 = vunpack.c.l.b16 %v7153
    %v8756 = vunpack.c.l.b16 %v7154
    %v8757 = vunpack.c.h.b16 %v7154
    %v8758 = vunpack.c.l.b16 %v7155
    %v8759 = vunpack.c.h.b16 %v7155
    %v8760 = vunpack.c.l.b16 %v7156
    %v8761 = vunpack.c.h.b16 %v7156
    %v8762 = vunpack.c.l.b16 %v7157
    %v8763 = vunpack.c.l.b16 %v7158
    %v8764 = vunpack.c.h.b16 %v7158
    %v8765 = vunpack.c.l.b16 %v7159
    %v8766 = vunpack.c.h.b16 %v7159
    %v8767 = vunpack.c.l.b16 %v7160
    %v8768 = vunpack.c.h.b16 %v7160
    %v8769 = vunpack.c.l.b16 %v7161
    %v8770 = vunpack.c.l.b16 %v7162
    %v8771 = vunpack.c.h.b16 %v7162
    %v8772 = vunpack.c.l.b16 %v7163
    %v8773 = vunpack.c.h.b16 %v7163
    %v8774 = vunpack.c.l.b16 %v7164
    %v8775 = vunpack.c.h.b16 %v7164
    %v8776 = vunpack.c.l.b16 %v7165
    %v8777 = vunpack.c.l.b16 %v7166
    %v8778 = vunpack.c.h.b16 %v7166
    %v8779 = vunpack.c.l.b16 %v7167
    %v8780 = vunpack.c.h.b16 %v7167
    %v8781 = vunpack.c.l.b16 %v7168
    %v8782 = vunpack.c.h.b16 %v7168
    %v8783 = vunpack.c.l.b16 %v7169
    %v8784 = vunpack.c.l.b16 %v7170
    %v8785 = vunpack.c.h.b16 %v7170
    %v8786 = vunpack.c.l.b16 %v7171
    %v8787 = vunpack.c.h.b16 %v7171
    %v8788 = vunpack.c.l.b16 %v7172
    %v8789 = vunpack.c.h.b16 %v7172
    %v8790 = vunpack.c.l.b16 %v7173
    %v8791 = vunpack.c.l.b16 %v7174
    %v8792 = vunpack.c.h.b16 %v7174
    %v8793 = vunpack.c.l.b16 %v7175
    %v8794 = vunpack.c.h.b16 %v7175
    %v8795 = vunpack.c.l.b16 %v7176
    %v8796 = vunpack.c.h.b16 %v7176
    %v8797 = vunpack.c.l.b16 %v7177
    %v8798 = vunpack.c.l.b16 %v7178
    %v8799 = vunpack.c.h.b16 %v7178
    %v8800 = vunpack.c.l.b16 %v7179
    %v8801 = vunpack.c.h.b16 %v7179
    %v8802 = vunpack.c.l.b16 %v7180
    %v8803 = vunpack.c.h.b16 %v7180
    %v8804 = vunpack.c.l.b16 %v7181
    %v8805 = vunpack.c.l.b16 %v7182
    %v8806 = vunpack.c.h.b16 %v7182
    %v8807 = vunpack.c.l.b16 %v7183
    %v8808 = vunpack.c.h.b16 %v7183
    %v8809 = vunpack.c.l.b16 %v7184
    %v8810 = vunpack.c.h.b16 %v7184
    %v8811 = vunpack.c.l.b16 %v7185
    %v8812 = vunpack.c.l.b16 %v7186
    %v8813 = vunpack.c.h.b16 %v7186
    %v8814 = vunpack.c.l.b16 %v7187
    %v8815 = vunpack.c.h.b16 %v7187
    %v8816 = vunpack.c.l.b16 %v7188
    %v8817 = vunpack.c.h.b16 %v7188
    %v8818 = vunpack.c.l.b16 %v7189
    %v8819 = vunpack.c.l.b16 %v7190
    %v8820 = vunpack.c.h.b16 %v7190
    %v8821 = vunpack.c.l.b16 %v7191
    %v8822 = vunpack.c.h.b16 %v7191
    %v8823 = vunpack.c.l.b16 %v7192
    %v8824 = vunpack.c.h.b16 %v7192
    %v8825 = vunpack.c.l.b16 %v7193
    %v8826 = vunpack.c.l.b16 %v7194
    %v8827 = vunpack.c.h.b16 %v7194
    %v8828 = vunpack.c.l.b16 %v7195
    %v8829 = vunpack.c.h.b16 %v7195
    %v8830 = vunpack.c.l.b16 %v7196
    %v8831 = vunpack.c.h.b16 %v7196
    %v8832 = vunpack.c.l.b16 %v7197
    %v8833 = vunpack.c.l.b16 %v7198
    %v8834 = vunpack.c.h.b16 %v7198
    %v8835 = vunpack.c.l.b16 %v7199
    %v8836 = vunpack.c.h.b16 %v7199
    %v8837 = vunpack.c.l.b16 %v7200
    %v8838 = vunpack.c.h.b16 %v7200
    %v8839 = vunpack.c.l.b16 %v7201
    %v8840 = vunpack.c.l.b16 %v7202
    %v8841 = vunpack.c.h.b16 %v7202
    %v8842 = vunpack.c.l.b16 %v7203
    %v8843 = vunpack.c.h.b16 %v7203
    %v8844 = vunpack.c.l.b16 %v7204
    %v8845 = vunpack.c.h.b16 %v7204
    %v8846 = vunpack.c.l.b16 %v7205
    %v8847 = vunpack.c.l.b16 %v7206
    %v8848 = vunpack.c.h.b16 %v7206
    %v8849 = vunpack.c.l.b16 %v7207
    %v8850 = vunpack.c.h.b16 %v7207
    %v8851 = vunpack.c.l.b16 %v7208
    %v8852 = vunpack.c.h.b16 %v7208
    %v8853 = vunpack.c.l.b16 %v7209
    %v8854 = vunpack.c.l.b16 %v7210
    %v8855 = vunpack.c.h.b16 %v7210
    %v8856 = vunpack.c.l.b16 %v7211
    %v8857 = vunpack.c.h.b16 %v7211
    %v8858 = vunpack.c.l.b16 %v7212
    %v8859 = vunpack.c.h.b16 %v7212
    %v8860 = vunpack.c.l.b16 %v7213
    %v8861 = vunpack.c.l.b16 %v7214
    %v8862 = vunpack.c.h.b16 %v7214
    %v8863 = vunpack.c.l.b16 %v7215
    %v8864 = vunpack.c.h.b16 %v7215
    %v8865 = vunpack.c.l.b16 %v7216
    %v8866 = vunpack.c.h.b16 %v7216
    %v8867 = vunpack.c.l.b16 %v7217
    %v8868 = vunpack.c.l.b16 %v7218
    %v8869 = vunpack.c.h.b16 %v7218
    %v8870 = vunpack.c.l.b16 %v7219
    %v8871 = vunpack.c.h.b16 %v7219
    %v8872 = vunpack.c.l.b16 %v7220
    %v8873 = vunpack.c.h.b16 %v7220
    %v8874 = vunpack.c.l.b16 %v7221
    %v8875 = vunpack.c.l.b16 %v7222
    %v8876 = vunpack.c.h.b16 %v7222
    %v8877 = vunpack.c.l.b16 %v7223
    %v8878 = vunpack.c.h.b16 %v7223
    %v8879 = vunpack.c.l.b16 %v7224
    %v8880 = vunpack.c.h.b16 %v7224
    %v8881 = vunpack.c.l.b16 %v7225
    %v8882 = vunpack.c.l.b16 %v7226
    %v8883 = vunpack.c.h.b16 %v7226
    %v8884 = vunpack.c.l.b16 %v7227
    %v8885 = vunpack.c.h.b16 %v7227
    %v8886 = vunpack.c.l.b16 %v7228
    %v8887 = vunpack.c.h.b16 %v7228
    %v8888 = vunpack.c.l.b16 %v7229
    %v8889 = vunpack.c.l.b16 %v7230
    %v8890 = vunpack.c.h.b16 %v7230
    %v8891 = vunpack.c.l.b16 %v7231
    %v8892 = vunpack.c.h.b16 %v7231
    %v8893 = vunpack.c.l.b16 %v7232
    %v8894 = vunpack.c.h.b16 %v7232
    %v8895 = vunpack.c.l.b16 %v7233
    %v8896 = vunpack.c.l.b16 %v7234
    %v8897 = vunpack.c.h.b16 %v7234
    %v8898 = vunpack.c.l.b16 %v7235
    %v8899 = vunpack.c.h.b16 %v7235
    %v8900 = vunpack.c.l.b16 %v7236
    %v8901 = vunpack.c.h.b16 %v7236
    %v8902 = vunpack.c.l.b16 %v7237
    %v8903 = vunpack.c.l.b16 %v7238
    %v8904 = vunpack.c.h.b16 %v7238
    %v8905 = vunpack.c.l.b16 %v7239
    %v8906 = vunpack.c.h.b16 %v7239
    %v8907 = vunpack.c.l.b16 %v7240
    %v8908 = vunpack.c.h.b16 %v7240
    %v8909 = vunpack.c.l.b16 %v7241
    %v8910 = vunpack.c.l.b16 %v7242
    %v8911 = vunpack.c.h.b16 %v7242
    %v8912 = vunpack.c.l.b16 %v7243
    %v8913 = vunpack.c.h.b16 %v7243
    %v8914 = vunpack.c.l.b16 %v7244
    %v8915 = vunpack.c.h.b16 %v7244
    %v8916 = vunpack.c.l.b16 %v7245
    %v8917 = vunpack.c.l.b16 %v7246
    %v8918 = vunpack.c.h.b16 %v7246
    %v8919 = vunpack.c.l.b16 %v7247
    %v8920 = vunpack.c.h.b16 %v7247
    %v8921 = vunpack.c.l.b16 %v7248
    %v8922 = vunpack.c.h.b16 %v7248
    %v8923 = vunpack.c.l.b16 %v7249
    %v8924 = vunpack.c.l.b16 %v7250
    %v8925 = vunpack.c.h.b16 %v7250
    %v8926 = vunpack.c.l.b16 %v7251
    %v8927 = vunpack.c.h.b16 %v7251
    %v8928 = vunpack.c.l.b16 %v7252
    %v8929 = vunpack.c.h.b16 %v7252
    %v8930 = vunpack.c.l.b16 %v7253
    %v8931 = vunpack.c.l.b16 %v7254
    %v8932 = vunpack.c.h.b16 %v7254
    %v8933 = vunpack.c.l.b16 %v7255
    %v8934 = vunpack.c.h.b16 %v7255
    %v8935 = vunpack.c.l.b16 %v7256
    %v8936 = vunpack.c.h.b16 %v7256
    %v8937 = vunpack.c.l.b16 %v7257
    %v8938 = vunpack.c.l.b16 %v7258
    %v8939 = vunpack.c.h.b16 %v7258
    %v8940 = vunpack.c.l.b16 %v7259
    %v8941 = vunpack.c.h.b16 %v7259
    %v8942 = vunpack.c.l.b16 %v7260
    %v8943 = vunpack.c.h.b16 %v7260
    %v8944 = vunpack.c.l.b16 %v7261
    %v8945 = vunpack.c.l.b16 %v7262
    %v8946 = vunpack.c.h.b16 %v7262
    %v8947 = vunpack.c.l.b16 %v7263
    %v8948 = vunpack.c.h.b16 %v7263
    %v8949 = vunpack.c.l.b16 %v7264
    %v8950 = vunpack.c.h.b16 %v7264
    %v8951 = vunpack.c.l.b16 %v7265
    %v8952 = vunpack.c.l.b16 %v7266
    %v8953 = vunpack.c.h.b16 %v7266
    %v8954 = vunpack.c.l.b16 %v7267
    %v8955 = vunpack.c.h.b16 %v7267
    %v8956 = vunpack.c.l.b16 %v7268
    %v8957 = vunpack.c.h.b16 %v7268
    %v8958 = vunpack.c.l.b16 %v7269
    %v8959 = vunpack.c.l.b16 %v7270
    %v8960 = vunpack.c.h.b16 %v7270
    %v8961 = vunpack.c.l.b16 %v7271
    %v8962 = vunpack.c.h.b16 %v7271
    %v8963 = vunpack.c.l.b16 %v7272
    %v8964 = vunpack.c.h.b16 %v7272
    %v8965 = vunpack.c.l.b16 %v7273
    %v8966 = vunpack.c.l.b16 %v7274
    %v8967 = vunpack.c.h.b16 %v7274
    %v8968 = vunpack.c.l.b16 %v7275
    %v8969 = vunpack.c.h.b16 %v7275
    %v8970 = vunpack.c.l.b16 %v7276
    %v8971 = vunpack.c.h.b16 %v7276
    %v8972 = vunpack.c.l.b16 %v7277
    %v8973 = vunpack.c.l.b16 %v7278
    %v8974 = vunpack.c.h.b16 %v7278
    %v8975 = vunpack.c.l.b16 %v7279
    %v8976 = vunpack.c.h.b16 %v7279
    %v8977 = vunpack.c.l.b16 %v7280
    %v8978 = vunpack.c.h.b16 %v7280
    %v8979 = vunpack.c.l.b16 %v7281
    %v8980 = vunpack.c.l.b16 %v7282
    %v8981 = vunpack.c.h.b16 %v7282
    %v8982 = vunpack.c.l.b16 %v7283
    %v8983 = vunpack.c.h.b16 %v7283
    %v8984 = vunpack.c.l.b16 %v7284
    %v8985 = vunpack.c.h.b16 %v7284
    %v8986 = vunpack.c.l.b16 %v7285
    %v8987 = vunpack.c.l.b16 %v7286
    %v8988 = vunpack.c.h.b16 %v7286
    %v8989 = vunpack.c.l.b16 %v7287
    %v8990 = vunpack.c.h.b16 %v7287
    %v8991 = vunpack.c.l.b16 %v7288
    %v8992 = vunpack.c.h.b16 %v7288
    %v8993 = vunpack.c.l.b16 %v7289
    %v8994 = vunpack.c.l.b16 %v7290
    %v8995 = vunpack.c.h.b16 %v7290
    %v8996 = vunpack.c.l.b16 %v7291
    %v8997 = vunpack.c.h.b16 %v7291
    %v8998 = vunpack.c.l.b16 %v7292
    %v8999 = vunpack.c.h.b16 %v7292
    %v9000 = vunpack.c.l.b16 %v7293
    %v9001 = vunpack.c.l.b16 %v7294
    %v9002 = vunpack.c.h.b16 %v7294
    %v9003 = vunpack.c.l.b16 %v7295
    %v9004 = vunpack.c.h.b16 %v7295
    %v9005 = vunpack.c.l.b16 %v7296
    %v9006 = vunpack.c.h.b16 %v7296
    %v9007 = vunpack.c.l.b16 %v7297
    %v9008 = vunpack.c.l.b16 %v7298
    %v9009 = vunpack.c.h.b16 %v7298
    %v9010 = vunpack.c.l.b16 %v7299
    %v9011 = vunpack.c.h.b16 %v7299
    %v9012 = vunpack.c.l.b16 %v7300
    %v9013 = vunpack.c.h.b16 %v7300
    %v9014 = vunpack.c.l.b16 %v7301
    %v9015 = vunpack.c.l.b16 %v7302
    %v9016 = vunpack.c.h.b16 %v7302
    %v9017 = vunpack.c.l.b16 %v7303
    %v9018 = vunpack.c.h.b16 %v7303
    %v9019 = vunpack.c.l.b16 %v7304
    %v9020 = vunpack.c.h.b16 %v7304
    %v9021 = vunpack.c.l.b16 %v7305
    %v9022 = vunpack.c.l.b16 %v7306
    %v9023 = vunpack.c.h.b16 %v7306
    %v9024 = vunpack.c.l.b16 %v7307
    %v9025 = vunpack.c.h.b16 %v7307
    %v9026 = vunpack.c.l.b16 %v7308
    %v9027 = vunpack.c.h.b16 %v7308
    %v9028 = vunpack.c.l.b16 %v7309
    %v9029 = vunpack.c.l.b16 %v7310
    %v9030 = vunpack.c.h.b16 %v7310
    %v9031 = vunpack.c.l.b16 %v7311
    %v9032 = vunpack.c.h.b16 %v7311
    %v9033 = vunpack.c.l.b16 %v7312
    %v9034 = vunpack.c.h.b16 %v7312
    %v9035 = vunpack.c.l.b16 %v7313
    %v9036 = vunpack.c.l.b16 %v7314
    %v9037 = vunpack.c.h.b16 %v7314
    %v9038 = vunpack.c.l.b16 %v7315
    %v9039 = vunpack.c.h.b16 %v7315
    %v9040 = vunpack.c.l.b16 %v7316
    %v9041 = vunpack.c.h.b16 %v7316
    %v9042 = vunpack.c.l.b16 %v7317
    %v9043 = vunpack.c.l.b16 %v7318
    %v9044 = vunpack.c.h.b16 %v7318
    %v9045 = vunpack.c.l.b16 %v7319
    %v9046 = vunpack.c.h.b16 %v7319
    %v9047 = vunpack.c.l.b16 %v7320
    %v9048 = vunpack.c.h.b16 %v7320
    %v9049 = vunpack.c.l.b16 %v7321
    %v9050 = vunpack.c.l.b16 %v7322
    %v9051 = vunpack.c.h.b16 %v7322
    %v9052 = vunpack.c.l.b16 %v7323
    %v9053 = vunpack.c.h.b16 %v7323
    %v9054 = vunpack.c.l.b16 %v7324
    %v9055 = vunpack.c.h.b16 %v7324
    %v9056 = vunpack.c.l.b16 %v7325
    %v9057 = vunpack.c.l.b16 %v7326
    %v9058 = vunpack.c.h.b16 %v7326
    %v9059 = vunpack.c.l.b16 %v7327
    %v9060 = vunpack.c.h.b16 %v7327
    %v9061 = vunpack.c.l.b16 %v7328
    %v9062 = vunpack.c.h.b16 %v7328
    %v9063 = vunpack.c.l.b16 %v7329
    %v9064 = vunpack.c.l.b16 %v7330
    %v9065 = vunpack.c.h.b16 %v7330
    %v9066 = vunpack.c.l.b16 %v7331
    %v9067 = vunpack.c.h.b16 %v7331
    %v9068 = vunpack.c.l.b16 %v7332
    %v9069 = vunpack.c.h.b16 %v7332
    %v9070 = vunpack.c.l.b16 %v7333
    %v9071 = vunpack.c.l.b16 %v7334
    %v9072 = vunpack.c.h.b16 %v7334
    %v9073 = vunpack.c.l.b16 %v7335
    %v9074 = vunpack.c.h.b16 %v7335
    %v9075 = vunpack.c.l.b16 %v7336
    %v9076 = vunpack.c.h.b16 %v7336
    %v9077 = vunpack.c.l.b16 %v7337
    %v9078 = vunpack.c.l.b16 %v7338
    %v9079 = vunpack.c.h.b16 %v7338
    %v9080 = vunpack.c.l.b16 %v7339
    %v9081 = vunpack.c.h.b16 %v7339
    %v9082 = vunpack.c.l.b16 %v7340
    %v9083 = vunpack.c.h.b16 %v7340
    %v9084 = vunpack.c.l.b16 %v7341
    %v9085 = vunpack.c.l.b16 %v7342
    %v9086 = vunpack.c.h.b16 %v7342
    %v9087 = vunpack.c.l.b16 %v7343
    %v9088 = vunpack.c.h.b16 %v7343
    %v9089 = vunpack.c.l.b16 %v7344
    %v9090 = vunpack.c.h.b16 %v7344
    %v9091 = vunpack.c.l.b16 %v7345
    %v9092 = vunpack.c.l.b16 %v7346
    %v9093 = vunpack.c.h.b16 %v7346
    %v9094 = vunpack.c.l.b16 %v7347
    %v9095 = vunpack.c.h.b16 %v7347
    %v9096 = vunpack.c.l.b16 %v7348
    %v9097 = vunpack.c.h.b16 %v7348
    %v9098 = vunpack.c.l.b16 %v7349
    %v9099 = vunpack.c.l.b16 %v7350
    %v9100 = vunpack.c.h.b16 %v7350
    %v9101 = vunpack.c.l.b16 %v7351
    %v9102 = vunpack.c.h.b16 %v7351
    %v9103 = vunpack.c.l.b16 %v7352
    %v9104 = vunpack.c.h.b16 %v7352
    %v9105 = vunpack.c.l.b16 %v7353
    %v9106 = vunpack.c.l.b16 %v7354
    %v9107 = vunpack.c.h.b16 %v7354
    %v9108 = vunpack.c.l.b16 %v7355
    %v9109 = vunpack.c.h.b16 %v7355
    %v9110 = vunpack.c.l.b16 %v7356
    %v9111 = vunpack.c.h.b16 %v7356
    %v9112 = vunpack.c.l.b16 %v7357
    %v9113 = vunpack.c.l.b16 %v7358
    %v9114 = vunpack.c.h.b16 %v7358
    %v9115 = vunpack.c.l.b16 %v7359
    %v9116 = vunpack.c.h.b16 %v7359
    %v9117 = vunpack.c.l.b16 %v7360
    %v9118 = vunpack.c.h.b16 %v7360
    %v9119 = vunpack.c.l.b16 %v7361
    %v9120 = vunpack.c.l.b16 %v7362
    %v9121 = vunpack.c.h.b16 %v7362
    %v9122 = vunpack.c.l.b16 %v7363
    %v9123 = vunpack.c.h.b16 %v7363
    %v9124 = vunpack.c.l.b16 %v7364
    %v9125 = vunpack.c.h.b16 %v7364
    %v9126 = vunpack.c.l.b16 %v7365
    %v9127 = vunpack.c.l.b16 %v7366
    %v9128 = vunpack.c.h.b16 %v7366
    %v9129 = vunpack.c.l.b16 %v7367
    %v9130 = vunpack.c.h.b16 %v7367
    %v9131 = vunpack.c.l.b16 %v7368
    %v9132 = vunpack.c.h.b16 %v7368
    %v9133 = vunpack.c.l.b16 %v7369
    %v9134 = vunpack.c.l.b16 %v7370
    %v9135 = vunpack.c.h.b16 %v7370
    %v9136 = vunpack.c.l.b16 %v7371
    %v9137 = vunpack.c.h.b16 %v7371
    %v9138 = vunpack.c.l.b16 %v7372
    %v9139 = vunpack.c.h.b16 %v7372
    %v9140 = vunpack.c.l.b16 %v7373
    %v9141 = vunpack.c.l.b16 %v7374
    %v9142 = vunpack.c.h.b16 %v7374
    %v9143 = vunpack.c.l.b16 %v7375
    %v9144 = vunpack.c.h.b16 %v7375
    %v9145 = vunpack.c.l.b16 %v7376
    %v9146 = vunpack.c.h.b16 %v7376
    %v9147 = vunpack.c.l.b16 %v7377
    %v9148 = vunpack.c.l.b16 %v7378
    %v9149 = vunpack.c.h.b16 %v7378
    %v9150 = vunpack.c.l.b16 %v7379
    %v9151 = vunpack.c.h.b16 %v7379
    %v9152 = vunpack.c.l.b16 %v7380
    %v9153 = vunpack.c.h.b16 %v7380
    %v9154 = vunpack.c.l.b16 %v7381
    %v9155 = vunpack.c.l.b16 %v7382
    %v9156 = vunpack.c.h.b16 %v7382
    %v9157 = vunpack.c.l.b16 %v7383
    %v9158 = vunpack.c.h.b16 %v7383
    %v9159 = vunpack.c.l.b16 %v7384
    %v9160 = vunpack.c.h.b16 %v7384
    %v9161 = vunpack.c.l.b16 %v7385
    %v9162 = vunpack.c.l.b16 %v7386
    %v9163 = vunpack.c.h.b16 %v7386
    %v9164 = vunpack.c.l.b16 %v7387
    %v9165 = vunpack.c.h.b16 %v7387
    %v9166 = vunpack.c.l.b16 %v7388
    %v9167 = vunpack.c.h.b16 %v7388
    %v9168 = vunpack.c.l.b16 %v7389
    %v9169 = vunpack.c.l.b16 %v7390
    %v9170 = vunpack.c.h.b16 %v7390
    %v9171 = vunpack.c.l.b16 %v7391
    %v9172 = vunpack.c.h.b16 %v7391
    %v9173 = vunpack.c.l.b16 %v7392
    %v9174 = vunpack.c.h.b16 %v7392
    %v9175 = vunpack.c.l.b16 %v7393
    %v9176 = vunpack.c.l.b16 %v7394
    %v9177 = vunpack.c.h.b16 %v7394
    %v9178 = vunpack.c.l.b16 %v7395
    %v9179 = vunpack.c.h.b16 %v7395
    %v9180 = vunpack.c.l.b16 %v7396
    %v9181 = vunpack.c.h.b16 %v7396
    %v9182 = vunpack.c.l.b16 %v7397
    %v9183 = vunpack.c.l.b16 %v7398
    %v9184 = vunpack.c.h.b16 %v7398
    %v9185 = vunpack.c.l.b16 %v7399
    %v9186 = vunpack.c.h.b16 %v7399
    %v9187 = vunpack.c.l.b16 %v7400
    %v9188 = vunpack.c.h.b16 %v7400
    %v9189 = vunpack.c.l.b16 %v7401
    %v9190 = vunpack.c.l.b16 %v7402
    %v9191 = vunpack.c.h.b16 %v7402
    %v9192 = vunpack.c.l.b16 %v7403
    %v9193 = vunpack.c.h.b16 %v7403
    %v9194 = vunpack.c.l.b16 %v7404
    %v9195 = vunpack.c.h.b16 %v7404
    %v9196 = vunpack.c.l.b16 %v7405
    %v9197 = vunpack.c.l.b16 %v7406
    %v9198 = vunpack.c.h.b16 %v7406
    %v9199 = vunpack.c.l.b16 %v7407
    %v9200 = vunpack.c.h.b16 %v7407
    %v9201 = vunpack.c.l.b16 %v7408
    %v9202 = vunpack.c.h.b16 %v7408
    %v9203 = vunpack.c.l.b16 %v7409
    %v9204 = vunpack.c.l.b16 %v7410
    %v9205 = vunpack.c.h.b16 %v7410
    %v9206 = vunpack.c.l.b16 %v7411
    %v9207 = vunpack.c.h.b16 %v7411
    %v9208 = vunpack.c.l.b16 %v7412
    %v9209 = vunpack.c.h.b16 %v7412
    %v9210 = vunpack.c.l.b16 %v7413
    %v9211 = vpack.c.b16 %v8098, %v8091
    %v9212 = vpack.c.b16 %v8099, %v8092
    %v9213 = vpack.c.b16 %v8100, %v8093
    %v9214 = vpack.c.b16 %v8101, %v8094
    %v9215 = vpack.c.b16 %v8102, %v8095
    %v9216 = vpack.c.b16 %v8103, %v8096
    %v9217 = vpack.c.b16 %v8104, %v8097
    %v9218 = vpack.c.b16 %v8112, %v8105
    %v9219 = vpack.c.b16 %v8113, %v8106
    %v9220 = vpack.c.b16 %v8114, %v8107
    %v9221 = vpack.c.b16 %v8115, %v8108
    %v9222 = vpack.c.b16 %v8116, %v8109
    %v9223 = vpack.c.b16 %v8117, %v8110
    %v9224 = vpack.c.b16 %v8118, %v8111
    %v9225 = vpack.c.b16 %v8126, %v8119
    %v9226 = vpack.c.b16 %v8127, %v8120
    %v9227 = vpack.c.b16 %v8128, %v8121
    %v9228 = vpack.c.b16 %v8129, %v8122
    %v9229 = vpack.c.b16 %v8130, %v8123
    %v9230 = vpack.c.b16 %v8131, %v8124
    %v9231 = vpack.c.b16 %v8132, %v8125
    %v9232 = vpack.c.b16 %v8140, %v8133
    %v9233 = vpack.c.b16 %v8141, %v8134
    %v9234 = vpack.c.b16 %v8142, %v8135
    %v9235 = vpack.c.b16 %v8143, %v8136
    %v9236 = vpack.c.b16 %v8144, %v8137
    %v9237 = vpack.c.b16 %v8145, %v8138
    %v9238 = vpack.c.b16 %v8146, %v8139
    %v9239 = vpack.c.b16 %v8154, %v8147
    %v9240 = vpack.c.b16 %v8155, %v8148
    %v9241 = vpack.c.b16 %v8156, %v8149
    %v9242 = vpack.c.b16 %v8157, %v8150
    %v9243 = vpack.c.b16 %v8158, %v8151
    %v9244 = vpack.c.b16 %v8159, %v8152
    %v9245 = vpack.c.b16 %v8160, %v8153
    %v9246 = vpack.c.b16 %v8168, %v8161
    %v9247 = vpack.c.b16 %v8169, %v8162
    %v9248 = vpack.c.b16 %v8170, %v8163
    %v9249 = vpack.c.b16 %v8171, %v8164
    %v9250 = vpack.c.b16 %v8172, %v8165
    %v9251 = vpack.c.b16 %v8173, %v8166
    %v9252 = vpack.c.b16 %v8174, %v8167
    %v9253 = vpack.c.b16 %v8182, %v8175
    %v9254 = vpack.c.b16 %v8183, %v8176
    %v9255 = vpack.c.b16 %v8184, %v8177
    %v9256 = vpack.c.b16 %v8185, %v8178
    %v9257 = vpack.c.b16 %v8186, %v8179
    %v9258 = vpack.c.b16 %v8187, %v8180
    %v9259 = vpack.c.b16 %v8188, %v8181
    %v9260 = vpack.c.b16 %v8196, %v8189
    %v9261 = vpack.c.b16 %v8197, %v8190
    %v9262 = vpack.c.b16 %v8198, %v8191
    %v9263 = vpack.c.b16 %v8199, %v8192
    %v9264 = vpack.c.b16 %v8200, %v8193
    %v9265 = vpack.c.b16 %v8201, %v8194
    %v9266 = vpack.c.b16 %v8202, %v8195
    %v9267 = vpack.c.b16 %v8210, %v8203
    %v9268 = vpack.c.b16 %v8211, %v8204
    %v9269 = vpack.c.b16 %v8212, %v8205
    %v9270 = vpack.c.b16 %v8213, %v8206
    %v9271 = vpack.c.b16 %v8214, %v8207
    %v9272 = vpack.c.b16 %v8215, %v8208
    %v9273 = vpack.c.b16 %v8216, %v8209
    %v9274 = vpack.c.b16 %v8224, %v8217
    %v9275 = vpack.c.b16 %v8225, %v8218
    %v9276 = vpack.c.b16 %v8226, %v8219
    %v9277 = vpack.c.b16 %v8227, %v8220
    %v9278 = vpack.c.b16 %v8228, %v8221
    %v9279 = vpack.c.b16 %v8229, %v8222
    %v9280 = vpack.c.b16 %v8230, %v8223
    %v9281 = vpack.c.b16 %v8238, %v8231
    %v9282 = vpack.c.b16 %v8239, %v8232
    %v9283 = vpack.c.b16 %v8240, %v8233
    %v9284 = vpack.c.b16 %v8241, %v8234
    %v9285 = vpack.c.b16 %v8242, %v8235
    %v9286 = vpack.c.b16 %v8243, %v8236
    %v9287 = vpack.c.b16 %v8244, %v8237
    %v9288 = vpack.c.b16 %v8252, %v8245
    %v9289 = vpack.c.b16 %v8253, %v8246
    %v9290 = vpack.c.b16 %v8254, %v8247
    %v9291 = vpack.c.b16 %v8255, %v8248
    %v9292 = vpack.c.b16 %v8256, %v8249
    %v9293 = vpack.c.b16 %v8257, %v8250
    %v9294 = vpack.c.b16 %v8258, %v8251
    %v9295 = vpack.c.b16 %v8266, %v8259
    %v9296 = vpack.c.b16 %v8267, %v8260
    %v9297 = vpack.c.b16 %v8268, %v8261
    %v9298 = vpack.c.b16 %v8269, %v8262
    %v9299 = vpack.c.b16 %v8270, %v8263
    %v9300 = vpack.c.b16 %v8271, %v8264
    %v9301 = vpack.c.b16 %v8272, %v8265
    %v9302 = vpack.c.b16 %v8280, %v8273
    %v9303 = vpack.c.b16 %v8281, %v8274
    %v9304 = vpack.c.b16 %v8282, %v8275
    %v9305 = vpack.c.b16 %v8283, %v8276
    %v9306 = vpack.c.b16 %v8284, %v8277
    %v9307 = vpack.c.b16 %v8285, %v8278
    %v9308 = vpack.c.b16 %v8286, %v8279
    %v9309 = vpack.c.b16 %v8294, %v8287
    %v9310 = vpack.c.b16 %v8295, %v8288
    %v9311 = vpack.c.b16 %v8296, %v8289
    %v9312 = vpack.c.b16 %v8297, %v8290
    %v9313 = vpack.c.b16 %v8298, %v8291
    %v9314 = vpack.c.b16 %v8299, %v8292
    %v9315 = vpack.c.b16 %v8300, %v8293
    %v9316 = vpack.c.b16 %v8308, %v8301
    %v9317 = vpack.c.b16 %v8309, %v8302
    %v9318 = vpack.c.b16 %v8310, %v8303
    %v9319 = vpack.c.b16 %v8311, %v8304
    %v9320 = vpack.c.b16 %v8312, %v8305
    %v9321 = vpack.c.b16 %v8313, %v8306
    %v9322 = vpack.c.b16 %v8314, %v8307
    %v9323 = vpack.c.b16 %v8322, %v8315
    %v9324 = vpack.c.b16 %v8323, %v8316
    %v9325 = vpack.c.b16 %v8324, %v8317
    %v9326 = vpack.c.b16 %v8325, %v8318
    %v9327 = vpack.c.b16 %v8326, %v8319
    %v9328 = vpack.c.b16 %v8327, %v8320
    %v9329 = vpack.c.b16 %v8328, %v8321
    %v9330 = vpack.c.b16 %v8336, %v8329
    %v9331 = vpack.c.b16 %v8337, %v8330
    %v9332 = vpack.c.b16 %v8338, %v8331
    %v9333 = vpack.c.b16 %v8339, %v8332
    %v9334 = vpack.c.b16 %v8340, %v8333
    %v9335 = vpack.c.b16 %v8341, %v8334
    %v9336 = vpack.c.b16 %v8342, %v8335
    %v9337 = vpack.c.b16 %v8350, %v8343
    %v9338 = vpack.c.b16 %v8351, %v8344
    %v9339 = vpack.c.b16 %v8352, %v8345
    %v9340 = vpack.c.b16 %v8353, %v8346
    %v9341 = vpack.c.b16 %v8354, %v8347
    %v9342 = vpack.c.b16 %v8355, %v8348
    %v9343 = vpack.c.b16 %v8356, %v8349
    %v9344 = vpack.c.b16 %v8364, %v8357
    %v9345 = vpack.c.b16 %v8365, %v8358
    %v9346 = vpack.c.b16 %v8366, %v8359
    %v9347 = vpack.c.b16 %v8367, %v8360
    %v9348 = vpack.c.b16 %v8368, %v8361
    %v9349 = vpack.c.b16 %v8369, %v8362
    %v9350 = vpack.c.b16 %v8370, %v8363
    %v9351 = vpack.c.b16 %v8378, %v8371
    %v9352 = vpack.c.b16 %v8379, %v8372
    %v9353 = vpack.c.b16 %v8380, %v8373
    %v9354 = vpack.c.b16 %v8381, %v8374
    %v9355 = vpack.c.b16 %v8382, %v8375
    %v9356 = vpack.c.b16 %v8383, %v8376
    %v9357 = vpack.c.b16 %v8384, %v8377
    %v9358 = vpack.c.b16 %v8392, %v8385
    %v9359 = vpack.c.b16 %v8393, %v8386
    %v9360 = vpack.c.b16 %v8394, %v8387
    %v9361 = vpack.c.b16 %v8395, %v8388
    %v9362 = vpack.c.b16 %v8396, %v8389
    %v9363 = vpack.c.b16 %v8397, %v8390
    %v9364 = vpack.c.b16 %v8398, %v8391
    %v9365 = vpack.c.b16 %v8406, %v8399
    %v9366 = vpack.c.b16 %v8407, %v8400
    %v9367 = vpack.c.b16 %v8408, %v8401
    %v9368 = vpack.c.b16 %v8409, %v8402
    %v9369 = vpack.c.b16 %v8410, %v8403
    %v9370 = vpack.c.b16 %v8411, %v8404
    %v9371 = vpack.c.b16 %v8412, %v8405
    %v9372 = vpack.c.b16 %v8420, %v8413
    %v9373 = vpack.c.b16 %v8421, %v8414
    %v9374 = vpack.c.b16 %v8422, %v8415
    %v9375 = vpack.c.b16 %v8423, %v8416
    %v9376 = vpack.c.b16 %v8424, %v8417
    %v9377 = vpack.c.b16 %v8425, %v8418
    %v9378 = vpack.c.b16 %v8426, %v8419
    %v9379 = vpack.c.b16 %v8434, %v8427
    %v9380 = vpack.c.b16 %v8435, %v8428
    %v9381 = vpack.c.b16 %v8436, %v8429
    %v9382 = vpack.c.b16 %v8437, %v8430
    %v9383 = vpack.c.b16 %v8438, %v8431
    %v9384 = vpack.c.b16 %v8439, %v8432
    %v9385 = vpack.c.b16 %v8440, %v8433
    %v9386 = vpack.c.b16 %v8448, %v8441
    %v9387 = vpack.c.b16 %v8449, %v8442
    %v9388 = vpack.c.b16 %v8450, %v8443
    %v9389 = vpack.c.b16 %v8451, %v8444
    %v9390 = vpack.c.b16 %v8452, %v8445
    %v9391 = vpack.c.b16 %v8453, %v8446
    %v9392 = vpack.c.b16 %v8454, %v8447
    %v9393 = vpack.c.b16 %v8462, %v8455
    %v9394 = vpack.c.b16 %v8463, %v8456
    %v9395 = vpack.c.b16 %v8464, %v8457
    %v9396 = vpack.c.b16 %v8465, %v8458
    %v9397 = vpack.c.b16 %v8466, %v8459
    %v9398 = vpack.c.b16 %v8467, %v8460
    %v9399 = vpack.c.b16 %v8468, %v8461
    %v9400 = vpack.c.b16 %v8476, %v8469
    %v9401 = vpack.c.b16 %v8477, %v8470
    %v9402 = vpack.c.b16 %v8478, %v8471
    %v9403 = vpack.c.b16 %v8479, %v8472
    %v9404 = vpack.c.b16 %v8480, %v8473
    %v9405 = vpack.c.b16 %v8481, %v8474
    %v9406 = vpack.c.b16 %v8482, %v8475
    %v9407 = vpack.c.b16 %v8490, %v8483
    %v9408 = vpack.c.b16 %v8491, %v8484
    %v9409 = vpack.c.b16 %v8492, %v8485
    %v9410 = vpack.c.b16 %v8493, %v8486
    %v9411 = vpack.c.b16 %v8494, %v8487
    %v9412 = vpack.c.b16 %v8495, %v8488
    %v9413 = vpack.c.b16 %v8496, %v8489
    %v9414 = vpack.c.b16 %v8504, %v8497
    %v9415 = vpack.c.b16 %v8505, %v8498
    %v9416 = vpack.c.b16 %v8506, %v8499
    %v9417 = vpack.c.b16 %v8507, %v8500
    %v9418 = vpack.c.b16 %v8508, %v8501
    %v9419 = vpack.c.b16 %v8509, %v8502
    %v9420 = vpack.c.b16 %v8510, %v8503
    %v9421 = vpack.c.b16 %v8518, %v8511
    %v9422 = vpack.c.b16 %v8519, %v8512
    %v9423 = vpack.c.b16 %v8520, %v8513
    %v9424 = vpack.c.b16 %v8521, %v8514
    %v9425 = vpack.c.b16 %v8522, %v8515
    %v9426 = vpack.c.b16 %v8523, %v8516
    %v9427 = vpack.c.b16 %v8524, %v8517
    %v9428 = vpack.c.b16 %v8532, %v8525
    %v9429 = vpack.c.b16 %v8533, %v8526
    %v9430 = vpack.c.b16 %v8534, %v8527
    %v9431 = vpack.c.b16 %v8535, %v8528
    %v9432 = vpack.c.b16 %v8536, %v8529
    %v9433 = vpack.c.b16 %v8537, %v8530
    %v9434 = vpack.c.b16 %v8538, %v8531
    %v9435 = vpack.c.b16 %v8546, %v8539
    %v9436 = vpack.c.b16 %v8547, %v8540
    %v9437 = vpack.c.b16 %v8548, %v8541
    %v9438 = vpack.c.b16 %v8549, %v8542
    %v9439 = vpack.c.b16 %v8550, %v8543
    %v9440 = vpack.c.b16 %v8551, %v8544
    %v9441 = vpack.c.b16 %v8552, %v8545
    %v9442 = vpack.c.b16 %v8560, %v8553
    %v9443 = vpack.c.b16 %v8561, %v8554
    %v9444 = vpack.c.b16 %v8562, %v8555
    %v9445 = vpack.c.b16 %v8563, %v8556
    %v9446 = vpack.c.b16 %v8564, %v8557
    %v9447 = vpack.c.b16 %v8565, %v8558
    %v9448 = vpack.c.b16 %v8566, %v8559
    %v9449 = vpack.c.b16 %v8574, %v8567
    %v9450 = vpack.c.b16 %v8575, %v8568
    %v9451 = vpack.c.b16 %v8576, %v8569
    %v9452 = vpack.c.b16 %v8577, %v8570
    %v9453 = vpack.c.b16 %v8578, %v8571
    %v9454 = vpack.c.b16 %v8579, %v8572
    %v9455 = vpack.c.b16 %v8580, %v8573
    %v9456 = vpack.c.b16 %v8588, %v8581
    %v9457 = vpack.c.b16 %v8589, %v8582
    %v9458 = vpack.c.b16 %v8590, %v8583
    %v9459 = vpack.c.b16 %v8591, %v8584
    %v9460 = vpack.c.b16 %v8592, %v8585
    %v9461 = vpack.c.b16 %v8593, %v8586
    %v9462 = vpack.c.b16 %v8594, %v8587
    %v9463 = vpack.c.b16 %v8602, %v8595
    %v9464 = vpack.c.b16 %v8603, %v8596
    %v9465 = vpack.c.b16 %v8604, %v8597
    %v9466 = vpack.c.b16 %v8605, %v8598
    %v9467 = vpack.c.b16 %v8606, %v8599
    %v9468 = vpack.c.b16 %v8607, %v8600
    %v9469 = vpack.c.b16 %v8608, %v8601
    %v9470 = vpack.c.b16 %v8616, %v8609
    %v9471 = vpack.c.b16 %v8617, %v8610
    %v9472 = vpack.c.b16 %v8618, %v8611
    %v9473 = vpack.c.b16 %v8619, %v8612
    %v9474 = vpack.c.b16 %v8620, %v8613
    %v9475 = vpack.c.b16 %v8621, %v8614
    %v9476 = vpack.c.b16 %v8622, %v8615
    %v9477 = vpack.c.b16 %v8630, %v8623
    %v9478 = vpack.c.b16 %v8631, %v8624
    %v9479 = vpack.c.b16 %v8632, %v8625
    %v9480 = vpack.c.b16 %v8633, %v8626
    %v9481 = vpack.c.b16 %v8634, %v8627
    %v9482 = vpack.c.b16 %v8635, %v8628
    %v9483 = vpack.c.b16 %v8636, %v8629
    %v9484 = vpack.c.b16 %v8644, %v8637
    %v9485 = vpack.c.b16 %v8645, %v8638
    %v9486 = vpack.c.b16 %v8646, %v8639
    %v9487 = vpack.c.b16 %v8647, %v8640
    %v9488 = vpack.c.b16 %v8648, %v8641
    %v9489 = vpack.c.b16 %v8649, %v8642
    %v9490 = vpack.c.b16 %v8650, %v8643
    %v9491 = vpack.c.b16 %v8658, %v8651
    %v9492 = vpack.c.b16 %v8659, %v8652
    %v9493 = vpack.c.b16 %v8660, %v8653
    %v9494 = vpack.c.b16 %v8661, %v8654
    %v9495 = vpack.c.b16 %v8662, %v8655
    %v9496 = vpack.c.b16 %v8663, %v8656
    %v9497 = vpack.c.b16 %v8664, %v8657
    %v9498 = vpack.c.b16 %v8672, %v8665
    %v9499 = vpack.c.b16 %v8673, %v8666
    %v9500 = vpack.c.b16 %v8674, %v8667
    %v9501 = vpack.c.b16 %v8675, %v8668
    %v9502 = vpack.c.b16 %v8676, %v8669
    %v9503 = vpack.c.b16 %v8677, %v8670
    %v9504 = vpack.c.b16 %v8678, %v8671
    %v9505 = vpack.c.b16 %v8686, %v8679
    %v9506 = vpack.c.b16 %v8687, %v8680
    %v9507 = vpack.c.b16 %v8688, %v8681
    %v9508 = vpack.c.b16 %v8689, %v8682
    %v9509 = vpack.c.b16 %v8690, %v8683
    %v9510 = vpack.c.b16 %v8691, %v8684
    %v9511 = vpack.c.b16 %v8692, %v8685
    %v9512 = vpack.c.b16 %v8700, %v8693
    %v9513 = vpack.c.b16 %v8701, %v8694
    %v9514 = vpack.c.b16 %v8702, %v8695
    %v9515 = vpack.c.b16 %v8703, %v8696
    %v9516 = vpack.c.b16 %v8704, %v8697
    %v9517 = vpack.c.b16 %v8705, %v8698
    %v9518 = vpack.c.b16 %v8706, %v8699
    %v9519 = vpack.c.b16 %v8714, %v8707
    %v9520 = vpack.c.b16 %v8715, %v8708
    %v9521 = vpack.c.b16 %v8716, %v8709
    %v9522 = vpack.c.b16 %v8717, %v8710
    %v9523 = vpack.c.b16 %v8718, %v8711
    %v9524 = vpack.c.b16 %v8719, %v8712
    %v9525 = vpack.c.b16 %v8720, %v8713
    %v9526 = vpack.c.b16 %v8728, %v8721
    %v9527 = vpack.c.b16 %v8729, %v8722
    %v9528 = vpack.c.b16 %v8730, %v8723
    %v9529 = vpack.c.b16 %v8731, %v8724
    %v9530 = vpack.c.b16 %v8732, %v8725
    %v9531 = vpack.c.b16 %v8733, %v8726
    %v9532 = vpack.c.b16 %v8734, %v8727
    %v9533 = vpack.c.b16 %v8742, %v8735
    %v9534 = vpack.c.b16 %v8743, %v8736
    %v9535 = vpack.c.b16 %v8744, %v8737
    %v9536 = vpack.c.b16 %v8745, %v8738
    %v9537 = vpack.c.b16 %v8746, %v8739
    %v9538 = vpack.c.b16 %v8747, %v8740
    %v9539 = vpack.c.b16 %v8748, %v8741
    %v9540 = vpack.c.b16 %v8756, %v8749
    %v9541 = vpack.c.b16 %v8757, %v8750
    %v9542 = vpack.c.b16 %v8758, %v8751
    %v9543 = vpack.c.b16 %v8759, %v8752
    %v9544 = vpack.c.b16 %v8760, %v8753
    %v9545 = vpack.c.b16 %v8761, %v8754
    %v9546 = vpack.c.b16 %v8762, %v8755
    %v9547 = vpack.c.b16 %v8770, %v8763
    %v9548 = vpack.c.b16 %v8771, %v8764
    %v9549 = vpack.c.b16 %v8772, %v8765
    %v9550 = vpack.c.b16 %v8773, %v8766
    %v9551 = vpack.c.b16 %v8774, %v8767
    %v9552 = vpack.c.b16 %v8775, %v8768
    %v9553 = vpack.c.b16 %v8776, %v8769
    %v9554 = vpack.c.b16 %v8784, %v8777
    %v9555 = vpack.c.b16 %v8785, %v8778
    %v9556 = vpack.c.b16 %v8786, %v8779
    %v9557 = vpack.c.b16 %v8787, %v8780
    %v9558 = vpack.c.b16 %v8788, %v8781
    %v9559 = vpack.c.b16 %v8789, %v8782
    %v9560 = vpack.c.b16 %v8790, %v8783
    %v9561 = vpack.c.b16 %v8798, %v8791
    %v9562 = vpack.c.b16 %v8799, %v8792
    %v9563 = vpack.c.b16 %v8800, %v8793
    %v9564 = vpack.c.b16 %v8801, %v8794
    %v9565 = vpack.c.b16 %v8802, %v8795
    %v9566 = vpack.c.b16 %v8803, %v8796
    %v9567 = vpack.c.b16 %v8804, %v8797
    %v9568 = vpack.c.b16 %v8812, %v8805
    %v9569 = vpack.c.b16 %v8813, %v8806
    %v9570 = vpack.c.b16 %v8814, %v8807
    %v9571 = vpack.c.b16 %v8815, %v8808
    %v9572 = vpack.c.b16 %v8816, %v8809
    %v9573 = vpack.c.b16 %v8817, %v8810
    %v9574 = vpack.c.b16 %v8818, %v8811
    %v9575 = vpack.c.b16 %v8826, %v8819
    %v9576 = vpack.c.b16 %v8827, %v8820
    %v9577 = vpack.c.b16 %v8828, %v8821
    %v9578 = vpack.c.b16 %v8829, %v8822
    %v9579 = vpack.c.b16 %v8830, %v8823
    %v9580 = vpack.c.b16 %v8831, %v8824
    %v9581 = vpack.c.b16 %v8832, %v8825
    %v9582 = vpack.c.b16 %v8840, %v8833
    %v9583 = vpack.c.b16 %v8841, %v8834
    %v9584 = vpack.c.b16 %v8842, %v8835
    %v9585 = vpack.c.b16 %v8843, %v8836
    %v9586 = vpack.c.b16 %v8844, %v8837
    %v9587 = vpack.c.b16 %v8845, %v8838
    %v9588 = vpack.c.b16 %v8846, %v8839
    %v9589 = vpack.c.b16 %v8854, %v8847
    %v9590 = vpack.c.b16 %v8855, %v8848
    %v9591 = vpack.c.b16 %v8856, %v8849
    %v9592 = vpack.c.b16 %v8857, %v8850
    %v9593 = vpack.c.b16 %v8858, %v8851
    %v9594 = vpack.c.b16 %v8859, %v8852
    %v9595 = vpack.c.b16 %v8860, %v8853
    %v9596 = vpack.c.b16 %v8868, %v8861
    %v9597 = vpack.c.b16 %v8869, %v8862
    %v9598 = vpack.c.b16 %v8870, %v8863
    %v9599 = vpack.c.b16 %v8871, %v8864
    %v9600 = vpack.c.b16 %v8872, %v8865
    %v9601 = vpack.c.b16 %v8873, %v8866
    %v9602 = vpack.c.b16 %v8874, %v8867
    %v9603 = vpack.c.b16 %v8882, %v8875
    %v9604 = vpack.c.b16 %v8883, %v8876
    %v9605 = vpack.c.b16 %v8884, %v8877
    %v9606 = vpack.c.b16 %v8885, %v8878
    %v9607 = vpack.c.b16 %v8886, %v8879
    %v9608 = vpack.c.b16 %v8887, %v8880
    %v9609 = vpack.c.b16 %v8888, %v8881
    %v9610 = vpack.c.b16 %v8896, %v8889
    %v9611 = vpack.c.b16 %v8897, %v8890
    %v9612 = vpack.c.b16 %v8898, %v8891
    %v9613 = vpack.c.b16 %v8899, %v8892
    %v9614 = vpack.c.b16 %v8900, %v8893
    %v9615 = vpack.c.b16 %v8901, %v8894
    %v9616 = vpack.c.b16 %v8902, %v8895
    %v9617 = vpack.c.b16 %v8910, %v8903
    %v9618 = vpack.c.b16 %v8911, %v8904
    %v9619 = vpack.c.b16 %v8912, %v8905
    %v9620 = vpack.c.b16 %v8913, %v8906
    %v9621 = vpack.c.b16 %v8914, %v8907
    %v9622 = vpack.c.b16 %v8915, %v8908
    %v9623 = vpack.c.b16 %v8916, %v8909
    %v9624 = vpack.c.b16 %v8924, %v8917
    %v9625 = vpack.c.b16 %v8925, %v8918
    %v9626 = vpack.c.b16 %v8926, %v8919
    %v9627 = vpack.c.b16 %v8927, %v8920
    %v9628 = vpack.c.b16 %v8928, %v8921
    %v9629 = vpack.c.b16 %v8929, %v8922
    %v9630 = vpack.c.b16 %v8930, %v8923
    %v9631 = vpack.c.b16 %v8938, %v8931
    %v9632 = vpack.c.b16 %v8939, %v8932
    %v9633 = vpack.c.b16 %v8940, %v8933
    %v9634 = vpack.c.b16 %v8941, %v8934
    %v9635 = vpack.c.b16 %v8942, %v8935
    %v9636 = vpack.c.b16 %v8943, %v8936
    %v9637 = vpack.c.b16 %v8944, %v8937
    %v9638 = vpack.c.b16 %v8952, %v8945
    %v9639 = vpack.c.b16 %v8953, %v8946
    %v9640 = vpack.c.b16 %v8954, %v8947
    %v9641 = vpack.c.b16 %v8955, %v8948
    %v9642 = vpack.c.b16 %v8956, %v8949
    %v9643 = vpack.c.b16 %v8957, %v8950
    %v9644 = vpack.c.b16 %v8958, %v8951
    %v9645 = vpack.c.b16 %v8966, %v8959
    %v9646 = vpack.c.b16 %v8967, %v8960
    %v9647 = vpack.c.b16 %v8968, %v8961
    %v9648 = vpack.c.b16 %v8969, %v8962
    %v9649 = vpack.c.b16 %v8970, %v8963
    %v9650 = vpack.c.b16 %v8971, %v8964
    %v9651 = vpack.c.b16 %v8972, %v8965
    %v9652 = vpack.c.b16 %v8980, %v8973
    %v9653 = vpack.c.b16 %v8981, %v8974
    %v9654 = vpack.c.b16 %v8982, %v8975
    %v9655 = vpack.c.b16 %v8983, %v8976
    %v9656 = vpack.c.b16 %v8984, %v8977
    %v9657 = vpack.c.b16 %v8985, %v8978
    %v9658 = vpack.c.b16 %v8986, %v8979
    %v9659 = vpack.c.b16 %v8994, %v8987
    %v9660 = vpack.c.b16 %v8995, %v8988
    %v9661 = vpack.c.b16 %v8996, %v8989
    %v9662 = vpack.c.b16 %v8997, %v8990
    %v9663 = vpack.c.b16 %v8998, %v8991
    %v9664 = vpack.c.b16 %v8999, %v8992
    %v9665 = vpack.c.b16 %v9000, %v8993
    %v9666 = vpack.c.b16 %v9008, %v9001
    %v9667 = vpack.c.b16 %v9009, %v9002
    %v9668 = vpack.c.b16 %v9010, %v9003
    %v9669 = vpack.c.b16 %v9011, %v9004
    %v9670 = vpack.c.b16 %v9012, %v9005
    %v9671 = vpack.c.b16 %v9013, %v9006
    %v9672 = vpack.c.b16 %v9014, %v9007
    %v9673 = vpack.c.b16 %v9022, %v9015
    %v9674 = vpack.c.b16 %v9023, %v9016
    %v9675 = vpack.c.b16 %v9024, %v9017
    %v9676 = vpack.c.b16 %v9025, %v9018
    %v9677 = vpack.c.b16 %v9026, %v9019
    %v9678 = vpack.c.b16 %v9027, %v9020
    %v9679 = vpack.c.b16 %v9028, %v9021
    %v9680 = vpack.c.b16 %v9036, %v9029
    %v9681 = vpack.c.b16 %v9037, %v9030
    %v9682 = vpack.c.b16 %v9038, %v9031
    %v9683 = vpack.c.b16 %v9039, %v9032
    %v9684 = vpack.c.b16 %v9040, %v9033
    %v9685 = vpack.c.b16 %v9041, %v9034
    %v9686 = vpack.c.b16 %v9042, %v9035
    %v9687 = vpack.c.b16 %v9050, %v9043
    %v9688 = vpack.c.b16 %v9051, %v9044
    %v9689 = vpack.c.b16 %v9052, %v9045
    %v9690 = vpack.c.b16 %v9053, %v9046
    %v9691 = vpack.c.b16 %v9054, %v9047
    %v9692 = vpack.c.b16 %v9055, %v9048
    %v9693 = vpack.c.b16 %v9056, %v9049
    %v9694 = vpack.c.b16 %v9064, %v9057
    %v9695 = vpack.c.b16 %v9065, %v9058
    %v9696 = vpack.c.b16 %v9066, %v9059
    %v9697 = vpack.c.b16 %v9067, %v9060
    %v9698 = vpack.c.b16 %v9068, %v9061
    %v9699 = vpack.c.b16 %v9069, %v9062
    %v9700 = vpack.c.b16 %v9070, %v9063
    %v9701 = vpack.c.b16 %v9078, %v9071
    %v9702 = vpack.c.b16 %v9079, %v9072
    %v9703 = vpack.c.b16 %v9080, %v9073
    %v9704 = vpack.c.b16 %v9081, %v9074
    %v9705 = vpack.c.b16 %v9082, %v9075
    %v9706 = vpack.c.b16 %v9083, %v9076
    %v9707 = vpack.c.b16 %v9084, %v9077
    %v9708 = vpack.c.b16 %v9092, %v9085
    %v9709 = vpack.c.b16 %v9093, %v9086
    %v9710 = vpack.c.b16 %v9094, %v9087
    %v9711 = vpack.c.b16 %v9095, %v9088
    %v9712 = vpack.c.b16 %v9096, %v9089
    %v9713 = vpack.c.b16 %v9097, %v9090
    %v9714 = vpack.c.b16 %v9098, %v9091
    %v9715 = vpack.c.b16 %v9106, %v9099
    %v9716 = vpack.c.b16 %v9107, %v9100
    %v9717 = vpack.c.b16 %v9108, %v9101
    %v9718 = vpack.c.b16 %v9109, %v9102
    %v9719 = vpack.c.b16 %v9110, %v9103
    %v9720 = vpack.c.b16 %v9111, %v9104
    %v9721 = vpack.c.b16 %v9112, %v9105
    %v9722 = vpack.c.b16 %v9120, %v9113
    %v9723 = vpack.c.b16 %v9121, %v9114
    %v9724 = vpack.c.b16 %v9122, %v9115
    %v9725 = vpack.c.b16 %v9123, %v9116
    %v9726 = vpack.c.b16 %v9124, %v9117
    %v9727 = vpack.c.b16 %v9125, %v9118
    %v9728 = vpack.c.b16 %v9126, %v9119
    %v9729 = vpack.c.b16 %v9134, %v9127
    %v9730 = vpack.c.b16 %v9135, %v9128
    %v9731 = vpack.c.b16 %v9136, %v9129
    %v9732 = vpack.c.b16 %v9137, %v9130
    %v9733 = vpack.c.b16 %v9138, %v9131
    %v9734 = vpack.c.b16 %v9139, %v9132
    %v9735 = vpack.c.b16 %v9140, %v9133
    %v9736 = vpack.c.b16 %v9148, %v9141
    %v9737 = vpack.c.b16 %v9149, %v9142
    %v9738 = vpack.c.b16 %v9150, %v9143
    %v9739 = vpack.c.b16 %v9151, %v9144
    %v9740 = vpack.c.b16 %v9152, %v9145
    %v9741 = vpack.c.b16 %v9153, %v9146
    %v9742 = vpack.c.b16 %v9154, %v9147
    %v9743 = vpack.c.b16 %v9162, %v9155
    %v9744 = vpack.c.b16 %v9163, %v9156
    %v9745 = vpack.c.b16 %v9164, %v9157
    %v9746 = vpack.c.b16 %v9165, %v9158
    %v9747 = vpack.c.b16 %v9166, %v9159
    %v9748 = vpack.c.b16 %v9167, %v9160
    %v9749 = vpack.c.b16 %v9168, %v9161
    %v9750 = vpack.c.b16 %v9176, %v9169
    %v9751 = vpack.c.b16 %v9177, %v9170
    %v9752 = vpack.c.b16 %v9178, %v9171
    %v9753 = vpack.c.b16 %v9179, %v9172
    %v9754 = vpack.c.b16 %v9180, %v9173
    %v9755 = vpack.c.b16 %v9181, %v9174
    %v9756 = vpack.c.b16 %v9182, %v9175
    %v9757 = vpack.c.b16 %v9190, %v9183
    %v9758 = vpack.c.b16 %v9191, %v9184
    %v9759 = vpack.c.b16 %v9192, %v9185
    %v9760 = vpack.c.b16 %v9193, %v9186
    %v9761 = vpack.c.b16 %v9194, %v9187
    %v9762 = vpack.c.b16 %v9195, %v9188
    %v9763 = vpack.c.b16 %v9196, %v9189
    %v9764 = vpack.c.b16 %v9204, %v9197
    %v9765 = vpack.c.b16 %v9205, %v9198
    %v9766 = vpack.c.b16 %v9206, %v9199
    %v9767 = vpack.c.b16 %v9207, %v9200
    %v9768 = vpack.c.b16 %v9208, %v9201
    %v9769 = vpack.c.b16 %v9209, %v9202
    %v9770 = vpack.c.b16 %v9210, %v9203
    %10331 = vmatprep.subr.bf16.mxu0 %v9212
    %10332 = vmatpush1.bf16.msra.mxu0 %v9211
    %10333 = vmatprep.subr.bf16.mxu0 %v9219
    %10334 = vmatpush1.bf16.msra.mxu0 %v9218
    %10335 = vmatprep.subr.bf16.mxu0 %v9226
    %10336 = vmatpush1.bf16.msra.mxu0 %v9225
    %10337 = vmatprep.subr.bf16.mxu0 %v9233
    %10338 = vmatpush1.bf16.msra.mxu0 %v9232
    %10339 = vmatprep.subr.bf16.mxu0 %v9240
    %10340 = vmatpush1.bf16.msra.mxu0 %v9239
    %10341 = vmatprep.subr.bf16.mxu0 %v9247
    %10342 = vmatpush1.bf16.msra.mxu0 %v9246
    %10343 = vmatprep.subr.bf16.mxu0 %v9254
    %10344 = vmatpush1.bf16.msra.mxu0 %v9253
    %10345 = vmatprep.subr.bf16.mxu0 %v9261
    %10346 = vmatpush1.bf16.msra.mxu0 %v9260
    %10347 = vmatprep.subr.bf16.mxu0 %v9268
    %10348 = vmatpush1.bf16.msra.mxu0 %v9267
    %10349 = vmatprep.subr.bf16.mxu0 %v9275
    %10350 = vmatpush1.bf16.msra.mxu0 %v9274
    %10351 = vmatprep.subr.bf16.mxu0 %v9282
    %10352 = vmatpush1.bf16.msra.mxu0 %v9281
    %10353 = vmatprep.subr.bf16.mxu0 %v9289
    %10354 = vmatpush1.bf16.msra.mxu0 %v9288
    %10355 = vmatprep.subr.bf16.mxu0 %v9296
    %10356 = vmatpush1.bf16.msra.mxu0 %v9295
    %10357 = vmatprep.subr.bf16.mxu0 %v9303
    %10358 = vmatpush1.bf16.msra.mxu0 %v9302
    %10359 = vmatprep.subr.bf16.mxu0 %v9310
    %10360 = vmatpush1.bf16.msra.mxu0 %v9309
    %10361 = vmatprep.subr.bf16.mxu0 %v9317
    %10362 = vmatpush1.bf16.msra.mxu0 %v9316
    %10363 = vmatprep.mubr.bf16.mxu0 %v6765
    %10364 = vmatmul.mubr.bf16.gmra.mrb[0].mxu0 %v6764
    %v10365 = vpop.f32.mrb[0].mxu0
    %v10366 = vadd.f32 %v7419, %v10365
    %v10367 = vpop.f32.mrb[0].mxu0
    %v10368 = vadd.f32 %v7423, %v10367
    %v10369 = vpop.f32.mrb[0].mxu0
    %v10370 = vpop.f32.mrb[0].mxu0
    %10371 = vdwg.mxu0
    %10372 = vmatprep.subr.bf16.mxu0 %v9324
    %10373 = vmatpush1.bf16.msra.mxu0 %v9323
    %10374 = vmatprep.subr.bf16.mxu0 %v9331
    %10375 = vmatpush1.bf16.msra.mxu0 %v9330
    %10376 = vmatprep.subr.bf16.mxu0 %v9338
    %10377 = vmatpush1.bf16.msra.mxu0 %v9337
    %10378 = vmatprep.subr.bf16.mxu0 %v9345
    %10379 = vmatpush1.bf16.msra.mxu0 %v9344
    %10380 = vmatprep.subr.bf16.mxu0 %v9352
    %10381 = vmatpush1.bf16.msra.mxu0 %v9351
    %10382 = vmatprep.subr.bf16.mxu0 %v9359
    %10383 = vmatpush1.bf16.msra.mxu0 %v9358
    %10384 = vmatprep.subr.bf16.mxu0 %v9366
    %10385 = vmatpush1.bf16.msra.mxu0 %v9365
    %10386 = vmatprep.subr.bf16.mxu0 %v9373
    %10387 = vmatpush1.bf16.msra.mxu0 %v9372
    %10388 = vmatprep.subr.bf16.mxu0 %v9380
    %10389 = vmatpush1.bf16.msra.mxu0 %v9379
    %10390 = vmatprep.subr.bf16.mxu0 %v9387
    %10391 = vmatpush1.bf16.msra.mxu0 %v9386
    %10392 = vmatprep.subr.bf16.mxu0 %v9394
    %10393 = vmatpush1.bf16.msra.mxu0 %v9393
    %10394 = vmatprep.subr.bf16.mxu0 %v9401
    %10395 = vmatpush1.bf16.msra.mxu0 %v9400
    %10396 = vmatprep.subr.bf16.mxu0 %v9408
    %10397 = vmatpush1.bf16.msra.mxu0 %v9407
    %10398 = vmatprep.subr.bf16.mxu0 %v9415
    %10399 = vmatpush1.bf16.msra.mxu0 %v9414
    %10400 = vmatprep.subr.bf16.mxu0 %v9422
    %10401 = vmatpush1.bf16.msra.mxu0 %v9421
    %10402 = vmatprep.subr.bf16.mxu0 %v9429
    %10403 = vmatpush1.bf16.msra.mxu0 %v9428
    %10404 = vmatprep.mubr.bf16.mxu0 %v6767
    %10405 = vmatmul.mubr.bf16.gmra.mrb[0].mxu0 %v6766
    %v10406 = vpop.f32.mrb[0].mxu0
    %v10407 = vadd.f32 %v10366, %v10406
    %v10408 = vpop.f32.mrb[0].mxu0
    %v10409 = vadd.f32 %v10368, %v10408
    %v10410 = vpop.f32.mrb[0].mxu0
    %v10411 = vpop.f32.mrb[0].mxu0
    %10412 = vdwg.mxu0
    %10413 = vmatprep.subr.bf16.mxu0 %v9436
    %10414 = vmatpush1.bf16.msra.mxu0 %v9435
    %10415 = vmatprep.subr.bf16.mxu0 %v9443
    %10416 = vmatpush1.bf16.msra.mxu0 %v9442
    %10417 = vmatprep.subr.bf16.mxu0 %v9450
    %10418 = vmatpush1.bf16.msra.mxu0 %v9449
    %10419 = vmatprep.subr.bf16.mxu0 %v9457
    %10420 = vmatpush1.bf16.msra.mxu0 %v9456
    %10421 = vmatprep.subr.bf16.mxu0 %v9464
    %10422 = vmatpush1.bf16.msra.mxu0 %v9463
    %10423 = vmatprep.subr.bf16.mxu0 %v9471
    %10424 = vmatpush1.bf16.msra.mxu0 %v9470
    %10425 = vmatprep.subr.bf16.mxu0 %v9478
    %10426 = vmatpush1.bf16.msra.mxu0 %v9477
    %10427 = vmatprep.subr.bf16.mxu0 %v9485
    %10428 = vmatpush1.bf16.msra.mxu0 %v9484
    %10429 = vmatprep.subr.bf16.mxu0 %v9492
    %10430 = vmatpush1.bf16.msra.mxu0 %v9491
    %10431 = vmatprep.subr.bf16.mxu0 %v9499
    %10432 = vmatpush1.bf16.msra.mxu0 %v9498
    %10433 = vmatprep.subr.bf16.mxu0 %v9506
    %10434 = vmatpush1.bf16.msra.mxu0 %v9505
    %10435 = vmatprep.subr.bf16.mxu0 %v9513
    %10436 = vmatpush1.bf16.msra.mxu0 %v9512
    %10437 = vmatprep.subr.bf16.mxu0 %v9520
    %10438 = vmatpush1.bf16.msra.mxu0 %v9519
    %10439 = vmatprep.subr.bf16.mxu0 %v9527
    %10440 = vmatpush1.bf16.msra.mxu0 %v9526
    %10441 = vmatprep.subr.bf16.mxu0 %v9534
    %10442 = vmatpush1.bf16.msra.mxu0 %v9533
    %10443 = vmatprep.subr.bf16.mxu0 %v9541
    %10444 = vmatpush1.bf16.msra.mxu0 %v9540
    %10445 = vmatprep.mubr.bf16.mxu0 %v6769
    %10446 = vmatmul.mubr.bf16.gmra.mrb[0].mxu0 %v6768
    %v10447 = vpop.f32.mrb[0].mxu0
    %v10448 = vadd.f32 %v10407, %v10447
    %v10449 = vpop.f32.mrb[0].mxu0
    %v10450 = vadd.f32 %v10409, %v10449
    %v10451 = vpop.f32.mrb[0].mxu0
    %v10452 = vpop.f32.mrb[0].mxu0
    %10453 = vdwg.mxu0
    %10454 = vmatprep.subr.bf16.mxu0 %v9548
    %10455 = vmatpush1.bf16.msra.mxu0 %v9547
    %10456 = vmatprep.subr.bf16.mxu0 %v9555
    %10457 = vmatpush1.bf16.msra.mxu0 %v9554
    %10458 = vmatprep.subr.bf16.mxu0 %v9562
    %10459 = vmatpush1.bf16.msra.mxu0 %v9561
    %10460 = vmatprep.subr.bf16.mxu0 %v9569
    %10461 = vmatpush1.bf16.msra.mxu0 %v9568
    %10462 = vmatprep.subr.bf16.mxu0 %v9576
    %10463 = vmatpush1.bf16.msra.mxu0 %v9575
    %10464 = vmatprep.subr.bf16.mxu0 %v9583
    %10465 = vmatpush1.bf16.msra.mxu0 %v9582
    %10466 = vmatprep.subr.bf16.mxu0 %v9590
    %10467 = vmatpush1.bf16.msra.mxu0 %v9589
    %10468 = vmatprep.subr.bf16.mxu0 %v9597
    %10469 = vmatpush1.bf16.msra.mxu0 %v9596
    %10470 = vmatprep.subr.bf16.mxu0 %v9604
    %10471 = vmatpush1.bf16.msra.mxu0 %v9603
    %10472 = vmatprep.subr.bf16.mxu0 %v9611
    %10473 = vmatpush1.bf16.msra.mxu0 %v9610
    %10474 = vmatprep.subr.bf16.mxu0 %v9618
    %10475 = vmatpush1.bf16.msra.mxu0 %v9617
    %10476 = vmatprep.subr.bf16.mxu0 %v9625
    %10477 = vmatpush1.bf16.msra.mxu0 %v9624
    %10478 = vmatprep.subr.bf16.mxu0 %v9632
    %10479 = vmatpush1.bf16.msra.mxu0 %v9631
    %10480 = vmatprep.subr.bf16.mxu0 %v9639
    %10481 = vmatpush1.bf16.msra.mxu0 %v9638
    %10482 = vmatprep.subr.bf16.mxu0 %v9646
    %10483 = vmatpush1.bf16.msra.mxu0 %v9645
    %10484 = vmatprep.subr.bf16.mxu0 %v9653
    %10485 = vmatpush1.bf16.msra.mxu0 %v9652
    %10486 = vmatprep.mubr.bf16.mxu0 %v6771
    %10487 = vmatmul.mubr.bf16.gmra.mrb[0].mxu0 %v6770
    %v10488 = vpop.f32.mrb[0].mxu0
    %v10489 = vadd.f32 %v10448, %v10488
    %v10490 = vpop.f32.mrb[0].mxu0
    %v10491 = vadd.f32 %v10450, %v10490
    %v10492 = vpop.f32.mrb[0].mxu0
    %v10493 = vpop.f32.mrb[0].mxu0
    %10494 = vdwg.mxu0
    %10495 = vmatprep.subr.bf16.mxu0 %v9660
    %10496 = vmatpush1.bf16.msra.mxu0 %v9659
    %10497 = vmatprep.subr.bf16.mxu0 %v9667
    %10498 = vmatpush1.bf16.msra.mxu0 %v9666
    %10499 = vmatprep.subr.bf16.mxu0 %v9674
    %10500 = vmatpush1.bf16.msra.mxu0 %v9673
    %10501 = vmatprep.subr.bf16.mxu0 %v9681
    %10502 = vmatpush1.bf16.msra.mxu0 %v9680
    %10503 = vmatprep.subr.bf16.mxu0 %v9688
    %10504 = vmatpush1.bf16.msra.mxu0 %v9687
    %10505 = vmatprep.subr.bf16.mxu0 %v9695
    %10506 = vmatpush1.bf16.msra.mxu0 %v9694
    %10507 = vmatprep.subr.bf16.mxu0 %v9702
    %10508 = vmatpush1.bf16.msra.mxu0 %v9701
    %10509 = vmatprep.subr.bf16.mxu0 %v9709
    %10510 = vmatpush1.bf16.msra.mxu0 %v9708
    %10511 = vmatprep.subr.bf16.mxu0 %v9716
    %10512 = vmatpush1.bf16.msra.mxu0 %v9715
    %10513 = vmatprep.subr.bf16.mxu0 %v9723
    %10514 = vmatpush1.bf16.msra.mxu0 %v9722
    %10515 = vmatprep.subr.bf16.mxu0 %v9730
    %10516 = vmatpush1.bf16.msra.mxu0 %v9729
    %10517 = vmatprep.subr.bf16.mxu0 %v9737
    %10518 = vmatpush1.bf16.msra.mxu0 %v9736
    %10519 = vmatprep.subr.bf16.mxu0 %v9744
    %10520 = vmatpush1.bf16.msra.mxu0 %v9743
    %10521 = vmatprep.subr.bf16.mxu0 %v9751
    %10522 = vmatpush1.bf16.msra.mxu0 %v9750
    %10523 = vmatprep.subr.bf16.mxu0 %v9758
    %10524 = vmatpush1.bf16.msra.mxu0 %v9757
    %10525 = vmatprep.subr.bf16.mxu0 %v9765
    %10526 = vmatpush1.bf16.msra.mxu0 %v9764
    %10527 = vmatprep.mubr.bf16.mxu0 %v6773
    %10528 = vmatmul.mubr.bf16.gmra.mrb[0].mxu0 %v6772
    %v10529 = vpop.f32.mrb[0].mxu0
    %v10530 = vadd.f32 %v10489, %v10529
    %v10531 = vpop.f32.mrb[0].mxu0
    %v10532 = vadd.f32 %v10491, %v10531
    %v10533 = vpop.f32.mrb[0].mxu0
    %v10534 = vpop.f32.mrb[0].mxu0
    %10535 = vdwg.mxu0
    %10536 = vmatprep.subr.bf16.mxu0 %v9214
    %10537 = vmatpush1.bf16.msra.mxu0 %v9213
    %10538 = vmatprep.subr.bf16.mxu0 %v9221
    %10539 = vmatpush1.bf16.msra.mxu0 %v9220
    %10540 = vmatprep.subr.bf16.mxu0 %v9228
    %10541 = vmatpush1.bf16.msra.mxu0 %v9227
    %10542 = vmatprep.subr.bf16.mxu0 %v9235
    %10543 = vmatpush1.bf16.msra.mxu0 %v9234
    %10544 = vmatprep.subr.bf16.mxu0 %v9242
    %10545 = vmatpush1.bf16.msra.mxu0 %v9241
    %10546 = vmatprep.subr.bf16.mxu0 %v9249
    %10547 = vmatpush1.bf16.msra.mxu0 %v9248
    %10548 = vmatprep.subr.bf16.mxu0 %v9256
    %10549 = vmatpush1.bf16.msra.mxu0 %v9255
    %10550 = vmatprep.subr.bf16.mxu0 %v9263
    %10551 = vmatpush1.bf16.msra.mxu0 %v9262
    %10552 = vmatprep.subr.bf16.mxu0 %v9270
    %10553 = vmatpush1.bf16.msra.mxu0 %v9269
    %10554 = vmatprep.subr.bf16.mxu0 %v9277
    %10555 = vmatpush1.bf16.msra.mxu0 %v9276
    %10556 = vmatprep.subr.bf16.mxu0 %v9284
    %10557 = vmatpush1.bf16.msra.mxu0 %v9283
    %10558 = vmatprep.subr.bf16.mxu0 %v9291
    %10559 = vmatpush1.bf16.msra.mxu0 %v9290
    %10560 = vmatprep.subr.bf16.mxu0 %v9298
    %10561 = vmatpush1.bf16.msra.mxu0 %v9297
    %10562 = vmatprep.subr.bf16.mxu0 %v9305
    %10563 = vmatpush1.bf16.msra.mxu0 %v9304
    %10564 = vmatprep.subr.bf16.mxu0 %v9312
    %10565 = vmatpush1.bf16.msra.mxu0 %v9311
    %10566 = vmatprep.subr.bf16.mxu0 %v9319
    %10567 = vmatpush1.bf16.msra.mxu0 %v9318
    %10568 = vmatprep.mubr.bf16.mxu0 %v6765
    %10569 = vmatmul.mubr.bf16.gmra.mrb[0].mxu0 %v6764
    %v10570 = vpop.f32.mrb[0].mxu0
    %v10571 = vadd.f32 %v7427, %v10570
    %v10572 = vpop.f32.mrb[0].mxu0
    %v10573 = vadd.f32 %v7431, %v10572
    %v10574 = vpop.f32.mrb[0].mxu0
    %v10575 = vpop.f32.mrb[0].mxu0
    %10576 = vdwg.mxu0
    %10577 = vmatprep.subr.bf16.mxu0 %v9326
    %10578 = vmatpush1.bf16.msra.mxu0 %v9325
    %10579 = vmatprep.subr.bf16.mxu0 %v9333
    %10580 = vmatpush1.bf16.msra.mxu0 %v9332
    %10581 = vmatprep.subr.bf16.mxu0 %v9340
    %10582 = vmatpush1.bf16.msra.mxu0 %v9339
    %10583 = vmatprep.subr.bf16.mxu0 %v9347
    %10584 = vmatpush1.bf16.msra.mxu0 %v9346
    %10585 = vmatprep.subr.bf16.mxu0 %v9354
    %10586 = vmatpush1.bf16.msra.mxu0 %v9353
    %10587 = vmatprep.subr.bf16.mxu0 %v9361
    %10588 = vmatpush1.bf16.msra.mxu0 %v9360
    %10589 = vmatprep.subr.bf16.mxu0 %v9368
    %10590 = vmatpush1.bf16.msra.mxu0 %v9367
    %10591 = vmatprep.subr.bf16.mxu0 %v9375
    %10592 = vmatpush1.bf16.msra.mxu0 %v9374
    %10593 = vmatprep.subr.bf16.mxu0 %v9382
    %10594 = vmatpush1.bf16.msra.mxu0 %v9381
    %10595 = vmatprep.subr.bf16.mxu0 %v9389
    %10596 = vmatpush1.bf16.msra.mxu0 %v9388
    %10597 = vmatprep.subr.bf16.mxu0 %v9396
    %10598 = vmatpush1.bf16.msra.mxu0 %v9395
    %10599 = vmatprep.subr.bf16.mxu0 %v9403
    %10600 = vmatpush1.bf16.msra.mxu0 %v9402
    %10601 = vmatprep.subr.bf16.mxu0 %v9410
    %10602 = vmatpush1.bf16.msra.mxu0 %v9409
    %10603 = vmatprep.subr.bf16.mxu0 %v9417
    %10604 = vmatpush1.bf16.msra.mxu0 %v9416
    %10605 = vmatprep.subr.bf16.mxu0 %v9424
    %10606 = vmatpush1.bf16.msra.mxu0 %v9423
    %10607 = vmatprep.subr.bf16.mxu0 %v9431
    %10608 = vmatpush1.bf16.msra.mxu0 %v9430
    %10609 = vmatprep.mubr.bf16.mxu0 %v6767
    %10610 = vmatmul.mubr.bf16.gmra.mrb[0].mxu0 %v6766
    %v10611 = vpop.f32.mrb[0].mxu0
    %v10612 = vadd.f32 %v10571, %v10611
    %v10613 = vpop.f32.mrb[0].mxu0
    %v10614 = vadd.f32 %v10573, %v10613
    %v10615 = vpop.f32.mrb[0].mxu0
    %v10616 = vpop.f32.mrb[0].mxu0
    %10617 = vdwg.mxu0
    %10618 = vmatprep.subr.bf16.mxu0 %v9438
    %10619 = vmatpush1.bf16.msra.mxu0 %v9437
    %10620 = vmatprep.subr.bf16.mxu0 %v9445
    %10621 = vmatpush1.bf16.msra.mxu0 %v9444
    %10622 = vmatprep.subr.bf16.mxu0 %v9452
    %10623 = vmatpush1.bf16.msra.mxu0 %v9451
    %10624 = vmatprep.subr.bf16.mxu0 %v9459
    %10625 = vmatpush1.bf16.msra.mxu0 %v9458
    %10626 = vmatprep.subr.bf16.mxu0 %v9466
    %10627 = vmatpush1.bf16.msra.mxu0 %v9465
    %10628 = vmatprep.subr.bf16.mxu0 %v9473
    %10629 = vmatpush1.bf16.msra.mxu0 %v9472
    %10630 = vmatprep.subr.bf16.mxu0 %v9480
    %10631 = vmatpush1.bf16.msra.mxu0 %v9479
    %10632 = vmatprep.subr.bf16.mxu0 %v9487
    %10633 = vmatpush1.bf16.msra.mxu0 %v9486
    %10634 = vmatprep.subr.bf16.mxu0 %v9494
    %10635 = vmatpush1.bf16.msra.mxu0 %v9493
    %10636 = vmatprep.subr.bf16.mxu0 %v9501
    %10637 = vmatpush1.bf16.msra.mxu0 %v9500
    %10638 = vmatprep.subr.bf16.mxu0 %v9508
    %10639 = vmatpush1.bf16.msra.mxu0 %v9507
    %10640 = vmatprep.subr.bf16.mxu0 %v9515
    %10641 = vmatpush1.bf16.msra.mxu0 %v9514
    %10642 = vmatprep.subr.bf16.mxu0 %v9522
    %10643 = vmatpush1.bf16.msra.mxu0 %v9521
    %10644 = vmatprep.subr.bf16.mxu0 %v9529
    %10645 = vmatpush1.bf16.msra.mxu0 %v9528
    %10646 = vmatprep.subr.bf16.mxu0 %v9536
    %10647 = vmatpush1.bf16.msra.mxu0 %v9535
    %10648 = vmatprep.subr.bf16.mxu0 %v9543
    %10649 = vmatpush1.bf16.msra.mxu0 %v9542
    %10650 = vmatprep.mubr.bf16.mxu0 %v6769
    %10651 = vmatmul.mubr.bf16.gmra.mrb[0].mxu0 %v6768
    %v10652 = vpop.f32.mrb[0].mxu0
    %v10653 = vadd.f32 %v10612, %v10652
    %v10654 = vpop.f32.mrb[0].mxu0
    %v10655 = vadd.f32 %v10614, %v10654
    %v10656 = vpop.f32.mrb[0].mxu0
    %v10657 = vpop.f32.mrb[0].mxu0
    %10658 = vdwg.mxu0
    %10659 = vmatprep.subr.bf16.mxu0 %v9550
    %10660 = vmatpush1.bf16.msra.mxu0 %v9549
    %10661 = vmatprep.subr.bf16.mxu0 %v9557
    %10662 = vmatpush1.bf16.msra.mxu0 %v9556
    %10663 = vmatprep.subr.bf16.mxu0 %v9564
    %10664 = vmatpush1.bf16.msra.mxu0 %v9563
    %10665 = vmatprep.subr.bf16.mxu0 %v9571
    %10666 = vmatpush1.bf16.msra.mxu0 %v9570
    %10667 = vmatprep.subr.bf16.mxu0 %v9578
    %10668 = vmatpush1.bf16.msra.mxu0 %v9577
    %10669 = vmatprep.subr.bf16.mxu0 %v9585
    %10670 = vmatpush1.bf16.msra.mxu0 %v9584
    %10671 = vmatprep.subr.bf16.mxu0 %v9592
    %10672 = vmatpush1.bf16.msra.mxu0 %v9591
    %10673 = vmatprep.subr.bf16.mxu0 %v9599
    %10674 = vmatpush1.bf16.msra.mxu0 %v9598
    %10675 = vmatprep.subr.bf16.mxu0 %v9606
    %10676 = vmatpush1.bf16.msra.mxu0 %v9605
    %10677 = vmatprep.subr.bf16.mxu0 %v9613
    %10678 = vmatpush1.bf16.msra.mxu0 %v9612
    %10679 = vmatprep.subr.bf16.mxu0 %v9620
    %10680 = vmatpush1.bf16.msra.mxu0 %v9619
    %10681 = vmatprep.subr.bf16.mxu0 %v9627
    %10682 = vmatpush1.bf16.msra.mxu0 %v9626
    %10683 = vmatprep.subr.bf16.mxu0 %v9634
    %10684 = vmatpush1.bf16.msra.mxu0 %v9633
    %10685 = vmatprep.subr.bf16.mxu0 %v9641
    %10686 = vmatpush1.bf16.msra.mxu0 %v9640
    %10687 = vmatprep.subr.bf16.mxu0 %v9648
    %10688 = vmatpush1.bf16.msra.mxu0 %v9647
    %10689 = vmatprep.subr.bf16.mxu0 %v9655
    %10690 = vmatpush1.bf16.msra.mxu0 %v9654
    %10691 = vmatprep.mubr.bf16.mxu0 %v6771
    %10692 = vmatmul.mubr.bf16.gmra.mrb[0].mxu0 %v6770
    %v10693 = vpop.f32.mrb[0].mxu0
    %v10694 = vadd.f32 %v10653, %v10693
    %v10695 = vpop.f32.mrb[0].mxu0
    %v10696 = vadd.f32 %v10655, %v10695
    %v10697 = vpop.f32.mrb[0].mxu0
    %v10698 = vpop.f32.mrb[0].mxu0
    %10699 = vdwg.mxu0
    %10700 = vmatprep.subr.bf16.mxu0 %v9662
    %10701 = vmatpush1.bf16.msra.mxu0 %v9661
    %10702 = vmatprep.subr.bf16.mxu0 %v9669
    %10703 = vmatpush1.bf16.msra.mxu0 %v9668
    %10704 = vmatprep.subr.bf16.mxu0 %v9676
    %10705 = vmatpush1.bf16.msra.mxu0 %v9675
    %10706 = vmatprep.subr.bf16.mxu0 %v9683
    %10707 = vmatpush1.bf16.msra.mxu0 %v9682
    %10708 = vmatprep.subr.bf16.mxu0 %v9690
    %10709 = vmatpush1.bf16.msra.mxu0 %v9689
    %10710 = vmatprep.subr.bf16.mxu0 %v9697
    %10711 = vmatpush1.bf16.msra.mxu0 %v9696
    %10712 = vmatprep.subr.bf16.mxu0 %v9704
    %10713 = vmatpush1.bf16.msra.mxu0 %v9703
    %10714 = vmatprep.subr.bf16.mxu0 %v9711
    %10715 = vmatpush1.bf16.msra.mxu0 %v9710
    %10716 = vmatprep.subr.bf16.mxu0 %v9718
    %10717 = vmatpush1.bf16.msra.mxu0 %v9717
    %10718 = vmatprep.subr.bf16.mxu0 %v9725
    %10719 = vmatpush1.bf16.msra.mxu0 %v9724
    %10720 = vmatprep.subr.bf16.mxu0 %v9732
    %10721 = vmatpush1.bf16.msra.mxu0 %v9731
    %10722 = vmatprep.subr.bf16.mxu0 %v9739
    %10723 = vmatpush1.bf16.msra.mxu0 %v9738
    %10724 = vmatprep.subr.bf16.mxu0 %v9746
    %10725 = vmatpush1.bf16.msra.mxu0 %v9745
    %10726 = vmatprep.subr.bf16.mxu0 %v9753
    %10727 = vmatpush1.bf16.msra.mxu0 %v9752
    %10728 = vmatprep.subr.bf16.mxu0 %v9760
    %10729 = vmatpush1.bf16.msra.mxu0 %v9759
    %10730 = vmatprep.subr.bf16.mxu0 %v9767
    %10731 = vmatpush1.bf16.msra.mxu0 %v9766
    %10732 = vmatprep.mubr.bf16.mxu0 %v6773
    %10733 = vmatmul.mubr.bf16.gmra.mrb[0].mxu0 %v6772
    %v10734 = vpop.f32.mrb[0].mxu0
    %v10735 = vadd.f32 %v10694, %v10734
    %v10736 = vpop.f32.mrb[0].mxu0
    %v10737 = vadd.f32 %v10696, %v10736
    %v10738 = vpop.f32.mrb[0].mxu0
    %v10739 = vpop.f32.mrb[0].mxu0
    %10740 = vdwg.mxu0
    %10741 = vmatprep.subr.bf16.mxu0 %v9216
    %10742 = vmatpush1.bf16.msra.mxu0 %v9215
    %10743 = vmatprep.subr.bf16.mxu0 %v9223
    %10744 = vmatpush1.bf16.msra.mxu0 %v9222
    %10745 = vmatprep.subr.bf16.mxu0 %v9230
    %10746 = vmatpush1.bf16.msra.mxu0 %v9229
    %10747 = vmatprep.subr.bf16.mxu0 %v9237
    %10748 = vmatpush1.bf16.msra.mxu0 %v9236
    %10749 = vmatprep.subr.bf16.mxu0 %v9244
    %10750 = vmatpush1.bf16.msra.mxu0 %v9243
    %10751 = vmatprep.subr.bf16.mxu0 %v9251
    %10752 = vmatpush1.bf16.msra.mxu0 %v9250
    %10753 = vmatprep.subr.bf16.mxu0 %v9258
    %10754 = vmatpush1.bf16.msra.mxu0 %v9257
    %10755 = vmatprep.subr.bf16.mxu0 %v9265
    %10756 = vmatpush1.bf16.msra.mxu0 %v9264
    %10757 = vmatprep.subr.bf16.mxu0 %v9272
    %10758 = vmatpush1.bf16.msra.mxu0 %v9271
    %10759 = vmatprep.subr.bf16.mxu0 %v9279
    %10760 = vmatpush1.bf16.msra.mxu0 %v9278
    %10761 = vmatprep.subr.bf16.mxu0 %v9286
    %10762 = vmatpush1.bf16.msra.mxu0 %v9285
    %10763 = vmatprep.subr.bf16.mxu0 %v9293
    %10764 = vmatpush1.bf16.msra.mxu0 %v9292
    %10765 = vmatprep.subr.bf16.mxu0 %v9300
    %10766 = vmatpush1.bf16.msra.mxu0 %v9299
    %10767 = vmatprep.subr.bf16.mxu0 %v9307
    %10768 = vmatpush1.bf16.msra.mxu0 %v9306
    %10769 = vmatprep.subr.bf16.mxu0 %v9314
    %10770 = vmatpush1.bf16.msra.mxu0 %v9313
    %10771 = vmatprep.subr.bf16.mxu0 %v9321
    %10772 = vmatpush1.bf16.msra.mxu0 %v9320
    %10773 = vmatprep.mubr.bf16.mxu0 %v6765
    %10774 = vmatmul.mubr.bf16.gmra.mrb[0].mxu0 %v6764
    %v10775 = vpop.f32.mrb[0].mxu0
    %v10776 = vadd.f32 %v7435, %v10775
    %v10777 = vpop.f32.mrb[0].mxu0
    %v10778 = vadd.f32 %v7439, %v10777
    %v10779 = vpop.f32.mrb[0].mxu0
    %v10780 = vpop.f32.mrb[0].mxu0
    %10781 = vdwg.mxu0
    %10782 = vmatprep.subr.bf16.mxu0 %v9328
    %10783 = vmatpush1.bf16.msra.mxu0 %v9327
    %10784 = vmatprep.subr.bf16.mxu0 %v9335
    %10785 = vmatpush1.bf16.msra.mxu0 %v9334
    %10786 = vmatprep.subr.bf16.mxu0 %v9342
    %10787 = vmatpush1.bf16.msra.mxu0 %v9341
    %10788 = vmatprep.subr.bf16.mxu0 %v9349
    %10789 = vmatpush1.bf16.msra.mxu0 %v9348
    %10790 = vmatprep.subr.bf16.mxu0 %v9356
    %10791 = vmatpush1.bf16.msra.mxu0 %v9355
    %10792 = vmatprep.subr.bf16.mxu0 %v9363
    %10793 = vmatpush1.bf16.msra.mxu0 %v9362
    %10794 = vmatprep.subr.bf16.mxu0 %v9370
    %10795 = vmatpush1.bf16.msra.mxu0 %v9369
    %10796 = vmatprep.subr.bf16.mxu0 %v9377
    %10797 = vmatpush1.bf16.msra.mxu0 %v9376
    %10798 = vmatprep.subr.bf16.mxu0 %v9384
    %10799 = vmatpush1.bf16.msra.mxu0 %v9383
    %10800 = vmatprep.subr.bf16.mxu0 %v9391
    %10801 = vmatpush1.bf16.msra.mxu0 %v9390
    %10802 = vmatprep.subr.bf16.mxu0 %v9398
    %10803 = vmatpush1.bf16.msra.mxu0 %v9397
    %10804 = vmatprep.subr.bf16.mxu0 %v9405
    %10805 = vmatpush1.bf16.msra.mxu0 %v9404
    %10806 = vmatprep.subr.bf16.mxu0 %v9412
    %10807 = vmatpush1.bf16.msra.mxu0 %v9411
    %10808 = vmatprep.subr.bf16.mxu0 %v9419
    %10809 = vmatpush1.bf16.msra.mxu0 %v9418
    %10810 = vmatprep.subr.bf16.mxu0 %v9426
    %10811 = vmatpush1.bf16.msra.mxu0 %v9425
    %10812 = vmatprep.subr.bf16.mxu0 %v9433
    %10813 = vmatpush1.bf16.msra.mxu0 %v9432
    %10814 = vmatprep.mubr.bf16.mxu0 %v6767
    %10815 = vmatmul.mubr.bf16.gmra.mrb[0].mxu0 %v6766
    %v10816 = vpop.f32.mrb[0].mxu0
    %v10817 = vadd.f32 %v10776, %v10816
    %v10818 = vpop.f32.mrb[0].mxu0
    %v10819 = vadd.f32 %v10778, %v10818
    %v10820 = vpop.f32.mrb[0].mxu0
    %v10821 = vpop.f32.mrb[0].mxu0
    %10822 = vdwg.mxu0
    %10823 = vmatprep.subr.bf16.mxu0 %v9440
    %10824 = vmatpush1.bf16.msra.mxu0 %v9439
    %10825 = vmatprep.subr.bf16.mxu0 %v9447
    %10826 = vmatpush1.bf16.msra.mxu0 %v9446
    %10827 = vmatprep.subr.bf16.mxu0 %v9454
    %10828 = vmatpush1.bf16.msra.mxu0 %v9453
    %10829 = vmatprep.subr.bf16.mxu0 %v9461
    %10830 = vmatpush1.bf16.msra.mxu0 %v9460
    %10831 = vmatprep.subr.bf16.mxu0 %v9468
    %10832 = vmatpush1.bf16.msra.mxu0 %v9467
    %10833 = vmatprep.subr.bf16.mxu0 %v9475
    %10834 = vmatpush1.bf16.msra.mxu0 %v9474
    %10835 = vmatprep.subr.bf16.mxu0 %v9482
    %10836 = vmatpush1.bf16.msra.mxu0 %v9481
    %10837 = vmatprep.subr.bf16.mxu0 %v9489
    %10838 = vmatpush1.bf16.msra.mxu0 %v9488
    %10839 = vmatprep.subr.bf16.mxu0 %v9496
    %10840 = vmatpush1.bf16.msra.mxu0 %v9495
    %10841 = vmatprep.subr.bf16.mxu0 %v9503
    %10842 = vmatpush1.bf16.msra.mxu0 %v9502
    %10843 = vmatprep.subr.bf16.mxu0 %v9510
    %10844 = vmatpush1.bf16.msra.mxu0 %v9509
    %10845 = vmatprep.subr.bf16.mxu0 %v9517
    %10846 = vmatpush1.bf16.msra.mxu0 %v9516
    %10847 = vmatprep.subr.bf16.mxu0 %v9524
    %10848 = vmatpush1.bf16.msra.mxu0 %v9523
    %10849 = vmatprep.subr.bf16.mxu0 %v9531
    %10850 = vmatpush1.bf16.msra.mxu0 %v9530
    %10851 = vmatprep.subr.bf16.mxu0 %v9538
    %10852 = vmatpush1.bf16.msra.mxu0 %v9537
    %10853 = vmatprep.subr.bf16.mxu0 %v9545
    %10854 = vmatpush1.bf16.msra.mxu0 %v9544
    %10855 = vmatprep.mubr.bf16.mxu0 %v6769
    %10856 = vmatmul.mubr.bf16.gmra.mrb[0].mxu0 %v6768
    %v10857 = vpop.f32.mrb[0].mxu0
    %v10858 = vadd.f32 %v10817, %v10857
    %v10859 = vpop.f32.mrb[0].mxu0
    %v10860 = vadd.f32 %v10819, %v10859
    %v10861 = vpop.f32.mrb[0].mxu0
    %v10862 = vpop.f32.mrb[0].mxu0
    %10863 = vdwg.mxu0
    %10864 = vmatprep.subr.bf16.mxu0 %v9552
    %10865 = vmatpush1.bf16.msra.mxu0 %v9551
    %10866 = vmatprep.subr.bf16.mxu0 %v9559
    %10867 = vmatpush1.bf16.msra.mxu0 %v9558
    %10868 = vmatprep.subr.bf16.mxu0 %v9566
    %10869 = vmatpush1.bf16.msra.mxu0 %v9565
    %10870 = vmatprep.subr.bf16.mxu0 %v9573
    %10871 = vmatpush1.bf16.msra.mxu0 %v9572
    %10872 = vmatprep.subr.bf16.mxu0 %v9580
    %10873 = vmatpush1.bf16.msra.mxu0 %v9579
    %10874 = vmatprep.subr.bf16.mxu0 %v9587
    %10875 = vmatpush1.bf16.msra.mxu0 %v9586
    %10876 = vmatprep.subr.bf16.mxu0 %v9594
    %10877 = vmatpush1.bf16.msra.mxu0 %v9593
    %10878 = vmatprep.subr.bf16.mxu0 %v9601
    %10879 = vmatpush1.bf16.msra.mxu0 %v9600
    %10880 = vmatprep.subr.bf16.mxu0 %v9608
    %10881 = vmatpush1.bf16.msra.mxu0 %v9607
    %10882 = vmatprep.subr.bf16.mxu0 %v9615
    %10883 = vmatpush1.bf16.msra.mxu0 %v9614
    %10884 = vmatprep.subr.bf16.mxu0 %v9622
    %10885 = vmatpush1.bf16.msra.mxu0 %v9621
    %10886 = vmatprep.subr.bf16.mxu0 %v9629
    %10887 = vmatpush1.bf16.msra.mxu0 %v9628
    %10888 = vmatprep.subr.bf16.mxu0 %v9636
    %10889 = vmatpush1.bf16.msra.mxu0 %v9635
    %10890 = vmatprep.subr.bf16.mxu0 %v9643
    %10891 = vmatpush1.bf16.msra.mxu0 %v9642
    %10892 = vmatprep.subr.bf16.mxu0 %v9650
    %10893 = vmatpush1.bf16.msra.mxu0 %v9649
    %10894 = vmatprep.subr.bf16.mxu0 %v9657
    %10895 = vmatpush1.bf16.msra.mxu0 %v9656
    %10896 = vmatprep.mubr.bf16.mxu0 %v6771
    %10897 = vmatmul.mubr.bf16.gmra.mrb[0].mxu0 %v6770
    %v10898 = vpop.f32.mrb[0].mxu0
    %v10899 = vadd.f32 %v10858, %v10898
    %v10900 = vpop.f32.mrb[0].mxu0
    %v10901 = vadd.f32 %v10860, %v10900
    %v10902 = vpop.f32.mrb[0].mxu0
    %v10903 = vpop.f32.mrb[0].mxu0
    %10904 = vdwg.mxu0
    %10905 = vmatprep.subr.bf16.mxu0 %v9664
    %10906 = vmatpush1.bf16.msra.mxu0 %v9663
    %10907 = vmatprep.subr.bf16.mxu0 %v9671
    %10908 = vmatpush1.bf16.msra.mxu0 %v9670
    %10909 = vmatprep.subr.bf16.mxu0 %v9678
    %10910 = vmatpush1.bf16.msra.mxu0 %v9677
    %10911 = vmatprep.subr.bf16.mxu0 %v9685
    %10912 = vmatpush1.bf16.msra.mxu0 %v9684
    %10913 = vmatprep.subr.bf16.mxu0 %v9692
    %10914 = vmatpush1.bf16.msra.mxu0 %v9691
    %10915 = vmatprep.subr.bf16.mxu0 %v9699
    %10916 = vmatpush1.bf16.msra.mxu0 %v9698
    %10917 = vmatprep.subr.bf16.mxu0 %v9706
    %10918 = vmatpush1.bf16.msra.mxu0 %v9705
    %10919 = vmatprep.subr.bf16.mxu0 %v9713
    %10920 = vmatpush1.bf16.msra.mxu0 %v9712
    %10921 = vmatprep.subr.bf16.mxu0 %v9720
    %10922 = vmatpush1.bf16.msra.mxu0 %v9719
    %10923 = vmatprep.subr.bf16.mxu0 %v9727
    %10924 = vmatpush1.bf16.msra.mxu0 %v9726
    %10925 = vmatprep.subr.bf16.mxu0 %v9734
    %10926 = vmatpush1.bf16.msra.mxu0 %v9733
    %10927 = vmatprep.subr.bf16.mxu0 %v9741
    %10928 = vmatpush1.bf16.msra.mxu0 %v9740
    %10929 = vmatprep.subr.bf16.mxu0 %v9748
    %10930 = vmatpush1.bf16.msra.mxu0 %v9747
    %10931 = vmatprep.subr.bf16.mxu0 %v9755
    %10932 = vmatpush1.bf16.msra.mxu0 %v9754
    %10933 = vmatprep.subr.bf16.mxu0 %v9762
    %10934 = vmatpush1.bf16.msra.mxu0 %v9761
    %10935 = vmatprep.subr.bf16.mxu0 %v9769
    %10936 = vmatpush1.bf16.msra.mxu0 %v9768
    %10937 = vmatprep.mubr.bf16.mxu0 %v6773
    %10938 = vmatmul.mubr.bf16.gmra.mrb[0].mxu0 %v6772
    %v10939 = vpop.f32.mrb[0].mxu0
    %v10940 = vadd.f32 %v10899, %v10939
    %v10941 = vpop.f32.mrb[0].mxu0
    %v10942 = vadd.f32 %v10901, %v10941
    %v10943 = vpop.f32.mrb[0].mxu0
    %v10944 = vpop.f32.mrb[0].mxu0
    %10945 = vdwg.mxu0
    %10946 = vmatprep.subr.bf16.mxu0 0
    %10947 = vmatpush1.bf16.msra.mxu0 %v9217
    %10948 = vmatprep.subr.bf16.mxu0 0
    %10949 = vmatpush1.bf16.msra.mxu0 %v9224
    %10950 = vmatprep.subr.bf16.mxu0 0
    %10951 = vmatpush1.bf16.msra.mxu0 %v9231
    %10952 = vmatprep.subr.bf16.mxu0 0
    %10953 = vmatpush1.bf16.msra.mxu0 %v9238
    %10954 = vmatprep.subr.bf16.mxu0 0
    %10955 = vmatpush1.bf16.msra.mxu0 %v9245
    %10956 = vmatprep.subr.bf16.mxu0 0
    %10957 = vmatpush1.bf16.msra.mxu0 %v9252
    %10958 = vmatprep.subr.bf16.mxu0 0
    %10959 = vmatpush1.bf16.msra.mxu0 %v9259
    %10960 = vmatprep.subr.bf16.mxu0 0
    %10961 = vmatpush1.bf16.msra.mxu0 %v9266
    %10962 = vmatprep.subr.bf16.mxu0 0
    %10963 = vmatpush1.bf16.msra.mxu0 %v9273
    %10964 = vmatprep.subr.bf16.mxu0 0
    %10965 = vmatpush1.bf16.msra.mxu0 %v9280
    %10966 = vmatprep.subr.bf16.mxu0 0
    %10967 = vmatpush1.bf16.msra.mxu0 %v9287
    %10968 = vmatprep.subr.bf16.mxu0 0
    %10969 = vmatpush1.bf16.msra.mxu0 %v9294
    %10970 = vmatprep.subr.bf16.mxu0 0
    %10971 = vmatpush1.bf16.msra.mxu0 %v9301
    %10972 = vmatprep.subr.bf16.mxu0 0
    %10973 = vmatpush1.bf16.msra.mxu0 %v9308
    %10974 = vmatprep.subr.bf16.mxu0 0
    %10975 = vmatpush1.bf16.msra.mxu0 %v9315
    %10976 = vmatprep.subr.bf16.mxu0 0
    %10977 = vmatpush1.bf16.msra.mxu0 %v9322
    %10978 = vmatprep.mubr.bf16.mxu0 %v6765
    %10979 = vmatmul.mubr.bf16.gmra.mrb[0].mxu0 %v6764
    %v10980 = vpop.f32.mrb[0].mxu0
    %v10981 = vadd.f32 %v7443, %v10980
    %v10982 = vpop.f32.mrb[0].mxu0
    %v10983 = vpop.f32.mrb[0].mxu0
    %v10984 = vpop.f32.mrb[0].mxu0
    %10985 = vdwg.mxu0
    %10986 = vmatprep.subr.bf16.mxu0 0
    %10987 = vmatpush1.bf16.msra.mxu0 %v9329
    %10988 = vmatprep.subr.bf16.mxu0 0
    %10989 = vmatpush1.bf16.msra.mxu0 %v9336
    %10990 = vmatprep.subr.bf16.mxu0 0
    %10991 = vmatpush1.bf16.msra.mxu0 %v9343
    %10992 = vmatprep.subr.bf16.mxu0 0
    %10993 = vmatpush1.bf16.msra.mxu0 %v9350
    %10994 = vmatprep.subr.bf16.mxu0 0
    %10995 = vmatpush1.bf16.msra.mxu0 %v9357
    %10996 = vmatprep.subr.bf16.mxu0 0
    %10997 = vmatpush1.bf16.msra.mxu0 %v9364
    %10998 = vmatprep.subr.bf16.mxu0 0
    %10999 = vmatpush1.bf16.msra.mxu0 %v9371
    %11000 = vmatprep.subr.bf16.mxu0 0
    %11001 = vmatpush1.bf16.msra.mxu0 %v9378
    %11002 = vmatprep.subr.bf16.mxu0 0
    %11003 = vmatpush1.bf16.msra.mxu0 %v9385
    %11004 = vmatprep.subr.bf16.mxu0 0
    %11005 = vmatpush1.bf16.msra.mxu0 %v9392
    %11006 = vmatprep.subr.bf16.mxu0 0
    %11007 = vmatpush1.bf16.msra.mxu0 %v9399
    %11008 = vmatprep.subr.bf16.mxu0 0
    %11009 = vmatpush1.bf16.msra.mxu0 %v9406
    %11010 = vmatprep.subr.bf16.mxu0 0
    %11011 = vmatpush1.bf16.msra.mxu0 %v9413
    %11012 = vmatprep.subr.bf16.mxu0 0
    %11013 = vmatpush1.bf16.msra.mxu0 %v9420
    %11014 = vmatprep.subr.bf16.mxu0 0
    %11015 = vmatpush1.bf16.msra.mxu0 %v9427
    %11016 = vmatprep.subr.bf16.mxu0 0
    %11017 = vmatpush1.bf16.msra.mxu0 %v9434
    %11018 = vmatprep.mubr.bf16.mxu0 %v6767
    %11019 = vmatmul.mubr.bf16.gmra.mrb[0].mxu0 %v6766
    %v11020 = vpop.f32.mrb[0].mxu0
    %v11021 = vadd.f32 %v10981, %v11020
    %v11022 = vpop.f32.mrb[0].mxu0
    %v11023 = vpop.f32.mrb[0].mxu0
    %v11024 = vpop.f32.mrb[0].mxu0
    %11025 = vdwg.mxu0
    %11026 = vmatprep.subr.bf16.mxu0 0
    %11027 = vmatpush1.bf16.msra.mxu0 %v9441
    %11028 = vmatprep.subr.bf16.mxu0 0
    %11029 = vmatpush1.bf16.msra.mxu0 %v9448
    %11030 = vmatprep.subr.bf16.mxu0 0
    %11031 = vmatpush1.bf16.msra.mxu0 %v9455
    %11032 = vmatprep.subr.bf16.mxu0 0
    %11033 = vmatpush1.bf16.msra.mxu0 %v9462
    %11034 = vmatprep.subr.bf16.mxu0 0
    %11035 = vmatpush1.bf16.msra.mxu0 %v9469
    %11036 = vmatprep.subr.bf16.mxu0 0
    %11037 = vmatpush1.bf16.msra.mxu0 %v9476
    %11038 = vmatprep.subr.bf16.mxu0 0
    %11039 = vmatpush1.bf16.msra.mxu0 %v9483
    %11040 = vmatprep.subr.bf16.mxu0 0
    %11041 = vmatpush1.bf16.msra.mxu0 %v9490
    %11042 = vmatprep.subr.bf16.mxu0 0
    %11043 = vmatpush1.bf16.msra.mxu0 %v9497
    %11044 = vmatprep.subr.bf16.mxu0 0
    %11045 = vmatpush1.bf16.msra.mxu0 %v9504
    %11046 = vmatprep.subr.bf16.mxu0 0
    %11047 = vmatpush1.bf16.msra.mxu0 %v9511
    %11048 = vmatprep.subr.bf16.mxu0 0
    %11049 = vmatpush1.bf16.msra.mxu0 %v9518
    %11050 = vmatprep.subr.bf16.mxu0 0
    %11051 = vmatpush1.bf16.msra.mxu0 %v9525
    %11052 = vmatprep.subr.bf16.mxu0 0
    %11053 = vmatpush1.bf16.msra.mxu0 %v9532
    %11054 = vmatprep.subr.bf16.mxu0 0
    %11055 = vmatpush1.bf16.msra.mxu0 %v9539
    %11056 = vmatprep.subr.bf16.mxu0 0
    %11057 = vmatpush1.bf16.msra.mxu0 %v9546
    %11058 = vmatprep.mubr.bf16.mxu0 %v6769
    %11059 = vmatmul.mubr.bf16.gmra.mrb[0].mxu0 %v6768
    %v11060 = vpop.f32.mrb[0].mxu0
    %v11061 = vadd.f32 %v11021, %v11060
    %v11062 = vpop.f32.mrb[0].mxu0
    %v11063 = vpop.f32.mrb[0].mxu0
    %v11064 = vpop.f32.mrb[0].mxu0
    %11065 = vdwg.mxu0
    %11066 = vmatprep.subr.bf16.mxu0 0
    %11067 = vmatpush1.bf16.msra.mxu0 %v9553
    %11068 = vmatprep.subr.bf16.mxu0 0
    %11069 = vmatpush1.bf16.msra.mxu0 %v9560
    %11070 = vmatprep.subr.bf16.mxu0 0
    %11071 = vmatpush1.bf16.msra.mxu0 %v9567
    %11072 = vmatprep.subr.bf16.mxu0 0
    %11073 = vmatpush1.bf16.msra.mxu0 %v9574
    %11074 = vmatprep.subr.bf16.mxu0 0
    %11075 = vmatpush1.bf16.msra.mxu0 %v9581
    %11076 = vmatprep.subr.bf16.mxu0 0
    %11077 = vmatpush1.bf16.msra.mxu0 %v9588
    %11078 = vmatprep.subr.bf16.mxu0 0
    %11079 = vmatpush1.bf16.msra.mxu0 %v9595
    %11080 = vmatprep.subr.bf16.mxu0 0
    %11081 = vmatpush1.bf16.msra.mxu0 %v9602
    %11082 = vmatprep.subr.bf16.mxu0 0
    %11083 = vmatpush1.bf16.msra.mxu0 %v9609
    %11084 = vmatprep.subr.bf16.mxu0 0
    %11085 = vmatpush1.bf16.msra.mxu0 %v9616
    %11086 = vmatprep.subr.bf16.mxu0 0
    %11087 = vmatpush1.bf16.msra.mxu0 %v9623
    %11088 = vmatprep.subr.bf16.mxu0 0
    %11089 = vmatpush1.bf16.msra.mxu0 %v9630
    %11090 = vmatprep.subr.bf16.mxu0 0
    %11091 = vmatpush1.bf16.msra.mxu0 %v9637
    %11092 = vmatprep.subr.bf16.mxu0 0
    %11093 = vmatpush1.bf16.msra.mxu0 %v9644
    %11094 = vmatprep.subr.bf16.mxu0 0
    %11095 = vmatpush1.bf16.msra.mxu0 %v9651
    %11096 = vmatprep.subr.bf16.mxu0 0
    %11097 = vmatpush1.bf16.msra.mxu0 %v9658
    %11098 = vmatprep.mubr.bf16.mxu0 %v6771
    %11099 = vmatmul.mubr.bf16.gmra.mrb[0].mxu0 %v6770
    %v11100 = vpop.f32.mrb[0].mxu0
    %v11101 = vadd.f32 %v11061, %v11100
    %v11102 = vpop.f32.mrb[0].mxu0
    %v11103 = vpop.f32.mrb[0].mxu0
    %v11104 = vpop.f32.mrb[0].mxu0
    %11105 = vdwg.mxu0
    %11106 = vmatprep.subr.bf16.mxu0 0
    %11107 = vmatpush1.bf16.msra.mxu0 %v9665
    %11108 = vmatprep.subr.bf16.mxu0 0
    %11109 = vmatpush1.bf16.msra.mxu0 %v9672
    %11110 = vmatprep.subr.bf16.mxu0 0
    %11111 = vmatpush1.bf16.msra.mxu0 %v9679
    %11112 = vmatprep.subr.bf16.mxu0 0
    %11113 = vmatpush1.bf16.msra.mxu0 %v9686
    %11114 = vmatprep.subr.bf16.mxu0 0
    %11115 = vmatpush1.bf16.msra.mxu0 %v9693
    %11116 = vmatprep.subr.bf16.mxu0 0
    %11117 = vmatpush1.bf16.msra.mxu0 %v9700
    %11118 = vmatprep.subr.bf16.mxu0 0
    %11119 = vmatpush1.bf16.msra.mxu0 %v9707
    %11120 = vmatprep.subr.bf16.mxu0 0
    %11121 = vmatpush1.bf16.msra.mxu0 %v9714
    %11122 = vmatprep.subr.bf16.mxu0 0
    %11123 = vmatpush1.bf16.msra.mxu0 %v9721
    %11124 = vmatprep.subr.bf16.mxu0 0
    %11125 = vmatpush1.bf16.msra.mxu0 %v9728
    %11126 = vmatprep.subr.bf16.mxu0 0
    %11127 = vmatpush1.bf16.msra.mxu0 %v9735
    %11128 = vmatprep.subr.bf16.mxu0 0
    %11129 = vmatpush1.bf16.msra.mxu0 %v9742
    %11130 = vmatprep.subr.bf16.mxu0 0
    %11131 = vmatpush1.bf16.msra.mxu0 %v9749
    %11132 = vmatprep.subr.bf16.mxu0 0
    %11133 = vmatpush1.bf16.msra.mxu0 %v9756
    %11134 = vmatprep.subr.bf16.mxu0 0
    %11135 = vmatpush1.bf16.msra.mxu0 %v9763
    %11136 = vmatprep.subr.bf16.mxu0 0
    %11137 = vmatpush1.bf16.msra.mxu0 %v9770
    %11138 = vmatprep.mubr.bf16.mxu0 %v6773
    %11139 = vmatmul.mubr.bf16.gmra.mrb[0].mxu0 %v6772
    %v11140 = vpop.f32.mrb[0].mxu0
    %v11141 = vadd.f32 %v11101, %v11140
    %v11142 = vpop.f32.mrb[0].mxu0
    %v11143 = vpop.f32.mrb[0].mxu0
    %v11144 = vpop.f32.mrb[0].mxu0
    %11145 = vdwg.mxu0
    %v11146 = vsub.f32 0.0, %v10530
    %v11147 = vsub.f32 0.0, %v10532
    %v11148 = vsub.f32 0.0, %v10735
    %v11149 = vsub.f32 0.0, %v10737
    %v11150 = vsub.f32 0.0, %v10940
    %v11151 = vsub.f32 0.0, %v10942
    %v11152 = vsub.f32 0.0, %v11141
    %v11153 = vmul.f32 %v11146, 1.442695
    %v11154 = vpow.pop %v11153
    %v11155 = vmul.f32 %v11147, 1.442695
    %v11156 = vpow.pop %v11155
    %v11157 = vmul.f32 %v11148, 1.442695
    %v11158 = vpow.pop %v11157
    %v11159 = vmul.f32 %v11149, 1.442695
    %v11160 = vpow.pop %v11159
    %v11161 = vmul.f32 %v11150, 1.442695
    %v11162 = vpow.pop %v11161
    %v11163 = vmul.f32 %v11151, 1.442695
    %v11164 = vpow.pop %v11163
    %v11165 = vmul.f32 %v11152, 1.442695
    %v11166 = vpow.pop %v11165
    %v11167 = vadd.f32 %v11154, 1.0
    %v11168 = vadd.f32 %v11156, 1.0
    %v11169 = vadd.f32 %v11158, 1.0
    %v11170 = vadd.f32 %v11160, 1.0
    %v11171 = vadd.f32 %v11162, 1.0
    %v11172 = vadd.f32 %v11164, 1.0
    %v11173 = vadd.f32 %v11166, 1.0
    %v11174 = vrcp.pop %v11167
    %v11175 = vrcp.pop %v11168
    %v11176 = vrcp.pop %v11169
    %v11177 = vrcp.pop %v11170
    %v11178 = vrcp.pop %v11171
    %v11179 = vrcp.pop %v11172
    %v11180 = vrcp.pop %v11173
    %11181 = vst [vmem:[#allocation14] sm:$0xff] %v11174
    %11182 = vst [vmem:[#allocation14 + $0x8] sm:$0xff] %v11175
    %11183 = vst [vmem:[#allocation14 + $0x10] sm:$0xff] %v11176
    %11184 = vst [vmem:[#allocation14 + $0x18] sm:$0xff] %v11177
    %11185 = vst [vmem:[#allocation14 + $0x20] sm:$0xff] %v11178
    %11186 = vst [vmem:[#allocation14 + $0x28] sm:$0xff] %v11179
    %11187 = vst [vmem:[#allocation14 + $0x30] sm:$0xff] %v11180
    // Predicated region
    $region58: #{tpu_custom_call.1} parent=1 // pred_check
      _
    $region59: #{tpu_custom_call.1} parent=1 // pred_check_branch
      %11189 = sbr.rel (0) target = $region61
    $region60: #{tpu_custom_call.1} parent=1 // pred_region
      %s11191 = ssub.s32 896, 896
      %11192 = vsyncadd [#allocation4], %s11191
      %s11194 = sshll.u32 [#allocation14], 4
      %s11195 = int_to_ptr.vmem [resolvable:$true] %s11194
      %11197 = dma.vmem_to_hbm [thread:$0]  %s11195, 896, %s7, [#allocation4]
    $region61: #{tpu_custom_call.1} parent=1 // pred_fallthru
      _
    // Predicated region
    $region62: #{tpu_custom_call.1} parent=1 // pred_check
      _
    $region63: #{tpu_custom_call.1} parent=1 // pred_check_branch
      %11199 = sbr.rel (0) target = $region65
    $region64: #{tpu_custom_call.1} parent=1 // pred_region
      %11200 = dma.done [#allocation4], 896
    $region65: #{tpu_custom_call.1} parent=1 // pred_fallthru
      _
    %11201 = vsyncpa [#allocation3], 1
    %11202 = vsyncpa [#allocation6], 1
    %11203 = vsyncpa [#allocation9], 1
    %11204 = vsyncpa [#allocation12], 1
    %11205 = vsyncpa [#allocation4], 1

</llo_original>
